<compile_context>
chip_gen: v6e
topology: v6e:2x2x1
jax: 0.10.0
libtpu: 0.0.40
codegen_flags: <defaults>
</compile_context>

<pallas_src>
import jax
import jax.numpy as jnp
from jax.experimental import pallas as pl
from jax.experimental.pallas import tpu as pltpu


IN_FEATURES = 3 * 28 * 28        # 2352
K_PAD = 2432                     # 19 * 128 (lane-aligned contraction dim)
HIDDEN = 512
OUT_FEATURES = 10
OUT_PAD = 128                    # lane-dense output block
_NEG_BIG = -1e30                 # bias for pad logits -> exp underflows to 0


def _mlp_softmax_kernel(x_ref, w1_ref, b1_ref, w2_ref, b2_ref, w3_ref, b3_ref,
                        o_ref):
    x = x_ref[...]                                                 # (TB, K_PAD) bf16

    # Linear(2352 -> 512) + ReLU   (bf16 x bf16 -> f32 accumulate on MXU)
    h1 = jnp.dot(x, w1_ref[...], preferred_element_type=jnp.float32)
    h1 = jnp.maximum(h1 + b1_ref[...], 0.0)                        # (TB, 512) f32

    # Linear(512 -> 512) + ReLU
    h2 = jnp.dot(h1.astype(jnp.bfloat16), w2_ref[...],
                 preferred_element_type=jnp.float32)
    h2 = jnp.maximum(h2 + b2_ref[...], 0.0)                        # (TB, 512) f32

    # Linear(512 -> 10), padded to 128 output lanes (pad lanes biased to -1e30)
    logits = jnp.dot(h2.astype(jnp.bfloat16), w3_ref[...],
                     preferred_element_type=jnp.float32)
    logits = logits + b3_ref[...]                                  # (TB, 128) f32

    # Softmax over dim=1 (numerically stable). Pad lanes: exp(-1e30 - m) == 0,
    # so they contribute nothing to the sum and get probability 0.
    m = jnp.max(logits, axis=-1, keepdims=True)
    e = jnp.exp(logits - m)
    s = jnp.sum(e, axis=-1, keepdims=True)
    o_ref[...] = (e * pl.reciprocal(s, approx=True)).astype(o_ref.dtype)


def _prepare_kernel_params(params):
    """(in,out)-layout f32 params -> padded, bf16-weight kernel operands."""
    w1, b1, w2, b2, w3, b3 = params
    w1p = jnp.pad(w1, ((0, K_PAD - IN_FEATURES), (0, 0))).astype(jnp.bfloat16)
    w2p = w2.astype(jnp.bfloat16)
    w3p = jnp.pad(w3, ((0, 0), (0, OUT_PAD - OUT_FEATURES))).astype(jnp.bfloat16)
    b3p = jnp.full((1, OUT_PAD), _NEG_BIG, jnp.float32)
    b3p = b3p.at[:, :OUT_FEATURES].set(b3.astype(jnp.float32))
    return w1p, b1.astype(jnp.float32), w2p, b2.astype(jnp.float32), w3p, b3p


def my_network_forward(x, params, *, tb=128):
    """x: (B, 3, 28, 28) float32 -> (B, 10) softmax probabilities.

    tb: batch tile (rows per grid step). 128 works everywhere (v5e MXU rows);
    use 256 on v6e/v7x for full 256x256 MXU tiles at large batch.
    """
    B = x.shape[0]
    x_flat = x.reshape(B, -1)                                      # Flatten(-3,-1)

    # Pad batch to the tile size and K to a lane multiple; cast to bf16.
    b_pad = pl.cdiv(B, tb) * tb
    x_flat = jnp.pad(x_flat, ((0, b_pad - B), (0, K_PAD - IN_FEATURES)))
    x_bf16 = x_flat.astype(jnp.bfloat16)

    w1, b1, w2, b2, w3, b3 = _prepare_kernel_params(params)

    resident = lambda i: (0, 0)   # weights/biases: same block every step

    out = pl.pallas_call(
        _mlp_softmax_kernel,
        out_shape=jax.ShapeDtypeStruct((b_pad, OUT_PAD), jnp.float32),
        grid=(b_pad // tb,),
        in_specs=[
            pl.BlockSpec((tb, K_PAD), lambda i: (i, 0)),           # x tile
            pl.BlockSpec((K_PAD, HIDDEN), resident),               # w1
            pl.BlockSpec((1, HIDDEN), resident),                   # b1
            pl.BlockSpec((HIDDEN, HIDDEN), resident),              # w2
            pl.BlockSpec((1, HIDDEN), resident),                   # b2
            pl.BlockSpec((HIDDEN, OUT_PAD), resident),             # w3 (padded)
            pl.BlockSpec((1, OUT_PAD), resident),                  # b3 (padded)
        ],
        out_specs=pl.BlockSpec((tb, OUT_PAD), lambda i: (i, 0)),
        compiler_params=pltpu.CompilerParams(
            dimension_semantics=("parallel",),
            vmem_limit_bytes=32 << 20,
        ),
    )(x_bf16, w1, b1, w2, b2, w3, b3)

    # Drop padded batch rows and padded output lanes.
    return out[:B, :OUT_FEATURES]


def init_params(key):
    """Deterministic synthetic parameters with the shapes nn.Linear implies.

    Weights stored as (in_features, out_features); biases as (1, out_features).
    """
    k1, k2, k3, k4, k5, k6 = jax.random.split(key, 6)

    def uniform(k, shape, fan_in):
        bound = 1.0 / jnp.sqrt(fan_in)
        return jax.random.uniform(k, shape, jnp.float32, -bound, bound)

    w1 = uniform(k1, (IN_FEATURES, HIDDEN), IN_FEATURES)
    b1 = uniform(k2, (1, HIDDEN), IN_FEATURES)
    w2 = uniform(k3, (HIDDEN, HIDDEN), HIDDEN)
    b2 = uniform(k4, (1, HIDDEN), HIDDEN)
    w3 = uniform(k5, (HIDDEN, OUT_FEATURES), HIDDEN)
    b3 = uniform(k6, (1, OUT_FEATURES), HIDDEN)
    return (w1, b1, w2, b2, w3, b3)


if __name__ == "__main__":
    key = jax.random.PRNGKey(0)
    kx, kp = jax.random.split(key)

    batch = 2   # NOTE: real throughput needs B >= one MXU tile (128/256 rows).
    x = jax.random.normal(kx, (batch, 3, 28, 28), jnp.float32)
    params = init_params(kp)

    out = my_network_forward(x, params)
    out = jax.block_until_ready(out)

    # Pure-JAX f32 reference of the same forward pass.
    w1, b1, w2, b2, w3, b3 = params
    xf = x.reshape(batch, -1)
    h1 = jnp.maximum(xf @ w1 + b1, 0.0)
    h2 = jnp.maximum(h1 @ w2 + b2, 0.0)
    ref = jax.nn.softmax(h2 @ w3 + b3, axis=1)

    assert out.shape == (batch, OUT_FEATURES)
    # Kernel uses bf16 weights/inputs (f32 accumulation) + approx reciprocal,
    # so compare against the f32 reference with a correspondingly loose tol.
    assert jnp.allclose(out, ref, atol=2e-2, rtol=2e-2)
    assert jnp.allclose(jnp.sum(out, axis=1), 1.0, atol=1e-2)

    print("KERNEL_OK")
</pallas_src>

<mosaic_0001>
module attributes {stable_mosaic.version = 11 : i64} {
  func.func @_mlp_softmax_kernel(%arg0: i32, %arg1: memref<128x2432xbf16, #tpu.memory_space<vmem>>, %arg2: memref<2432x512xbf16, #tpu.memory_space<vmem>>, %arg3: memref<1x512xf32, #tpu.memory_space<vmem>>, %arg4: memref<512x512xbf16, #tpu.memory_space<vmem>>, %arg5: memref<1x512xf32, #tpu.memory_space<vmem>>, %arg6: memref<512x128xbf16, #tpu.memory_space<vmem>>, %arg7: memref<1x128xf32, #tpu.memory_space<vmem>>, %arg8: memref<128x128xf32, #tpu.memory_space<vmem>>) attributes {dimension_semantics = [#tpu.dimension_semantics<parallel>], iteration_bounds = array<i64: 1>, scalar_prefetch = 0 : i64, scratch_operands = 0 : i64, tpu.core_type = #tpu.core_type<tc>, window_params = [{transform_indices = @transform_0, window_bounds = array<i64: 128, 2432>}, {pipeline_mode = #tpu.pipeline_mode<synchronous>, transform_indices = @transform_1, window_bounds = array<i64: 2432, 512>}, {pipeline_mode = #tpu.pipeline_mode<synchronous>, transform_indices = @transform_2, window_bounds = array<i64: 1, 512>}, {pipeline_mode = #tpu.pipeline_mode<synchronous>, transform_indices = @transform_3, window_bounds = array<i64: 512, 512>}, {pipeline_mode = #tpu.pipeline_mode<synchronous>, transform_indices = @transform_4, window_bounds = array<i64: 1, 512>}, {pipeline_mode = #tpu.pipeline_mode<synchronous>, transform_indices = @transform_5, window_bounds = array<i64: 512, 128>}, {pipeline_mode = #tpu.pipeline_mode<synchronous>, transform_indices = @transform_6, window_bounds = array<i64: 1, 128>}, {transform_indices = @transform_7, window_bounds = array<i64: 128, 128>}]} {
    %c0 = arith.constant 0 : index
    %c0_0 = arith.constant 0 : index
    %0 = vector.load %arg1[%c0, %c0_0] : memref<128x2432xbf16, #tpu.memory_space<vmem>>, vector<128x2432xbf16>
    %c0_1 = arith.constant 0 : index
    %c0_2 = arith.constant 0 : index
    %1 = vector.load %arg2[%c0_1, %c0_2] : memref<2432x512xbf16, #tpu.memory_space<vmem>>, vector<2432x512xbf16>
    %cst = arith.constant dense<0.000000e+00> : vector<128x512xf32>
    %2 = tpu.matmul %0, %1, %cst {dimension_numbers = #tpu.dot_dimension_numbers<[1], [0], [0], [1], [0, 0, 1, 1], [], []>} : vector<128x2432xbf16>, vector<2432x512xbf16>, vector<128x512xf32> -> vector<128x512xf32>
    %c0_3 = arith.constant 0 : index
    %c0_4 = arith.constant 0 : index
    %3 = vector.load %arg3[%c0_3, %c0_4] : memref<1x512xf32, #tpu.memory_space<vmem>>, vector<1x512xf32>
    %4 = vector.broadcast %3 : vector<1x512xf32> to vector<128x512xf32>
    %5 = arith.addf %2, %4 : vector<128x512xf32>
    %cst_5 = arith.constant 0.000000e+00 : f32
    %6 = vector.broadcast %cst_5 : f32 to vector<128x512xf32>
    %7 = arith.maximumf %5, %6 : vector<128x512xf32>
    %8 = arith.truncf %7 : vector<128x512xf32> to vector<128x512xbf16>
    %c0_6 = arith.constant 0 : index
    %c0_7 = arith.constant 0 : index
    %9 = vector.load %arg4[%c0_6, %c0_7] : memref<512x512xbf16, #tpu.memory_space<vmem>>, vector<512x512xbf16>
    %cst_8 = arith.constant dense<0.000000e+00> : vector<128x512xf32>
    %10 = tpu.matmul %8, %9, %cst_8 {dimension_numbers = #tpu.dot_dimension_numbers<[1], [0], [0], [1], [0, 0, 1, 1], [], []>} : vector<128x512xbf16>, vector<512x512xbf16>, vector<128x512xf32> -> vector<128x512xf32>
    %c0_9 = arith.constant 0 : index
    %c0_10 = arith.constant 0 : index
    %11 = vector.load %arg5[%c0_9, %c0_10] : memref<1x512xf32, #tpu.memory_space<vmem>>, vector<1x512xf32>
    %12 = vector.broadcast %11 : vector<1x512xf32> to vector<128x512xf32>
    %13 = arith.addf %10, %12 : vector<128x512xf32>
    %cst_11 = arith.constant 0.000000e+00 : f32
    %14 = vector.broadcast %cst_11 : f32 to vector<128x512xf32>
    %15 = arith.maximumf %13, %14 : vector<128x512xf32>
    %16 = arith.truncf %15 : vector<128x512xf32> to vector<128x512xbf16>
    %c0_12 = arith.constant 0 : index
    %c0_13 = arith.constant 0 : index
    %17 = vector.load %arg6[%c0_12, %c0_13] : memref<512x128xbf16, #tpu.memory_space<vmem>>, vector<512x128xbf16>
    %cst_14 = arith.constant dense<0.000000e+00> : vector<128x128xf32>
    %18 = tpu.matmul %16, %17, %cst_14 {dimension_numbers = #tpu.dot_dimension_numbers<[1], [0], [0], [1], [0, 0, 1, 1], [], []>} : vector<128x512xbf16>, vector<512x128xbf16>, vector<128x128xf32> -> vector<128x128xf32>
    %c0_15 = arith.constant 0 : index
    %c0_16 = arith.constant 0 : index
    %19 = vector.load %arg7[%c0_15, %c0_16] : memref<1x128xf32, #tpu.memory_space<vmem>>, vector<1x128xf32>
    %20 = vector.broadcast %19 : vector<1x128xf32> to vector<128x128xf32>
    %21 = arith.addf %18, %20 : vector<128x128xf32>
    %cst_17 = arith.constant dense<0xFF800000> : vector<128xf32>
    %22 = vector.multi_reduction <maximumf>, %21, %cst_17 [1] : vector<128x128xf32> to vector<128xf32>
    %23 = vector.shape_cast %22 : vector<128xf32> to vector<128x1xf32>
    %24 = vector.broadcast %23 : vector<128x1xf32> to vector<128x128xf32>
    %25 = arith.subf %21, %24 : vector<128x128xf32>
    %26 = math.exp %25 : vector<128x128xf32>
    %cst_18 = arith.constant dense<0.000000e+00> : vector<128xf32>
    %27 = vector.multi_reduction <add>, %26, %cst_18 [1] : vector<128x128xf32> to vector<128xf32>
    %28 = vector.shape_cast %27 : vector<128xf32> to vector<128x1xf32>
    %29 = tpu.reciprocal %28 {approx = true} : vector<128x1xf32> -> vector<128x1xf32>
    %30 = vector.broadcast %29 : vector<128x1xf32> to vector<128x128xf32>
    %31 = arith.mulf %26, %30 : vector<128x128xf32>
    %c0_19 = arith.constant 0 : index
    %c0_20 = arith.constant 0 : index
    %32 = vector.load %arg8[%c0_19, %c0_20] : memref<128x128xf32, #tpu.memory_space<vmem>>, vector<128x128xf32>
    tpu.vector_store %arg8[%c0_19, %c0_20], %31 {strides = array<i32>} : memref<128x128xf32, #tpu.memory_space<vmem>>, vector<128x128xf32>,
    return
  }
  func.func @transform_0(%arg0: i32) -> (i32, i32) {
    %c0_i32 = arith.constant 0 : i32
    %c0_i32_0 = arith.constant 0 : i32
    return %arg0, %c0_i32 : i32, i32
  }
  func.func @transform_1(%arg0: i32) -> (i32, i32) {
    %c0_i32 = arith.constant 0 : i32
    %c0_i32_0 = arith.constant 0 : i32
    %c0_i32_1 = arith.constant 0 : i32
    return %c0_i32, %c0_i32_0 : i32, i32
  }
  func.func @transform_2(%arg0: i32) -> (i32, i32) {
    %c0_i32 = arith.constant 0 : i32
    %c0_i32_0 = arith.constant 0 : i32
    %c0_i32_1 = arith.constant 0 : i32
    return %c0_i32, %c0_i32_0 : i32, i32
  }
  func.func @transform_3(%arg0: i32) -> (i32, i32) {
    %c0_i32 = arith.constant 0 : i32
    %c0_i32_0 = arith.constant 0 : i32
    %c0_i32_1 = arith.constant 0 : i32
    return %c0_i32, %c0_i32_0 : i32, i32
  }
  func.func @transform_4(%arg0: i32) -> (i32, i32) {
    %c0_i32 = arith.constant 0 : i32
    %c0_i32_0 = arith.constant 0 : i32
    %c0_i32_1 = arith.constant 0 : i32
    return %c0_i32, %c0_i32_0 : i32, i32
  }
  func.func @transform_5(%arg0: i32) -> (i32, i32) {
    %c0_i32 = arith.constant 0 : i32
    %c0_i32_0 = arith.constant 0 : i32
    %c0_i32_1 = arith.constant 0 : i32
    return %c0_i32, %c0_i32_0 : i32, i32
  }
  func.func @transform_6(%arg0: i32) -> (i32, i32) {
    %c0_i32 = arith.constant 0 : i32
    %c0_i32_0 = arith.constant 0 : i32
    %c0_i32_1 = arith.constant 0 : i32
    return %c0_i32, %c0_i32_0 : i32, i32
  }
  func.func @transform_7(%arg0: i32) -> (i32, i32) {
    %c0_i32 = arith.constant 0 : i32
    %c0_i32_0 = arith.constant 0 : i32
    return %arg0, %c0_i32 : i32, i32
  }
}

</mosaic_0001>

<llo_original>
// kernel: tpu_custom_call.1
$region0: #{tpu_custom_call.1}
  #allocation0 [shape = 'u32[]', space=smem, size = 0x4, offset = 0x4, fixed_abs, tag = 'smem constant byte address 0x4 - core index']
  #allocation1 [shape = 'u32[144,128]{1,0:T(1,128)}', space=vmem, size = 0x12000, scoped, tag = 'internal scratch']
  %s0 = inlined_call_operand.hbm [shape: bf16[128,2432], index: 0, kind: input, shape index: {}]
  %s1 = inlined_call_operand.hbm [shape: bf16[2432,512], index: 1, kind: input, shape index: {}]
  %s2 = inlined_call_operand.hbm [shape: f32[1,512], index: 2, kind: input, shape index: {}]
  %s3 = inlined_call_operand.hbm [shape: bf16[512,512], index: 3, kind: input, shape index: {}]
  %s4 = inlined_call_operand.hbm [shape: f32[1,512], index: 4, kind: input, shape index: {}]
  %s5 = inlined_call_operand.hbm [shape: bf16[512,128], index: 5, kind: input, shape index: {}]
  %s6 = inlined_call_operand.hbm [shape: f32[1,128], index: 6, kind: input, shape index: {}]
  %s7 = inlined_call_operand.hbm [shape: f32[128,128], index: 7, kind: output, shape index: {}]
  %s8 = sld [smem:[#allocation0]]
  $region66: #{tpu_custom_call.1} parent=0
    _
  %s10 = ssub.s32 1, %s8
  %s11 = scalar_select 0, %s10, %s8
  $region1: #{tpu_custom_call.1} parent=0
    #allocation2 [shape = 'u8[622592]{0}', space=vmem, size = 0x98000, scoped, tag = 'input window, operand 0, single buffered']
    #allocation3 [shape = 's32[1]{0}', space=sflag, size = 0x4, scoped, tag = 'scoped memory for tpu_custom_call.1']
    #allocation4 [shape = 's32[1]{0}', space=sflag, size = 0x4, scoped, tag = 'scoped memory for tpu_custom_call.1']
    #allocation5 [shape = 'u8[2490368]{0}', space=vmem, size = 0x260000, scoped, tag = 'input window, operand 1, single buffered']
    #allocation6 [shape = 's32[1]{0}', space=sflag, size = 0x4, scoped, tag = 'scoped memory for tpu_custom_call.1']
    #allocation7 [shape = 'u8[2048]{0}', space=vmem, size = 0x800, scoped, tag = 'input window, operand 2, single buffered']
    #allocation8 [shape = 'u8[524288]{0}', space=vmem, size = 0x80000, scoped, tag = 'input window, operand 3, single buffered']
    #allocation9 [shape = 's32[1]{0}', space=sflag, size = 0x4, scoped, tag = 'scoped memory for tpu_custom_call.1']
    #allocation10 [shape = 'u8[2048]{0}', space=vmem, size = 0x800, scoped, tag = 'input window, operand 4, single buffered']
    #allocation11 [shape = 'u8[131072]{0}', space=vmem, size = 0x20000, scoped, tag = 'input window, operand 5, single buffered']
    #allocation12 [shape = 's32[1]{0}', space=sflag, size = 0x4, scoped, tag = 'scoped memory for tpu_custom_call.1']
    #allocation13 [shape = 'u8[512]{0}', space=vmem, size = 0x400, scoped, tag = 'input window, operand 6, single buffered']
    #allocation14 [shape = 'u8[65536]{0}', space=vmem, size = 0x10000, scoped, tag = 'output window, operand 0, single buffered']
    %12 = vsyncpa [#allocation3], 0
    %13 = vsyncpa [#allocation6], 0
    %14 = vsyncpa [#allocation9], 0
    %15 = vsyncpa [#allocation12], 0
    %16 = vsyncpa [#allocation4], 0
    // Predicated region
    $region2: #{tpu_custom_call.1} parent=1 // pred_check
      _
    $region3: #{tpu_custom_call.1} parent=1 // pred_check_branch
      %18 = sbr.rel (0) target = $region5
    $region4: #{tpu_custom_call.1} parent=1 // pred_region
      %s20 = ssub.s32 19456, 19456
      %21 = vsyncadd [#allocation3], %s20
      %s22 = sshll.u32 [#allocation2], 4
      %s23 = int_to_ptr.vmem [resolvable:$true] %s22
      %28 = dma.hbm_to_vmem [thread:$0]  %s0, 19456, %s23, [#allocation3], 1216, 1216, 76
    $region5: #{tpu_custom_call.1} parent=1 // pred_fallthru
      _
    // Predicated region
    $region6: #{tpu_custom_call.1} parent=1 // pred_check
      _
    $region7: #{tpu_custom_call.1} parent=1 // pred_check_branch
      %30 = sbr.rel (0) target = $region9
    $region8: #{tpu_custom_call.1} parent=1 // pred_region
      %s32 = ssub.s32 77824, 77824
      %33 = vsyncadd [#allocation6], %s32
      %s34 = sshll.u32 [#allocation5], 4
      %s35 = int_to_ptr.vmem [resolvable:$true] %s34
      %40 = dma.hbm_to_vmem [thread:$0]  %s1, 77824, %s35, [#allocation6], 256, 256, 16
    $region9: #{tpu_custom_call.1} parent=1 // pred_fallthru
      _
    // Predicated region
    $region10: #{tpu_custom_call.1} parent=1 // pred_check
      _
    $region11: #{tpu_custom_call.1} parent=1 // pred_check_branch
      %42 = sbr.rel (0) target = $region13
    $region12: #{tpu_custom_call.1} parent=1 // pred_region
      %s44 = ssub.s32 64, 64
      %45 = vsyncadd [#allocation6], %s44
      %s47 = sshll.u32 [#allocation7], 4
      %s48 = int_to_ptr.vmem [resolvable:$true] %s47
      %50 = dma.hbm_to_vmem [thread:$0]  %s2, 64, %s48, [#allocation6]
    $region13: #{tpu_custom_call.1} parent=1 // pred_fallthru
      _
    // Predicated region
    $region14: #{tpu_custom_call.1} parent=1 // pred_check
      _
    $region15: #{tpu_custom_call.1} parent=1 // pred_check_branch
      %52 = sbr.rel (0) target = $region17
    $region16: #{tpu_custom_call.1} parent=1 // pred_region
      %s54 = ssub.s32 16384, 16384
      %55 = vsyncadd [#allocation9], %s54
      %s56 = sshll.u32 [#allocation8], 4
      %s57 = int_to_ptr.vmem [resolvable:$true] %s56
      %62 = dma.hbm_to_vmem [thread:$0]  %s3, 16384, %s57, [#allocation9], 256, 256, 16
    $region17: #{tpu_custom_call.1} parent=1 // pred_fallthru
      _
    // Predicated region
    $region18: #{tpu_custom_call.1} parent=1 // pred_check
      _
    $region19: #{tpu_custom_call.1} parent=1 // pred_check_branch
      %64 = sbr.rel (0) target = $region21
    $region20: #{tpu_custom_call.1} parent=1 // pred_region
      %s66 = ssub.s32 64, 64
      %67 = vsyncadd [#allocation9], %s66
      %s69 = sshll.u32 [#allocation10], 4
      %s70 = int_to_ptr.vmem [resolvable:$true] %s69
      %72 = dma.hbm_to_vmem [thread:$0]  %s4, 64, %s70, [#allocation9]
    $region21: #{tpu_custom_call.1} parent=1 // pred_fallthru
      _
    // Predicated region
    $region22: #{tpu_custom_call.1} parent=1 // pred_check
      _
    $region23: #{tpu_custom_call.1} parent=1 // pred_check_branch
      %74 = sbr.rel (0) target = $region25
    $region24: #{tpu_custom_call.1} parent=1 // pred_region
      %s76 = ssub.s32 4096, 4096
      %77 = vsyncadd [#allocation12], %s76
      %s78 = sshll.u32 [#allocation11], 4
      %s79 = int_to_ptr.vmem [resolvable:$true] %s78
      %84 = dma.hbm_to_vmem [thread:$0]  %s5, 4096, %s79, [#allocation12], 64, 64, 4
    $region25: #{tpu_custom_call.1} parent=1 // pred_fallthru
      _
    // Predicated region
    $region26: #{tpu_custom_call.1} parent=1 // pred_check
      _
    $region27: #{tpu_custom_call.1} parent=1 // pred_check_branch
      %86 = sbr.rel (0) target = $region29
    $region28: #{tpu_custom_call.1} parent=1 // pred_region
      %s88 = ssub.s32 16, 16
      %89 = vsyncadd [#allocation12], %s88
      %s91 = sshll.u32 [#allocation13], 4
      %s92 = int_to_ptr.vmem [resolvable:$true] %s91
      %94 = dma.hbm_to_vmem [thread:$0]  %s6, 16, %s92, [#allocation12]
    $region29: #{tpu_custom_call.1} parent=1 // pred_fallthru
      _
    // Predicated region
    $region30: #{tpu_custom_call.1} parent=1 // pred_check
      _
    $region31: #{tpu_custom_call.1} parent=1 // pred_check_branch
      %96 = sbr.rel (0) target = $region33
    $region32: #{tpu_custom_call.1} parent=1 // pred_region
      %97 = dma.done [#allocation3], 19456
    $region33: #{tpu_custom_call.1} parent=1 // pred_fallthru
      _
    // Predicated region
    $region34: #{tpu_custom_call.1} parent=1 // pred_check
      _
    $region35: #{tpu_custom_call.1} parent=1 // pred_check_branch
      %99 = sbr.rel (0) target = $region37
    $region36: #{tpu_custom_call.1} parent=1 // pred_region
      %100 = dma.done [#allocation6], 77824
    $region37: #{tpu_custom_call.1} parent=1 // pred_fallthru
      _
    // Predicated region
    $region38: #{tpu_custom_call.1} parent=1 // pred_check
      _
    $region39: #{tpu_custom_call.1} parent=1 // pred_check_branch
      %102 = sbr.rel (0) target = $region41
    $region40: #{tpu_custom_call.1} parent=1 // pred_region
      %103 = dma.done [#allocation6], 64
    $region41: #{tpu_custom_call.1} parent=1 // pred_fallthru
      _
    // Predicated region
    $region42: #{tpu_custom_call.1} parent=1 // pred_check
      _
    $region43: #{tpu_custom_call.1} parent=1 // pred_check_branch
      %105 = sbr.rel (0) target = $region45
    $region44: #{tpu_custom_call.1} parent=1 // pred_region
      %106 = dma.done [#allocation9], 16384
    $region45: #{tpu_custom_call.1} parent=1 // pred_fallthru
      _
    // Predicated region
    $region46: #{tpu_custom_call.1} parent=1 // pred_check
      _
    $region47: #{tpu_custom_call.1} parent=1 // pred_check_branch
      %108 = sbr.rel (0) target = $region49
    $region48: #{tpu_custom_call.1} parent=1 // pred_region
      %109 = dma.done [#allocation9], 64
    $region49: #{tpu_custom_call.1} parent=1 // pred_fallthru
      _
    // Predicated region
    $region50: #{tpu_custom_call.1} parent=1 // pred_check
      _
    $region51: #{tpu_custom_call.1} parent=1 // pred_check_branch
      %111 = sbr.rel (0) target = $region53
    $region52: #{tpu_custom_call.1} parent=1 // pred_region
      %112 = dma.done [#allocation12], 4096
    $region53: #{tpu_custom_call.1} parent=1 // pred_fallthru
      _
    // Predicated region
    $region54: #{tpu_custom_call.1} parent=1 // pred_check
      _
    $region55: #{tpu_custom_call.1} parent=1 // pred_check_branch
      %114 = sbr.rel (0) target = $region57
    $region56: #{tpu_custom_call.1} parent=1 // pred_region
      %115 = dma.done [#allocation12], 16
    $region57: #{tpu_custom_call.1} parent=1 // pred_fallthru
      _
    %v117 = vld [vmem:[#allocation2] sm:$0xff]
    %v118 = vld [vmem:[#allocation2 + $0x8] sm:$0xff]
    %v119 = vld [vmem:[#allocation2 + $0x10] sm:$0xff]
    %v120 = vld [vmem:[#allocation2 + $0x18] sm:$0xff]
    %v121 = vld [vmem:[#allocation2 + $0x20] sm:$0xff]
    %v122 = vld [vmem:[#allocation2 + $0x28] sm:$0xff]
    %v123 = vld [vmem:[#allocation2 + $0x30] sm:$0xff]
    %v124 = vld [vmem:[#allocation2 + $0x38] sm:$0xff]
    %v125 = vld [vmem:[#allocation2 + $0x40] sm:$0xff]
    %v126 = vld [vmem:[#allocation2 + $0x48] sm:$0xf]
    %v127 = vld [vmem:[#allocation2 + $0x4c] sm:$0xff]
    %v128 = vld [vmem:[#allocation2 + $0x54] sm:$0xff]
    %v129 = vld [vmem:[#allocation2 + $0x5c] sm:$0xff]
    %v130 = vld [vmem:[#allocation2 + $0x64] sm:$0xff]
    %v131 = vld [vmem:[#allocation2 + $0x6c] sm:$0xff]
    %v132 = vld [vmem:[#allocation2 + $0x74] sm:$0xff]
    %v133 = vld [vmem:[#allocation2 + $0x7c] sm:$0xff]
    %v134 = vld [vmem:[#allocation2 + $0x84] sm:$0xff]
    %v135 = vld [vmem:[#allocation2 + $0x8c] sm:$0xff]
    %v136 = vld [vmem:[#allocation2 + $0x94] sm:$0xf]
    %v137 = vld [vmem:[#allocation2 + $0x98] sm:$0xff]
    %v138 = vld [vmem:[#allocation2 + $0xa0] sm:$0xff]
    %v139 = vld [vmem:[#allocation2 + $0xa8] sm:$0xff]
    %v140 = vld [vmem:[#allocation2 + $0xb0] sm:$0xff]
    %v141 = vld [vmem:[#allocation2 + $0xb8] sm:$0xff]
    %v142 = vld [vmem:[#allocation2 + $0xc0] sm:$0xff]
    %v143 = vld [vmem:[#allocation2 + $0xc8] sm:$0xff]
    %v144 = vld [vmem:[#allocation2 + $0xd0] sm:$0xff]
    %v145 = vld [vmem:[#allocation2 + $0xd8] sm:$0xff]
    %v146 = vld [vmem:[#allocation2 + $0xe0] sm:$0xf]
    %v147 = vld [vmem:[#allocation2 + $0xe4] sm:$0xff]
    %v148 = vld [vmem:[#allocation2 + $0xec] sm:$0xff]
    %v149 = vld [vmem:[#allocation2 + $0xf4] sm:$0xff]
    %v150 = vld [vmem:[#allocation2 + $0xfc] sm:$0xff]
    %v151 = vld [vmem:[#allocation2 + $0x104] sm:$0xff]
    %v152 = vld [vmem:[#allocation2 + $0x10c] sm:$0xff]
    %v153 = vld [vmem:[#allocation2 + $0x114] sm:$0xff]
    %v154 = vld [vmem:[#allocation2 + $0x11c] sm:$0xff]
    %v155 = vld [vmem:[#allocation2 + $0x124] sm:$0xff]
    %v156 = vld [vmem:[#allocation2 + $0x12c] sm:$0xf]
    %v157 = vld [vmem:[#allocation2 + $0x130] sm:$0xff]
    %v158 = vld [vmem:[#allocation2 + $0x138] sm:$0xff]
    %v159 = vld [vmem:[#allocation2 + $0x140] sm:$0xff]
    %v160 = vld [vmem:[#allocation2 + $0x148] sm:$0xff]
    %v161 = vld [vmem:[#allocation2 + $0x150] sm:$0xff]
    %v162 = vld [vmem:[#allocation2 + $0x158] sm:$0xff]
    %v163 = vld [vmem:[#allocation2 + $0x160] sm:$0xff]
    %v164 = vld [vmem:[#allocation2 + $0x168] sm:$0xff]
    %v165 = vld [vmem:[#allocation2 + $0x170] sm:$0xff]
    %v166 = vld [vmem:[#allocation2 + $0x178] sm:$0xf]
    %v167 = vld [vmem:[#allocation2 + $0x17c] sm:$0xff]
    %v168 = vld [vmem:[#allocation2 + $0x184] sm:$0xff]
    %v169 = vld [vmem:[#allocation2 + $0x18c] sm:$0xff]
    %v170 = vld [vmem:[#allocation2 + $0x194] sm:$0xff]
    %v171 = vld [vmem:[#allocation2 + $0x19c] sm:$0xff]
    %v172 = vld [vmem:[#allocation2 + $0x1a4] sm:$0xff]
    %v173 = vld [vmem:[#allocation2 + $0x1ac] sm:$0xff]
    %v174 = vld [vmem:[#allocation2 + $0x1b4] sm:$0xff]
    %v175 = vld [vmem:[#allocation2 + $0x1bc] sm:$0xff]
    %v176 = vld [vmem:[#allocation2 + $0x1c4] sm:$0xf]
    %v177 = vld [vmem:[#allocation2 + $0x1c8] sm:$0xff]
    %v178 = vld [vmem:[#allocation2 + $0x1d0] sm:$0xff]
    %v179 = vld [vmem:[#allocation2 + $0x1d8] sm:$0xff]
    %v180 = vld [vmem:[#allocation2 + $0x1e0] sm:$0xff]
    %v181 = vld [vmem:[#allocation2 + $0x1e8] sm:$0xff]
    %v182 = vld [vmem:[#allocation2 + $0x1f0] sm:$0xff]
    %v183 = vld [vmem:[#allocation2 + $0x1f8] sm:$0xff]
    %v184 = vld [vmem:[#allocation2 + $0x200] sm:$0xff]
    %v185 = vld [vmem:[#allocation2 + $0x208] sm:$0xff]
    %v186 = vld [vmem:[#allocation2 + $0x210] sm:$0xf]
    %v187 = vld [vmem:[#allocation2 + $0x214] sm:$0xff]
    %v188 = vld [vmem:[#allocation2 + $0x21c] sm:$0xff]
    %v189 = vld [vmem:[#allocation2 + $0x224] sm:$0xff]
    %v190 = vld [vmem:[#allocation2 + $0x22c] sm:$0xff]
    %v191 = vld [vmem:[#allocation2 + $0x234] sm:$0xff]
    %v192 = vld [vmem:[#allocation2 + $0x23c] sm:$0xff]
    %v193 = vld [vmem:[#allocation2 + $0x244] sm:$0xff]
    %v194 = vld [vmem:[#allocation2 + $0x24c] sm:$0xff]
    %v195 = vld [vmem:[#allocation2 + $0x254] sm:$0xff]
    %v196 = vld [vmem:[#allocation2 + $0x25c] sm:$0xf]
    %v197 = vld [vmem:[#allocation2 + $0x260] sm:$0xff]
    %v198 = vld [vmem:[#allocation2 + $0x268] sm:$0xff]
    %v199 = vld [vmem:[#allocation2 + $0x270] sm:$0xff]
    %v200 = vld [vmem:[#allocation2 + $0x278] sm:$0xff]
    %v201 = vld [vmem:[#allocation2 + $0x280] sm:$0xff]
    %v202 = vld [vmem:[#allocation2 + $0x288] sm:$0xff]
    %v203 = vld [vmem:[#allocation2 + $0x290] sm:$0xff]
    %v204 = vld [vmem:[#allocation2 + $0x298] sm:$0xff]
    %v205 = vld [vmem:[#allocation2 + $0x2a0] sm:$0xff]
    %v206 = vld [vmem:[#allocation2 + $0x2a8] sm:$0xf]
    %v207 = vld [vmem:[#allocation2 + $0x2ac] sm:$0xff]
    %v208 = vld [vmem:[#allocation2 + $0x2b4] sm:$0xff]
    %v209 = vld [vmem:[#allocation2 + $0x2bc] sm:$0xff]
    %v210 = vld [vmem:[#allocation2 + $0x2c4] sm:$0xff]
    %v211 = vld [vmem:[#allocation2 + $0x2cc] sm:$0xff]
    %v212 = vld [vmem:[#allocation2 + $0x2d4] sm:$0xff]
    %v213 = vld [vmem:[#allocation2 + $0x2dc] sm:$0xff]
    %v214 = vld [vmem:[#allocation2 + $0x2e4] sm:$0xff]
    %v215 = vld [vmem:[#allocation2 + $0x2ec] sm:$0xff]
    %v216 = vld [vmem:[#allocation2 + $0x2f4] sm:$0xf]
    %v217 = vld [vmem:[#allocation2 + $0x2f8] sm:$0xff]
    %v218 = vld [vmem:[#allocation2 + $0x300] sm:$0xff]
    %v219 = vld [vmem:[#allocation2 + $0x308] sm:$0xff]
    %v220 = vld [vmem:[#allocation2 + $0x310] sm:$0xff]
    %v221 = vld [vmem:[#allocation2 + $0x318] sm:$0xff]
    %v222 = vld [vmem:[#allocation2 + $0x320] sm:$0xff]
    %v223 = vld [vmem:[#allocation2 + $0x328] sm:$0xff]
    %v224 = vld [vmem:[#allocation2 + $0x330] sm:$0xff]
    %v225 = vld [vmem:[#allocation2 + $0x338] sm:$0xff]
    %v226 = vld [vmem:[#allocation2 + $0x340] sm:$0xf]
    %v227 = vld [vmem:[#allocation2 + $0x344] sm:$0xff]
    %v228 = vld [vmem:[#allocation2 + $0x34c] sm:$0xff]
    %v229 = vld [vmem:[#allocation2 + $0x354] sm:$0xff]
    %v230 = vld [vmem:[#allocation2 + $0x35c] sm:$0xff]
    %v231 = vld [vmem:[#allocation2 + $0x364] sm:$0xff]
    %v232 = vld [vmem:[#allocation2 + $0x36c] sm:$0xff]
    %v233 = vld [vmem:[#allocation2 + $0x374] sm:$0xff]
    %v234 = vld [vmem:[#allocation2 + $0x37c] sm:$0xff]
    %v235 = vld [vmem:[#allocation2 + $0x384] sm:$0xff]
    %v236 = vld [vmem:[#allocation2 + $0x38c] sm:$0xf]
    %v237 = vld [vmem:[#allocation2 + $0x390] sm:$0xff]
    %v238 = vld [vmem:[#allocation2 + $0x398] sm:$0xff]
    %v239 = vld [vmem:[#allocation2 + $0x3a0] sm:$0xff]
    %v240 = vld [vmem:[#allocation2 + $0x3a8] sm:$0xff]
    %v241 = vld [vmem:[#allocation2 + $0x3b0] sm:$0xff]
    %v242 = vld [vmem:[#allocation2 + $0x3b8] sm:$0xff]
    %v243 = vld [vmem:[#allocation2 + $0x3c0] sm:$0xff]
    %v244 = vld [vmem:[#allocation2 + $0x3c8] sm:$0xff]
    %v245 = vld [vmem:[#allocation2 + $0x3d0] sm:$0xff]
    %v246 = vld [vmem:[#allocation2 + $0x3d8] sm:$0xf]
    %v247 = vld [vmem:[#allocation2 + $0x3dc] sm:$0xff]
    %v248 = vld [vmem:[#allocation2 + $0x3e4] sm:$0xff]
    %v249 = vld [vmem:[#allocation2 + $0x3ec] sm:$0xff]
    %v250 = vld [vmem:[#allocation2 + $0x3f4] sm:$0xff]
    %v251 = vld [vmem:[#allocation2 + $0x3fc] sm:$0xff]
    %v252 = vld [vmem:[#allocation2 + $0x404] sm:$0xff]
    %v253 = vld [vmem:[#allocation2 + $0x40c] sm:$0xff]
    %v254 = vld [vmem:[#allocation2 + $0x414] sm:$0xff]
    %v255 = vld [vmem:[#allocation2 + $0x41c] sm:$0xff]
    %v256 = vld [vmem:[#allocation2 + $0x424] sm:$0xf]
    %v257 = vld [vmem:[#allocation2 + $0x428] sm:$0xff]
    %v258 = vld [vmem:[#allocation2 + $0x430] sm:$0xff]
    %v259 = vld [vmem:[#allocation2 + $0x438] sm:$0xff]
    %v260 = vld [vmem:[#allocation2 + $0x440] sm:$0xff]
    %v261 = vld [vmem:[#allocation2 + $0x448] sm:$0xff]
    %v262 = vld [vmem:[#allocation2 + $0x450] sm:$0xff]
    %v263 = vld [vmem:[#allocation2 + $0x458] sm:$0xff]
    %v264 = vld [vmem:[#allocation2 + $0x460] sm:$0xff]
    %v265 = vld [vmem:[#allocation2 + $0x468] sm:$0xff]
    %v266 = vld [vmem:[#allocation2 + $0x470] sm:$0xf]
    %v267 = vld [vmem:[#allocation2 + $0x474] sm:$0xff]
    %v268 = vld [vmem:[#allocation2 + $0x47c] sm:$0xff]
    %v269 = vld [vmem:[#allocation2 + $0x484] sm:$0xff]
    %v270 = vld [vmem:[#allocation2 + $0x48c] sm:$0xff]
    %v271 = vld [vmem:[#allocation2 + $0x494] sm:$0xff]
    %v272 = vld [vmem:[#allocation2 + $0x49c] sm:$0xff]
    %v273 = vld [vmem:[#allocation2 + $0x4a4] sm:$0xff]
    %v274 = vld [vmem:[#allocation2 + $0x4ac] sm:$0xff]
    %v275 = vld [vmem:[#allocation2 + $0x4b4] sm:$0xff]
    %v276 = vld [vmem:[#allocation2 + $0x4bc] sm:$0xf]
    %v277 = vld [vmem:[#allocation5] sm:$0xff]
    %v278 = vld [vmem:[#allocation5 + $0x8] sm:$0xff]
    %v279 = vld [vmem:[#allocation5 + $0x10] sm:$0xff]
    %v280 = vld [vmem:[#allocation5 + $0x18] sm:$0xff]
    %v281 = vld [vmem:[#allocation5 + $0x20] sm:$0xff]
    %v282 = vld [vmem:[#allocation5 + $0x28] sm:$0xff]
    %v283 = vld [vmem:[#allocation5 + $0x30] sm:$0xff]
    %v284 = vld [vmem:[#allocation5 + $0x38] sm:$0xff]
    %v285 = vld [vmem:[#allocation5 + $0x40] sm:$0xff]
    %v286 = vld [vmem:[#allocation5 + $0x48] sm:$0xff]
    %v287 = vld [vmem:[#allocation5 + $0x50] sm:$0xff]
    %v288 = vld [vmem:[#allocation5 + $0x58] sm:$0xff]
    %v289 = vld [vmem:[#allocation5 + $0x60] sm:$0xff]
    %v290 = vld [vmem:[#allocation5 + $0x68] sm:$0xff]
    %v291 = vld [vmem:[#allocation5 + $0x70] sm:$0xff]
    %v292 = vld [vmem:[#allocation5 + $0x78] sm:$0xff]
    %v293 = vld [vmem:[#allocation5 + $0x80] sm:$0xff]
    %v294 = vld [vmem:[#allocation5 + $0x88] sm:$0xff]
    %v295 = vld [vmem:[#allocation5 + $0x90] sm:$0xff]
    %v296 = vld [vmem:[#allocation5 + $0x98] sm:$0xff]
    %v297 = vld [vmem:[#allocation5 + $0xa0] sm:$0xff]
    %v298 = vld [vmem:[#allocation5 + $0xa8] sm:$0xff]
    %v299 = vld [vmem:[#allocation5 + $0xb0] sm:$0xff]
    %v300 = vld [vmem:[#allocation5 + $0xb8] sm:$0xff]
    %v301 = vld [vmem:[#allocation5 + $0xc0] sm:$0xff]
    %v302 = vld [vmem:[#allocation5 + $0xc8] sm:$0xff]
    %v303 = vld [vmem:[#allocation5 + $0xd0] sm:$0xff]
    %v304 = vld [vmem:[#allocation5 + $0xd8] sm:$0xff]
    %v305 = vld [vmem:[#allocation5 + $0xe0] sm:$0xff]
    %v306 = vld [vmem:[#allocation5 + $0xe8] sm:$0xff]
    %v307 = vld [vmem:[#allocation5 + $0xf0] sm:$0xff]
    %v308 = vld [vmem:[#allocation5 + $0xf8] sm:$0xff]
    %v309 = vld [vmem:[#allocation5 + $0x100] sm:$0xff]
    %v310 = vld [vmem:[#allocation5 + $0x108] sm:$0xff]
    %v311 = vld [vmem:[#allocation5 + $0x110] sm:$0xff]
    %v312 = vld [vmem:[#allocation5 + $0x118] sm:$0xff]
    %v313 = vld [vmem:[#allocation5 + $0x120] sm:$0xff]
    %v314 = vld [vmem:[#allocation5 + $0x128] sm:$0xff]
    %v315 = vld [vmem:[#allocation5 + $0x130] sm:$0xff]
    %v316 = vld [vmem:[#allocation5 + $0x138] sm:$0xff]
    %v317 = vld [vmem:[#allocation5 + $0x140] sm:$0xff]
    %v318 = vld [vmem:[#allocation5 + $0x148] sm:$0xff]
    %v319 = vld [vmem:[#allocation5 + $0x150] sm:$0xff]
    %v320 = vld [vmem:[#allocation5 + $0x158] sm:$0xff]
    %v321 = vld [vmem:[#allocation5 + $0x160] sm:$0xff]
    %v322 = vld [vmem:[#allocation5 + $0x168] sm:$0xff]
    %v323 = vld [vmem:[#allocation5 + $0x170] sm:$0xff]
    %v324 = vld [vmem:[#allocation5 + $0x178] sm:$0xff]
    %v325 = vld [vmem:[#allocation5 + $0x180] sm:$0xff]
    %v326 = vld [vmem:[#allocation5 + $0x188] sm:$0xff]
    %v327 = vld [vmem:[#allocation5 + $0x190] sm:$0xff]
    %v328 = vld [vmem:[#allocation5 + $0x198] sm:$0xff]
    %v329 = vld [vmem:[#allocation5 + $0x1a0] sm:$0xff]
    %v330 = vld [vmem:[#allocation5 + $0x1a8] sm:$0xff]
    %v331 = vld [vmem:[#allocation5 + $0x1b0] sm:$0xff]
    %v332 = vld [vmem:[#allocation5 + $0x1b8] sm:$0xff]
    %v333 = vld [vmem:[#allocation5 + $0x1c0] sm:$0xff]
    %v334 = vld [vmem:[#allocation5 + $0x1c8] sm:$0xff]
    %v335 = vld [vmem:[#allocation5 + $0x1d0] sm:$0xff]
    %v336 = vld [vmem:[#allocation5 + $0x1d8] sm:$0xff]
    %v337 = vld [vmem:[#allocation5 + $0x1e0] sm:$0xff]
    %v338 = vld [vmem:[#allocation5 + $0x1e8] sm:$0xff]
    %v339 = vld [vmem:[#allocation5 + $0x1f0] sm:$0xff]
    %v340 = vld [vmem:[#allocation5 + $0x1f8] sm:$0xff]
    %v341 = vld [vmem:[#allocation5 + $0x200] sm:$0xff]
    %v342 = vld [vmem:[#allocation5 + $0x208] sm:$0xff]
    %v343 = vld [vmem:[#allocation5 + $0x210] sm:$0xff]
    %v344 = vld [vmem:[#allocation5 + $0x218] sm:$0xff]
    %v345 = vld [vmem:[#allocation5 + $0x220] sm:$0xff]
    %v346 = vld [vmem:[#allocation5 + $0x228] sm:$0xff]
    %v347 = vld [vmem:[#allocation5 + $0x230] sm:$0xff]
    %v348 = vld [vmem:[#allocation5 + $0x238] sm:$0xff]
    %v349 = vld [vmem:[#allocation5 + $0x240] sm:$0xff]
    %v350 = vld [vmem:[#allocation5 + $0x248] sm:$0xff]
    %v351 = vld [vmem:[#allocation5 + $0x250] sm:$0xff]
    %v352 = vld [vmem:[#allocation5 + $0x258] sm:$0xff]
    %v353 = vld [vmem:[#allocation5 + $0x260] sm:$0xff]
    %v354 = vld [vmem:[#allocation5 + $0x268] sm:$0xff]
    %v355 = vld [vmem:[#allocation5 + $0x270] sm:$0xff]
    %v356 = vld [vmem:[#allocation5 + $0x278] sm:$0xff]
    %v357 = vld [vmem:[#allocation5 + $0x280] sm:$0xff]
    %v358 = vld [vmem:[#allocation5 + $0x288] sm:$0xff]
    %v359 = vld [vmem:[#allocation5 + $0x290] sm:$0xff]
    %v360 = vld [vmem:[#allocation5 + $0x298] sm:$0xff]
    %v361 = vld [vmem:[#allocation5 + $0x2a0] sm:$0xff]
    %v362 = vld [vmem:[#allocation5 + $0x2a8] sm:$0xff]
    %v363 = vld [vmem:[#allocation5 + $0x2b0] sm:$0xff]
    %v364 = vld [vmem:[#allocation5 + $0x2b8] sm:$0xff]
    %v365 = vld [vmem:[#allocation5 + $0x2c0] sm:$0xff]
    %v366 = vld [vmem:[#allocation5 + $0x2c8] sm:$0xff]
    %v367 = vld [vmem:[#allocation5 + $0x2d0] sm:$0xff]
    %v368 = vld [vmem:[#allocation5 + $0x2d8] sm:$0xff]
    %v369 = vld [vmem:[#allocation5 + $0x2e0] sm:$0xff]
    %v370 = vld [vmem:[#allocation5 + $0x2e8] sm:$0xff]
    %v371 = vld [vmem:[#allocation5 + $0x2f0] sm:$0xff]
    %v372 = vld [vmem:[#allocation5 + $0x2f8] sm:$0xff]
    %v373 = vld [vmem:[#allocation5 + $0x300] sm:$0xff]
    %v374 = vld [vmem:[#allocation5 + $0x308] sm:$0xff]
    %v375 = vld [vmem:[#allocation5 + $0x310] sm:$0xff]
    %v376 = vld [vmem:[#allocation5 + $0x318] sm:$0xff]
    %v377 = vld [vmem:[#allocation5 + $0x320] sm:$0xff]
    %v378 = vld [vmem:[#allocation5 + $0x328] sm:$0xff]
    %v379 = vld [vmem:[#allocation5 + $0x330] sm:$0xff]
    %v380 = vld [vmem:[#allocation5 + $0x338] sm:$0xff]
    %v381 = vld [vmem:[#allocation5 + $0x340] sm:$0xff]
    %v382 = vld [vmem:[#allocation5 + $0x348] sm:$0xff]
    %v383 = vld [vmem:[#allocation5 + $0x350] sm:$0xff]
    %v384 = vld [vmem:[#allocation5 + $0x358] sm:$0xff]
    %v385 = vld [vmem:[#allocation5 + $0x360] sm:$0xff]
    %v386 = vld [vmem:[#allocation5 + $0x368] sm:$0xff]
    %v387 = vld [vmem:[#allocation5 + $0x370] sm:$0xff]
    %v388 = vld [vmem:[#allocation5 + $0x378] sm:$0xff]
    %v389 = vld [vmem:[#allocation5 + $0x380] sm:$0xff]
    %v390 = vld [vmem:[#allocation5 + $0x388] sm:$0xff]
    %v391 = vld [vmem:[#allocation5 + $0x390] sm:$0xff]
    %v392 = vld [vmem:[#allocation5 + $0x398] sm:$0xff]
    %v393 = vld [vmem:[#allocation5 + $0x3a0] sm:$0xff]
    %v394 = vld [vmem:[#allocation5 + $0x3a8] sm:$0xff]
    %v395 = vld [vmem:[#allocation5 + $0x3b0] sm:$0xff]
    %v396 = vld [vmem:[#allocation5 + $0x3b8] sm:$0xff]
    %v397 = vld [vmem:[#allocation5 + $0x3c0] sm:$0xff]
    %v398 = vld [vmem:[#allocation5 + $0x3c8] sm:$0xff]
    %v399 = vld [vmem:[#allocation5 + $0x3d0] sm:$0xff]
    %v400 = vld [vmem:[#allocation5 + $0x3d8] sm:$0xff]
    %v401 = vld [vmem:[#allocation5 + $0x3e0] sm:$0xff]
    %v402 = vld [vmem:[#allocation5 + $0x3e8] sm:$0xff]
    %v403 = vld [vmem:[#allocation5 + $0x3f0] sm:$0xff]
    %v404 = vld [vmem:[#allocation5 + $0x3f8] sm:$0xff]
    %v405 = vld [vmem:[#allocation5 + $0x400] sm:$0xff]
    %v406 = vld [vmem:[#allocation5 + $0x408] sm:$0xff]
    %v407 = vld [vmem:[#allocation5 + $0x410] sm:$0xff]
    %v408 = vld [vmem:[#allocation5 + $0x418] sm:$0xff]
    %v409 = vld [vmem:[#allocation5 + $0x420] sm:$0xff]
    %v410 = vld [vmem:[#allocation5 + $0x428] sm:$0xff]
    %v411 = vld [vmem:[#allocation5 + $0x430] sm:$0xff]
    %v412 = vld [vmem:[#allocation5 + $0x438] sm:$0xff]
    %v413 = vld [vmem:[#allocation5 + $0x440] sm:$0xff]
    %v414 = vld [vmem:[#allocation5 + $0x448] sm:$0xff]
    %v415 = vld [vmem:[#allocation5 + $0x450] sm:$0xff]
    %v416 = vld [vmem:[#allocation5 + $0x458] sm:$0xff]
    %v417 = vld [vmem:[#allocation5 + $0x460] sm:$0xff]
    %v418 = vld [vmem:[#allocation5 + $0x468] sm:$0xff]
    %v419 = vld [vmem:[#allocation5 + $0x470] sm:$0xff]
    %v420 = vld [vmem:[#allocation5 + $0x478] sm:$0xff]
    %v421 = vld [vmem:[#allocation5 + $0x480] sm:$0xff]
    %v422 = vld [vmem:[#allocation5 + $0x488] sm:$0xff]
    %v423 = vld [vmem:[#allocation5 + $0x490] sm:$0xff]
    %v424 = vld [vmem:[#allocation5 + $0x498] sm:$0xff]
    %v425 = vld [vmem:[#allocation5 + $0x4a0] sm:$0xff]
    %v426 = vld [vmem:[#allocation5 + $0x4a8] sm:$0xff]
    %v427 = vld [vmem:[#allocation5 + $0x4b0] sm:$0xff]
    %v428 = vld [vmem:[#allocation5 + $0x4b8] sm:$0xff]
    %v429 = vld [vmem:[#allocation5 + $0x4c0] sm:$0xff]
    %v430 = vld [vmem:[#allocation5 + $0x4c8] sm:$0xff]
    %v431 = vld [vmem:[#allocation5 + $0x4d0] sm:$0xff]
    %v432 = vld [vmem:[#allocation5 + $0x4d8] sm:$0xff]
    %v433 = vld [vmem:[#allocation5 + $0x4e0] sm:$0xff]
    %v434 = vld [vmem:[#allocation5 + $0x4e8] sm:$0xff]
    %v435 = vld [vmem:[#allocation5 + $0x4f0] sm:$0xff]
    %v436 = vld [vmem:[#allocation5 + $0x4f8] sm:$0xff]
    %v437 = vld [vmem:[#allocation5 + $0x500] sm:$0xff]
    %v438 = vld [vmem:[#allocation5 + $0x508] sm:$0xff]
    %v439 = vld [vmem:[#allocation5 + $0x510] sm:$0xff]
    %v440 = vld [vmem:[#allocation5 + $0x518] sm:$0xff]
    %v441 = vld [vmem:[#allocation5 + $0x520] sm:$0xff]
    %v442 = vld [vmem:[#allocation5 + $0x528] sm:$0xff]
    %v443 = vld [vmem:[#allocation5 + $0x530] sm:$0xff]
    %v444 = vld [vmem:[#allocation5 + $0x538] sm:$0xff]
    %v445 = vld [vmem:[#allocation5 + $0x540] sm:$0xff]
    %v446 = vld [vmem:[#allocation5 + $0x548] sm:$0xff]
    %v447 = vld [vmem:[#allocation5 + $0x550] sm:$0xff]
    %v448 = vld [vmem:[#allocation5 + $0x558] sm:$0xff]
    %v449 = vld [vmem:[#allocation5 + $0x560] sm:$0xff]
    %v450 = vld [vmem:[#allocation5 + $0x568] sm:$0xff]
    %v451 = vld [vmem:[#allocation5 + $0x570] sm:$0xff]
    %v452 = vld [vmem:[#allocation5 + $0x578] sm:$0xff]
    %v453 = vld [vmem:[#allocation5 + $0x580] sm:$0xff]
    %v454 = vld [vmem:[#allocation5 + $0x588] sm:$0xff]
    %v455 = vld [vmem:[#allocation5 + $0x590] sm:$0xff]
    %v456 = vld [vmem:[#allocation5 + $0x598] sm:$0xff]
    %v457 = vld [vmem:[#allocation5 + $0x5a0] sm:$0xff]
    %v458 = vld [vmem:[#allocation5 + $0x5a8] sm:$0xff]
    %v459 = vld [vmem:[#allocation5 + $0x5b0] sm:$0xff]
    %v460 = vld [vmem:[#allocation5 + $0x5b8] sm:$0xff]
    %v461 = vld [vmem:[#allocation5 + $0x5c0] sm:$0xff]
    %v462 = vld [vmem:[#allocation5 + $0x5c8] sm:$0xff]
    %v463 = vld [vmem:[#allocation5 + $0x5d0] sm:$0xff]
    %v464 = vld [vmem:[#allocation5 + $0x5d8] sm:$0xff]
    %v465 = vld [vmem:[#allocation5 + $0x5e0] sm:$0xff]
    %v466 = vld [vmem:[#allocation5 + $0x5e8] sm:$0xff]
    %v467 = vld [vmem:[#allocation5 + $0x5f0] sm:$0xff]
    %v468 = vld [vmem:[#allocation5 + $0x5f8] sm:$0xff]
    %v469 = vld [vmem:[#allocation5 + $0x600] sm:$0xff]
    %v470 = vld [vmem:[#allocation5 + $0x608] sm:$0xff]
    %v471 = vld [vmem:[#allocation5 + $0x610] sm:$0xff]
    %v472 = vld [vmem:[#allocation5 + $0x618] sm:$0xff]
    %v473 = vld [vmem:[#allocation5 + $0x620] sm:$0xff]
    %v474 = vld [vmem:[#allocation5 + $0x628] sm:$0xff]
    %v475 = vld [vmem:[#allocation5 + $0x630] sm:$0xff]
    %v476 = vld [vmem:[#allocation5 + $0x638] sm:$0xff]
    %v477 = vld [vmem:[#allocation5 + $0x640] sm:$0xff]
    %v478 = vld [vmem:[#allocation5 + $0x648] sm:$0xff]
    %v479 = vld [vmem:[#allocation5 + $0x650] sm:$0xff]
    %v480 = vld [vmem:[#allocation5 + $0x658] sm:$0xff]
    %v481 = vld [vmem:[#allocation5 + $0x660] sm:$0xff]
    %v482 = vld [vmem:[#allocation5 + $0x668] sm:$0xff]
    %v483 = vld [vmem:[#allocation5 + $0x670] sm:$0xff]
    %v484 = vld [vmem:[#allocation5 + $0x678] sm:$0xff]
    %v485 = vld [vmem:[#allocation5 + $0x680] sm:$0xff]
    %v486 = vld [vmem:[#allocation5 + $0x688] sm:$0xff]
    %v487 = vld [vmem:[#allocation5 + $0x690] sm:$0xff]
    %v488 = vld [vmem:[#allocation5 + $0x698] sm:$0xff]
    %v489 = vld [vmem:[#allocation5 + $0x6a0] sm:$0xff]
    %v490 = vld [vmem:[#allocation5 + $0x6a8] sm:$0xff]
    %v491 = vld [vmem:[#allocation5 + $0x6b0] sm:$0xff]
    %v492 = vld [vmem:[#allocation5 + $0x6b8] sm:$0xff]
    %v493 = vld [vmem:[#allocation5 + $0x6c0] sm:$0xff]
    %v494 = vld [vmem:[#allocation5 + $0x6c8] sm:$0xff]
    %v495 = vld [vmem:[#allocation5 + $0x6d0] sm:$0xff]
    %v496 = vld [vmem:[#allocation5 + $0x6d8] sm:$0xff]
    %v497 = vld [vmem:[#allocation5 + $0x6e0] sm:$0xff]
    %v498 = vld [vmem:[#allocation5 + $0x6e8] sm:$0xff]
    %v499 = vld [vmem:[#allocation5 + $0x6f0] sm:$0xff]
    %v500 = vld [vmem:[#allocation5 + $0x6f8] sm:$0xff]
    %v501 = vld [vmem:[#allocation5 + $0x700] sm:$0xff]
    %v502 = vld [vmem:[#allocation5 + $0x708] sm:$0xff]
    %v503 = vld [vmem:[#allocation5 + $0x710] sm:$0xff]
    %v504 = vld [vmem:[#allocation5 + $0x718] sm:$0xff]
    %v505 = vld [vmem:[#allocation5 + $0x720] sm:$0xff]
    %v506 = vld [vmem:[#allocation5 + $0x728] sm:$0xff]
    %v507 = vld [vmem:[#allocation5 + $0x730] sm:$0xff]
    %v508 = vld [vmem:[#allocation5 + $0x738] sm:$0xff]
    %v509 = vld [vmem:[#allocation5 + $0x740] sm:$0xff]
    %v510 = vld [vmem:[#allocation5 + $0x748] sm:$0xff]
    %v511 = vld [vmem:[#allocation5 + $0x750] sm:$0xff]
    %v512 = vld [vmem:[#allocation5 + $0x758] sm:$0xff]
    %v513 = vld [vmem:[#allocation5 + $0x760] sm:$0xff]
    %v514 = vld [vmem:[#allocation5 + $0x768] sm:$0xff]
    %v515 = vld [vmem:[#allocation5 + $0x770] sm:$0xff]
    %v516 = vld [vmem:[#allocation5 + $0x778] sm:$0xff]
    %v517 = vld [vmem:[#allocation5 + $0x780] sm:$0xff]
    %v518 = vld [vmem:[#allocation5 + $0x788] sm:$0xff]
    %v519 = vld [vmem:[#allocation5 + $0x790] sm:$0xff]
    %v520 = vld [vmem:[#allocation5 + $0x798] sm:$0xff]
    %v521 = vld [vmem:[#allocation5 + $0x7a0] sm:$0xff]
    %v522 = vld [vmem:[#allocation5 + $0x7a8] sm:$0xff]
    %v523 = vld [vmem:[#allocation5 + $0x7b0] sm:$0xff]
    %v524 = vld [vmem:[#allocation5 + $0x7b8] sm:$0xff]
    %v525 = vld [vmem:[#allocation5 + $0x7c0] sm:$0xff]
    %v526 = vld [vmem:[#allocation5 + $0x7c8] sm:$0xff]
    %v527 = vld [vmem:[#allocation5 + $0x7d0] sm:$0xff]
    %v528 = vld [vmem:[#allocation5 + $0x7d8] sm:$0xff]
    %v529 = vld [vmem:[#allocation5 + $0x7e0] sm:$0xff]
    %v530 = vld [vmem:[#allocation5 + $0x7e8] sm:$0xff]
    %v531 = vld [vmem:[#allocation5 + $0x7f0] sm:$0xff]
    %v532 = vld [vmem:[#allocation5 + $0x7f8] sm:$0xff]
    %v533 = vld [vmem:[#allocation5 + $0x800] sm:$0xff]
    %v534 = vld [vmem:[#allocation5 + $0x808] sm:$0xff]
    %v535 = vld [vmem:[#allocation5 + $0x810] sm:$0xff]
    %v536 = vld [vmem:[#allocation5 + $0x818] sm:$0xff]
    %v537 = vld [vmem:[#allocation5 + $0x820] sm:$0xff]
    %v538 = vld [vmem:[#allocation5 + $0x828] sm:$0xff]
    %v539 = vld [vmem:[#allocation5 + $0x830] sm:$0xff]
    %v540 = vld [vmem:[#allocation5 + $0x838] sm:$0xff]
    %v541 = vld [vmem:[#allocation5 + $0x840] sm:$0xff]
    %v542 = vld [vmem:[#allocation5 + $0x848] sm:$0xff]
    %v543 = vld [vmem:[#allocation5 + $0x850] sm:$0xff]
    %v544 = vld [vmem:[#allocation5 + $0x858] sm:$0xff]
    %v545 = vld [vmem:[#allocation5 + $0x860] sm:$0xff]
    %v546 = vld [vmem:[#allocation5 + $0x868] sm:$0xff]
    %v547 = vld [vmem:[#allocation5 + $0x870] sm:$0xff]
    %v548 = vld [vmem:[#allocation5 + $0x878] sm:$0xff]
    %v549 = vld [vmem:[#allocation5 + $0x880] sm:$0xff]
    %v550 = vld [vmem:[#allocation5 + $0x888] sm:$0xff]
    %v551 = vld [vmem:[#allocation5 + $0x890] sm:$0xff]
    %v552 = vld [vmem:[#allocation5 + $0x898] sm:$0xff]
    %v553 = vld [vmem:[#allocation5 + $0x8a0] sm:$0xff]
    %v554 = vld [vmem:[#allocation5 + $0x8a8] sm:$0xff]
    %v555 = vld [vmem:[#allocation5 + $0x8b0] sm:$0xff]
    %v556 = vld [vmem:[#allocation5 + $0x8b8] sm:$0xff]
    %v557 = vld [vmem:[#allocation5 + $0x8c0] sm:$0xff]
    %v558 = vld [vmem:[#allocation5 + $0x8c8] sm:$0xff]
    %v559 = vld [vmem:[#allocation5 + $0x8d0] sm:$0xff]
    %v560 = vld [vmem:[#allocation5 + $0x8d8] sm:$0xff]
    %v561 = vld [vmem:[#allocation5 + $0x8e0] sm:$0xff]
    %v562 = vld [vmem:[#allocation5 + $0x8e8] sm:$0xff]
    %v563 = vld [vmem:[#allocation5 + $0x8f0] sm:$0xff]
    %v564 = vld [vmem:[#allocation5 + $0x8f8] sm:$0xff]
    %v565 = vld [vmem:[#allocation5 + $0x900] sm:$0xff]
    %v566 = vld [vmem:[#allocation5 + $0x908] sm:$0xff]
    %v567 = vld [vmem:[#allocation5 + $0x910] sm:$0xff]
    %v568 = vld [vmem:[#allocation5 + $0x918] sm:$0xff]
    %v569 = vld [vmem:[#allocation5 + $0x920] sm:$0xff]
    %v570 = vld [vmem:[#allocation5 + $0x928] sm:$0xff]
    %v571 = vld [vmem:[#allocation5 + $0x930] sm:$0xff]
    %v572 = vld [vmem:[#allocation5 + $0x938] sm:$0xff]
    %v573 = vld [vmem:[#allocation5 + $0x940] sm:$0xff]
    %v574 = vld [vmem:[#allocation5 + $0x948] sm:$0xff]
    %v575 = vld [vmem:[#allocation5 + $0x950] sm:$0xff]
    %v576 = vld [vmem:[#allocation5 + $0x958] sm:$0xff]
    %v577 = vld [vmem:[#allocation5 + $0x960] sm:$0xff]
    %v578 = vld [vmem:[#allocation5 + $0x968] sm:$0xff]
    %v579 = vld [vmem:[#allocation5 + $0x970] sm:$0xff]
    %v580 = vld [vmem:[#allocation5 + $0x978] sm:$0xff]
    %v581 = vld [vmem:[#allocation5 + $0x980] sm:$0xff]
    %v582 = vld [vmem:[#allocation5 + $0x988] sm:$0xff]
    %v583 = vld [vmem:[#allocation5 + $0x990] sm:$0xff]
    %v584 = vld [vmem:[#allocation5 + $0x998] sm:$0xff]
    %v585 = vld [vmem:[#allocation5 + $0x9a0] sm:$0xff]
    %v586 = vld [vmem:[#allocation5 + $0x9a8] sm:$0xff]
    %v587 = vld [vmem:[#allocation5 + $0x9b0] sm:$0xff]
    %v588 = vld [vmem:[#allocation5 + $0x9b8] sm:$0xff]
    %v589 = vld [vmem:[#allocation5 + $0x9c0] sm:$0xff]
    %v590 = vld [vmem:[#allocation5 + $0x9c8] sm:$0xff]
    %v591 = vld [vmem:[#allocation5 + $0x9d0] sm:$0xff]
    %v592 = vld [vmem:[#allocation5 + $0x9d8] sm:$0xff]
    %v593 = vld [vmem:[#allocation5 + $0x9e0] sm:$0xff]
    %v594 = vld [vmem:[#allocation5 + $0x9e8] sm:$0xff]
    %v595 = vld [vmem:[#allocation5 + $0x9f0] sm:$0xff]
    %v596 = vld [vmem:[#allocation5 + $0x9f8] sm:$0xff]
    %v597 = vld [vmem:[#allocation5 + $0xa00] sm:$0xff]
    %v598 = vld [vmem:[#allocation5 + $0xa08] sm:$0xff]
    %v599 = vld [vmem:[#allocation5 + $0xa10] sm:$0xff]
    %v600 = vld [vmem:[#allocation5 + $0xa18] sm:$0xff]
    %v601 = vld [vmem:[#allocation5 + $0xa20] sm:$0xff]
    %v602 = vld [vmem:[#allocation5 + $0xa28] sm:$0xff]
    %v603 = vld [vmem:[#allocation5 + $0xa30] sm:$0xff]
    %v604 = vld [vmem:[#allocation5 + $0xa38] sm:$0xff]
    %v605 = vld [vmem:[#allocation5 + $0xa40] sm:$0xff]
    %v606 = vld [vmem:[#allocation5 + $0xa48] sm:$0xff]
    %v607 = vld [vmem:[#allocation5 + $0xa50] sm:$0xff]
    %v608 = vld [vmem:[#allocation5 + $0xa58] sm:$0xff]
    %v609 = vld [vmem:[#allocation5 + $0xa60] sm:$0xff]
    %v610 = vld [vmem:[#allocation5 + $0xa68] sm:$0xff]
    %v611 = vld [vmem:[#allocation5 + $0xa70] sm:$0xff]
    %v612 = vld [vmem:[#allocation5 + $0xa78] sm:$0xff]
    %v613 = vld [vmem:[#allocation5 + $0xa80] sm:$0xff]
    %v614 = vld [vmem:[#allocation5 + $0xa88] sm:$0xff]
    %v615 = vld [vmem:[#allocation5 + $0xa90] sm:$0xff]
    %v616 = vld [vmem:[#allocation5 + $0xa98] sm:$0xff]
    %v617 = vld [vmem:[#allocation5 + $0xaa0] sm:$0xff]
    %v618 = vld [vmem:[#allocation5 + $0xaa8] sm:$0xff]
    %v619 = vld [vmem:[#allocation5 + $0xab0] sm:$0xff]
    %v620 = vld [vmem:[#allocation5 + $0xab8] sm:$0xff]
    %v621 = vld [vmem:[#allocation5 + $0xac0] sm:$0xff]
    %v622 = vld [vmem:[#allocation5 + $0xac8] sm:$0xff]
    %v623 = vld [vmem:[#allocation5 + $0xad0] sm:$0xff]
    %v624 = vld [vmem:[#allocation5 + $0xad8] sm:$0xff]
    %v625 = vld [vmem:[#allocation5 + $0xae0] sm:$0xff]
    %v626 = vld [vmem:[#allocation5 + $0xae8] sm:$0xff]
    %v627 = vld [vmem:[#allocation5 + $0xaf0] sm:$0xff]
    %v628 = vld [vmem:[#allocation5 + $0xaf8] sm:$0xff]
    %v629 = vld [vmem:[#allocation5 + $0xb00] sm:$0xff]
    %v630 = vld [vmem:[#allocation5 + $0xb08] sm:$0xff]
    %v631 = vld [vmem:[#allocation5 + $0xb10] sm:$0xff]
    %v632 = vld [vmem:[#allocation5 + $0xb18] sm:$0xff]
    %v633 = vld [vmem:[#allocation5 + $0xb20] sm:$0xff]
    %v634 = vld [vmem:[#allocation5 + $0xb28] sm:$0xff]
    %v635 = vld [vmem:[#allocation5 + $0xb30] sm:$0xff]
    %v636 = vld [vmem:[#allocation5 + $0xb38] sm:$0xff]
    %v637 = vld [vmem:[#allocation5 + $0xb40] sm:$0xff]
    %v638 = vld [vmem:[#allocation5 + $0xb48] sm:$0xff]
    %v639 = vld [vmem:[#allocation5 + $0xb50] sm:$0xff]
    %v640 = vld [vmem:[#allocation5 + $0xb58] sm:$0xff]
    %v641 = vld [vmem:[#allocation5 + $0xb60] sm:$0xff]
    %v642 = vld [vmem:[#allocation5 + $0xb68] sm:$0xff]
    %v643 = vld [vmem:[#allocation5 + $0xb70] sm:$0xff]
    %v644 = vld [vmem:[#allocation5 + $0xb78] sm:$0xff]
    %v645 = vld [vmem:[#allocation5 + $0xb80] sm:$0xff]
    %v646 = vld [vmem:[#allocation5 + $0xb88] sm:$0xff]
    %v647 = vld [vmem:[#allocation5 + $0xb90] sm:$0xff]
    %v648 = vld [vmem:[#allocation5 + $0xb98] sm:$0xff]
    %v649 = vld [vmem:[#allocation5 + $0xba0] sm:$0xff]
    %v650 = vld [vmem:[#allocation5 + $0xba8] sm:$0xff]
    %v651 = vld [vmem:[#allocation5 + $0xbb0] sm:$0xff]
    %v652 = vld [vmem:[#allocation5 + $0xbb8] sm:$0xff]
    %v653 = vld [vmem:[#allocation5 + $0xbc0] sm:$0xff]
    %v654 = vld [vmem:[#allocation5 + $0xbc8] sm:$0xff]
    %v655 = vld [vmem:[#allocation5 + $0xbd0] sm:$0xff]
    %v656 = vld [vmem:[#allocation5 + $0xbd8] sm:$0xff]
    %v657 = vld [vmem:[#allocation5 + $0xbe0] sm:$0xff]
    %v658 = vld [vmem:[#allocation5 + $0xbe8] sm:$0xff]
    %v659 = vld [vmem:[#allocation5 + $0xbf0] sm:$0xff]
    %v660 = vld [vmem:[#allocation5 + $0xbf8] sm:$0xff]
    %v661 = vld [vmem:[#allocation5 + $0xc00] sm:$0xff]
    %v662 = vld [vmem:[#allocation5 + $0xc08] sm:$0xff]
    %v663 = vld [vmem:[#allocation5 + $0xc10] sm:$0xff]
    %v664 = vld [vmem:[#allocation5 + $0xc18] sm:$0xff]
    %v665 = vld [vmem:[#allocation5 + $0xc20] sm:$0xff]
    %v666 = vld [vmem:[#allocation5 + $0xc28] sm:$0xff]
    %v667 = vld [vmem:[#allocation5 + $0xc30] sm:$0xff]
    %v668 = vld [vmem:[#allocation5 + $0xc38] sm:$0xff]
    %v669 = vld [vmem:[#allocation5 + $0xc40] sm:$0xff]
    %v670 = vld [vmem:[#allocation5 + $0xc48] sm:$0xff]
    %v671 = vld [vmem:[#allocation5 + $0xc50] sm:$0xff]
    %v672 = vld [vmem:[#allocation5 + $0xc58] sm:$0xff]
    %v673 = vld [vmem:[#allocation5 + $0xc60] sm:$0xff]
    %v674 = vld [vmem:[#allocation5 + $0xc68] sm:$0xff]
    %v675 = vld [vmem:[#allocation5 + $0xc70] sm:$0xff]
    %v676 = vld [vmem:[#allocation5 + $0xc78] sm:$0xff]
    %v677 = vld [vmem:[#allocation5 + $0xc80] sm:$0xff]
    %v678 = vld [vmem:[#allocation5 + $0xc88] sm:$0xff]
    %v679 = vld [vmem:[#allocation5 + $0xc90] sm:$0xff]
    %v680 = vld [vmem:[#allocation5 + $0xc98] sm:$0xff]
    %v681 = vld [vmem:[#allocation5 + $0xca0] sm:$0xff]
    %v682 = vld [vmem:[#allocation5 + $0xca8] sm:$0xff]
    %v683 = vld [vmem:[#allocation5 + $0xcb0] sm:$0xff]
    %v684 = vld [vmem:[#allocation5 + $0xcb8] sm:$0xff]
    %v685 = vld [vmem:[#allocation5 + $0xcc0] sm:$0xff]
    %v686 = vld [vmem:[#allocation5 + $0xcc8] sm:$0xff]
    %v687 = vld [vmem:[#allocation5 + $0xcd0] sm:$0xff]
    %v688 = vld [vmem:[#allocation5 + $0xcd8] sm:$0xff]
    %v689 = vld [vmem:[#allocation5 + $0xce0] sm:$0xff]
    %v690 = vld [vmem:[#allocation5 + $0xce8] sm:$0xff]
    %v691 = vld [vmem:[#allocation5 + $0xcf0] sm:$0xff]
    %v692 = vld [vmem:[#allocation5 + $0xcf8] sm:$0xff]
    %v693 = vld [vmem:[#allocation5 + $0xd00] sm:$0xff]
    %v694 = vld [vmem:[#allocation5 + $0xd08] sm:$0xff]
    %v695 = vld [vmem:[#allocation5 + $0xd10] sm:$0xff]
    %v696 = vld [vmem:[#allocation5 + $0xd18] sm:$0xff]
    %v697 = vld [vmem:[#allocation5 + $0xd20] sm:$0xff]
    %v698 = vld [vmem:[#allocation5 + $0xd28] sm:$0xff]
    %v699 = vld [vmem:[#allocation5 + $0xd30] sm:$0xff]
    %v700 = vld [vmem:[#allocation5 + $0xd38] sm:$0xff]
    %v701 = vld [vmem:[#allocation5 + $0xd40] sm:$0xff]
    %v702 = vld [vmem:[#allocation5 + $0xd48] sm:$0xff]
    %v703 = vld [vmem:[#allocation5 + $0xd50] sm:$0xff]
    %v704 = vld [vmem:[#allocation5 + $0xd58] sm:$0xff]
    %v705 = vld [vmem:[#allocation5 + $0xd60] sm:$0xff]
    %v706 = vld [vmem:[#allocation5 + $0xd68] sm:$0xff]
    %v707 = vld [vmem:[#allocation5 + $0xd70] sm:$0xff]
    %v708 = vld [vmem:[#allocation5 + $0xd78] sm:$0xff]
    %v709 = vld [vmem:[#allocation5 + $0xd80] sm:$0xff]
    %v710 = vld [vmem:[#allocation5 + $0xd88] sm:$0xff]
    %v711 = vld [vmem:[#allocation5 + $0xd90] sm:$0xff]
    %v712 = vld [vmem:[#allocation5 + $0xd98] sm:$0xff]
    %v713 = vld [vmem:[#allocation5 + $0xda0] sm:$0xff]
    %v714 = vld [vmem:[#allocation5 + $0xda8] sm:$0xff]
    %v715 = vld [vmem:[#allocation5 + $0xdb0] sm:$0xff]
    %v716 = vld [vmem:[#allocation5 + $0xdb8] sm:$0xff]
    %v717 = vld [vmem:[#allocation5 + $0xdc0] sm:$0xff]
    %v718 = vld [vmem:[#allocation5 + $0xdc8] sm:$0xff]
    %v719 = vld [vmem:[#allocation5 + $0xdd0] sm:$0xff]
    %v720 = vld [vmem:[#allocation5 + $0xdd8] sm:$0xff]
    %v721 = vld [vmem:[#allocation5 + $0xde0] sm:$0xff]
    %v722 = vld [vmem:[#allocation5 + $0xde8] sm:$0xff]
    %v723 = vld [vmem:[#allocation5 + $0xdf0] sm:$0xff]
    %v724 = vld [vmem:[#allocation5 + $0xdf8] sm:$0xff]
    %v725 = vld [vmem:[#allocation5 + $0xe00] sm:$0xff]
    %v726 = vld [vmem:[#allocation5 + $0xe08] sm:$0xff]
    %v727 = vld [vmem:[#allocation5 + $0xe10] sm:$0xff]
    %v728 = vld [vmem:[#allocation5 + $0xe18] sm:$0xff]
    %v729 = vld [vmem:[#allocation5 + $0xe20] sm:$0xff]
    %v730 = vld [vmem:[#allocation5 + $0xe28] sm:$0xff]
    %v731 = vld [vmem:[#allocation5 + $0xe30] sm:$0xff]
    %v732 = vld [vmem:[#allocation5 + $0xe38] sm:$0xff]
    %v733 = vld [vmem:[#allocation5 + $0xe40] sm:$0xff]
    %v734 = vld [vmem:[#allocation5 + $0xe48] sm:$0xff]
    %v735 = vld [vmem:[#allocation5 + $0xe50] sm:$0xff]
    %v736 = vld [vmem:[#allocation5 + $0xe58] sm:$0xff]
    %v737 = vld [vmem:[#allocation5 + $0xe60] sm:$0xff]
    %v738 = vld [vmem:[#allocation5 + $0xe68] sm:$0xff]
    %v739 = vld [vmem:[#allocation5 + $0xe70] sm:$0xff]
    %v740 = vld [vmem:[#allocation5 + $0xe78] sm:$0xff]
    %v741 = vld [vmem:[#allocation5 + $0xe80] sm:$0xff]
    %v742 = vld [vmem:[#allocation5 + $0xe88] sm:$0xff]
    %v743 = vld [vmem:[#allocation5 + $0xe90] sm:$0xff]
    %v744 = vld [vmem:[#allocation5 + $0xe98] sm:$0xff]
    %v745 = vld [vmem:[#allocation5 + $0xea0] sm:$0xff]
    %v746 = vld [vmem:[#allocation5 + $0xea8] sm:$0xff]
    %v747 = vld [vmem:[#allocation5 + $0xeb0] sm:$0xff]
    %v748 = vld [vmem:[#allocation5 + $0xeb8] sm:$0xff]
    %v749 = vld [vmem:[#allocation5 + $0xec0] sm:$0xff]
    %v750 = vld [vmem:[#allocation5 + $0xec8] sm:$0xff]
    %v751 = vld [vmem:[#allocation5 + $0xed0] sm:$0xff]
    %v752 = vld [vmem:[#allocation5 + $0xed8] sm:$0xff]
    %v753 = vld [vmem:[#allocation5 + $0xee0] sm:$0xff]
    %v754 = vld [vmem:[#allocation5 + $0xee8] sm:$0xff]
    %v755 = vld [vmem:[#allocation5 + $0xef0] sm:$0xff]
    %v756 = vld [vmem:[#allocation5 + $0xef8] sm:$0xff]
    %v757 = vld [vmem:[#allocation5 + $0xf00] sm:$0xff]
    %v758 = vld [vmem:[#allocation5 + $0xf08] sm:$0xff]
    %v759 = vld [vmem:[#allocation5 + $0xf10] sm:$0xff]
    %v760 = vld [vmem:[#allocation5 + $0xf18] sm:$0xff]
    %v761 = vld [vmem:[#allocation5 + $0xf20] sm:$0xff]
    %v762 = vld [vmem:[#allocation5 + $0xf28] sm:$0xff]
    %v763 = vld [vmem:[#allocation5 + $0xf30] sm:$0xff]
    %v764 = vld [vmem:[#allocation5 + $0xf38] sm:$0xff]
    %v765 = vld [vmem:[#allocation5 + $0xf40] sm:$0xff]
    %v766 = vld [vmem:[#allocation5 + $0xf48] sm:$0xff]
    %v767 = vld [vmem:[#allocation5 + $0xf50] sm:$0xff]
    %v768 = vld [vmem:[#allocation5 + $0xf58] sm:$0xff]
    %v769 = vld [vmem:[#allocation5 + $0xf60] sm:$0xff]
    %v770 = vld [vmem:[#allocation5 + $0xf68] sm:$0xff]
    %v771 = vld [vmem:[#allocation5 + $0xf70] sm:$0xff]
    %v772 = vld [vmem:[#allocation5 + $0xf78] sm:$0xff]
    %v773 = vld [vmem:[#allocation5 + $0xf80] sm:$0xff]
    %v774 = vld [vmem:[#allocation5 + $0xf88] sm:$0xff]
    %v775 = vld [vmem:[#allocation5 + $0xf90] sm:$0xff]
    %v776 = vld [vmem:[#allocation5 + $0xf98] sm:$0xff]
    %v777 = vld [vmem:[#allocation5 + $0xfa0] sm:$0xff]
    %v778 = vld [vmem:[#allocation5 + $0xfa8] sm:$0xff]
    %v779 = vld [vmem:[#allocation5 + $0xfb0] sm:$0xff]
    %v780 = vld [vmem:[#allocation5 + $0xfb8] sm:$0xff]
    %v781 = vld [vmem:[#allocation5 + $0xfc0] sm:$0xff]
    %v782 = vld [vmem:[#allocation5 + $0xfc8] sm:$0xff]
    %v783 = vld [vmem:[#allocation5 + $0xfd0] sm:$0xff]
    %v784 = vld [vmem:[#allocation5 + $0xfd8] sm:$0xff]
    %v785 = vld [vmem:[#allocation5 + $0xfe0] sm:$0xff]
    %v786 = vld [vmem:[#allocation5 + $0xfe8] sm:$0xff]
    %v787 = vld [vmem:[#allocation5 + $0xff0] sm:$0xff]
    %v788 = vld [vmem:[#allocation5 + $0xff8] sm:$0xff]
    %v789 = vld [vmem:[#allocation5 + $0x1000] sm:$0xff]
    %v790 = vld [vmem:[#allocation5 + $0x1008] sm:$0xff]
    %v791 = vld [vmem:[#allocation5 + $0x1010] sm:$0xff]
    %v792 = vld [vmem:[#allocation5 + $0x1018] sm:$0xff]
    %v793 = vld [vmem:[#allocation5 + $0x1020] sm:$0xff]
    %v794 = vld [vmem:[#allocation5 + $0x1028] sm:$0xff]
    %v795 = vld [vmem:[#allocation5 + $0x1030] sm:$0xff]
    %v796 = vld [vmem:[#allocation5 + $0x1038] sm:$0xff]
    %v797 = vld [vmem:[#allocation5 + $0x1040] sm:$0xff]
    %v798 = vld [vmem:[#allocation5 + $0x1048] sm:$0xff]
    %v799 = vld [vmem:[#allocation5 + $0x1050] sm:$0xff]
    %v800 = vld [vmem:[#allocation5 + $0x1058] sm:$0xff]
    %v801 = vld [vmem:[#allocation5 + $0x1060] sm:$0xff]
    %v802 = vld [vmem:[#allocation5 + $0x1068] sm:$0xff]
    %v803 = vld [vmem:[#allocation5 + $0x1070] sm:$0xff]
    %v804 = vld [vmem:[#allocation5 + $0x1078] sm:$0xff]
    %v805 = vld [vmem:[#allocation5 + $0x1080] sm:$0xff]
    %v806 = vld [vmem:[#allocation5 + $0x1088] sm:$0xff]
    %v807 = vld [vmem:[#allocation5 + $0x1090] sm:$0xff]
    %v808 = vld [vmem:[#allocation5 + $0x1098] sm:$0xff]
    %v809 = vld [vmem:[#allocation5 + $0x10a0] sm:$0xff]
    %v810 = vld [vmem:[#allocation5 + $0x10a8] sm:$0xff]
    %v811 = vld [vmem:[#allocation5 + $0x10b0] sm:$0xff]
    %v812 = vld [vmem:[#allocation5 + $0x10b8] sm:$0xff]
    %v813 = vld [vmem:[#allocation5 + $0x10c0] sm:$0xff]
    %v814 = vld [vmem:[#allocation5 + $0x10c8] sm:$0xff]
    %v815 = vld [vmem:[#allocation5 + $0x10d0] sm:$0xff]
    %v816 = vld [vmem:[#allocation5 + $0x10d8] sm:$0xff]
    %v817 = vld [vmem:[#allocation5 + $0x10e0] sm:$0xff]
    %v818 = vld [vmem:[#allocation5 + $0x10e8] sm:$0xff]
    %v819 = vld [vmem:[#allocation5 + $0x10f0] sm:$0xff]
    %v820 = vld [vmem:[#allocation5 + $0x10f8] sm:$0xff]
    %v821 = vld [vmem:[#allocation5 + $0x1100] sm:$0xff]
    %v822 = vld [vmem:[#allocation5 + $0x1108] sm:$0xff]
    %v823 = vld [vmem:[#allocation5 + $0x1110] sm:$0xff]
    %v824 = vld [vmem:[#allocation5 + $0x1118] sm:$0xff]
    %v825 = vld [vmem:[#allocation5 + $0x1120] sm:$0xff]
    %v826 = vld [vmem:[#allocation5 + $0x1128] sm:$0xff]
    %v827 = vld [vmem:[#allocation5 + $0x1130] sm:$0xff]
    %v828 = vld [vmem:[#allocation5 + $0x1138] sm:$0xff]
    %v829 = vld [vmem:[#allocation5 + $0x1140] sm:$0xff]
    %v830 = vld [vmem:[#allocation5 + $0x1148] sm:$0xff]
    %v831 = vld [vmem:[#allocation5 + $0x1150] sm:$0xff]
    %v832 = vld [vmem:[#allocation5 + $0x1158] sm:$0xff]
    %v833 = vld [vmem:[#allocation5 + $0x1160] sm:$0xff]
    %v834 = vld [vmem:[#allocation5 + $0x1168] sm:$0xff]
    %v835 = vld [vmem:[#allocation5 + $0x1170] sm:$0xff]
    %v836 = vld [vmem:[#allocation5 + $0x1178] sm:$0xff]
    %v837 = vld [vmem:[#allocation5 + $0x1180] sm:$0xff]
    %v838 = vld [vmem:[#allocation5 + $0x1188] sm:$0xff]
    %v839 = vld [vmem:[#allocation5 + $0x1190] sm:$0xff]
    %v840 = vld [vmem:[#allocation5 + $0x1198] sm:$0xff]
    %v841 = vld [vmem:[#allocation5 + $0x11a0] sm:$0xff]
    %v842 = vld [vmem:[#allocation5 + $0x11a8] sm:$0xff]
    %v843 = vld [vmem:[#allocation5 + $0x11b0] sm:$0xff]
    %v844 = vld [vmem:[#allocation5 + $0x11b8] sm:$0xff]
    %v845 = vld [vmem:[#allocation5 + $0x11c0] sm:$0xff]
    %v846 = vld [vmem:[#allocation5 + $0x11c8] sm:$0xff]
    %v847 = vld [vmem:[#allocation5 + $0x11d0] sm:$0xff]
    %v848 = vld [vmem:[#allocation5 + $0x11d8] sm:$0xff]
    %v849 = vld [vmem:[#allocation5 + $0x11e0] sm:$0xff]
    %v850 = vld [vmem:[#allocation5 + $0x11e8] sm:$0xff]
    %v851 = vld [vmem:[#allocation5 + $0x11f0] sm:$0xff]
    %v852 = vld [vmem:[#allocation5 + $0x11f8] sm:$0xff]
    %v853 = vld [vmem:[#allocation5 + $0x1200] sm:$0xff]
    %v854 = vld [vmem:[#allocation5 + $0x1208] sm:$0xff]
    %v855 = vld [vmem:[#allocation5 + $0x1210] sm:$0xff]
    %v856 = vld [vmem:[#allocation5 + $0x1218] sm:$0xff]
    %v857 = vld [vmem:[#allocation5 + $0x1220] sm:$0xff]
    %v858 = vld [vmem:[#allocation5 + $0x1228] sm:$0xff]
    %v859 = vld [vmem:[#allocation5 + $0x1230] sm:$0xff]
    %v860 = vld [vmem:[#allocation5 + $0x1238] sm:$0xff]
    %v861 = vld [vmem:[#allocation5 + $0x1240] sm:$0xff]
    %v862 = vld [vmem:[#allocation5 + $0x1248] sm:$0xff]
    %v863 = vld [vmem:[#allocation5 + $0x1250] sm:$0xff]
    %v864 = vld [vmem:[#allocation5 + $0x1258] sm:$0xff]
    %v865 = vld [vmem:[#allocation5 + $0x1260] sm:$0xff]
    %v866 = vld [vmem:[#allocation5 + $0x1268] sm:$0xff]
    %v867 = vld [vmem:[#allocation5 + $0x1270] sm:$0xff]
    %v868 = vld [vmem:[#allocation5 + $0x1278] sm:$0xff]
    %v869 = vld [vmem:[#allocation5 + $0x1280] sm:$0xff]
    %v870 = vld [vmem:[#allocation5 + $0x1288] sm:$0xff]
    %v871 = vld [vmem:[#allocation5 + $0x1290] sm:$0xff]
    %v872 = vld [vmem:[#allocation5 + $0x1298] sm:$0xff]
    %v873 = vld [vmem:[#allocation5 + $0x12a0] sm:$0xff]
    %v874 = vld [vmem:[#allocation5 + $0x12a8] sm:$0xff]
    %v875 = vld [vmem:[#allocation5 + $0x12b0] sm:$0xff]
    %v876 = vld [vmem:[#allocation5 + $0x12b8] sm:$0xff]
    %v877 = vld [vmem:[#allocation5 + $0x12c0] sm:$0xff]
    %v878 = vld [vmem:[#allocation5 + $0x12c8] sm:$0xff]
    %v879 = vld [vmem:[#allocation5 + $0x12d0] sm:$0xff]
    %v880 = vld [vmem:[#allocation5 + $0x12d8] sm:$0xff]
    %v881 = vld [vmem:[#allocation5 + $0x12e0] sm:$0xff]
    %v882 = vld [vmem:[#allocation5 + $0x12e8] sm:$0xff]
    %v883 = vld [vmem:[#allocation5 + $0x12f0] sm:$0xff]
    %v884 = vld [vmem:[#allocation5 + $0x12f8] sm:$0xff]
    %v885 = vld [vmem:[#allocation7] sm:$0xf]
    %v887 = vlaneseq
    %v888 = vshrl.u32 %v887, 7
    %v889 = vsub.s32 0, %v888
    %v890 = vrot.slane %v885, %v889
    %v891 = vlaneseq
    %v892 = vshrl.u32 %v891, 7
    %v893 = vsub.s32 1, %v892
    %v894 = vrot.slane %v885, %v893
    %v895 = vlaneseq
    %v896 = vshrl.u32 %v895, 7
    %v897 = vsub.s32 2, %v896
    %v898 = vrot.slane %v885, %v897
    %v899 = vlaneseq
    %v900 = vshrl.u32 %v899, 7
    %v901 = vsub.s32 3, %v900
    %v902 = vrot.slane %v885, %v901
    %v1067 = vunpack.c.l.b16 %v117
    %v1068 = vunpack.c.h.b16 %v117
    %v1069 = vunpack.c.l.b16 %v118
    %v1070 = vunpack.c.h.b16 %v118
    %v1071 = vunpack.c.l.b16 %v119
    %v1072 = vunpack.c.h.b16 %v119
    %v1073 = vunpack.c.l.b16 %v120
    %v1074 = vunpack.c.h.b16 %v120
    %v1075 = vunpack.c.l.b16 %v121
    %v1076 = vunpack.c.h.b16 %v121
    %v1077 = vunpack.c.l.b16 %v122
    %v1078 = vunpack.c.h.b16 %v122
    %v1079 = vunpack.c.l.b16 %v123
    %v1080 = vunpack.c.h.b16 %v123
    %v1081 = vunpack.c.l.b16 %v124
    %v1082 = vunpack.c.h.b16 %v124
    %v1083 = vunpack.c.l.b16 %v125
    %v1084 = vunpack.c.h.b16 %v125
    %v1085 = vunpack.c.l.b16 %v126
    %v1086 = vunpack.c.l.b16 %v127
    %v1087 = vunpack.c.h.b16 %v127
    %v1088 = vunpack.c.l.b16 %v128
    %v1089 = vunpack.c.h.b16 %v128
    %v1090 = vunpack.c.l.b16 %v129
    %v1091 = vunpack.c.h.b16 %v129
    %v1092 = vunpack.c.l.b16 %v130
    %v1093 = vunpack.c.h.b16 %v130
    %v1094 = vunpack.c.l.b16 %v131
    %v1095 = vunpack.c.h.b16 %v131
    %v1096 = vunpack.c.l.b16 %v132
    %v1097 = vunpack.c.h.b16 %v132
    %v1098 = vunpack.c.l.b16 %v133
    %v1099 = vunpack.c.h.b16 %v133
    %v1100 = vunpack.c.l.b16 %v134
    %v1101 = vunpack.c.h.b16 %v134
    %v1102 = vunpack.c.l.b16 %v135
    %v1103 = vunpack.c.h.b16 %v135
    %v1104 = vunpack.c.l.b16 %v136
    %v1105 = vunpack.c.l.b16 %v137
    %v1106 = vunpack.c.h.b16 %v137
    %v1107 = vunpack.c.l.b16 %v138
    %v1108 = vunpack.c.h.b16 %v138
    %v1109 = vunpack.c.l.b16 %v139
    %v1110 = vunpack.c.h.b16 %v139
    %v1111 = vunpack.c.l.b16 %v140
    %v1112 = vunpack.c.h.b16 %v140
    %v1113 = vunpack.c.l.b16 %v141
    %v1114 = vunpack.c.h.b16 %v141
    %v1115 = vunpack.c.l.b16 %v142
    %v1116 = vunpack.c.h.b16 %v142
    %v1117 = vunpack.c.l.b16 %v143
    %v1118 = vunpack.c.h.b16 %v143
    %v1119 = vunpack.c.l.b16 %v144
    %v1120 = vunpack.c.h.b16 %v144
    %v1121 = vunpack.c.l.b16 %v145
    %v1122 = vunpack.c.h.b16 %v145
    %v1123 = vunpack.c.l.b16 %v146
    %v1124 = vunpack.c.l.b16 %v147
    %v1125 = vunpack.c.h.b16 %v147
    %v1126 = vunpack.c.l.b16 %v148
    %v1127 = vunpack.c.h.b16 %v148
    %v1128 = vunpack.c.l.b16 %v149
    %v1129 = vunpack.c.h.b16 %v149
    %v1130 = vunpack.c.l.b16 %v150
    %v1131 = vunpack.c.h.b16 %v150
    %v1132 = vunpack.c.l.b16 %v151
    %v1133 = vunpack.c.h.b16 %v151
    %v1134 = vunpack.c.l.b16 %v152
    %v1135 = vunpack.c.h.b16 %v152
    %v1136 = vunpack.c.l.b16 %v153
    %v1137 = vunpack.c.h.b16 %v153
    %v1138 = vunpack.c.l.b16 %v154
    %v1139 = vunpack.c.h.b16 %v154
    %v1140 = vunpack.c.l.b16 %v155
    %v1141 = vunpack.c.h.b16 %v155
    %v1142 = vunpack.c.l.b16 %v156
    %v1143 = vunpack.c.l.b16 %v157
    %v1144 = vunpack.c.h.b16 %v157
    %v1145 = vunpack.c.l.b16 %v158
    %v1146 = vunpack.c.h.b16 %v158
    %v1147 = vunpack.c.l.b16 %v159
    %v1148 = vunpack.c.h.b16 %v159
    %v1149 = vunpack.c.l.b16 %v160
    %v1150 = vunpack.c.h.b16 %v160
    %v1151 = vunpack.c.l.b16 %v161
    %v1152 = vunpack.c.h.b16 %v161
    %v1153 = vunpack.c.l.b16 %v162
    %v1154 = vunpack.c.h.b16 %v162
    %v1155 = vunpack.c.l.b16 %v163
    %v1156 = vunpack.c.h.b16 %v163
    %v1157 = vunpack.c.l.b16 %v164
    %v1158 = vunpack.c.h.b16 %v164
    %v1159 = vunpack.c.l.b16 %v165
    %v1160 = vunpack.c.h.b16 %v165
    %v1161 = vunpack.c.l.b16 %v166
    %v1162 = vunpack.c.l.b16 %v167
    %v1163 = vunpack.c.h.b16 %v167
    %v1164 = vunpack.c.l.b16 %v168
    %v1165 = vunpack.c.h.b16 %v168
    %v1166 = vunpack.c.l.b16 %v169
    %v1167 = vunpack.c.h.b16 %v169
    %v1168 = vunpack.c.l.b16 %v170
    %v1169 = vunpack.c.h.b16 %v170
    %v1170 = vunpack.c.l.b16 %v171
    %v1171 = vunpack.c.h.b16 %v171
    %v1172 = vunpack.c.l.b16 %v172
    %v1173 = vunpack.c.h.b16 %v172
    %v1174 = vunpack.c.l.b16 %v173
    %v1175 = vunpack.c.h.b16 %v173
    %v1176 = vunpack.c.l.b16 %v174
    %v1177 = vunpack.c.h.b16 %v174
    %v1178 = vunpack.c.l.b16 %v175
    %v1179 = vunpack.c.h.b16 %v175
    %v1180 = vunpack.c.l.b16 %v176
    %v1181 = vunpack.c.l.b16 %v177
    %v1182 = vunpack.c.h.b16 %v177
    %v1183 = vunpack.c.l.b16 %v178
    %v1184 = vunpack.c.h.b16 %v178
    %v1185 = vunpack.c.l.b16 %v179
    %v1186 = vunpack.c.h.b16 %v179
    %v1187 = vunpack.c.l.b16 %v180
    %v1188 = vunpack.c.h.b16 %v180
    %v1189 = vunpack.c.l.b16 %v181
    %v1190 = vunpack.c.h.b16 %v181
    %v1191 = vunpack.c.l.b16 %v182
    %v1192 = vunpack.c.h.b16 %v182
    %v1193 = vunpack.c.l.b16 %v183
    %v1194 = vunpack.c.h.b16 %v183
    %v1195 = vunpack.c.l.b16 %v184
    %v1196 = vunpack.c.h.b16 %v184
    %v1197 = vunpack.c.l.b16 %v185
    %v1198 = vunpack.c.h.b16 %v185
    %v1199 = vunpack.c.l.b16 %v186
    %v1200 = vunpack.c.l.b16 %v187
    %v1201 = vunpack.c.h.b16 %v187
    %v1202 = vunpack.c.l.b16 %v188
    %v1203 = vunpack.c.h.b16 %v188
    %v1204 = vunpack.c.l.b16 %v189
    %v1205 = vunpack.c.h.b16 %v189
    %v1206 = vunpack.c.l.b16 %v190
    %v1207 = vunpack.c.h.b16 %v190
    %v1208 = vunpack.c.l.b16 %v191
    %v1209 = vunpack.c.h.b16 %v191
    %v1210 = vunpack.c.l.b16 %v192
    %v1211 = vunpack.c.h.b16 %v192
    %v1212 = vunpack.c.l.b16 %v193
    %v1213 = vunpack.c.h.b16 %v193
    %v1214 = vunpack.c.l.b16 %v194
    %v1215 = vunpack.c.h.b16 %v194
    %v1216 = vunpack.c.l.b16 %v195
    %v1217 = vunpack.c.h.b16 %v195
    %v1218 = vunpack.c.l.b16 %v196
    %v1219 = vunpack.c.l.b16 %v197
    %v1220 = vunpack.c.h.b16 %v197
    %v1221 = vunpack.c.l.b16 %v198
    %v1222 = vunpack.c.h.b16 %v198
    %v1223 = vunpack.c.l.b16 %v199
    %v1224 = vunpack.c.h.b16 %v199
    %v1225 = vunpack.c.l.b16 %v200
    %v1226 = vunpack.c.h.b16 %v200
    %v1227 = vunpack.c.l.b16 %v201
    %v1228 = vunpack.c.h.b16 %v201
    %v1229 = vunpack.c.l.b16 %v202
    %v1230 = vunpack.c.h.b16 %v202
    %v1231 = vunpack.c.l.b16 %v203
    %v1232 = vunpack.c.h.b16 %v203
    %v1233 = vunpack.c.l.b16 %v204
    %v1234 = vunpack.c.h.b16 %v204
    %v1235 = vunpack.c.l.b16 %v205
    %v1236 = vunpack.c.h.b16 %v205
    %v1237 = vunpack.c.l.b16 %v206
    %v1238 = vunpack.c.l.b16 %v207
    %v1239 = vunpack.c.h.b16 %v207
    %v1240 = vunpack.c.l.b16 %v208
    %v1241 = vunpack.c.h.b16 %v208
    %v1242 = vunpack.c.l.b16 %v209
    %v1243 = vunpack.c.h.b16 %v209
    %v1244 = vunpack.c.l.b16 %v210
    %v1245 = vunpack.c.h.b16 %v210
    %v1246 = vunpack.c.l.b16 %v211
    %v1247 = vunpack.c.h.b16 %v211
    %v1248 = vunpack.c.l.b16 %v212
    %v1249 = vunpack.c.h.b16 %v212
    %v1250 = vunpack.c.l.b16 %v213
    %v1251 = vunpack.c.h.b16 %v213
    %v1252 = vunpack.c.l.b16 %v214
    %v1253 = vunpack.c.h.b16 %v214
    %v1254 = vunpack.c.l.b16 %v215
    %v1255 = vunpack.c.h.b16 %v215
    %v1256 = vunpack.c.l.b16 %v216
    %v1257 = vunpack.c.l.b16 %v217
    %v1258 = vunpack.c.h.b16 %v217
    %v1259 = vunpack.c.l.b16 %v218
    %v1260 = vunpack.c.h.b16 %v218
    %v1261 = vunpack.c.l.b16 %v219
    %v1262 = vunpack.c.h.b16 %v219
    %v1263 = vunpack.c.l.b16 %v220
    %v1264 = vunpack.c.h.b16 %v220
    %v1265 = vunpack.c.l.b16 %v221
    %v1266 = vunpack.c.h.b16 %v221
    %v1267 = vunpack.c.l.b16 %v222
    %v1268 = vunpack.c.h.b16 %v222
    %v1269 = vunpack.c.l.b16 %v223
    %v1270 = vunpack.c.h.b16 %v223
    %v1271 = vunpack.c.l.b16 %v224
    %v1272 = vunpack.c.h.b16 %v224
    %v1273 = vunpack.c.l.b16 %v225
    %v1274 = vunpack.c.h.b16 %v225
    %v1275 = vunpack.c.l.b16 %v226
    %v1276 = vunpack.c.l.b16 %v227
    %v1277 = vunpack.c.h.b16 %v227
    %v1278 = vunpack.c.l.b16 %v228
    %v1279 = vunpack.c.h.b16 %v228
    %v1280 = vunpack.c.l.b16 %v229
    %v1281 = vunpack.c.h.b16 %v229
    %v1282 = vunpack.c.l.b16 %v230
    %v1283 = vunpack.c.h.b16 %v230
    %v1284 = vunpack.c.l.b16 %v231
    %v1285 = vunpack.c.h.b16 %v231
    %v1286 = vunpack.c.l.b16 %v232
    %v1287 = vunpack.c.h.b16 %v232
    %v1288 = vunpack.c.l.b16 %v233
    %v1289 = vunpack.c.h.b16 %v233
    %v1290 = vunpack.c.l.b16 %v234
    %v1291 = vunpack.c.h.b16 %v234
    %v1292 = vunpack.c.l.b16 %v235
    %v1293 = vunpack.c.h.b16 %v235
    %v1294 = vunpack.c.l.b16 %v236
    %v1295 = vunpack.c.l.b16 %v237
    %v1296 = vunpack.c.h.b16 %v237
    %v1297 = vunpack.c.l.b16 %v238
    %v1298 = vunpack.c.h.b16 %v238
    %v1299 = vunpack.c.l.b16 %v239
    %v1300 = vunpack.c.h.b16 %v239
    %v1301 = vunpack.c.l.b16 %v240
    %v1302 = vunpack.c.h.b16 %v240
    %v1303 = vunpack.c.l.b16 %v241
    %v1304 = vunpack.c.h.b16 %v241
    %v1305 = vunpack.c.l.b16 %v242
    %v1306 = vunpack.c.h.b16 %v242
    %v1307 = vunpack.c.l.b16 %v243
    %v1308 = vunpack.c.h.b16 %v243
    %v1309 = vunpack.c.l.b16 %v244
    %v1310 = vunpack.c.h.b16 %v244
    %v1311 = vunpack.c.l.b16 %v245
    %v1312 = vunpack.c.h.b16 %v245
    %v1313 = vunpack.c.l.b16 %v246
    %v1314 = vunpack.c.l.b16 %v247
    %v1315 = vunpack.c.h.b16 %v247
    %v1316 = vunpack.c.l.b16 %v248
    %v1317 = vunpack.c.h.b16 %v248
    %v1318 = vunpack.c.l.b16 %v249
    %v1319 = vunpack.c.h.b16 %v249
    %v1320 = vunpack.c.l.b16 %v250
    %v1321 = vunpack.c.h.b16 %v250
    %v1322 = vunpack.c.l.b16 %v251
    %v1323 = vunpack.c.h.b16 %v251
    %v1324 = vunpack.c.l.b16 %v252
    %v1325 = vunpack.c.h.b16 %v252
    %v1326 = vunpack.c.l.b16 %v253
    %v1327 = vunpack.c.h.b16 %v253
    %v1328 = vunpack.c.l.b16 %v254
    %v1329 = vunpack.c.h.b16 %v254
    %v1330 = vunpack.c.l.b16 %v255
    %v1331 = vunpack.c.h.b16 %v255
    %v1332 = vunpack.c.l.b16 %v256
    %v1333 = vunpack.c.l.b16 %v257
    %v1334 = vunpack.c.h.b16 %v257
    %v1335 = vunpack.c.l.b16 %v258
    %v1336 = vunpack.c.h.b16 %v258
    %v1337 = vunpack.c.l.b16 %v259
    %v1338 = vunpack.c.h.b16 %v259
    %v1339 = vunpack.c.l.b16 %v260
    %v1340 = vunpack.c.h.b16 %v260
    %v1341 = vunpack.c.l.b16 %v261
    %v1342 = vunpack.c.h.b16 %v261
    %v1343 = vunpack.c.l.b16 %v262
    %v1344 = vunpack.c.h.b16 %v262
    %v1345 = vunpack.c.l.b16 %v263
    %v1346 = vunpack.c.h.b16 %v263
    %v1347 = vunpack.c.l.b16 %v264
    %v1348 = vunpack.c.h.b16 %v264
    %v1349 = vunpack.c.l.b16 %v265
    %v1350 = vunpack.c.h.b16 %v265
    %v1351 = vunpack.c.l.b16 %v266
    %v1352 = vunpack.c.l.b16 %v267
    %v1353 = vunpack.c.h.b16 %v267
    %v1354 = vunpack.c.l.b16 %v268
    %v1355 = vunpack.c.h.b16 %v268
    %v1356 = vunpack.c.l.b16 %v269
    %v1357 = vunpack.c.h.b16 %v269
    %v1358 = vunpack.c.l.b16 %v270
    %v1359 = vunpack.c.h.b16 %v270
    %v1360 = vunpack.c.l.b16 %v271
    %v1361 = vunpack.c.h.b16 %v271
    %v1362 = vunpack.c.l.b16 %v272
    %v1363 = vunpack.c.h.b16 %v272
    %v1364 = vunpack.c.l.b16 %v273
    %v1365 = vunpack.c.h.b16 %v273
    %v1366 = vunpack.c.l.b16 %v274
    %v1367 = vunpack.c.h.b16 %v274
    %v1368 = vunpack.c.l.b16 %v275
    %v1369 = vunpack.c.h.b16 %v275
    %v1370 = vunpack.c.l.b16 %v276
    %v1371 = vpack.c.b16 %v1086, %v1067
    %v1372 = vpack.c.b16 %v1087, %v1068
    %v1373 = vpack.c.b16 %v1088, %v1069
    %v1374 = vpack.c.b16 %v1089, %v1070
    %v1375 = vpack.c.b16 %v1090, %v1071
    %v1376 = vpack.c.b16 %v1091, %v1072
    %v1377 = vpack.c.b16 %v1092, %v1073
    %v1378 = vpack.c.b16 %v1093, %v1074
    %v1379 = vpack.c.b16 %v1094, %v1075
    %v1380 = vpack.c.b16 %v1095, %v1076
    %v1381 = vpack.c.b16 %v1096, %v1077
    %v1382 = vpack.c.b16 %v1097, %v1078
    %v1383 = vpack.c.b16 %v1098, %v1079
    %v1384 = vpack.c.b16 %v1099, %v1080
    %v1385 = vpack.c.b16 %v1100, %v1081
    %v1386 = vpack.c.b16 %v1101, %v1082
    %v1387 = vpack.c.b16 %v1102, %v1083
    %v1388 = vpack.c.b16 %v1103, %v1084
    %v1389 = vpack.c.b16 %v1104, %v1085
    %v1390 = vpack.c.b16 %v1124, %v1105
    %v1391 = vpack.c.b16 %v1125, %v1106
    %v1392 = vpack.c.b16 %v1126, %v1107
    %v1393 = vpack.c.b16 %v1127, %v1108
    %v1394 = vpack.c.b16 %v1128, %v1109
    %v1395 = vpack.c.b16 %v1129, %v1110
    %v1396 = vpack.c.b16 %v1130, %v1111
    %v1397 = vpack.c.b16 %v1131, %v1112
    %v1398 = vpack.c.b16 %v1132, %v1113
    %v1399 = vpack.c.b16 %v1133, %v1114
    %v1400 = vpack.c.b16 %v1134, %v1115
    %v1401 = vpack.c.b16 %v1135, %v1116
    %v1402 = vpack.c.b16 %v1136, %v1117
    %v1403 = vpack.c.b16 %v1137, %v1118
    %v1404 = vpack.c.b16 %v1138, %v1119
    %v1405 = vpack.c.b16 %v1139, %v1120
    %v1406 = vpack.c.b16 %v1140, %v1121
    %v1407 = vpack.c.b16 %v1141, %v1122
    %v1408 = vpack.c.b16 %v1142, %v1123
    %v1409 = vpack.c.b16 %v1162, %v1143
    %v1410 = vpack.c.b16 %v1163, %v1144
    %v1411 = vpack.c.b16 %v1164, %v1145
    %v1412 = vpack.c.b16 %v1165, %v1146
    %v1413 = vpack.c.b16 %v1166, %v1147
    %v1414 = vpack.c.b16 %v1167, %v1148
    %v1415 = vpack.c.b16 %v1168, %v1149
    %v1416 = vpack.c.b16 %v1169, %v1150
    %v1417 = vpack.c.b16 %v1170, %v1151
    %v1418 = vpack.c.b16 %v1171, %v1152
    %v1419 = vpack.c.b16 %v1172, %v1153
    %v1420 = vpack.c.b16 %v1173, %v1154
    %v1421 = vpack.c.b16 %v1174, %v1155
    %v1422 = vpack.c.b16 %v1175, %v1156
    %v1423 = vpack.c.b16 %v1176, %v1157
    %v1424 = vpack.c.b16 %v1177, %v1158
    %v1425 = vpack.c.b16 %v1178, %v1159
    %v1426 = vpack.c.b16 %v1179, %v1160
    %v1427 = vpack.c.b16 %v1180, %v1161
    %v1428 = vpack.c.b16 %v1200, %v1181
    %v1429 = vpack.c.b16 %v1201, %v1182
    %v1430 = vpack.c.b16 %v1202, %v1183
    %v1431 = vpack.c.b16 %v1203, %v1184
    %v1432 = vpack.c.b16 %v1204, %v1185
    %v1433 = vpack.c.b16 %v1205, %v1186
    %v1434 = vpack.c.b16 %v1206, %v1187
    %v1435 = vpack.c.b16 %v1207, %v1188
    %v1436 = vpack.c.b16 %v1208, %v1189
    %v1437 = vpack.c.b16 %v1209, %v1190
    %v1438 = vpack.c.b16 %v1210, %v1191
    %v1439 = vpack.c.b16 %v1211, %v1192
    %v1440 = vpack.c.b16 %v1212, %v1193
    %v1441 = vpack.c.b16 %v1213, %v1194
    %v1442 = vpack.c.b16 %v1214, %v1195
    %v1443 = vpack.c.b16 %v1215, %v1196
    %v1444 = vpack.c.b16 %v1216, %v1197
    %v1445 = vpack.c.b16 %v1217, %v1198
    %v1446 = vpack.c.b16 %v1218, %v1199
    %v1447 = vpack.c.b16 %v1238, %v1219
    %v1448 = vpack.c.b16 %v1239, %v1220
    %v1449 = vpack.c.b16 %v1240, %v1221
    %v1450 = vpack.c.b16 %v1241, %v1222
    %v1451 = vpack.c.b16 %v1242, %v1223
    %v1452 = vpack.c.b16 %v1243, %v1224
    %v1453 = vpack.c.b16 %v1244, %v1225
    %v1454 = vpack.c.b16 %v1245, %v1226
    %v1455 = vpack.c.b16 %v1246, %v1227
    %v1456 = vpack.c.b16 %v1247, %v1228
    %v1457 = vpack.c.b16 %v1248, %v1229
    %v1458 = vpack.c.b16 %v1249, %v1230
    %v1459 = vpack.c.b16 %v1250, %v1231
    %v1460 = vpack.c.b16 %v1251, %v1232
    %v1461 = vpack.c.b16 %v1252, %v1233
    %v1462 = vpack.c.b16 %v1253, %v1234
    %v1463 = vpack.c.b16 %v1254, %v1235
    %v1464 = vpack.c.b16 %v1255, %v1236
    %v1465 = vpack.c.b16 %v1256, %v1237
    %v1466 = vpack.c.b16 %v1276, %v1257
    %v1467 = vpack.c.b16 %v1277, %v1258
    %v1468 = vpack.c.b16 %v1278, %v1259
    %v1469 = vpack.c.b16 %v1279, %v1260
    %v1470 = vpack.c.b16 %v1280, %v1261
    %v1471 = vpack.c.b16 %v1281, %v1262
    %v1472 = vpack.c.b16 %v1282, %v1263
    %v1473 = vpack.c.b16 %v1283, %v1264
    %v1474 = vpack.c.b16 %v1284, %v1265
    %v1475 = vpack.c.b16 %v1285, %v1266
    %v1476 = vpack.c.b16 %v1286, %v1267
    %v1477 = vpack.c.b16 %v1287, %v1268
    %v1478 = vpack.c.b16 %v1288, %v1269
    %v1479 = vpack.c.b16 %v1289, %v1270
    %v1480 = vpack.c.b16 %v1290, %v1271
    %v1481 = vpack.c.b16 %v1291, %v1272
    %v1482 = vpack.c.b16 %v1292, %v1273
    %v1483 = vpack.c.b16 %v1293, %v1274
    %v1484 = vpack.c.b16 %v1294, %v1275
    %v1485 = vpack.c.b16 %v1314, %v1295
    %v1486 = vpack.c.b16 %v1315, %v1296
    %v1487 = vpack.c.b16 %v1316, %v1297
    %v1488 = vpack.c.b16 %v1317, %v1298
    %v1489 = vpack.c.b16 %v1318, %v1299
    %v1490 = vpack.c.b16 %v1319, %v1300
    %v1491 = vpack.c.b16 %v1320, %v1301
    %v1492 = vpack.c.b16 %v1321, %v1302
    %v1493 = vpack.c.b16 %v1322, %v1303
    %v1494 = vpack.c.b16 %v1323, %v1304
    %v1495 = vpack.c.b16 %v1324, %v1305
    %v1496 = vpack.c.b16 %v1325, %v1306
    %v1497 = vpack.c.b16 %v1326, %v1307
    %v1498 = vpack.c.b16 %v1327, %v1308
    %v1499 = vpack.c.b16 %v1328, %v1309
    %v1500 = vpack.c.b16 %v1329, %v1310
    %v1501 = vpack.c.b16 %v1330, %v1311
    %v1502 = vpack.c.b16 %v1331, %v1312
    %v1503 = vpack.c.b16 %v1332, %v1313
    %v1504 = vpack.c.b16 %v1352, %v1333
    %v1505 = vpack.c.b16 %v1353, %v1334
    %v1506 = vpack.c.b16 %v1354, %v1335
    %v1507 = vpack.c.b16 %v1355, %v1336
    %v1508 = vpack.c.b16 %v1356, %v1337
    %v1509 = vpack.c.b16 %v1357, %v1338
    %v1510 = vpack.c.b16 %v1358, %v1339
    %v1511 = vpack.c.b16 %v1359, %v1340
    %v1512 = vpack.c.b16 %v1360, %v1341
    %v1513 = vpack.c.b16 %v1361, %v1342
    %v1514 = vpack.c.b16 %v1362, %v1343
    %v1515 = vpack.c.b16 %v1363, %v1344
    %v1516 = vpack.c.b16 %v1364, %v1345
    %v1517 = vpack.c.b16 %v1365, %v1346
    %v1518 = vpack.c.b16 %v1366, %v1347
    %v1519 = vpack.c.b16 %v1367, %v1348
    %v1520 = vpack.c.b16 %v1368, %v1349
    %v1521 = vpack.c.b16 %v1369, %v1350
    %v1522 = vpack.c.b16 %v1370, %v1351
    %v2283 = vunpack.c.l.b16 %v277
    %v2284 = vunpack.c.h.b16 %v277
    %v2285 = vunpack.c.l.b16 %v278
    %v2286 = vunpack.c.h.b16 %v278
    %v2287 = vunpack.c.l.b16 %v279
    %v2288 = vunpack.c.h.b16 %v279
    %v2289 = vunpack.c.l.b16 %v280
    %v2290 = vunpack.c.h.b16 %v280
    %v2291 = vunpack.c.l.b16 %v281
    %v2292 = vunpack.c.h.b16 %v281
    %v2293 = vunpack.c.l.b16 %v282
    %v2294 = vunpack.c.h.b16 %v282
    %v2295 = vunpack.c.l.b16 %v283
    %v2296 = vunpack.c.h.b16 %v283
    %v2297 = vunpack.c.l.b16 %v284
    %v2298 = vunpack.c.h.b16 %v284
    %v2299 = vunpack.c.l.b16 %v285
    %v2300 = vunpack.c.h.b16 %v285
    %v2301 = vunpack.c.l.b16 %v286
    %v2302 = vunpack.c.h.b16 %v286
    %v2303 = vunpack.c.l.b16 %v287
    %v2304 = vunpack.c.h.b16 %v287
    %v2305 = vunpack.c.l.b16 %v288
    %v2306 = vunpack.c.h.b16 %v288
    %v2307 = vunpack.c.l.b16 %v289
    %v2308 = vunpack.c.h.b16 %v289
    %v2309 = vunpack.c.l.b16 %v290
    %v2310 = vunpack.c.h.b16 %v290
    %v2311 = vunpack.c.l.b16 %v291
    %v2312 = vunpack.c.h.b16 %v291
    %v2313 = vunpack.c.l.b16 %v292
    %v2314 = vunpack.c.h.b16 %v292
    %v2315 = vunpack.c.l.b16 %v293
    %v2316 = vunpack.c.h.b16 %v293
    %v2317 = vunpack.c.l.b16 %v294
    %v2318 = vunpack.c.h.b16 %v294
    %v2319 = vunpack.c.l.b16 %v295
    %v2320 = vunpack.c.h.b16 %v295
    %v2321 = vunpack.c.l.b16 %v296
    %v2322 = vunpack.c.h.b16 %v296
    %v2323 = vunpack.c.l.b16 %v297
    %v2324 = vunpack.c.h.b16 %v297
    %v2325 = vunpack.c.l.b16 %v298
    %v2326 = vunpack.c.h.b16 %v298
    %v2327 = vunpack.c.l.b16 %v299
    %v2328 = vunpack.c.h.b16 %v299
    %v2329 = vunpack.c.l.b16 %v300
    %v2330 = vunpack.c.h.b16 %v300
    %v2331 = vunpack.c.l.b16 %v301
    %v2332 = vunpack.c.h.b16 %v301
    %v2333 = vunpack.c.l.b16 %v302
    %v2334 = vunpack.c.h.b16 %v302
    %v2335 = vunpack.c.l.b16 %v303
    %v2336 = vunpack.c.h.b16 %v303
    %v2337 = vunpack.c.l.b16 %v304
    %v2338 = vunpack.c.h.b16 %v304
    %v2339 = vunpack.c.l.b16 %v305
    %v2340 = vunpack.c.h.b16 %v305
    %v2341 = vunpack.c.l.b16 %v306
    %v2342 = vunpack.c.h.b16 %v306
    %v2343 = vunpack.c.l.b16 %v307
    %v2344 = vunpack.c.h.b16 %v307
    %v2345 = vunpack.c.l.b16 %v308
    %v2346 = vunpack.c.h.b16 %v308
    %v2347 = vunpack.c.l.b16 %v309
    %v2348 = vunpack.c.h.b16 %v309
    %v2349 = vunpack.c.l.b16 %v310
    %v2350 = vunpack.c.h.b16 %v310
    %v2351 = vunpack.c.l.b16 %v311
    %v2352 = vunpack.c.h.b16 %v311
    %v2353 = vunpack.c.l.b16 %v312
    %v2354 = vunpack.c.h.b16 %v312
    %v2355 = vunpack.c.l.b16 %v313
    %v2356 = vunpack.c.h.b16 %v313
    %v2357 = vunpack.c.l.b16 %v314
    %v2358 = vunpack.c.h.b16 %v314
    %v2359 = vunpack.c.l.b16 %v315
    %v2360 = vunpack.c.h.b16 %v315
    %v2361 = vunpack.c.l.b16 %v316
    %v2362 = vunpack.c.h.b16 %v316
    %v2363 = vunpack.c.l.b16 %v317
    %v2364 = vunpack.c.h.b16 %v317
    %v2365 = vunpack.c.l.b16 %v318
    %v2366 = vunpack.c.h.b16 %v318
    %v2367 = vunpack.c.l.b16 %v319
    %v2368 = vunpack.c.h.b16 %v319
    %v2369 = vunpack.c.l.b16 %v320
    %v2370 = vunpack.c.h.b16 %v320
    %v2371 = vunpack.c.l.b16 %v321
    %v2372 = vunpack.c.h.b16 %v321
    %v2373 = vunpack.c.l.b16 %v322
    %v2374 = vunpack.c.h.b16 %v322
    %v2375 = vunpack.c.l.b16 %v323
    %v2376 = vunpack.c.h.b16 %v323
    %v2377 = vunpack.c.l.b16 %v324
    %v2378 = vunpack.c.h.b16 %v324
    %v2379 = vunpack.c.l.b16 %v325
    %v2380 = vunpack.c.h.b16 %v325
    %v2381 = vunpack.c.l.b16 %v326
    %v2382 = vunpack.c.h.b16 %v326
    %v2383 = vunpack.c.l.b16 %v327
    %v2384 = vunpack.c.h.b16 %v327
    %v2385 = vunpack.c.l.b16 %v328
    %v2386 = vunpack.c.h.b16 %v328
    %v2387 = vunpack.c.l.b16 %v329
    %v2388 = vunpack.c.h.b16 %v329
    %v2389 = vunpack.c.l.b16 %v330
    %v2390 = vunpack.c.h.b16 %v330
    %v2391 = vunpack.c.l.b16 %v331
    %v2392 = vunpack.c.h.b16 %v331
    %v2393 = vunpack.c.l.b16 %v332
    %v2394 = vunpack.c.h.b16 %v332
    %v2395 = vunpack.c.l.b16 %v333
    %v2396 = vunpack.c.h.b16 %v333
    %v2397 = vunpack.c.l.b16 %v334
    %v2398 = vunpack.c.h.b16 %v334
    %v2399 = vunpack.c.l.b16 %v335
    %v2400 = vunpack.c.h.b16 %v335
    %v2401 = vunpack.c.l.b16 %v336
    %v2402 = vunpack.c.h.b16 %v336
    %v2403 = vunpack.c.l.b16 %v337
    %v2404 = vunpack.c.h.b16 %v337
    %v2405 = vunpack.c.l.b16 %v338
    %v2406 = vunpack.c.h.b16 %v338
    %v2407 = vunpack.c.l.b16 %v339
    %v2408 = vunpack.c.h.b16 %v339
    %v2409 = vunpack.c.l.b16 %v340
    %v2410 = vunpack.c.h.b16 %v340
    %v2411 = vunpack.c.l.b16 %v341
    %v2412 = vunpack.c.h.b16 %v341
    %v2413 = vunpack.c.l.b16 %v342
    %v2414 = vunpack.c.h.b16 %v342
    %v2415 = vunpack.c.l.b16 %v343
    %v2416 = vunpack.c.h.b16 %v343
    %v2417 = vunpack.c.l.b16 %v344
    %v2418 = vunpack.c.h.b16 %v344
    %v2419 = vunpack.c.l.b16 %v345
    %v2420 = vunpack.c.h.b16 %v345
    %v2421 = vunpack.c.l.b16 %v346
    %v2422 = vunpack.c.h.b16 %v346
    %v2423 = vunpack.c.l.b16 %v347
    %v2424 = vunpack.c.h.b16 %v347
    %v2425 = vunpack.c.l.b16 %v348
    %v2426 = vunpack.c.h.b16 %v348
    %v2427 = vunpack.c.l.b16 %v349
    %v2428 = vunpack.c.h.b16 %v349
    %v2429 = vunpack.c.l.b16 %v350
    %v2430 = vunpack.c.h.b16 %v350
    %v2431 = vunpack.c.l.b16 %v351
    %v2432 = vunpack.c.h.b16 %v351
    %v2433 = vunpack.c.l.b16 %v352
    %v2434 = vunpack.c.h.b16 %v352
    %v2435 = vunpack.c.l.b16 %v353
    %v2436 = vunpack.c.h.b16 %v353
    %v2437 = vunpack.c.l.b16 %v354
    %v2438 = vunpack.c.h.b16 %v354
    %v2439 = vunpack.c.l.b16 %v355
    %v2440 = vunpack.c.h.b16 %v355
    %v2441 = vunpack.c.l.b16 %v356
    %v2442 = vunpack.c.h.b16 %v356
    %v2443 = vunpack.c.l.b16 %v357
    %v2444 = vunpack.c.h.b16 %v357
    %v2445 = vunpack.c.l.b16 %v358
    %v2446 = vunpack.c.h.b16 %v358
    %v2447 = vunpack.c.l.b16 %v359
    %v2448 = vunpack.c.h.b16 %v359
    %v2449 = vunpack.c.l.b16 %v360
    %v2450 = vunpack.c.h.b16 %v360
    %v2451 = vunpack.c.l.b16 %v361
    %v2452 = vunpack.c.h.b16 %v361
    %v2453 = vunpack.c.l.b16 %v362
    %v2454 = vunpack.c.h.b16 %v362
    %v2455 = vunpack.c.l.b16 %v363
    %v2456 = vunpack.c.h.b16 %v363
    %v2457 = vunpack.c.l.b16 %v364
    %v2458 = vunpack.c.h.b16 %v364
    %v2459 = vunpack.c.l.b16 %v365
    %v2460 = vunpack.c.h.b16 %v365
    %v2461 = vunpack.c.l.b16 %v366
    %v2462 = vunpack.c.h.b16 %v366
    %v2463 = vunpack.c.l.b16 %v367
    %v2464 = vunpack.c.h.b16 %v367
    %v2465 = vunpack.c.l.b16 %v368
    %v2466 = vunpack.c.h.b16 %v368
    %v2467 = vunpack.c.l.b16 %v369
    %v2468 = vunpack.c.h.b16 %v369
    %v2469 = vunpack.c.l.b16 %v370
    %v2470 = vunpack.c.h.b16 %v370
    %v2471 = vunpack.c.l.b16 %v371
    %v2472 = vunpack.c.h.b16 %v371
    %v2473 = vunpack.c.l.b16 %v372
    %v2474 = vunpack.c.h.b16 %v372
    %v2475 = vunpack.c.l.b16 %v373
    %v2476 = vunpack.c.h.b16 %v373
    %v2477 = vunpack.c.l.b16 %v374
    %v2478 = vunpack.c.h.b16 %v374
    %v2479 = vunpack.c.l.b16 %v375
    %v2480 = vunpack.c.h.b16 %v375
    %v2481 = vunpack.c.l.b16 %v376
    %v2482 = vunpack.c.h.b16 %v376
    %v2483 = vunpack.c.l.b16 %v377
    %v2484 = vunpack.c.h.b16 %v377
    %v2485 = vunpack.c.l.b16 %v378
    %v2486 = vunpack.c.h.b16 %v378
    %v2487 = vunpack.c.l.b16 %v379
    %v2488 = vunpack.c.h.b16 %v379
    %v2489 = vunpack.c.l.b16 %v380
    %v2490 = vunpack.c.h.b16 %v380
    %v2491 = vunpack.c.l.b16 %v381
    %v2492 = vunpack.c.h.b16 %v381
    %v2493 = vunpack.c.l.b16 %v382
    %v2494 = vunpack.c.h.b16 %v382
    %v2495 = vunpack.c.l.b16 %v383
    %v2496 = vunpack.c.h.b16 %v383
    %v2497 = vunpack.c.l.b16 %v384
    %v2498 = vunpack.c.h.b16 %v384
    %v2499 = vunpack.c.l.b16 %v385
    %v2500 = vunpack.c.h.b16 %v385
    %v2501 = vunpack.c.l.b16 %v386
    %v2502 = vunpack.c.h.b16 %v386
    %v2503 = vunpack.c.l.b16 %v387
    %v2504 = vunpack.c.h.b16 %v387
    %v2505 = vunpack.c.l.b16 %v388
    %v2506 = vunpack.c.h.b16 %v388
    %v2507 = vunpack.c.l.b16 %v389
    %v2508 = vunpack.c.h.b16 %v389
    %v2509 = vunpack.c.l.b16 %v390
    %v2510 = vunpack.c.h.b16 %v390
    %v2511 = vunpack.c.l.b16 %v391
    %v2512 = vunpack.c.h.b16 %v391
    %v2513 = vunpack.c.l.b16 %v392
    %v2514 = vunpack.c.h.b16 %v392
    %v2515 = vunpack.c.l.b16 %v393
    %v2516 = vunpack.c.h.b16 %v393
    %v2517 = vunpack.c.l.b16 %v394
    %v2518 = vunpack.c.h.b16 %v394
    %v2519 = vunpack.c.l.b16 %v395
    %v2520 = vunpack.c.h.b16 %v395
    %v2521 = vunpack.c.l.b16 %v396
    %v2522 = vunpack.c.h.b16 %v396
    %v2523 = vunpack.c.l.b16 %v397
    %v2524 = vunpack.c.h.b16 %v397
    %v2525 = vunpack.c.l.b16 %v398
    %v2526 = vunpack.c.h.b16 %v398
    %v2527 = vunpack.c.l.b16 %v399
    %v2528 = vunpack.c.h.b16 %v399
    %v2529 = vunpack.c.l.b16 %v400
    %v2530 = vunpack.c.h.b16 %v400
    %v2531 = vunpack.c.l.b16 %v401
    %v2532 = vunpack.c.h.b16 %v401
    %v2533 = vunpack.c.l.b16 %v402
    %v2534 = vunpack.c.h.b16 %v402
    %v2535 = vunpack.c.l.b16 %v403
    %v2536 = vunpack.c.h.b16 %v403
    %v2537 = vunpack.c.l.b16 %v404
    %v2538 = vunpack.c.h.b16 %v404
    %v2539 = vunpack.c.l.b16 %v405
    %v2540 = vunpack.c.h.b16 %v405
    %v2541 = vunpack.c.l.b16 %v406
    %v2542 = vunpack.c.h.b16 %v406
    %v2543 = vunpack.c.l.b16 %v407
    %v2544 = vunpack.c.h.b16 %v407
    %v2545 = vunpack.c.l.b16 %v408
    %v2546 = vunpack.c.h.b16 %v408
    %v2547 = vunpack.c.l.b16 %v409
    %v2548 = vunpack.c.h.b16 %v409
    %v2549 = vunpack.c.l.b16 %v410
    %v2550 = vunpack.c.h.b16 %v410
    %v2551 = vunpack.c.l.b16 %v411
    %v2552 = vunpack.c.h.b16 %v411
    %v2553 = vunpack.c.l.b16 %v412
    %v2554 = vunpack.c.h.b16 %v412
    %v2555 = vunpack.c.l.b16 %v413
    %v2556 = vunpack.c.h.b16 %v413
    %v2557 = vunpack.c.l.b16 %v414
    %v2558 = vunpack.c.h.b16 %v414
    %v2559 = vunpack.c.l.b16 %v415
    %v2560 = vunpack.c.h.b16 %v415
    %v2561 = vunpack.c.l.b16 %v416
    %v2562 = vunpack.c.h.b16 %v416
    %v2563 = vunpack.c.l.b16 %v417
    %v2564 = vunpack.c.h.b16 %v417
    %v2565 = vunpack.c.l.b16 %v418
    %v2566 = vunpack.c.h.b16 %v418
    %v2567 = vunpack.c.l.b16 %v419
    %v2568 = vunpack.c.h.b16 %v419
    %v2569 = vunpack.c.l.b16 %v420
    %v2570 = vunpack.c.h.b16 %v420
    %v2571 = vunpack.c.l.b16 %v421
    %v2572 = vunpack.c.h.b16 %v421
    %v2573 = vunpack.c.l.b16 %v422
    %v2574 = vunpack.c.h.b16 %v422
    %v2575 = vunpack.c.l.b16 %v423
    %v2576 = vunpack.c.h.b16 %v423
    %v2577 = vunpack.c.l.b16 %v424
    %v2578 = vunpack.c.h.b16 %v424
    %v2579 = vunpack.c.l.b16 %v425
    %v2580 = vunpack.c.h.b16 %v425
    %v2581 = vunpack.c.l.b16 %v426
    %v2582 = vunpack.c.h.b16 %v426
    %v2583 = vunpack.c.l.b16 %v427
    %v2584 = vunpack.c.h.b16 %v427
    %v2585 = vunpack.c.l.b16 %v428
    %v2586 = vunpack.c.h.b16 %v428
    %v2587 = vunpack.c.l.b16 %v429
    %v2588 = vunpack.c.h.b16 %v429
    %v2589 = vunpack.c.l.b16 %v430
    %v2590 = vunpack.c.h.b16 %v430
    %v2591 = vunpack.c.l.b16 %v431
    %v2592 = vunpack.c.h.b16 %v431
    %v2593 = vunpack.c.l.b16 %v432
    %v2594 = vunpack.c.h.b16 %v432
    %v2595 = vunpack.c.l.b16 %v433
    %v2596 = vunpack.c.h.b16 %v433
    %v2597 = vunpack.c.l.b16 %v434
    %v2598 = vunpack.c.h.b16 %v434
    %v2599 = vunpack.c.l.b16 %v435
    %v2600 = vunpack.c.h.b16 %v435
    %v2601 = vunpack.c.l.b16 %v436
    %v2602 = vunpack.c.h.b16 %v436
    %v2603 = vunpack.c.l.b16 %v437
    %v2604 = vunpack.c.h.b16 %v437
    %v2605 = vunpack.c.l.b16 %v438
    %v2606 = vunpack.c.h.b16 %v438
    %v2607 = vunpack.c.l.b16 %v439
    %v2608 = vunpack.c.h.b16 %v439
    %v2609 = vunpack.c.l.b16 %v440
    %v2610 = vunpack.c.h.b16 %v440
    %v2611 = vunpack.c.l.b16 %v441
    %v2612 = vunpack.c.h.b16 %v441
    %v2613 = vunpack.c.l.b16 %v442
    %v2614 = vunpack.c.h.b16 %v442
    %v2615 = vunpack.c.l.b16 %v443
    %v2616 = vunpack.c.h.b16 %v443
    %v2617 = vunpack.c.l.b16 %v444
    %v2618 = vunpack.c.h.b16 %v444
    %v2619 = vunpack.c.l.b16 %v445
    %v2620 = vunpack.c.h.b16 %v445
    %v2621 = vunpack.c.l.b16 %v446
    %v2622 = vunpack.c.h.b16 %v446
    %v2623 = vunpack.c.l.b16 %v447
    %v2624 = vunpack.c.h.b16 %v447
    %v2625 = vunpack.c.l.b16 %v448
    %v2626 = vunpack.c.h.b16 %v448
    %v2627 = vunpack.c.l.b16 %v449
    %v2628 = vunpack.c.h.b16 %v449
    %v2629 = vunpack.c.l.b16 %v450
    %v2630 = vunpack.c.h.b16 %v450
    %v2631 = vunpack.c.l.b16 %v451
    %v2632 = vunpack.c.h.b16 %v451
    %v2633 = vunpack.c.l.b16 %v452
    %v2634 = vunpack.c.h.b16 %v452
    %v2635 = vunpack.c.l.b16 %v453
    %v2636 = vunpack.c.h.b16 %v453
    %v2637 = vunpack.c.l.b16 %v454
    %v2638 = vunpack.c.h.b16 %v454
    %v2639 = vunpack.c.l.b16 %v455
    %v2640 = vunpack.c.h.b16 %v455
    %v2641 = vunpack.c.l.b16 %v456
    %v2642 = vunpack.c.h.b16 %v456
    %v2643 = vunpack.c.l.b16 %v457
    %v2644 = vunpack.c.h.b16 %v457
    %v2645 = vunpack.c.l.b16 %v458
    %v2646 = vunpack.c.h.b16 %v458
    %v2647 = vunpack.c.l.b16 %v459
    %v2648 = vunpack.c.h.b16 %v459
    %v2649 = vunpack.c.l.b16 %v460
    %v2650 = vunpack.c.h.b16 %v460
    %v2651 = vunpack.c.l.b16 %v461
    %v2652 = vunpack.c.h.b16 %v461
    %v2653 = vunpack.c.l.b16 %v462
    %v2654 = vunpack.c.h.b16 %v462
    %v2655 = vunpack.c.l.b16 %v463
    %v2656 = vunpack.c.h.b16 %v463
    %v2657 = vunpack.c.l.b16 %v464
    %v2658 = vunpack.c.h.b16 %v464
    %v2659 = vunpack.c.l.b16 %v465
    %v2660 = vunpack.c.h.b16 %v465
    %v2661 = vunpack.c.l.b16 %v466
    %v2662 = vunpack.c.h.b16 %v466
    %v2663 = vunpack.c.l.b16 %v467
    %v2664 = vunpack.c.h.b16 %v467
    %v2665 = vunpack.c.l.b16 %v468
    %v2666 = vunpack.c.h.b16 %v468
    %v2667 = vunpack.c.l.b16 %v469
    %v2668 = vunpack.c.h.b16 %v469
    %v2669 = vunpack.c.l.b16 %v470
    %v2670 = vunpack.c.h.b16 %v470
    %v2671 = vunpack.c.l.b16 %v471
    %v2672 = vunpack.c.h.b16 %v471
    %v2673 = vunpack.c.l.b16 %v472
    %v2674 = vunpack.c.h.b16 %v472
    %v2675 = vunpack.c.l.b16 %v473
    %v2676 = vunpack.c.h.b16 %v473
    %v2677 = vunpack.c.l.b16 %v474
    %v2678 = vunpack.c.h.b16 %v474
    %v2679 = vunpack.c.l.b16 %v475
    %v2680 = vunpack.c.h.b16 %v475
    %v2681 = vunpack.c.l.b16 %v476
    %v2682 = vunpack.c.h.b16 %v476
    %v2683 = vunpack.c.l.b16 %v477
    %v2684 = vunpack.c.h.b16 %v477
    %v2685 = vunpack.c.l.b16 %v478
    %v2686 = vunpack.c.h.b16 %v478
    %v2687 = vunpack.c.l.b16 %v479
    %v2688 = vunpack.c.h.b16 %v479
    %v2689 = vunpack.c.l.b16 %v480
    %v2690 = vunpack.c.h.b16 %v480
    %v2691 = vunpack.c.l.b16 %v481
    %v2692 = vunpack.c.h.b16 %v481
    %v2693 = vunpack.c.l.b16 %v482
    %v2694 = vunpack.c.h.b16 %v482
    %v2695 = vunpack.c.l.b16 %v483
    %v2696 = vunpack.c.h.b16 %v483
    %v2697 = vunpack.c.l.b16 %v484
    %v2698 = vunpack.c.h.b16 %v484
    %v2699 = vunpack.c.l.b16 %v485
    %v2700 = vunpack.c.h.b16 %v485
    %v2701 = vunpack.c.l.b16 %v486
    %v2702 = vunpack.c.h.b16 %v486
    %v2703 = vunpack.c.l.b16 %v487
    %v2704 = vunpack.c.h.b16 %v487
    %v2705 = vunpack.c.l.b16 %v488
    %v2706 = vunpack.c.h.b16 %v488
    %v2707 = vunpack.c.l.b16 %v489
    %v2708 = vunpack.c.h.b16 %v489
    %v2709 = vunpack.c.l.b16 %v490
    %v2710 = vunpack.c.h.b16 %v490
    %v2711 = vunpack.c.l.b16 %v491
    %v2712 = vunpack.c.h.b16 %v491
    %v2713 = vunpack.c.l.b16 %v492
    %v2714 = vunpack.c.h.b16 %v492
    %v2715 = vunpack.c.l.b16 %v493
    %v2716 = vunpack.c.h.b16 %v493
    %v2717 = vunpack.c.l.b16 %v494
    %v2718 = vunpack.c.h.b16 %v494
    %v2719 = vunpack.c.l.b16 %v495
    %v2720 = vunpack.c.h.b16 %v495
    %v2721 = vunpack.c.l.b16 %v496
    %v2722 = vunpack.c.h.b16 %v496
    %v2723 = vunpack.c.l.b16 %v497
    %v2724 = vunpack.c.h.b16 %v497
    %v2725 = vunpack.c.l.b16 %v498
    %v2726 = vunpack.c.h.b16 %v498
    %v2727 = vunpack.c.l.b16 %v499
    %v2728 = vunpack.c.h.b16 %v499
    %v2729 = vunpack.c.l.b16 %v500
    %v2730 = vunpack.c.h.b16 %v500
    %v2731 = vunpack.c.l.b16 %v501
    %v2732 = vunpack.c.h.b16 %v501
    %v2733 = vunpack.c.l.b16 %v502
    %v2734 = vunpack.c.h.b16 %v502
    %v2735 = vunpack.c.l.b16 %v503
    %v2736 = vunpack.c.h.b16 %v503
    %v2737 = vunpack.c.l.b16 %v504
    %v2738 = vunpack.c.h.b16 %v504
    %v2739 = vunpack.c.l.b16 %v505
    %v2740 = vunpack.c.h.b16 %v505
    %v2741 = vunpack.c.l.b16 %v506
    %v2742 = vunpack.c.h.b16 %v506
    %v2743 = vunpack.c.l.b16 %v507
    %v2744 = vunpack.c.h.b16 %v507
    %v2745 = vunpack.c.l.b16 %v508
    %v2746 = vunpack.c.h.b16 %v508
    %v2747 = vunpack.c.l.b16 %v509
    %v2748 = vunpack.c.h.b16 %v509
    %v2749 = vunpack.c.l.b16 %v510
    %v2750 = vunpack.c.h.b16 %v510
    %v2751 = vunpack.c.l.b16 %v511
    %v2752 = vunpack.c.h.b16 %v511
    %v2753 = vunpack.c.l.b16 %v512
    %v2754 = vunpack.c.h.b16 %v512
    %v2755 = vunpack.c.l.b16 %v513
    %v2756 = vunpack.c.h.b16 %v513
    %v2757 = vunpack.c.l.b16 %v514
    %v2758 = vunpack.c.h.b16 %v514
    %v2759 = vunpack.c.l.b16 %v515
    %v2760 = vunpack.c.h.b16 %v515
    %v2761 = vunpack.c.l.b16 %v516
    %v2762 = vunpack.c.h.b16 %v516
    %v2763 = vunpack.c.l.b16 %v517
    %v2764 = vunpack.c.h.b16 %v517
    %v2765 = vunpack.c.l.b16 %v518
    %v2766 = vunpack.c.h.b16 %v518
    %v2767 = vunpack.c.l.b16 %v519
    %v2768 = vunpack.c.h.b16 %v519
    %v2769 = vunpack.c.l.b16 %v520
    %v2770 = vunpack.c.h.b16 %v520
    %v2771 = vunpack.c.l.b16 %v521
    %v2772 = vunpack.c.h.b16 %v521
    %v2773 = vunpack.c.l.b16 %v522
    %v2774 = vunpack.c.h.b16 %v522
    %v2775 = vunpack.c.l.b16 %v523
    %v2776 = vunpack.c.h.b16 %v523
    %v2777 = vunpack.c.l.b16 %v524
    %v2778 = vunpack.c.h.b16 %v524
    %v2779 = vunpack.c.l.b16 %v525
    %v2780 = vunpack.c.h.b16 %v525
    %v2781 = vunpack.c.l.b16 %v526
    %v2782 = vunpack.c.h.b16 %v526
    %v2783 = vunpack.c.l.b16 %v527
    %v2784 = vunpack.c.h.b16 %v527
    %v2785 = vunpack.c.l.b16 %v528
    %v2786 = vunpack.c.h.b16 %v528
    %v2787 = vunpack.c.l.b16 %v529
    %v2788 = vunpack.c.h.b16 %v529
    %v2789 = vunpack.c.l.b16 %v530
    %v2790 = vunpack.c.h.b16 %v530
    %v2791 = vunpack.c.l.b16 %v531
    %v2792 = vunpack.c.h.b16 %v531
    %v2793 = vunpack.c.l.b16 %v532
    %v2794 = vunpack.c.h.b16 %v532
    %v2795 = vunpack.c.l.b16 %v533
    %v2796 = vunpack.c.h.b16 %v533
    %v2797 = vunpack.c.l.b16 %v534
    %v2798 = vunpack.c.h.b16 %v534
    %v2799 = vunpack.c.l.b16 %v535
    %v2800 = vunpack.c.h.b16 %v535
    %v2801 = vunpack.c.l.b16 %v536
    %v2802 = vunpack.c.h.b16 %v536
    %v2803 = vunpack.c.l.b16 %v537
    %v2804 = vunpack.c.h.b16 %v537
    %v2805 = vunpack.c.l.b16 %v538
    %v2806 = vunpack.c.h.b16 %v538
    %v2807 = vunpack.c.l.b16 %v539
    %v2808 = vunpack.c.h.b16 %v539
    %v2809 = vunpack.c.l.b16 %v540
    %v2810 = vunpack.c.h.b16 %v540
    %v2811 = vunpack.c.l.b16 %v541
    %v2812 = vunpack.c.h.b16 %v541
    %v2813 = vunpack.c.l.b16 %v542
    %v2814 = vunpack.c.h.b16 %v542
    %v2815 = vunpack.c.l.b16 %v543
    %v2816 = vunpack.c.h.b16 %v543
    %v2817 = vunpack.c.l.b16 %v544
    %v2818 = vunpack.c.h.b16 %v544
    %v2819 = vunpack.c.l.b16 %v545
    %v2820 = vunpack.c.h.b16 %v545
    %v2821 = vunpack.c.l.b16 %v546
    %v2822 = vunpack.c.h.b16 %v546
    %v2823 = vunpack.c.l.b16 %v547
    %v2824 = vunpack.c.h.b16 %v547
    %v2825 = vunpack.c.l.b16 %v548
    %v2826 = vunpack.c.h.b16 %v548
    %v2827 = vunpack.c.l.b16 %v549
    %v2828 = vunpack.c.h.b16 %v549
    %v2829 = vunpack.c.l.b16 %v550
    %v2830 = vunpack.c.h.b16 %v550
    %v2831 = vunpack.c.l.b16 %v551
    %v2832 = vunpack.c.h.b16 %v551
    %v2833 = vunpack.c.l.b16 %v552
    %v2834 = vunpack.c.h.b16 %v552
    %v2835 = vunpack.c.l.b16 %v553
    %v2836 = vunpack.c.h.b16 %v553
    %v2837 = vunpack.c.l.b16 %v554
    %v2838 = vunpack.c.h.b16 %v554
    %v2839 = vunpack.c.l.b16 %v555
    %v2840 = vunpack.c.h.b16 %v555
    %v2841 = vunpack.c.l.b16 %v556
    %v2842 = vunpack.c.h.b16 %v556
    %v2843 = vunpack.c.l.b16 %v557
    %v2844 = vunpack.c.h.b16 %v557
    %v2845 = vunpack.c.l.b16 %v558
    %v2846 = vunpack.c.h.b16 %v558
    %v2847 = vunpack.c.l.b16 %v559
    %v2848 = vunpack.c.h.b16 %v559
    %v2849 = vunpack.c.l.b16 %v560
    %v2850 = vunpack.c.h.b16 %v560
    %v2851 = vunpack.c.l.b16 %v561
    %v2852 = vunpack.c.h.b16 %v561
    %v2853 = vunpack.c.l.b16 %v562
    %v2854 = vunpack.c.h.b16 %v562
    %v2855 = vunpack.c.l.b16 %v563
    %v2856 = vunpack.c.h.b16 %v563
    %v2857 = vunpack.c.l.b16 %v564
    %v2858 = vunpack.c.h.b16 %v564
    %v2859 = vunpack.c.l.b16 %v565
    %v2860 = vunpack.c.h.b16 %v565
    %v2861 = vunpack.c.l.b16 %v566
    %v2862 = vunpack.c.h.b16 %v566
    %v2863 = vunpack.c.l.b16 %v567
    %v2864 = vunpack.c.h.b16 %v567
    %v2865 = vunpack.c.l.b16 %v568
    %v2866 = vunpack.c.h.b16 %v568
    %v2867 = vunpack.c.l.b16 %v569
    %v2868 = vunpack.c.h.b16 %v569
    %v2869 = vunpack.c.l.b16 %v570
    %v2870 = vunpack.c.h.b16 %v570
    %v2871 = vunpack.c.l.b16 %v571
    %v2872 = vunpack.c.h.b16 %v571
    %v2873 = vunpack.c.l.b16 %v572
    %v2874 = vunpack.c.h.b16 %v572
    %v2875 = vunpack.c.l.b16 %v573
    %v2876 = vunpack.c.h.b16 %v573
    %v2877 = vunpack.c.l.b16 %v574
    %v2878 = vunpack.c.h.b16 %v574
    %v2879 = vunpack.c.l.b16 %v575
    %v2880 = vunpack.c.h.b16 %v575
    %v2881 = vunpack.c.l.b16 %v576
    %v2882 = vunpack.c.h.b16 %v576
    %v2883 = vunpack.c.l.b16 %v577
    %v2884 = vunpack.c.h.b16 %v577
    %v2885 = vunpack.c.l.b16 %v578
    %v2886 = vunpack.c.h.b16 %v578
    %v2887 = vunpack.c.l.b16 %v579
    %v2888 = vunpack.c.h.b16 %v579
    %v2889 = vunpack.c.l.b16 %v580
    %v2890 = vunpack.c.h.b16 %v580
    %v2891 = vunpack.c.l.b16 %v581
    %v2892 = vunpack.c.h.b16 %v581
    %v2893 = vunpack.c.l.b16 %v582
    %v2894 = vunpack.c.h.b16 %v582
    %v2895 = vunpack.c.l.b16 %v583
    %v2896 = vunpack.c.h.b16 %v583
    %v2897 = vunpack.c.l.b16 %v584
    %v2898 = vunpack.c.h.b16 %v584
    %v2899 = vunpack.c.l.b16 %v585
    %v2900 = vunpack.c.h.b16 %v585
    %v2901 = vunpack.c.l.b16 %v586
    %v2902 = vunpack.c.h.b16 %v586
    %v2903 = vunpack.c.l.b16 %v587
    %v2904 = vunpack.c.h.b16 %v587
    %v2905 = vunpack.c.l.b16 %v588
    %v2906 = vunpack.c.h.b16 %v588
    %v2907 = vunpack.c.l.b16 %v589
    %v2908 = vunpack.c.h.b16 %v589
    %v2909 = vunpack.c.l.b16 %v590
    %v2910 = vunpack.c.h.b16 %v590
    %v2911 = vunpack.c.l.b16 %v591
    %v2912 = vunpack.c.h.b16 %v591
    %v2913 = vunpack.c.l.b16 %v592
    %v2914 = vunpack.c.h.b16 %v592
    %v2915 = vunpack.c.l.b16 %v593
    %v2916 = vunpack.c.h.b16 %v593
    %v2917 = vunpack.c.l.b16 %v594
    %v2918 = vunpack.c.h.b16 %v594
    %v2919 = vunpack.c.l.b16 %v595
    %v2920 = vunpack.c.h.b16 %v595
    %v2921 = vunpack.c.l.b16 %v596
    %v2922 = vunpack.c.h.b16 %v596
    %v2923 = vunpack.c.l.b16 %v597
    %v2924 = vunpack.c.h.b16 %v597
    %v2925 = vunpack.c.l.b16 %v598
    %v2926 = vunpack.c.h.b16 %v598
    %v2927 = vunpack.c.l.b16 %v599
    %v2928 = vunpack.c.h.b16 %v599
    %v2929 = vunpack.c.l.b16 %v600
    %v2930 = vunpack.c.h.b16 %v600
    %v2931 = vunpack.c.l.b16 %v601
    %v2932 = vunpack.c.h.b16 %v601
    %v2933 = vunpack.c.l.b16 %v602
    %v2934 = vunpack.c.h.b16 %v602
    %v2935 = vunpack.c.l.b16 %v603
    %v2936 = vunpack.c.h.b16 %v603
    %v2937 = vunpack.c.l.b16 %v604
    %v2938 = vunpack.c.h.b16 %v604
    %v2939 = vunpack.c.l.b16 %v605
    %v2940 = vunpack.c.h.b16 %v605
    %v2941 = vunpack.c.l.b16 %v606
    %v2942 = vunpack.c.h.b16 %v606
    %v2943 = vunpack.c.l.b16 %v607
    %v2944 = vunpack.c.h.b16 %v607
    %v2945 = vunpack.c.l.b16 %v608
    %v2946 = vunpack.c.h.b16 %v608
    %v2947 = vunpack.c.l.b16 %v609
    %v2948 = vunpack.c.h.b16 %v609
    %v2949 = vunpack.c.l.b16 %v610
    %v2950 = vunpack.c.h.b16 %v610
    %v2951 = vunpack.c.l.b16 %v611
    %v2952 = vunpack.c.h.b16 %v611
    %v2953 = vunpack.c.l.b16 %v612
    %v2954 = vunpack.c.h.b16 %v612
    %v2955 = vunpack.c.l.b16 %v613
    %v2956 = vunpack.c.h.b16 %v613
    %v2957 = vunpack.c.l.b16 %v614
    %v2958 = vunpack.c.h.b16 %v614
    %v2959 = vunpack.c.l.b16 %v615
    %v2960 = vunpack.c.h.b16 %v615
    %v2961 = vunpack.c.l.b16 %v616
    %v2962 = vunpack.c.h.b16 %v616
    %v2963 = vunpack.c.l.b16 %v617
    %v2964 = vunpack.c.h.b16 %v617
    %v2965 = vunpack.c.l.b16 %v618
    %v2966 = vunpack.c.h.b16 %v618
    %v2967 = vunpack.c.l.b16 %v619
    %v2968 = vunpack.c.h.b16 %v619
    %v2969 = vunpack.c.l.b16 %v620
    %v2970 = vunpack.c.h.b16 %v620
    %v2971 = vunpack.c.l.b16 %v621
    %v2972 = vunpack.c.h.b16 %v621
    %v2973 = vunpack.c.l.b16 %v622
    %v2974 = vunpack.c.h.b16 %v622
    %v2975 = vunpack.c.l.b16 %v623
    %v2976 = vunpack.c.h.b16 %v623
    %v2977 = vunpack.c.l.b16 %v624
    %v2978 = vunpack.c.h.b16 %v624
    %v2979 = vunpack.c.l.b16 %v625
    %v2980 = vunpack.c.h.b16 %v625
    %v2981 = vunpack.c.l.b16 %v626
    %v2982 = vunpack.c.h.b16 %v626
    %v2983 = vunpack.c.l.b16 %v627
    %v2984 = vunpack.c.h.b16 %v627
    %v2985 = vunpack.c.l.b16 %v628
    %v2986 = vunpack.c.h.b16 %v628
    %v2987 = vunpack.c.l.b16 %v629
    %v2988 = vunpack.c.h.b16 %v629
    %v2989 = vunpack.c.l.b16 %v630
    %v2990 = vunpack.c.h.b16 %v630
    %v2991 = vunpack.c.l.b16 %v631
    %v2992 = vunpack.c.h.b16 %v631
    %v2993 = vunpack.c.l.b16 %v632
    %v2994 = vunpack.c.h.b16 %v632
    %v2995 = vunpack.c.l.b16 %v633
    %v2996 = vunpack.c.h.b16 %v633
    %v2997 = vunpack.c.l.b16 %v634
    %v2998 = vunpack.c.h.b16 %v634
    %v2999 = vunpack.c.l.b16 %v635
    %v3000 = vunpack.c.h.b16 %v635
    %v3001 = vunpack.c.l.b16 %v636
    %v3002 = vunpack.c.h.b16 %v636
    %v3003 = vunpack.c.l.b16 %v637
    %v3004 = vunpack.c.h.b16 %v637
    %v3005 = vunpack.c.l.b16 %v638
    %v3006 = vunpack.c.h.b16 %v638
    %v3007 = vunpack.c.l.b16 %v639
    %v3008 = vunpack.c.h.b16 %v639
    %v3009 = vunpack.c.l.b16 %v640
    %v3010 = vunpack.c.h.b16 %v640
    %v3011 = vunpack.c.l.b16 %v641
    %v3012 = vunpack.c.h.b16 %v641
    %v3013 = vunpack.c.l.b16 %v642
    %v3014 = vunpack.c.h.b16 %v642
    %v3015 = vunpack.c.l.b16 %v643
    %v3016 = vunpack.c.h.b16 %v643
    %v3017 = vunpack.c.l.b16 %v644
    %v3018 = vunpack.c.h.b16 %v644
    %v3019 = vunpack.c.l.b16 %v645
    %v3020 = vunpack.c.h.b16 %v645
    %v3021 = vunpack.c.l.b16 %v646
    %v3022 = vunpack.c.h.b16 %v646
    %v3023 = vunpack.c.l.b16 %v647
    %v3024 = vunpack.c.h.b16 %v647
    %v3025 = vunpack.c.l.b16 %v648
    %v3026 = vunpack.c.h.b16 %v648
    %v3027 = vunpack.c.l.b16 %v649
    %v3028 = vunpack.c.h.b16 %v649
    %v3029 = vunpack.c.l.b16 %v650
    %v3030 = vunpack.c.h.b16 %v650
    %v3031 = vunpack.c.l.b16 %v651
    %v3032 = vunpack.c.h.b16 %v651
    %v3033 = vunpack.c.l.b16 %v652
    %v3034 = vunpack.c.h.b16 %v652
    %v3035 = vunpack.c.l.b16 %v653
    %v3036 = vunpack.c.h.b16 %v653
    %v3037 = vunpack.c.l.b16 %v654
    %v3038 = vunpack.c.h.b16 %v654
    %v3039 = vunpack.c.l.b16 %v655
    %v3040 = vunpack.c.h.b16 %v655
    %v3041 = vunpack.c.l.b16 %v656
    %v3042 = vunpack.c.h.b16 %v656
    %v3043 = vunpack.c.l.b16 %v657
    %v3044 = vunpack.c.h.b16 %v657
    %v3045 = vunpack.c.l.b16 %v658
    %v3046 = vunpack.c.h.b16 %v658
    %v3047 = vunpack.c.l.b16 %v659
    %v3048 = vunpack.c.h.b16 %v659
    %v3049 = vunpack.c.l.b16 %v660
    %v3050 = vunpack.c.h.b16 %v660
    %v3051 = vunpack.c.l.b16 %v661
    %v3052 = vunpack.c.h.b16 %v661
    %v3053 = vunpack.c.l.b16 %v662
    %v3054 = vunpack.c.h.b16 %v662
    %v3055 = vunpack.c.l.b16 %v663
    %v3056 = vunpack.c.h.b16 %v663
    %v3057 = vunpack.c.l.b16 %v664
    %v3058 = vunpack.c.h.b16 %v664
    %v3059 = vunpack.c.l.b16 %v665
    %v3060 = vunpack.c.h.b16 %v665
    %v3061 = vunpack.c.l.b16 %v666
    %v3062 = vunpack.c.h.b16 %v666
    %v3063 = vunpack.c.l.b16 %v667
    %v3064 = vunpack.c.h.b16 %v667
    %v3065 = vunpack.c.l.b16 %v668
    %v3066 = vunpack.c.h.b16 %v668
    %v3067 = vunpack.c.l.b16 %v669
    %v3068 = vunpack.c.h.b16 %v669
    %v3069 = vunpack.c.l.b16 %v670
    %v3070 = vunpack.c.h.b16 %v670
    %v3071 = vunpack.c.l.b16 %v671
    %v3072 = vunpack.c.h.b16 %v671
    %v3073 = vunpack.c.l.b16 %v672
    %v3074 = vunpack.c.h.b16 %v672
    %v3075 = vunpack.c.l.b16 %v673
    %v3076 = vunpack.c.h.b16 %v673
    %v3077 = vunpack.c.l.b16 %v674
    %v3078 = vunpack.c.h.b16 %v674
    %v3079 = vunpack.c.l.b16 %v675
    %v3080 = vunpack.c.h.b16 %v675
    %v3081 = vunpack.c.l.b16 %v676
    %v3082 = vunpack.c.h.b16 %v676
    %v3083 = vunpack.c.l.b16 %v677
    %v3084 = vunpack.c.h.b16 %v677
    %v3085 = vunpack.c.l.b16 %v678
    %v3086 = vunpack.c.h.b16 %v678
    %v3087 = vunpack.c.l.b16 %v679
    %v3088 = vunpack.c.h.b16 %v679
    %v3089 = vunpack.c.l.b16 %v680
    %v3090 = vunpack.c.h.b16 %v680
    %v3091 = vunpack.c.l.b16 %v681
    %v3092 = vunpack.c.h.b16 %v681
    %v3093 = vunpack.c.l.b16 %v682
    %v3094 = vunpack.c.h.b16 %v682
    %v3095 = vunpack.c.l.b16 %v683
    %v3096 = vunpack.c.h.b16 %v683
    %v3097 = vunpack.c.l.b16 %v684
    %v3098 = vunpack.c.h.b16 %v684
    %v3099 = vunpack.c.l.b16 %v685
    %v3100 = vunpack.c.h.b16 %v685
    %v3101 = vunpack.c.l.b16 %v686
    %v3102 = vunpack.c.h.b16 %v686
    %v3103 = vunpack.c.l.b16 %v687
    %v3104 = vunpack.c.h.b16 %v687
    %v3105 = vunpack.c.l.b16 %v688
    %v3106 = vunpack.c.h.b16 %v688
    %v3107 = vunpack.c.l.b16 %v689
    %v3108 = vunpack.c.h.b16 %v689
    %v3109 = vunpack.c.l.b16 %v690
    %v3110 = vunpack.c.h.b16 %v690
    %v3111 = vunpack.c.l.b16 %v691
    %v3112 = vunpack.c.h.b16 %v691
    %v3113 = vunpack.c.l.b16 %v692
    %v3114 = vunpack.c.h.b16 %v692
    %v3115 = vunpack.c.l.b16 %v693
    %v3116 = vunpack.c.h.b16 %v693
    %v3117 = vunpack.c.l.b16 %v694
    %v3118 = vunpack.c.h.b16 %v694
    %v3119 = vunpack.c.l.b16 %v695
    %v3120 = vunpack.c.h.b16 %v695
    %v3121 = vunpack.c.l.b16 %v696
    %v3122 = vunpack.c.h.b16 %v696
    %v3123 = vunpack.c.l.b16 %v697
    %v3124 = vunpack.c.h.b16 %v697
    %v3125 = vunpack.c.l.b16 %v698
    %v3126 = vunpack.c.h.b16 %v698
    %v3127 = vunpack.c.l.b16 %v699
    %v3128 = vunpack.c.h.b16 %v699
    %v3129 = vunpack.c.l.b16 %v700
    %v3130 = vunpack.c.h.b16 %v700
    %v3131 = vunpack.c.l.b16 %v701
    %v3132 = vunpack.c.h.b16 %v701
    %v3133 = vunpack.c.l.b16 %v702
    %v3134 = vunpack.c.h.b16 %v702
    %v3135 = vunpack.c.l.b16 %v703
    %v3136 = vunpack.c.h.b16 %v703
    %v3137 = vunpack.c.l.b16 %v704
    %v3138 = vunpack.c.h.b16 %v704
    %v3139 = vunpack.c.l.b16 %v705
    %v3140 = vunpack.c.h.b16 %v705
    %v3141 = vunpack.c.l.b16 %v706
    %v3142 = vunpack.c.h.b16 %v706
    %v3143 = vunpack.c.l.b16 %v707
    %v3144 = vunpack.c.h.b16 %v707
    %v3145 = vunpack.c.l.b16 %v708
    %v3146 = vunpack.c.h.b16 %v708
    %v3147 = vunpack.c.l.b16 %v709
    %v3148 = vunpack.c.h.b16 %v709
    %v3149 = vunpack.c.l.b16 %v710
    %v3150 = vunpack.c.h.b16 %v710
    %v3151 = vunpack.c.l.b16 %v711
    %v3152 = vunpack.c.h.b16 %v711
    %v3153 = vunpack.c.l.b16 %v712
    %v3154 = vunpack.c.h.b16 %v712
    %v3155 = vunpack.c.l.b16 %v713
    %v3156 = vunpack.c.h.b16 %v713
    %v3157 = vunpack.c.l.b16 %v714
    %v3158 = vunpack.c.h.b16 %v714
    %v3159 = vunpack.c.l.b16 %v715
    %v3160 = vunpack.c.h.b16 %v715
    %v3161 = vunpack.c.l.b16 %v716
    %v3162 = vunpack.c.h.b16 %v716
    %v3163 = vunpack.c.l.b16 %v717
    %v3164 = vunpack.c.h.b16 %v717
    %v3165 = vunpack.c.l.b16 %v718
    %v3166 = vunpack.c.h.b16 %v718
    %v3167 = vunpack.c.l.b16 %v719
    %v3168 = vunpack.c.h.b16 %v719
    %v3169 = vunpack.c.l.b16 %v720
    %v3170 = vunpack.c.h.b16 %v720
    %v3171 = vunpack.c.l.b16 %v721
    %v3172 = vunpack.c.h.b16 %v721
    %v3173 = vunpack.c.l.b16 %v722
    %v3174 = vunpack.c.h.b16 %v722
    %v3175 = vunpack.c.l.b16 %v723
    %v3176 = vunpack.c.h.b16 %v723
    %v3177 = vunpack.c.l.b16 %v724
    %v3178 = vunpack.c.h.b16 %v724
    %v3179 = vunpack.c.l.b16 %v725
    %v3180 = vunpack.c.h.b16 %v725
    %v3181 = vunpack.c.l.b16 %v726
    %v3182 = vunpack.c.h.b16 %v726
    %v3183 = vunpack.c.l.b16 %v727
    %v3184 = vunpack.c.h.b16 %v727
    %v3185 = vunpack.c.l.b16 %v728
    %v3186 = vunpack.c.h.b16 %v728
    %v3187 = vunpack.c.l.b16 %v729
    %v3188 = vunpack.c.h.b16 %v729
    %v3189 = vunpack.c.l.b16 %v730
    %v3190 = vunpack.c.h.b16 %v730
    %v3191 = vunpack.c.l.b16 %v731
    %v3192 = vunpack.c.h.b16 %v731
    %v3193 = vunpack.c.l.b16 %v732
    %v3194 = vunpack.c.h.b16 %v732
    %v3195 = vunpack.c.l.b16 %v733
    %v3196 = vunpack.c.h.b16 %v733
    %v3197 = vunpack.c.l.b16 %v734
    %v3198 = vunpack.c.h.b16 %v734
    %v3199 = vunpack.c.l.b16 %v735
    %v3200 = vunpack.c.h.b16 %v735
    %v3201 = vunpack.c.l.b16 %v736
    %v3202 = vunpack.c.h.b16 %v736
    %v3203 = vunpack.c.l.b16 %v737
    %v3204 = vunpack.c.h.b16 %v737
    %v3205 = vunpack.c.l.b16 %v738
    %v3206 = vunpack.c.h.b16 %v738
    %v3207 = vunpack.c.l.b16 %v739
    %v3208 = vunpack.c.h.b16 %v739
    %v3209 = vunpack.c.l.b16 %v740
    %v3210 = vunpack.c.h.b16 %v740
    %v3211 = vunpack.c.l.b16 %v741
    %v3212 = vunpack.c.h.b16 %v741
    %v3213 = vunpack.c.l.b16 %v742
    %v3214 = vunpack.c.h.b16 %v742
    %v3215 = vunpack.c.l.b16 %v743
    %v3216 = vunpack.c.h.b16 %v743
    %v3217 = vunpack.c.l.b16 %v744
    %v3218 = vunpack.c.h.b16 %v744
    %v3219 = vunpack.c.l.b16 %v745
    %v3220 = vunpack.c.h.b16 %v745
    %v3221 = vunpack.c.l.b16 %v746
    %v3222 = vunpack.c.h.b16 %v746
    %v3223 = vunpack.c.l.b16 %v747
    %v3224 = vunpack.c.h.b16 %v747
    %v3225 = vunpack.c.l.b16 %v748
    %v3226 = vunpack.c.h.b16 %v748
    %v3227 = vunpack.c.l.b16 %v749
    %v3228 = vunpack.c.h.b16 %v749
    %v3229 = vunpack.c.l.b16 %v750
    %v3230 = vunpack.c.h.b16 %v750
    %v3231 = vunpack.c.l.b16 %v751
    %v3232 = vunpack.c.h.b16 %v751
    %v3233 = vunpack.c.l.b16 %v752
    %v3234 = vunpack.c.h.b16 %v752
    %v3235 = vunpack.c.l.b16 %v753
    %v3236 = vunpack.c.h.b16 %v753
    %v3237 = vunpack.c.l.b16 %v754
    %v3238 = vunpack.c.h.b16 %v754
    %v3239 = vunpack.c.l.b16 %v755
    %v3240 = vunpack.c.h.b16 %v755
    %v3241 = vunpack.c.l.b16 %v756
    %v3242 = vunpack.c.h.b16 %v756
    %v3243 = vunpack.c.l.b16 %v757
    %v3244 = vunpack.c.h.b16 %v757
    %v3245 = vunpack.c.l.b16 %v758
    %v3246 = vunpack.c.h.b16 %v758
    %v3247 = vunpack.c.l.b16 %v759
    %v3248 = vunpack.c.h.b16 %v759
    %v3249 = vunpack.c.l.b16 %v760
    %v3250 = vunpack.c.h.b16 %v760
    %v3251 = vunpack.c.l.b16 %v761
    %v3252 = vunpack.c.h.b16 %v761
    %v3253 = vunpack.c.l.b16 %v762
    %v3254 = vunpack.c.h.b16 %v762
    %v3255 = vunpack.c.l.b16 %v763
    %v3256 = vunpack.c.h.b16 %v763
    %v3257 = vunpack.c.l.b16 %v764
    %v3258 = vunpack.c.h.b16 %v764
    %v3259 = vunpack.c.l.b16 %v765
    %v3260 = vunpack.c.h.b16 %v765
    %v3261 = vunpack.c.l.b16 %v766
    %v3262 = vunpack.c.h.b16 %v766
    %v3263 = vunpack.c.l.b16 %v767
    %v3264 = vunpack.c.h.b16 %v767
    %v3265 = vunpack.c.l.b16 %v768
    %v3266 = vunpack.c.h.b16 %v768
    %v3267 = vunpack.c.l.b16 %v769
    %v3268 = vunpack.c.h.b16 %v769
    %v3269 = vunpack.c.l.b16 %v770
    %v3270 = vunpack.c.h.b16 %v770
    %v3271 = vunpack.c.l.b16 %v771
    %v3272 = vunpack.c.h.b16 %v771
    %v3273 = vunpack.c.l.b16 %v772
    %v3274 = vunpack.c.h.b16 %v772
    %v3275 = vunpack.c.l.b16 %v773
    %v3276 = vunpack.c.h.b16 %v773
    %v3277 = vunpack.c.l.b16 %v774
    %v3278 = vunpack.c.h.b16 %v774
    %v3279 = vunpack.c.l.b16 %v775
    %v3280 = vunpack.c.h.b16 %v775
    %v3281 = vunpack.c.l.b16 %v776
    %v3282 = vunpack.c.h.b16 %v776
    %v3283 = vunpack.c.l.b16 %v777
    %v3284 = vunpack.c.h.b16 %v777
    %v3285 = vunpack.c.l.b16 %v778
    %v3286 = vunpack.c.h.b16 %v778
    %v3287 = vunpack.c.l.b16 %v779
    %v3288 = vunpack.c.h.b16 %v779
    %v3289 = vunpack.c.l.b16 %v780
    %v3290 = vunpack.c.h.b16 %v780
    %v3291 = vunpack.c.l.b16 %v781
    %v3292 = vunpack.c.h.b16 %v781
    %v3293 = vunpack.c.l.b16 %v782
    %v3294 = vunpack.c.h.b16 %v782
    %v3295 = vunpack.c.l.b16 %v783
    %v3296 = vunpack.c.h.b16 %v783
    %v3297 = vunpack.c.l.b16 %v784
    %v3298 = vunpack.c.h.b16 %v784
    %v3299 = vunpack.c.l.b16 %v785
    %v3300 = vunpack.c.h.b16 %v785
    %v3301 = vunpack.c.l.b16 %v786
    %v3302 = vunpack.c.h.b16 %v786
    %v3303 = vunpack.c.l.b16 %v787
    %v3304 = vunpack.c.h.b16 %v787
    %v3305 = vunpack.c.l.b16 %v788
    %v3306 = vunpack.c.h.b16 %v788
    %v3307 = vunpack.c.l.b16 %v789
    %v3308 = vunpack.c.h.b16 %v789
    %v3309 = vunpack.c.l.b16 %v790
    %v3310 = vunpack.c.h.b16 %v790
    %v3311 = vunpack.c.l.b16 %v791
    %v3312 = vunpack.c.h.b16 %v791
    %v3313 = vunpack.c.l.b16 %v792
    %v3314 = vunpack.c.h.b16 %v792
    %v3315 = vunpack.c.l.b16 %v793
    %v3316 = vunpack.c.h.b16 %v793
    %v3317 = vunpack.c.l.b16 %v794
    %v3318 = vunpack.c.h.b16 %v794
    %v3319 = vunpack.c.l.b16 %v795
    %v3320 = vunpack.c.h.b16 %v795
    %v3321 = vunpack.c.l.b16 %v796
    %v3322 = vunpack.c.h.b16 %v796
    %v3323 = vunpack.c.l.b16 %v797
    %v3324 = vunpack.c.h.b16 %v797
    %v3325 = vunpack.c.l.b16 %v798
    %v3326 = vunpack.c.h.b16 %v798
    %v3327 = vunpack.c.l.b16 %v799
    %v3328 = vunpack.c.h.b16 %v799
    %v3329 = vunpack.c.l.b16 %v800
    %v3330 = vunpack.c.h.b16 %v800
    %v3331 = vunpack.c.l.b16 %v801
    %v3332 = vunpack.c.h.b16 %v801
    %v3333 = vunpack.c.l.b16 %v802
    %v3334 = vunpack.c.h.b16 %v802
    %v3335 = vunpack.c.l.b16 %v803
    %v3336 = vunpack.c.h.b16 %v803
    %v3337 = vunpack.c.l.b16 %v804
    %v3338 = vunpack.c.h.b16 %v804
    %v3339 = vunpack.c.l.b16 %v805
    %v3340 = vunpack.c.h.b16 %v805
    %v3341 = vunpack.c.l.b16 %v806
    %v3342 = vunpack.c.h.b16 %v806
    %v3343 = vunpack.c.l.b16 %v807
    %v3344 = vunpack.c.h.b16 %v807
    %v3345 = vunpack.c.l.b16 %v808
    %v3346 = vunpack.c.h.b16 %v808
    %v3347 = vunpack.c.l.b16 %v809
    %v3348 = vunpack.c.h.b16 %v809
    %v3349 = vunpack.c.l.b16 %v810
    %v3350 = vunpack.c.h.b16 %v810
    %v3351 = vunpack.c.l.b16 %v811
    %v3352 = vunpack.c.h.b16 %v811
    %v3353 = vunpack.c.l.b16 %v812
    %v3354 = vunpack.c.h.b16 %v812
    %v3355 = vunpack.c.l.b16 %v813
    %v3356 = vunpack.c.h.b16 %v813
    %v3357 = vunpack.c.l.b16 %v814
    %v3358 = vunpack.c.h.b16 %v814
    %v3359 = vunpack.c.l.b16 %v815
    %v3360 = vunpack.c.h.b16 %v815
    %v3361 = vunpack.c.l.b16 %v816
    %v3362 = vunpack.c.h.b16 %v816
    %v3363 = vunpack.c.l.b16 %v817
    %v3364 = vunpack.c.h.b16 %v817
    %v3365 = vunpack.c.l.b16 %v818
    %v3366 = vunpack.c.h.b16 %v818
    %v3367 = vunpack.c.l.b16 %v819
    %v3368 = vunpack.c.h.b16 %v819
    %v3369 = vunpack.c.l.b16 %v820
    %v3370 = vunpack.c.h.b16 %v820
    %v3371 = vunpack.c.l.b16 %v821
    %v3372 = vunpack.c.h.b16 %v821
    %v3373 = vunpack.c.l.b16 %v822
    %v3374 = vunpack.c.h.b16 %v822
    %v3375 = vunpack.c.l.b16 %v823
    %v3376 = vunpack.c.h.b16 %v823
    %v3377 = vunpack.c.l.b16 %v824
    %v3378 = vunpack.c.h.b16 %v824
    %v3379 = vunpack.c.l.b16 %v825
    %v3380 = vunpack.c.h.b16 %v825
    %v3381 = vunpack.c.l.b16 %v826
    %v3382 = vunpack.c.h.b16 %v826
    %v3383 = vunpack.c.l.b16 %v827
    %v3384 = vunpack.c.h.b16 %v827
    %v3385 = vunpack.c.l.b16 %v828
    %v3386 = vunpack.c.h.b16 %v828
    %v3387 = vunpack.c.l.b16 %v829
    %v3388 = vunpack.c.h.b16 %v829
    %v3389 = vunpack.c.l.b16 %v830
    %v3390 = vunpack.c.h.b16 %v830
    %v3391 = vunpack.c.l.b16 %v831
    %v3392 = vunpack.c.h.b16 %v831
    %v3393 = vunpack.c.l.b16 %v832
    %v3394 = vunpack.c.h.b16 %v832
    %v3395 = vunpack.c.l.b16 %v833
    %v3396 = vunpack.c.h.b16 %v833
    %v3397 = vunpack.c.l.b16 %v834
    %v3398 = vunpack.c.h.b16 %v834
    %v3399 = vunpack.c.l.b16 %v835
    %v3400 = vunpack.c.h.b16 %v835
    %v3401 = vunpack.c.l.b16 %v836
    %v3402 = vunpack.c.h.b16 %v836
    %v3403 = vunpack.c.l.b16 %v837
    %v3404 = vunpack.c.h.b16 %v837
    %v3405 = vunpack.c.l.b16 %v838
    %v3406 = vunpack.c.h.b16 %v838
    %v3407 = vunpack.c.l.b16 %v839
    %v3408 = vunpack.c.h.b16 %v839
    %v3409 = vunpack.c.l.b16 %v840
    %v3410 = vunpack.c.h.b16 %v840
    %v3411 = vunpack.c.l.b16 %v841
    %v3412 = vunpack.c.h.b16 %v841
    %v3413 = vunpack.c.l.b16 %v842
    %v3414 = vunpack.c.h.b16 %v842
    %v3415 = vunpack.c.l.b16 %v843
    %v3416 = vunpack.c.h.b16 %v843
    %v3417 = vunpack.c.l.b16 %v844
    %v3418 = vunpack.c.h.b16 %v844
    %v3419 = vunpack.c.l.b16 %v845
    %v3420 = vunpack.c.h.b16 %v845
    %v3421 = vunpack.c.l.b16 %v846
    %v3422 = vunpack.c.h.b16 %v846
    %v3423 = vunpack.c.l.b16 %v847
    %v3424 = vunpack.c.h.b16 %v847
    %v3425 = vunpack.c.l.b16 %v848
    %v3426 = vunpack.c.h.b16 %v848
    %v3427 = vunpack.c.l.b16 %v849
    %v3428 = vunpack.c.h.b16 %v849
    %v3429 = vunpack.c.l.b16 %v850
    %v3430 = vunpack.c.h.b16 %v850
    %v3431 = vunpack.c.l.b16 %v851
    %v3432 = vunpack.c.h.b16 %v851
    %v3433 = vunpack.c.l.b16 %v852
    %v3434 = vunpack.c.h.b16 %v852
    %v3435 = vunpack.c.l.b16 %v853
    %v3436 = vunpack.c.h.b16 %v853
    %v3437 = vunpack.c.l.b16 %v854
    %v3438 = vunpack.c.h.b16 %v854
    %v3439 = vunpack.c.l.b16 %v855
    %v3440 = vunpack.c.h.b16 %v855
    %v3441 = vunpack.c.l.b16 %v856
    %v3442 = vunpack.c.h.b16 %v856
    %v3443 = vunpack.c.l.b16 %v857
    %v3444 = vunpack.c.h.b16 %v857
    %v3445 = vunpack.c.l.b16 %v858
    %v3446 = vunpack.c.h.b16 %v858
    %v3447 = vunpack.c.l.b16 %v859
    %v3448 = vunpack.c.h.b16 %v859
    %v3449 = vunpack.c.l.b16 %v860
    %v3450 = vunpack.c.h.b16 %v860
    %v3451 = vunpack.c.l.b16 %v861
    %v3452 = vunpack.c.h.b16 %v861
    %v3453 = vunpack.c.l.b16 %v862
    %v3454 = vunpack.c.h.b16 %v862
    %v3455 = vunpack.c.l.b16 %v863
    %v3456 = vunpack.c.h.b16 %v863
    %v3457 = vunpack.c.l.b16 %v864
    %v3458 = vunpack.c.h.b16 %v864
    %v3459 = vunpack.c.l.b16 %v865
    %v3460 = vunpack.c.h.b16 %v865
    %v3461 = vunpack.c.l.b16 %v866
    %v3462 = vunpack.c.h.b16 %v866
    %v3463 = vunpack.c.l.b16 %v867
    %v3464 = vunpack.c.h.b16 %v867
    %v3465 = vunpack.c.l.b16 %v868
    %v3466 = vunpack.c.h.b16 %v868
    %v3467 = vunpack.c.l.b16 %v869
    %v3468 = vunpack.c.h.b16 %v869
    %v3469 = vunpack.c.l.b16 %v870
    %v3470 = vunpack.c.h.b16 %v870
    %v3471 = vunpack.c.l.b16 %v871
    %v3472 = vunpack.c.h.b16 %v871
    %v3473 = vunpack.c.l.b16 %v872
    %v3474 = vunpack.c.h.b16 %v872
    %v3475 = vunpack.c.l.b16 %v873
    %v3476 = vunpack.c.h.b16 %v873
    %v3477 = vunpack.c.l.b16 %v874
    %v3478 = vunpack.c.h.b16 %v874
    %v3479 = vunpack.c.l.b16 %v875
    %v3480 = vunpack.c.h.b16 %v875
    %v3481 = vunpack.c.l.b16 %v876
    %v3482 = vunpack.c.h.b16 %v876
    %v3483 = vunpack.c.l.b16 %v877
    %v3484 = vunpack.c.h.b16 %v877
    %v3485 = vunpack.c.l.b16 %v878
    %v3486 = vunpack.c.h.b16 %v878
    %v3487 = vunpack.c.l.b16 %v879
    %v3488 = vunpack.c.h.b16 %v879
    %v3489 = vunpack.c.l.b16 %v880
    %v3490 = vunpack.c.h.b16 %v880
    %v3491 = vunpack.c.l.b16 %v881
    %v3492 = vunpack.c.h.b16 %v881
    %v3493 = vunpack.c.l.b16 %v882
    %v3494 = vunpack.c.h.b16 %v882
    %v3495 = vunpack.c.l.b16 %v883
    %v3496 = vunpack.c.h.b16 %v883
    %v3497 = vunpack.c.l.b16 %v884
    %v3498 = vunpack.c.h.b16 %v884
    %v3499 = vpack.c.b16 %v2287, %v2283
    %v3500 = vpack.c.b16 %v2288, %v2284
    %v3501 = vpack.c.b16 %v2289, %v2285
    %v3502 = vpack.c.b16 %v2290, %v2286
    %v3503 = vpack.c.b16 %v2295, %v2291
    %v3504 = vpack.c.b16 %v2296, %v2292
    %v3505 = vpack.c.b16 %v2297, %v2293
    %v3506 = vpack.c.b16 %v2298, %v2294
    %v3507 = vpack.c.b16 %v2303, %v2299
    %v3508 = vpack.c.b16 %v2304, %v2300
    %v3509 = vpack.c.b16 %v2305, %v2301
    %v3510 = vpack.c.b16 %v2306, %v2302
    %v3511 = vpack.c.b16 %v2311, %v2307
    %v3512 = vpack.c.b16 %v2312, %v2308
    %v3513 = vpack.c.b16 %v2313, %v2309
    %v3514 = vpack.c.b16 %v2314, %v2310
    %v3515 = vpack.c.b16 %v2319, %v2315
    %v3516 = vpack.c.b16 %v2320, %v2316
    %v3517 = vpack.c.b16 %v2321, %v2317
    %v3518 = vpack.c.b16 %v2322, %v2318
    %v3519 = vpack.c.b16 %v2327, %v2323
    %v3520 = vpack.c.b16 %v2328, %v2324
    %v3521 = vpack.c.b16 %v2329, %v2325
    %v3522 = vpack.c.b16 %v2330, %v2326
    %v3523 = vpack.c.b16 %v2335, %v2331
    %v3524 = vpack.c.b16 %v2336, %v2332
    %v3525 = vpack.c.b16 %v2337, %v2333
    %v3526 = vpack.c.b16 %v2338, %v2334
    %v3527 = vpack.c.b16 %v2343, %v2339
    %v3528 = vpack.c.b16 %v2344, %v2340
    %v3529 = vpack.c.b16 %v2345, %v2341
    %v3530 = vpack.c.b16 %v2346, %v2342
    %v3531 = vpack.c.b16 %v2351, %v2347
    %v3532 = vpack.c.b16 %v2352, %v2348
    %v3533 = vpack.c.b16 %v2353, %v2349
    %v3534 = vpack.c.b16 %v2354, %v2350
    %v3535 = vpack.c.b16 %v2359, %v2355
    %v3536 = vpack.c.b16 %v2360, %v2356
    %v3537 = vpack.c.b16 %v2361, %v2357
    %v3538 = vpack.c.b16 %v2362, %v2358
    %v3539 = vpack.c.b16 %v2367, %v2363
    %v3540 = vpack.c.b16 %v2368, %v2364
    %v3541 = vpack.c.b16 %v2369, %v2365
    %v3542 = vpack.c.b16 %v2370, %v2366
    %v3543 = vpack.c.b16 %v2375, %v2371
    %v3544 = vpack.c.b16 %v2376, %v2372
    %v3545 = vpack.c.b16 %v2377, %v2373
    %v3546 = vpack.c.b16 %v2378, %v2374
    %v3547 = vpack.c.b16 %v2383, %v2379
    %v3548 = vpack.c.b16 %v2384, %v2380
    %v3549 = vpack.c.b16 %v2385, %v2381
    %v3550 = vpack.c.b16 %v2386, %v2382
    %v3551 = vpack.c.b16 %v2391, %v2387
    %v3552 = vpack.c.b16 %v2392, %v2388
    %v3553 = vpack.c.b16 %v2393, %v2389
    %v3554 = vpack.c.b16 %v2394, %v2390
    %v3555 = vpack.c.b16 %v2399, %v2395
    %v3556 = vpack.c.b16 %v2400, %v2396
    %v3557 = vpack.c.b16 %v2401, %v2397
    %v3558 = vpack.c.b16 %v2402, %v2398
    %v3559 = vpack.c.b16 %v2407, %v2403
    %v3560 = vpack.c.b16 %v2408, %v2404
    %v3561 = vpack.c.b16 %v2409, %v2405
    %v3562 = vpack.c.b16 %v2410, %v2406
    %v3563 = vpack.c.b16 %v2415, %v2411
    %v3564 = vpack.c.b16 %v2416, %v2412
    %v3565 = vpack.c.b16 %v2417, %v2413
    %v3566 = vpack.c.b16 %v2418, %v2414
    %v3567 = vpack.c.b16 %v2423, %v2419
    %v3568 = vpack.c.b16 %v2424, %v2420
    %v3569 = vpack.c.b16 %v2425, %v2421
    %v3570 = vpack.c.b16 %v2426, %v2422
    %v3571 = vpack.c.b16 %v2431, %v2427
    %v3572 = vpack.c.b16 %v2432, %v2428
    %v3573 = vpack.c.b16 %v2433, %v2429
    %v3574 = vpack.c.b16 %v2434, %v2430
    %v3575 = vpack.c.b16 %v2439, %v2435
    %v3576 = vpack.c.b16 %v2440, %v2436
    %v3577 = vpack.c.b16 %v2441, %v2437
    %v3578 = vpack.c.b16 %v2442, %v2438
    %v3579 = vpack.c.b16 %v2447, %v2443
    %v3580 = vpack.c.b16 %v2448, %v2444
    %v3581 = vpack.c.b16 %v2449, %v2445
    %v3582 = vpack.c.b16 %v2450, %v2446
    %v3583 = vpack.c.b16 %v2455, %v2451
    %v3584 = vpack.c.b16 %v2456, %v2452
    %v3585 = vpack.c.b16 %v2457, %v2453
    %v3586 = vpack.c.b16 %v2458, %v2454
    %v3587 = vpack.c.b16 %v2463, %v2459
    %v3588 = vpack.c.b16 %v2464, %v2460
    %v3589 = vpack.c.b16 %v2465, %v2461
    %v3590 = vpack.c.b16 %v2466, %v2462
    %v3591 = vpack.c.b16 %v2471, %v2467
    %v3592 = vpack.c.b16 %v2472, %v2468
    %v3593 = vpack.c.b16 %v2473, %v2469
    %v3594 = vpack.c.b16 %v2474, %v2470
    %v3595 = vpack.c.b16 %v2479, %v2475
    %v3596 = vpack.c.b16 %v2480, %v2476
    %v3597 = vpack.c.b16 %v2481, %v2477
    %v3598 = vpack.c.b16 %v2482, %v2478
    %v3599 = vpack.c.b16 %v2487, %v2483
    %v3600 = vpack.c.b16 %v2488, %v2484
    %v3601 = vpack.c.b16 %v2489, %v2485
    %v3602 = vpack.c.b16 %v2490, %v2486
    %v3603 = vpack.c.b16 %v2495, %v2491
    %v3604 = vpack.c.b16 %v2496, %v2492
    %v3605 = vpack.c.b16 %v2497, %v2493
    %v3606 = vpack.c.b16 %v2498, %v2494
    %v3607 = vpack.c.b16 %v2503, %v2499
    %v3608 = vpack.c.b16 %v2504, %v2500
    %v3609 = vpack.c.b16 %v2505, %v2501
    %v3610 = vpack.c.b16 %v2506, %v2502
    %v3611 = vpack.c.b16 %v2511, %v2507
    %v3612 = vpack.c.b16 %v2512, %v2508
    %v3613 = vpack.c.b16 %v2513, %v2509
    %v3614 = vpack.c.b16 %v2514, %v2510
    %v3615 = vpack.c.b16 %v2519, %v2515
    %v3616 = vpack.c.b16 %v2520, %v2516
    %v3617 = vpack.c.b16 %v2521, %v2517
    %v3618 = vpack.c.b16 %v2522, %v2518
    %v3619 = vpack.c.b16 %v2527, %v2523
    %v3620 = vpack.c.b16 %v2528, %v2524
    %v3621 = vpack.c.b16 %v2529, %v2525
    %v3622 = vpack.c.b16 %v2530, %v2526
    %v3623 = vpack.c.b16 %v2535, %v2531
    %v3624 = vpack.c.b16 %v2536, %v2532
    %v3625 = vpack.c.b16 %v2537, %v2533
    %v3626 = vpack.c.b16 %v2538, %v2534
    %v3627 = vpack.c.b16 %v2543, %v2539
    %v3628 = vpack.c.b16 %v2544, %v2540
    %v3629 = vpack.c.b16 %v2545, %v2541
    %v3630 = vpack.c.b16 %v2546, %v2542
    %v3631 = vpack.c.b16 %v2551, %v2547
    %v3632 = vpack.c.b16 %v2552, %v2548
    %v3633 = vpack.c.b16 %v2553, %v2549
    %v3634 = vpack.c.b16 %v2554, %v2550
    %v3635 = vpack.c.b16 %v2559, %v2555
    %v3636 = vpack.c.b16 %v2560, %v2556
    %v3637 = vpack.c.b16 %v2561, %v2557
    %v3638 = vpack.c.b16 %v2562, %v2558
    %v3639 = vpack.c.b16 %v2567, %v2563
    %v3640 = vpack.c.b16 %v2568, %v2564
    %v3641 = vpack.c.b16 %v2569, %v2565
    %v3642 = vpack.c.b16 %v2570, %v2566
    %v3643 = vpack.c.b16 %v2575, %v2571
    %v3644 = vpack.c.b16 %v2576, %v2572
    %v3645 = vpack.c.b16 %v2577, %v2573
    %v3646 = vpack.c.b16 %v2578, %v2574
    %v3647 = vpack.c.b16 %v2583, %v2579
    %v3648 = vpack.c.b16 %v2584, %v2580
    %v3649 = vpack.c.b16 %v2585, %v2581
    %v3650 = vpack.c.b16 %v2586, %v2582
    %v3651 = vpack.c.b16 %v2591, %v2587
    %v3652 = vpack.c.b16 %v2592, %v2588
    %v3653 = vpack.c.b16 %v2593, %v2589
    %v3654 = vpack.c.b16 %v2594, %v2590
    %v3655 = vpack.c.b16 %v2599, %v2595
    %v3656 = vpack.c.b16 %v2600, %v2596
    %v3657 = vpack.c.b16 %v2601, %v2597
    %v3658 = vpack.c.b16 %v2602, %v2598
    %v3659 = vpack.c.b16 %v2607, %v2603
    %v3660 = vpack.c.b16 %v2608, %v2604
    %v3661 = vpack.c.b16 %v2609, %v2605
    %v3662 = vpack.c.b16 %v2610, %v2606
    %v3663 = vpack.c.b16 %v2615, %v2611
    %v3664 = vpack.c.b16 %v2616, %v2612
    %v3665 = vpack.c.b16 %v2617, %v2613
    %v3666 = vpack.c.b16 %v2618, %v2614
    %v3667 = vpack.c.b16 %v2623, %v2619
    %v3668 = vpack.c.b16 %v2624, %v2620
    %v3669 = vpack.c.b16 %v2625, %v2621
    %v3670 = vpack.c.b16 %v2626, %v2622
    %v3671 = vpack.c.b16 %v2631, %v2627
    %v3672 = vpack.c.b16 %v2632, %v2628
    %v3673 = vpack.c.b16 %v2633, %v2629
    %v3674 = vpack.c.b16 %v2634, %v2630
    %v3675 = vpack.c.b16 %v2639, %v2635
    %v3676 = vpack.c.b16 %v2640, %v2636
    %v3677 = vpack.c.b16 %v2641, %v2637
    %v3678 = vpack.c.b16 %v2642, %v2638
    %v3679 = vpack.c.b16 %v2647, %v2643
    %v3680 = vpack.c.b16 %v2648, %v2644
    %v3681 = vpack.c.b16 %v2649, %v2645
    %v3682 = vpack.c.b16 %v2650, %v2646
    %v3683 = vpack.c.b16 %v2655, %v2651
    %v3684 = vpack.c.b16 %v2656, %v2652
    %v3685 = vpack.c.b16 %v2657, %v2653
    %v3686 = vpack.c.b16 %v2658, %v2654
    %v3687 = vpack.c.b16 %v2663, %v2659
    %v3688 = vpack.c.b16 %v2664, %v2660
    %v3689 = vpack.c.b16 %v2665, %v2661
    %v3690 = vpack.c.b16 %v2666, %v2662
    %v3691 = vpack.c.b16 %v2671, %v2667
    %v3692 = vpack.c.b16 %v2672, %v2668
    %v3693 = vpack.c.b16 %v2673, %v2669
    %v3694 = vpack.c.b16 %v2674, %v2670
    %v3695 = vpack.c.b16 %v2679, %v2675
    %v3696 = vpack.c.b16 %v2680, %v2676
    %v3697 = vpack.c.b16 %v2681, %v2677
    %v3698 = vpack.c.b16 %v2682, %v2678
    %v3699 = vpack.c.b16 %v2687, %v2683
    %v3700 = vpack.c.b16 %v2688, %v2684
    %v3701 = vpack.c.b16 %v2689, %v2685
    %v3702 = vpack.c.b16 %v2690, %v2686
    %v3703 = vpack.c.b16 %v2695, %v2691
    %v3704 = vpack.c.b16 %v2696, %v2692
    %v3705 = vpack.c.b16 %v2697, %v2693
    %v3706 = vpack.c.b16 %v2698, %v2694
    %v3707 = vpack.c.b16 %v2703, %v2699
    %v3708 = vpack.c.b16 %v2704, %v2700
    %v3709 = vpack.c.b16 %v2705, %v2701
    %v3710 = vpack.c.b16 %v2706, %v2702
    %v3711 = vpack.c.b16 %v2711, %v2707
    %v3712 = vpack.c.b16 %v2712, %v2708
    %v3713 = vpack.c.b16 %v2713, %v2709
    %v3714 = vpack.c.b16 %v2714, %v2710
    %v3715 = vpack.c.b16 %v2719, %v2715
    %v3716 = vpack.c.b16 %v2720, %v2716
    %v3717 = vpack.c.b16 %v2721, %v2717
    %v3718 = vpack.c.b16 %v2722, %v2718
    %v3719 = vpack.c.b16 %v2727, %v2723
    %v3720 = vpack.c.b16 %v2728, %v2724
    %v3721 = vpack.c.b16 %v2729, %v2725
    %v3722 = vpack.c.b16 %v2730, %v2726
    %v3723 = vpack.c.b16 %v2735, %v2731
    %v3724 = vpack.c.b16 %v2736, %v2732
    %v3725 = vpack.c.b16 %v2737, %v2733
    %v3726 = vpack.c.b16 %v2738, %v2734
    %v3727 = vpack.c.b16 %v2743, %v2739
    %v3728 = vpack.c.b16 %v2744, %v2740
    %v3729 = vpack.c.b16 %v2745, %v2741
    %v3730 = vpack.c.b16 %v2746, %v2742
    %v3731 = vpack.c.b16 %v2751, %v2747
    %v3732 = vpack.c.b16 %v2752, %v2748
    %v3733 = vpack.c.b16 %v2753, %v2749
    %v3734 = vpack.c.b16 %v2754, %v2750
    %v3735 = vpack.c.b16 %v2759, %v2755
    %v3736 = vpack.c.b16 %v2760, %v2756
    %v3737 = vpack.c.b16 %v2761, %v2757
    %v3738 = vpack.c.b16 %v2762, %v2758
    %v3739 = vpack.c.b16 %v2767, %v2763
    %v3740 = vpack.c.b16 %v2768, %v2764
    %v3741 = vpack.c.b16 %v2769, %v2765
    %v3742 = vpack.c.b16 %v2770, %v2766
    %v3743 = vpack.c.b16 %v2775, %v2771
    %v3744 = vpack.c.b16 %v2776, %v2772
    %v3745 = vpack.c.b16 %v2777, %v2773
    %v3746 = vpack.c.b16 %v2778, %v2774
    %v3747 = vpack.c.b16 %v2783, %v2779
    %v3748 = vpack.c.b16 %v2784, %v2780
    %v3749 = vpack.c.b16 %v2785, %v2781
    %v3750 = vpack.c.b16 %v2786, %v2782
    %v3751 = vpack.c.b16 %v2791, %v2787
    %v3752 = vpack.c.b16 %v2792, %v2788
    %v3753 = vpack.c.b16 %v2793, %v2789
    %v3754 = vpack.c.b16 %v2794, %v2790
    %v3755 = vpack.c.b16 %v2799, %v2795
    %v3756 = vpack.c.b16 %v2800, %v2796
    %v3757 = vpack.c.b16 %v2801, %v2797
    %v3758 = vpack.c.b16 %v2802, %v2798
    %v3759 = vpack.c.b16 %v2807, %v2803
    %v3760 = vpack.c.b16 %v2808, %v2804
    %v3761 = vpack.c.b16 %v2809, %v2805
    %v3762 = vpack.c.b16 %v2810, %v2806
    %v3763 = vpack.c.b16 %v2815, %v2811
    %v3764 = vpack.c.b16 %v2816, %v2812
    %v3765 = vpack.c.b16 %v2817, %v2813
    %v3766 = vpack.c.b16 %v2818, %v2814
    %v3767 = vpack.c.b16 %v2823, %v2819
    %v3768 = vpack.c.b16 %v2824, %v2820
    %v3769 = vpack.c.b16 %v2825, %v2821
    %v3770 = vpack.c.b16 %v2826, %v2822
    %v3771 = vpack.c.b16 %v2831, %v2827
    %v3772 = vpack.c.b16 %v2832, %v2828
    %v3773 = vpack.c.b16 %v2833, %v2829
    %v3774 = vpack.c.b16 %v2834, %v2830
    %v3775 = vpack.c.b16 %v2839, %v2835
    %v3776 = vpack.c.b16 %v2840, %v2836
    %v3777 = vpack.c.b16 %v2841, %v2837
    %v3778 = vpack.c.b16 %v2842, %v2838
    %v3779 = vpack.c.b16 %v2847, %v2843
    %v3780 = vpack.c.b16 %v2848, %v2844
    %v3781 = vpack.c.b16 %v2849, %v2845
    %v3782 = vpack.c.b16 %v2850, %v2846
    %v3783 = vpack.c.b16 %v2855, %v2851
    %v3784 = vpack.c.b16 %v2856, %v2852
    %v3785 = vpack.c.b16 %v2857, %v2853
    %v3786 = vpack.c.b16 %v2858, %v2854
    %v3787 = vpack.c.b16 %v2863, %v2859
    %v3788 = vpack.c.b16 %v2864, %v2860
    %v3789 = vpack.c.b16 %v2865, %v2861
    %v3790 = vpack.c.b16 %v2866, %v2862
    %v3791 = vpack.c.b16 %v2871, %v2867
    %v3792 = vpack.c.b16 %v2872, %v2868
    %v3793 = vpack.c.b16 %v2873, %v2869
    %v3794 = vpack.c.b16 %v2874, %v2870
    %v3795 = vpack.c.b16 %v2879, %v2875
    %v3796 = vpack.c.b16 %v2880, %v2876
    %v3797 = vpack.c.b16 %v2881, %v2877
    %v3798 = vpack.c.b16 %v2882, %v2878
    %v3799 = vpack.c.b16 %v2887, %v2883
    %v3800 = vpack.c.b16 %v2888, %v2884
    %v3801 = vpack.c.b16 %v2889, %v2885
    %v3802 = vpack.c.b16 %v2890, %v2886
    %v3803 = vpack.c.b16 %v2895, %v2891
    %v3804 = vpack.c.b16 %v2896, %v2892
    %v3805 = vpack.c.b16 %v2897, %v2893
    %v3806 = vpack.c.b16 %v2898, %v2894
    %v3807 = vpack.c.b16 %v2903, %v2899
    %v3808 = vpack.c.b16 %v2904, %v2900
    %v3809 = vpack.c.b16 %v2905, %v2901
    %v3810 = vpack.c.b16 %v2906, %v2902
    %v3811 = vpack.c.b16 %v2911, %v2907
    %v3812 = vpack.c.b16 %v2912, %v2908
    %v3813 = vpack.c.b16 %v2913, %v2909
    %v3814 = vpack.c.b16 %v2914, %v2910
    %v3815 = vpack.c.b16 %v2919, %v2915
    %v3816 = vpack.c.b16 %v2920, %v2916
    %v3817 = vpack.c.b16 %v2921, %v2917
    %v3818 = vpack.c.b16 %v2922, %v2918
    %v3819 = vpack.c.b16 %v2927, %v2923
    %v3820 = vpack.c.b16 %v2928, %v2924
    %v3821 = vpack.c.b16 %v2929, %v2925
    %v3822 = vpack.c.b16 %v2930, %v2926
    %v3823 = vpack.c.b16 %v2935, %v2931
    %v3824 = vpack.c.b16 %v2936, %v2932
    %v3825 = vpack.c.b16 %v2937, %v2933
    %v3826 = vpack.c.b16 %v2938, %v2934
    %v3827 = vpack.c.b16 %v2943, %v2939
    %v3828 = vpack.c.b16 %v2944, %v2940
    %v3829 = vpack.c.b16 %v2945, %v2941
    %v3830 = vpack.c.b16 %v2946, %v2942
    %v3831 = vpack.c.b16 %v2951, %v2947
    %v3832 = vpack.c.b16 %v2952, %v2948
    %v3833 = vpack.c.b16 %v2953, %v2949
    %v3834 = vpack.c.b16 %v2954, %v2950
    %v3835 = vpack.c.b16 %v2959, %v2955
    %v3836 = vpack.c.b16 %v2960, %v2956
    %v3837 = vpack.c.b16 %v2961, %v2957
    %v3838 = vpack.c.b16 %v2962, %v2958
    %v3839 = vpack.c.b16 %v2967, %v2963
    %v3840 = vpack.c.b16 %v2968, %v2964
    %v3841 = vpack.c.b16 %v2969, %v2965
    %v3842 = vpack.c.b16 %v2970, %v2966
    %v3843 = vpack.c.b16 %v2975, %v2971
    %v3844 = vpack.c.b16 %v2976, %v2972
    %v3845 = vpack.c.b16 %v2977, %v2973
    %v3846 = vpack.c.b16 %v2978, %v2974
    %v3847 = vpack.c.b16 %v2983, %v2979
    %v3848 = vpack.c.b16 %v2984, %v2980
    %v3849 = vpack.c.b16 %v2985, %v2981
    %v3850 = vpack.c.b16 %v2986, %v2982
    %v3851 = vpack.c.b16 %v2991, %v2987
    %v3852 = vpack.c.b16 %v2992, %v2988
    %v3853 = vpack.c.b16 %v2993, %v2989
    %v3854 = vpack.c.b16 %v2994, %v2990
    %v3855 = vpack.c.b16 %v2999, %v2995
    %v3856 = vpack.c.b16 %v3000, %v2996
    %v3857 = vpack.c.b16 %v3001, %v2997
    %v3858 = vpack.c.b16 %v3002, %v2998
    %v3859 = vpack.c.b16 %v3007, %v3003
    %v3860 = vpack.c.b16 %v3008, %v3004
    %v3861 = vpack.c.b16 %v3009, %v3005
    %v3862 = vpack.c.b16 %v3010, %v3006
    %v3863 = vpack.c.b16 %v3015, %v3011
    %v3864 = vpack.c.b16 %v3016, %v3012
    %v3865 = vpack.c.b16 %v3017, %v3013
    %v3866 = vpack.c.b16 %v3018, %v3014
    %v3867 = vpack.c.b16 %v3023, %v3019
    %v3868 = vpack.c.b16 %v3024, %v3020
    %v3869 = vpack.c.b16 %v3025, %v3021
    %v3870 = vpack.c.b16 %v3026, %v3022
    %v3871 = vpack.c.b16 %v3031, %v3027
    %v3872 = vpack.c.b16 %v3032, %v3028
    %v3873 = vpack.c.b16 %v3033, %v3029
    %v3874 = vpack.c.b16 %v3034, %v3030
    %v3875 = vpack.c.b16 %v3039, %v3035
    %v3876 = vpack.c.b16 %v3040, %v3036
    %v3877 = vpack.c.b16 %v3041, %v3037
    %v3878 = vpack.c.b16 %v3042, %v3038
    %v3879 = vpack.c.b16 %v3047, %v3043
    %v3880 = vpack.c.b16 %v3048, %v3044
    %v3881 = vpack.c.b16 %v3049, %v3045
    %v3882 = vpack.c.b16 %v3050, %v3046
    %v3883 = vpack.c.b16 %v3055, %v3051
    %v3884 = vpack.c.b16 %v3056, %v3052
    %v3885 = vpack.c.b16 %v3057, %v3053
    %v3886 = vpack.c.b16 %v3058, %v3054
    %v3887 = vpack.c.b16 %v3063, %v3059
    %v3888 = vpack.c.b16 %v3064, %v3060
    %v3889 = vpack.c.b16 %v3065, %v3061
    %v3890 = vpack.c.b16 %v3066, %v3062
    %v3891 = vpack.c.b16 %v3071, %v3067
    %v3892 = vpack.c.b16 %v3072, %v3068
    %v3893 = vpack.c.b16 %v3073, %v3069
    %v3894 = vpack.c.b16 %v3074, %v3070
    %v3895 = vpack.c.b16 %v3079, %v3075
    %v3896 = vpack.c.b16 %v3080, %v3076
    %v3897 = vpack.c.b16 %v3081, %v3077
    %v3898 = vpack.c.b16 %v3082, %v3078
    %v3899 = vpack.c.b16 %v3087, %v3083
    %v3900 = vpack.c.b16 %v3088, %v3084
    %v3901 = vpack.c.b16 %v3089, %v3085
    %v3902 = vpack.c.b16 %v3090, %v3086
    %v3903 = vpack.c.b16 %v3095, %v3091
    %v3904 = vpack.c.b16 %v3096, %v3092
    %v3905 = vpack.c.b16 %v3097, %v3093
    %v3906 = vpack.c.b16 %v3098, %v3094
    %v3907 = vpack.c.b16 %v3103, %v3099
    %v3908 = vpack.c.b16 %v3104, %v3100
    %v3909 = vpack.c.b16 %v3105, %v3101
    %v3910 = vpack.c.b16 %v3106, %v3102
    %v3911 = vpack.c.b16 %v3111, %v3107
    %v3912 = vpack.c.b16 %v3112, %v3108
    %v3913 = vpack.c.b16 %v3113, %v3109
    %v3914 = vpack.c.b16 %v3114, %v3110
    %v3915 = vpack.c.b16 %v3119, %v3115
    %v3916 = vpack.c.b16 %v3120, %v3116
    %v3917 = vpack.c.b16 %v3121, %v3117
    %v3918 = vpack.c.b16 %v3122, %v3118
    %v3919 = vpack.c.b16 %v3127, %v3123
    %v3920 = vpack.c.b16 %v3128, %v3124
    %v3921 = vpack.c.b16 %v3129, %v3125
    %v3922 = vpack.c.b16 %v3130, %v3126
    %v3923 = vpack.c.b16 %v3135, %v3131
    %v3924 = vpack.c.b16 %v3136, %v3132
    %v3925 = vpack.c.b16 %v3137, %v3133
    %v3926 = vpack.c.b16 %v3138, %v3134
    %v3927 = vpack.c.b16 %v3143, %v3139
    %v3928 = vpack.c.b16 %v3144, %v3140
    %v3929 = vpack.c.b16 %v3145, %v3141
    %v3930 = vpack.c.b16 %v3146, %v3142
    %v3931 = vpack.c.b16 %v3151, %v3147
    %v3932 = vpack.c.b16 %v3152, %v3148
    %v3933 = vpack.c.b16 %v3153, %v3149
    %v3934 = vpack.c.b16 %v3154, %v3150
    %v3935 = vpack.c.b16 %v3159, %v3155
    %v3936 = vpack.c.b16 %v3160, %v3156
    %v3937 = vpack.c.b16 %v3161, %v3157
    %v3938 = vpack.c.b16 %v3162, %v3158
    %v3939 = vpack.c.b16 %v3167, %v3163
    %v3940 = vpack.c.b16 %v3168, %v3164
    %v3941 = vpack.c.b16 %v3169, %v3165
    %v3942 = vpack.c.b16 %v3170, %v3166
    %v3943 = vpack.c.b16 %v3175, %v3171
    %v3944 = vpack.c.b16 %v3176, %v3172
    %v3945 = vpack.c.b16 %v3177, %v3173
    %v3946 = vpack.c.b16 %v3178, %v3174
    %v3947 = vpack.c.b16 %v3183, %v3179
    %v3948 = vpack.c.b16 %v3184, %v3180
    %v3949 = vpack.c.b16 %v3185, %v3181
    %v3950 = vpack.c.b16 %v3186, %v3182
    %v3951 = vpack.c.b16 %v3191, %v3187
    %v3952 = vpack.c.b16 %v3192, %v3188
    %v3953 = vpack.c.b16 %v3193, %v3189
    %v3954 = vpack.c.b16 %v3194, %v3190
    %v3955 = vpack.c.b16 %v3199, %v3195
    %v3956 = vpack.c.b16 %v3200, %v3196
    %v3957 = vpack.c.b16 %v3201, %v3197
    %v3958 = vpack.c.b16 %v3202, %v3198
    %v3959 = vpack.c.b16 %v3207, %v3203
    %v3960 = vpack.c.b16 %v3208, %v3204
    %v3961 = vpack.c.b16 %v3209, %v3205
    %v3962 = vpack.c.b16 %v3210, %v3206
    %v3963 = vpack.c.b16 %v3215, %v3211
    %v3964 = vpack.c.b16 %v3216, %v3212
    %v3965 = vpack.c.b16 %v3217, %v3213
    %v3966 = vpack.c.b16 %v3218, %v3214
    %v3967 = vpack.c.b16 %v3223, %v3219
    %v3968 = vpack.c.b16 %v3224, %v3220
    %v3969 = vpack.c.b16 %v3225, %v3221
    %v3970 = vpack.c.b16 %v3226, %v3222
    %v3971 = vpack.c.b16 %v3231, %v3227
    %v3972 = vpack.c.b16 %v3232, %v3228
    %v3973 = vpack.c.b16 %v3233, %v3229
    %v3974 = vpack.c.b16 %v3234, %v3230
    %v3975 = vpack.c.b16 %v3239, %v3235
    %v3976 = vpack.c.b16 %v3240, %v3236
    %v3977 = vpack.c.b16 %v3241, %v3237
    %v3978 = vpack.c.b16 %v3242, %v3238
    %v3979 = vpack.c.b16 %v3247, %v3243
    %v3980 = vpack.c.b16 %v3248, %v3244
    %v3981 = vpack.c.b16 %v3249, %v3245
    %v3982 = vpack.c.b16 %v3250, %v3246
    %v3983 = vpack.c.b16 %v3255, %v3251
    %v3984 = vpack.c.b16 %v3256, %v3252
    %v3985 = vpack.c.b16 %v3257, %v3253
    %v3986 = vpack.c.b16 %v3258, %v3254
    %v3987 = vpack.c.b16 %v3263, %v3259
    %v3988 = vpack.c.b16 %v3264, %v3260
    %v3989 = vpack.c.b16 %v3265, %v3261
    %v3990 = vpack.c.b16 %v3266, %v3262
    %v3991 = vpack.c.b16 %v3271, %v3267
    %v3992 = vpack.c.b16 %v3272, %v3268
    %v3993 = vpack.c.b16 %v3273, %v3269
    %v3994 = vpack.c.b16 %v3274, %v3270
    %v3995 = vpack.c.b16 %v3279, %v3275
    %v3996 = vpack.c.b16 %v3280, %v3276
    %v3997 = vpack.c.b16 %v3281, %v3277
    %v3998 = vpack.c.b16 %v3282, %v3278
    %v3999 = vpack.c.b16 %v3287, %v3283
    %v4000 = vpack.c.b16 %v3288, %v3284
    %v4001 = vpack.c.b16 %v3289, %v3285
    %v4002 = vpack.c.b16 %v3290, %v3286
    %v4003 = vpack.c.b16 %v3295, %v3291
    %v4004 = vpack.c.b16 %v3296, %v3292
    %v4005 = vpack.c.b16 %v3297, %v3293
    %v4006 = vpack.c.b16 %v3298, %v3294
    %v4007 = vpack.c.b16 %v3303, %v3299
    %v4008 = vpack.c.b16 %v3304, %v3300
    %v4009 = vpack.c.b16 %v3305, %v3301
    %v4010 = vpack.c.b16 %v3306, %v3302
    %v4011 = vpack.c.b16 %v3311, %v3307
    %v4012 = vpack.c.b16 %v3312, %v3308
    %v4013 = vpack.c.b16 %v3313, %v3309
    %v4014 = vpack.c.b16 %v3314, %v3310
    %v4015 = vpack.c.b16 %v3319, %v3315
    %v4016 = vpack.c.b16 %v3320, %v3316
    %v4017 = vpack.c.b16 %v3321, %v3317
    %v4018 = vpack.c.b16 %v3322, %v3318
    %v4019 = vpack.c.b16 %v3327, %v3323
    %v4020 = vpack.c.b16 %v3328, %v3324
    %v4021 = vpack.c.b16 %v3329, %v3325
    %v4022 = vpack.c.b16 %v3330, %v3326
    %v4023 = vpack.c.b16 %v3335, %v3331
    %v4024 = vpack.c.b16 %v3336, %v3332
    %v4025 = vpack.c.b16 %v3337, %v3333
    %v4026 = vpack.c.b16 %v3338, %v3334
    %v4027 = vpack.c.b16 %v3343, %v3339
    %v4028 = vpack.c.b16 %v3344, %v3340
    %v4029 = vpack.c.b16 %v3345, %v3341
    %v4030 = vpack.c.b16 %v3346, %v3342
    %v4031 = vpack.c.b16 %v3351, %v3347
    %v4032 = vpack.c.b16 %v3352, %v3348
    %v4033 = vpack.c.b16 %v3353, %v3349
    %v4034 = vpack.c.b16 %v3354, %v3350
    %v4035 = vpack.c.b16 %v3359, %v3355
    %v4036 = vpack.c.b16 %v3360, %v3356
    %v4037 = vpack.c.b16 %v3361, %v3357
    %v4038 = vpack.c.b16 %v3362, %v3358
    %v4039 = vpack.c.b16 %v3367, %v3363
    %v4040 = vpack.c.b16 %v3368, %v3364
    %v4041 = vpack.c.b16 %v3369, %v3365
    %v4042 = vpack.c.b16 %v3370, %v3366
    %v4043 = vpack.c.b16 %v3375, %v3371
    %v4044 = vpack.c.b16 %v3376, %v3372
    %v4045 = vpack.c.b16 %v3377, %v3373
    %v4046 = vpack.c.b16 %v3378, %v3374
    %v4047 = vpack.c.b16 %v3383, %v3379
    %v4048 = vpack.c.b16 %v3384, %v3380
    %v4049 = vpack.c.b16 %v3385, %v3381
    %v4050 = vpack.c.b16 %v3386, %v3382
    %v4051 = vpack.c.b16 %v3391, %v3387
    %v4052 = vpack.c.b16 %v3392, %v3388
    %v4053 = vpack.c.b16 %v3393, %v3389
    %v4054 = vpack.c.b16 %v3394, %v3390
    %v4055 = vpack.c.b16 %v3399, %v3395
    %v4056 = vpack.c.b16 %v3400, %v3396
    %v4057 = vpack.c.b16 %v3401, %v3397
    %v4058 = vpack.c.b16 %v3402, %v3398
    %v4059 = vpack.c.b16 %v3407, %v3403
    %v4060 = vpack.c.b16 %v3408, %v3404
    %v4061 = vpack.c.b16 %v3409, %v3405
    %v4062 = vpack.c.b16 %v3410, %v3406
    %v4063 = vpack.c.b16 %v3415, %v3411
    %v4064 = vpack.c.b16 %v3416, %v3412
    %v4065 = vpack.c.b16 %v3417, %v3413
    %v4066 = vpack.c.b16 %v3418, %v3414
    %v4067 = vpack.c.b16 %v3423, %v3419
    %v4068 = vpack.c.b16 %v3424, %v3420
    %v4069 = vpack.c.b16 %v3425, %v3421
    %v4070 = vpack.c.b16 %v3426, %v3422
    %v4071 = vpack.c.b16 %v3431, %v3427
    %v4072 = vpack.c.b16 %v3432, %v3428
    %v4073 = vpack.c.b16 %v3433, %v3429
    %v4074 = vpack.c.b16 %v3434, %v3430
    %v4075 = vpack.c.b16 %v3439, %v3435
    %v4076 = vpack.c.b16 %v3440, %v3436
    %v4077 = vpack.c.b16 %v3441, %v3437
    %v4078 = vpack.c.b16 %v3442, %v3438
    %v4079 = vpack.c.b16 %v3447, %v3443
    %v4080 = vpack.c.b16 %v3448, %v3444
    %v4081 = vpack.c.b16 %v3449, %v3445
    %v4082 = vpack.c.b16 %v3450, %v3446
    %v4083 = vpack.c.b16 %v3455, %v3451
    %v4084 = vpack.c.b16 %v3456, %v3452
    %v4085 = vpack.c.b16 %v3457, %v3453
    %v4086 = vpack.c.b16 %v3458, %v3454
    %v4087 = vpack.c.b16 %v3463, %v3459
    %v4088 = vpack.c.b16 %v3464, %v3460
    %v4089 = vpack.c.b16 %v3465, %v3461
    %v4090 = vpack.c.b16 %v3466, %v3462
    %v4091 = vpack.c.b16 %v3471, %v3467
    %v4092 = vpack.c.b16 %v3472, %v3468
    %v4093 = vpack.c.b16 %v3473, %v3469
    %v4094 = vpack.c.b16 %v3474, %v3470
    %v4095 = vpack.c.b16 %v3479, %v3475
    %v4096 = vpack.c.b16 %v3480, %v3476
    %v4097 = vpack.c.b16 %v3481, %v3477
    %v4098 = vpack.c.b16 %v3482, %v3478
    %v4099 = vpack.c.b16 %v3487, %v3483
    %v4100 = vpack.c.b16 %v3488, %v3484
    %v4101 = vpack.c.b16 %v3489, %v3485
    %v4102 = vpack.c.b16 %v3490, %v3486
    %v4103 = vpack.c.b16 %v3495, %v3491
    %v4104 = vpack.c.b16 %v3496, %v3492
    %v4105 = vpack.c.b16 %v3497, %v3493
    %v4106 = vpack.c.b16 %v3498, %v3494
    %4715 = vmatprep.subr.bf16.mxu0 %v3528
    %4716 = vmatpush1.bf16.msra.mxu0 %v3527
    %4717 = vmatprep.subr.bf16.mxu0 %v3524
    %4718 = vmatpush1.bf16.msra.mxu0 %v3523
    %4719 = vmatprep.subr.bf16.mxu0 %v3520
    %4720 = vmatpush1.bf16.msra.mxu0 %v3519
    %4721 = vmatprep.subr.bf16.mxu0 %v3516
    %4722 = vmatpush1.bf16.msra.mxu0 %v3515
    %4723 = vmatprep.subr.bf16.mxu0 %v3512
    %4724 = vmatpush1.bf16.msra.mxu0 %v3511
    %4725 = vmatprep.subr.bf16.mxu0 %v3508
    %4726 = vmatpush1.bf16.msra.mxu0 %v3507
    %4727 = vmatprep.subr.bf16.mxu0 %v3504
    %4728 = vmatpush1.bf16.msra.mxu0 %v3503
    %4729 = vmatprep.subr.bf16.mxu0 %v3500
    %4730 = vmatpush1.bf16.msra.mxu0 %v3499
    %4731 = vmatprep.subr.bf16.mxu0 %v3560
    %4732 = vmatpush2.bf16.msra.mxu0 %v3559
    %4733 = vmatprep.subr.bf16.mxu0 %v3556
    %4734 = vmatpush2.bf16.msra.mxu0 %v3555
    %4735 = vmatprep.subr.bf16.mxu0 %v3552
    %4736 = vmatpush2.bf16.msra.mxu0 %v3551
    %4737 = vmatprep.subr.bf16.mxu0 %v3548
    %4738 = vmatpush2.bf16.msra.mxu0 %v3547
    %4739 = vmatprep.subr.bf16.mxu0 %v3544
    %4740 = vmatpush2.bf16.msra.mxu0 %v3543
    %4741 = vmatprep.subr.bf16.mxu0 %v3540
    %4742 = vmatpush2.bf16.msra.mxu0 %v3539
    %4743 = vmatprep.subr.bf16.mxu0 %v3536
    %4744 = vmatpush2.bf16.msra.mxu0 %v3535
    %4745 = vmatprep.subr.bf16.mxu0 %v3532
    %4746 = vmatpush2.bf16.msra.mxu0 %v3531
    %4747 = vmatprep.mubr.bf16.mxu0 %v1372
    %4748 = vmatmul.mubr.bf16.gmra.mxu0 %v1371
    %v4749 = vpop.f32.mrf.mxu0
    %v4750 = vadd.f32 %v890, %v4749
    %v4751 = vpop.f32.mrf.mxu0
    %v4752 = vadd.f32 %v894, %v4751
    %v4753 = vpop.f32.mrf.mxu0
    %v4754 = vadd.f32 %v890, %v4753
    %v4755 = vpop.f32.mrf.mxu0
    %v4756 = vadd.f32 %v894, %v4755
    %4757 = vmatprep.mubr.bf16.mxu0 %v1391
    %4758 = vmatmul.mubr.bf16.gmra.mxu0 %v1390
    %v4759 = vpop.f32.mrf.mxu0
    %v4760 = vadd.f32 %v890, %v4759
    %v4761 = vpop.f32.mrf.mxu0
    %v4762 = vadd.f32 %v894, %v4761
    %v4763 = vpop.f32.mrf.mxu0
    %v4764 = vadd.f32 %v890, %v4763
    %v4765 = vpop.f32.mrf.mxu0
    %v4766 = vadd.f32 %v894, %v4765
    %4767 = vmatprep.mubr.bf16.mxu0 %v1410
    %4768 = vmatmul.mubr.bf16.gmra.mxu0 %v1409
    %v4769 = vpop.f32.mrf.mxu0
    %v4770 = vadd.f32 %v890, %v4769
    %v4771 = vpop.f32.mrf.mxu0
    %v4772 = vadd.f32 %v894, %v4771
    %v4773 = vpop.f32.mrf.mxu0
    %v4774 = vadd.f32 %v890, %v4773
    %v4775 = vpop.f32.mrf.mxu0
    %v4776 = vadd.f32 %v894, %v4775
    %4777 = vmatprep.mubr.bf16.mxu0 %v1429
    %4778 = vmatmul.mubr.bf16.gmra.mxu0 %v1428
    %v4779 = vpop.f32.mrf.mxu0
    %v4780 = vadd.f32 %v890, %v4779
    %v4781 = vpop.f32.mrf.mxu0
    %v4782 = vadd.f32 %v894, %v4781
    %v4783 = vpop.f32.mrf.mxu0
    %v4784 = vadd.f32 %v890, %v4783
    %v4785 = vpop.f32.mrf.mxu0
    %v4786 = vadd.f32 %v894, %v4785
    %4787 = vmatprep.mubr.bf16.mxu0 %v1448
    %4788 = vmatmul.mubr.bf16.gmra.mxu0 %v1447
    %v4789 = vpop.f32.mrf.mxu0
    %v4790 = vadd.f32 %v890, %v4789
    %v4791 = vpop.f32.mrf.mxu0
    %v4792 = vadd.f32 %v894, %v4791
    %v4793 = vpop.f32.mrf.mxu0
    %v4794 = vadd.f32 %v890, %v4793
    %v4795 = vpop.f32.mrf.mxu0
    %v4796 = vadd.f32 %v894, %v4795
    %4797 = vmatprep.mubr.bf16.mxu0 %v1467
    %4798 = vmatmul.mubr.bf16.gmra.mxu0 %v1466
    %v4799 = vpop.f32.mrf.mxu0
    %v4800 = vadd.f32 %v890, %v4799
    %v4801 = vpop.f32.mrf.mxu0
    %v4802 = vadd.f32 %v894, %v4801
    %v4803 = vpop.f32.mrf.mxu0
    %v4804 = vadd.f32 %v890, %v4803
    %v4805 = vpop.f32.mrf.mxu0
    %v4806 = vadd.f32 %v894, %v4805
    %4807 = vmatprep.mubr.bf16.mxu0 %v1486
    %4808 = vmatmul.mubr.bf16.gmra.mxu0 %v1485
    %v4809 = vpop.f32.mrf.mxu0
    %v4810 = vadd.f32 %v890, %v4809
    %v4811 = vpop.f32.mrf.mxu0
    %v4812 = vadd.f32 %v894, %v4811
    %v4813 = vpop.f32.mrf.mxu0
    %v4814 = vadd.f32 %v890, %v4813
    %v4815 = vpop.f32.mrf.mxu0
    %v4816 = vadd.f32 %v894, %v4815
    %4817 = vmatprep.mubr.bf16.mxu0 %v1505
    %4818 = vmatmul.mubr.bf16.gmra.mxu0 %v1504
    %v4819 = vpop.f32.mrf.mxu0
    %v4820 = vadd.f32 %v890, %v4819
    %v4821 = vpop.f32.mrf.mxu0
    %v4822 = vadd.f32 %v894, %v4821
    %v4823 = vpop.f32.mrf.mxu0
    %v4824 = vadd.f32 %v890, %v4823
    %v4825 = vpop.f32.mrf.mxu0
    %v4826 = vadd.f32 %v894, %v4825
    %4827 = vdwg.mxu0
    %4828 = vmatprep.subr.bf16.mxu0 %v3592
    %4829 = vmatpush1.bf16.msra.mxu0 %v3591
    %4830 = vmatprep.subr.bf16.mxu0 %v3588
    %4831 = vmatpush1.bf16.msra.mxu0 %v3587
    %4832 = vmatprep.subr.bf16.mxu0 %v3584
    %4833 = vmatpush1.bf16.msra.mxu0 %v3583
    %4834 = vmatprep.subr.bf16.mxu0 %v3580
    %4835 = vmatpush1.bf16.msra.mxu0 %v3579
    %4836 = vmatprep.subr.bf16.mxu0 %v3576
    %4837 = vmatpush1.bf16.msra.mxu0 %v3575
    %4838 = vmatprep.subr.bf16.mxu0 %v3572
    %4839 = vmatpush1.bf16.msra.mxu0 %v3571
    %4840 = vmatprep.subr.bf16.mxu0 %v3568
    %4841 = vmatpush1.bf16.msra.mxu0 %v3567
    %4842 = vmatprep.subr.bf16.mxu0 %v3564
    %4843 = vmatpush1.bf16.msra.mxu0 %v3563
    %4844 = vmatprep.subr.bf16.mxu0 %v3624
    %4845 = vmatpush2.bf16.msra.mxu0 %v3623
    %4846 = vmatprep.subr.bf16.mxu0 %v3620
    %4847 = vmatpush2.bf16.msra.mxu0 %v3619
    %4848 = vmatprep.subr.bf16.mxu0 %v3616
    %4849 = vmatpush2.bf16.msra.mxu0 %v3615
    %4850 = vmatprep.subr.bf16.mxu0 %v3612
    %4851 = vmatpush2.bf16.msra.mxu0 %v3611
    %4852 = vmatprep.subr.bf16.mxu0 %v3608
    %4853 = vmatpush2.bf16.msra.mxu0 %v3607
    %4854 = vmatprep.subr.bf16.mxu0 %v3604
    %4855 = vmatpush2.bf16.msra.mxu0 %v3603
    %4856 = vmatprep.subr.bf16.mxu0 %v3600
    %4857 = vmatpush2.bf16.msra.mxu0 %v3599
    %4858 = vmatprep.subr.bf16.mxu0 %v3596
    %4859 = vmatpush2.bf16.msra.mxu0 %v3595
    %4860 = vmatprep.mubr.bf16.mxu0 %v1374
    %4861 = vmatmul.mubr.bf16.gmra.mxu0 %v1373
    %v4862 = vpop.f32.mrf.mxu0
    %v4863 = vadd.f32 %v4750, %v4862
    %v4864 = vpop.f32.mrf.mxu0
    %v4865 = vadd.f32 %v4752, %v4864
    %v4866 = vpop.f32.mrf.mxu0
    %v4867 = vadd.f32 %v4754, %v4866
    %v4868 = vpop.f32.mrf.mxu0
    %v4869 = vadd.f32 %v4756, %v4868
    %4870 = vmatprep.mubr.bf16.mxu0 %v1393
    %4871 = vmatmul.mubr.bf16.gmra.mxu0 %v1392
    %v4872 = vpop.f32.mrf.mxu0
    %v4873 = vadd.f32 %v4760, %v4872
    %v4874 = vpop.f32.mrf.mxu0
    %v4875 = vadd.f32 %v4762, %v4874
    %v4876 = vpop.f32.mrf.mxu0
    %v4877 = vadd.f32 %v4764, %v4876
    %v4878 = vpop.f32.mrf.mxu0
    %v4879 = vadd.f32 %v4766, %v4878
    %4880 = vmatprep.mubr.bf16.mxu0 %v1412
    %4881 = vmatmul.mubr.bf16.gmra.mxu0 %v1411
    %v4882 = vpop.f32.mrf.mxu0
    %v4883 = vadd.f32 %v4770, %v4882
    %v4884 = vpop.f32.mrf.mxu0
    %v4885 = vadd.f32 %v4772, %v4884
    %v4886 = vpop.f32.mrf.mxu0
    %v4887 = vadd.f32 %v4774, %v4886
    %v4888 = vpop.f32.mrf.mxu0
    %v4889 = vadd.f32 %v4776, %v4888
    %4890 = vmatprep.mubr.bf16.mxu0 %v1431
    %4891 = vmatmul.mubr.bf16.gmra.mxu0 %v1430
    %v4892 = vpop.f32.mrf.mxu0
    %v4893 = vadd.f32 %v4780, %v4892
    %v4894 = vpop.f32.mrf.mxu0
    %v4895 = vadd.f32 %v4782, %v4894
    %v4896 = vpop.f32.mrf.mxu0
    %v4897 = vadd.f32 %v4784, %v4896
    %v4898 = vpop.f32.mrf.mxu0
    %v4899 = vadd.f32 %v4786, %v4898
    %4900 = vmatprep.mubr.bf16.mxu0 %v1450
    %4901 = vmatmul.mubr.bf16.gmra.mxu0 %v1449
    %v4902 = vpop.f32.mrf.mxu0
    %v4903 = vadd.f32 %v4790, %v4902
    %v4904 = vpop.f32.mrf.mxu0
    %v4905 = vadd.f32 %v4792, %v4904
    %v4906 = vpop.f32.mrf.mxu0
    %v4907 = vadd.f32 %v4794, %v4906
    %v4908 = vpop.f32.mrf.mxu0
    %v4909 = vadd.f32 %v4796, %v4908
    %4910 = vmatprep.mubr.bf16.mxu0 %v1469
    %4911 = vmatmul.mubr.bf16.gmra.mxu0 %v1468
    %v4912 = vpop.f32.mrf.mxu0
    %v4913 = vadd.f32 %v4800, %v4912
    %v4914 = vpop.f32.mrf.mxu0
    %v4915 = vadd.f32 %v4802, %v4914
    %v4916 = vpop.f32.mrf.mxu0
    %v4917 = vadd.f32 %v4804, %v4916
    %v4918 = vpop.f32.mrf.mxu0
    %v4919 = vadd.f32 %v4806, %v4918
    %4920 = vmatprep.mubr.bf16.mxu0 %v1488
    %4921 = vmatmul.mubr.bf16.gmra.mxu0 %v1487
    %v4922 = vpop.f32.mrf.mxu0
    %v4923 = vadd.f32 %v4810, %v4922
    %v4924 = vpop.f32.mrf.mxu0
    %v4925 = vadd.f32 %v4812, %v4924
    %v4926 = vpop.f32.mrf.mxu0
    %v4927 = vadd.f32 %v4814, %v4926
    %v4928 = vpop.f32.mrf.mxu0
    %v4929 = vadd.f32 %v4816, %v4928
    %4930 = vmatprep.mubr.bf16.mxu0 %v1507
    %4931 = vmatmul.mubr.bf16.gmra.mxu0 %v1506
    %v4932 = vpop.f32.mrf.mxu0
    %v4933 = vadd.f32 %v4820, %v4932
    %v4934 = vpop.f32.mrf.mxu0
    %v4935 = vadd.f32 %v4822, %v4934
    %v4936 = vpop.f32.mrf.mxu0
    %v4937 = vadd.f32 %v4824, %v4936
    %v4938 = vpop.f32.mrf.mxu0
    %v4939 = vadd.f32 %v4826, %v4938
    %4940 = vdwg.mxu0
    %4941 = vmatprep.subr.bf16.mxu0 %v3656
    %4942 = vmatpush1.bf16.msra.mxu0 %v3655
    %4943 = vmatprep.subr.bf16.mxu0 %v3652
    %4944 = vmatpush1.bf16.msra.mxu0 %v3651
    %4945 = vmatprep.subr.bf16.mxu0 %v3648
    %4946 = vmatpush1.bf16.msra.mxu0 %v3647
    %4947 = vmatprep.subr.bf16.mxu0 %v3644
    %4948 = vmatpush1.bf16.msra.mxu0 %v3643
    %4949 = vmatprep.subr.bf16.mxu0 %v3640
    %4950 = vmatpush1.bf16.msra.mxu0 %v3639
    %4951 = vmatprep.subr.bf16.mxu0 %v3636
    %4952 = vmatpush1.bf16.msra.mxu0 %v3635
    %4953 = vmatprep.subr.bf16.mxu0 %v3632
    %4954 = vmatpush1.bf16.msra.mxu0 %v3631
    %4955 = vmatprep.subr.bf16.mxu0 %v3628
    %4956 = vmatpush1.bf16.msra.mxu0 %v3627
    %4957 = vmatprep.subr.bf16.mxu0 %v3688
    %4958 = vmatpush2.bf16.msra.mxu0 %v3687
    %4959 = vmatprep.subr.bf16.mxu0 %v3684
    %4960 = vmatpush2.bf16.msra.mxu0 %v3683
    %4961 = vmatprep.subr.bf16.mxu0 %v3680
    %4962 = vmatpush2.bf16.msra.mxu0 %v3679
    %4963 = vmatprep.subr.bf16.mxu0 %v3676
    %4964 = vmatpush2.bf16.msra.mxu0 %v3675
    %4965 = vmatprep.subr.bf16.mxu0 %v3672
    %4966 = vmatpush2.bf16.msra.mxu0 %v3671
    %4967 = vmatprep.subr.bf16.mxu0 %v3668
    %4968 = vmatpush2.bf16.msra.mxu0 %v3667
    %4969 = vmatprep.subr.bf16.mxu0 %v3664
    %4970 = vmatpush2.bf16.msra.mxu0 %v3663
    %4971 = vmatprep.subr.bf16.mxu0 %v3660
    %4972 = vmatpush2.bf16.msra.mxu0 %v3659
    %4973 = vmatprep.mubr.bf16.mxu0 %v1376
    %4974 = vmatmul.mubr.bf16.gmra.mxu0 %v1375
    %v4975 = vpop.f32.mrf.mxu0
    %v4976 = vadd.f32 %v4863, %v4975
    %v4977 = vpop.f32.mrf.mxu0
    %v4978 = vadd.f32 %v4865, %v4977
    %v4979 = vpop.f32.mrf.mxu0
    %v4980 = vadd.f32 %v4867, %v4979
    %v4981 = vpop.f32.mrf.mxu0
    %v4982 = vadd.f32 %v4869, %v4981
    %4983 = vmatprep.mubr.bf16.mxu0 %v1395
    %4984 = vmatmul.mubr.bf16.gmra.mxu0 %v1394
    %v4985 = vpop.f32.mrf.mxu0
    %v4986 = vadd.f32 %v4873, %v4985
    %v4987 = vpop.f32.mrf.mxu0
    %v4988 = vadd.f32 %v4875, %v4987
    %v4989 = vpop.f32.mrf.mxu0
    %v4990 = vadd.f32 %v4877, %v4989
    %v4991 = vpop.f32.mrf.mxu0
    %v4992 = vadd.f32 %v4879, %v4991
    %4993 = vmatprep.mubr.bf16.mxu0 %v1414
    %4994 = vmatmul.mubr.bf16.gmra.mxu0 %v1413
    %v4995 = vpop.f32.mrf.mxu0
    %v4996 = vadd.f32 %v4883, %v4995
    %v4997 = vpop.f32.mrf.mxu0
    %v4998 = vadd.f32 %v4885, %v4997
    %v4999 = vpop.f32.mrf.mxu0
    %v5000 = vadd.f32 %v4887, %v4999
    %v5001 = vpop.f32.mrf.mxu0
    %v5002 = vadd.f32 %v4889, %v5001
    %5003 = vmatprep.mubr.bf16.mxu0 %v1433
    %5004 = vmatmul.mubr.bf16.gmra.mxu0 %v1432
    %v5005 = vpop.f32.mrf.mxu0
    %v5006 = vadd.f32 %v4893, %v5005
    %v5007 = vpop.f32.mrf.mxu0
    %v5008 = vadd.f32 %v4895, %v5007
    %v5009 = vpop.f32.mrf.mxu0
    %v5010 = vadd.f32 %v4897, %v5009
    %v5011 = vpop.f32.mrf.mxu0
    %v5012 = vadd.f32 %v4899, %v5011
    %5013 = vmatprep.mubr.bf16.mxu0 %v1452
    %5014 = vmatmul.mubr.bf16.gmra.mxu0 %v1451
    %v5015 = vpop.f32.mrf.mxu0
    %v5016 = vadd.f32 %v4903, %v5015
    %v5017 = vpop.f32.mrf.mxu0
    %v5018 = vadd.f32 %v4905, %v5017
    %v5019 = vpop.f32.mrf.mxu0
    %v5020 = vadd.f32 %v4907, %v5019
    %v5021 = vpop.f32.mrf.mxu0
    %v5022 = vadd.f32 %v4909, %v5021
    %5023 = vmatprep.mubr.bf16.mxu0 %v1471
    %5024 = vmatmul.mubr.bf16.gmra.mxu0 %v1470
    %v5025 = vpop.f32.mrf.mxu0
    %v5026 = vadd.f32 %v4913, %v5025
    %v5027 = vpop.f32.mrf.mxu0
    %v5028 = vadd.f32 %v4915, %v5027
    %v5029 = vpop.f32.mrf.mxu0
    %v5030 = vadd.f32 %v4917, %v5029
    %v5031 = vpop.f32.mrf.mxu0
    %v5032 = vadd.f32 %v4919, %v5031
    %5033 = vmatprep.mubr.bf16.mxu0 %v1490
    %5034 = vmatmul.mubr.bf16.gmra.mxu0 %v1489
    %v5035 = vpop.f32.mrf.mxu0
    %v5036 = vadd.f32 %v4923, %v5035
    %v5037 = vpop.f32.mrf.mxu0
    %v5038 = vadd.f32 %v4925, %v5037
    %v5039 = vpop.f32.mrf.mxu0
    %v5040 = vadd.f32 %v4927, %v5039
    %v5041 = vpop.f32.mrf.mxu0
    %v5042 = vadd.f32 %v4929, %v5041
    %5043 = vmatprep.mubr.bf16.mxu0 %v1509
    %5044 = vmatmul.mubr.bf16.gmra.mxu0 %v1508
    %v5045 = vpop.f32.mrf.mxu0
    %v5046 = vadd.f32 %v4933, %v5045
    %v5047 = vpop.f32.mrf.mxu0
    %v5048 = vadd.f32 %v4935, %v5047
    %v5049 = vpop.f32.mrf.mxu0
    %v5050 = vadd.f32 %v4937, %v5049
    %v5051 = vpop.f32.mrf.mxu0
    %v5052 = vadd.f32 %v4939, %v5051
    %5053 = vdwg.mxu0
    %5054 = vmatprep.subr.bf16.mxu0 %v3720
    %5055 = vmatpush1.bf16.msra.mxu0 %v3719
    %5056 = vmatprep.subr.bf16.mxu0 %v3716
    %5057 = vmatpush1.bf16.msra.mxu0 %v3715
    %5058 = vmatprep.subr.bf16.mxu0 %v3712
    %5059 = vmatpush1.bf16.msra.mxu0 %v3711
    %5060 = vmatprep.subr.bf16.mxu0 %v3708
    %5061 = vmatpush1.bf16.msra.mxu0 %v3707
    %5062 = vmatprep.subr.bf16.mxu0 %v3704
    %5063 = vmatpush1.bf16.msra.mxu0 %v3703
    %5064 = vmatprep.subr.bf16.mxu0 %v3700
    %5065 = vmatpush1.bf16.msra.mxu0 %v3699
    %5066 = vmatprep.subr.bf16.mxu0 %v3696
    %5067 = vmatpush1.bf16.msra.mxu0 %v3695
    %5068 = vmatprep.subr.bf16.mxu0 %v3692
    %5069 = vmatpush1.bf16.msra.mxu0 %v3691
    %5070 = vmatprep.subr.bf16.mxu0 %v3752
    %5071 = vmatpush2.bf16.msra.mxu0 %v3751
    %5072 = vmatprep.subr.bf16.mxu0 %v3748
    %5073 = vmatpush2.bf16.msra.mxu0 %v3747
    %5074 = vmatprep.subr.bf16.mxu0 %v3744
    %5075 = vmatpush2.bf16.msra.mxu0 %v3743
    %5076 = vmatprep.subr.bf16.mxu0 %v3740
    %5077 = vmatpush2.bf16.msra.mxu0 %v3739
    %5078 = vmatprep.subr.bf16.mxu0 %v3736
    %5079 = vmatpush2.bf16.msra.mxu0 %v3735
    %5080 = vmatprep.subr.bf16.mxu0 %v3732
    %5081 = vmatpush2.bf16.msra.mxu0 %v3731
    %5082 = vmatprep.subr.bf16.mxu0 %v3728
    %5083 = vmatpush2.bf16.msra.mxu0 %v3727
    %5084 = vmatprep.subr.bf16.mxu0 %v3724
    %5085 = vmatpush2.bf16.msra.mxu0 %v3723
    %5086 = vmatprep.mubr.bf16.mxu0 %v1378
    %5087 = vmatmul.mubr.bf16.gmra.mxu0 %v1377
    %v5088 = vpop.f32.mrf.mxu0
    %v5089 = vadd.f32 %v4976, %v5088
    %v5090 = vpop.f32.mrf.mxu0
    %v5091 = vadd.f32 %v4978, %v5090
    %v5092 = vpop.f32.mrf.mxu0
    %v5093 = vadd.f32 %v4980, %v5092
    %v5094 = vpop.f32.mrf.mxu0
    %v5095 = vadd.f32 %v4982, %v5094
    %5096 = vmatprep.mubr.bf16.mxu0 %v1397
    %5097 = vmatmul.mubr.bf16.gmra.mxu0 %v1396
    %v5098 = vpop.f32.mrf.mxu0
    %v5099 = vadd.f32 %v4986, %v5098
    %v5100 = vpop.f32.mrf.mxu0
    %v5101 = vadd.f32 %v4988, %v5100
    %v5102 = vpop.f32.mrf.mxu0
    %v5103 = vadd.f32 %v4990, %v5102
    %v5104 = vpop.f32.mrf.mxu0
    %v5105 = vadd.f32 %v4992, %v5104
    %5106 = vmatprep.mubr.bf16.mxu0 %v1416
    %5107 = vmatmul.mubr.bf16.gmra.mxu0 %v1415
    %v5108 = vpop.f32.mrf.mxu0
    %v5109 = vadd.f32 %v4996, %v5108
    %v5110 = vpop.f32.mrf.mxu0
    %v5111 = vadd.f32 %v4998, %v5110
    %v5112 = vpop.f32.mrf.mxu0
    %v5113 = vadd.f32 %v5000, %v5112
    %v5114 = vpop.f32.mrf.mxu0
    %v5115 = vadd.f32 %v5002, %v5114
    %5116 = vmatprep.mubr.bf16.mxu0 %v1435
    %5117 = vmatmul.mubr.bf16.gmra.mxu0 %v1434
    %v5118 = vpop.f32.mrf.mxu0
    %v5119 = vadd.f32 %v5006, %v5118
    %v5120 = vpop.f32.mrf.mxu0
    %v5121 = vadd.f32 %v5008, %v5120
    %v5122 = vpop.f32.mrf.mxu0
    %v5123 = vadd.f32 %v5010, %v5122
    %v5124 = vpop.f32.mrf.mxu0
    %v5125 = vadd.f32 %v5012, %v5124
    %5126 = vmatprep.mubr.bf16.mxu0 %v1454
    %5127 = vmatmul.mubr.bf16.gmra.mxu0 %v1453
    %v5128 = vpop.f32.mrf.mxu0
    %v5129 = vadd.f32 %v5016, %v5128
    %v5130 = vpop.f32.mrf.mxu0
    %v5131 = vadd.f32 %v5018, %v5130
    %v5132 = vpop.f32.mrf.mxu0
    %v5133 = vadd.f32 %v5020, %v5132
    %v5134 = vpop.f32.mrf.mxu0
    %v5135 = vadd.f32 %v5022, %v5134
    %5136 = vmatprep.mubr.bf16.mxu0 %v1473
    %5137 = vmatmul.mubr.bf16.gmra.mxu0 %v1472
    %v5138 = vpop.f32.mrf.mxu0
    %v5139 = vadd.f32 %v5026, %v5138
    %v5140 = vpop.f32.mrf.mxu0
    %v5141 = vadd.f32 %v5028, %v5140
    %v5142 = vpop.f32.mrf.mxu0
    %v5143 = vadd.f32 %v5030, %v5142
    %v5144 = vpop.f32.mrf.mxu0
    %v5145 = vadd.f32 %v5032, %v5144
    %5146 = vmatprep.mubr.bf16.mxu0 %v1492
    %5147 = vmatmul.mubr.bf16.gmra.mxu0 %v1491
    %v5148 = vpop.f32.mrf.mxu0
    %v5149 = vadd.f32 %v5036, %v5148
    %v5150 = vpop.f32.mrf.mxu0
    %v5151 = vadd.f32 %v5038, %v5150
    %v5152 = vpop.f32.mrf.mxu0
    %v5153 = vadd.f32 %v5040, %v5152
    %v5154 = vpop.f32.mrf.mxu0
    %v5155 = vadd.f32 %v5042, %v5154
    %5156 = vmatprep.mubr.bf16.mxu0 %v1511
    %5157 = vmatmul.mubr.bf16.gmra.mxu0 %v1510
    %v5158 = vpop.f32.mrf.mxu0
    %v5159 = vadd.f32 %v5046, %v5158
    %v5160 = vpop.f32.mrf.mxu0
    %v5161 = vadd.f32 %v5048, %v5160
    %v5162 = vpop.f32.mrf.mxu0
    %v5163 = vadd.f32 %v5050, %v5162
    %v5164 = vpop.f32.mrf.mxu0
    %v5165 = vadd.f32 %v5052, %v5164
    %5166 = vdwg.mxu0
    %5167 = vmatprep.subr.bf16.mxu0 %v3784
    %5168 = vmatpush1.bf16.msra.mxu0 %v3783
    %5169 = vmatprep.subr.bf16.mxu0 %v3780
    %5170 = vmatpush1.bf16.msra.mxu0 %v3779
    %5171 = vmatprep.subr.bf16.mxu0 %v3776
    %5172 = vmatpush1.bf16.msra.mxu0 %v3775
    %5173 = vmatprep.subr.bf16.mxu0 %v3772
    %5174 = vmatpush1.bf16.msra.mxu0 %v3771
    %5175 = vmatprep.subr.bf16.mxu0 %v3768
    %5176 = vmatpush1.bf16.msra.mxu0 %v3767
    %5177 = vmatprep.subr.bf16.mxu0 %v3764
    %5178 = vmatpush1.bf16.msra.mxu0 %v3763
    %5179 = vmatprep.subr.bf16.mxu0 %v3760
    %5180 = vmatpush1.bf16.msra.mxu0 %v3759
    %5181 = vmatprep.subr.bf16.mxu0 %v3756
    %5182 = vmatpush1.bf16.msra.mxu0 %v3755
    %5183 = vmatprep.subr.bf16.mxu0 %v3816
    %5184 = vmatpush2.bf16.msra.mxu0 %v3815
    %5185 = vmatprep.subr.bf16.mxu0 %v3812
    %5186 = vmatpush2.bf16.msra.mxu0 %v3811
    %5187 = vmatprep.subr.bf16.mxu0 %v3808
    %5188 = vmatpush2.bf16.msra.mxu0 %v3807
    %5189 = vmatprep.subr.bf16.mxu0 %v3804
    %5190 = vmatpush2.bf16.msra.mxu0 %v3803
    %5191 = vmatprep.subr.bf16.mxu0 %v3800
    %5192 = vmatpush2.bf16.msra.mxu0 %v3799
    %5193 = vmatprep.subr.bf16.mxu0 %v3796
    %5194 = vmatpush2.bf16.msra.mxu0 %v3795
    %5195 = vmatprep.subr.bf16.mxu0 %v3792
    %5196 = vmatpush2.bf16.msra.mxu0 %v3791
    %5197 = vmatprep.subr.bf16.mxu0 %v3788
    %5198 = vmatpush2.bf16.msra.mxu0 %v3787
    %5199 = vmatprep.mubr.bf16.mxu0 %v1380
    %5200 = vmatmul.mubr.bf16.gmra.mxu0 %v1379
    %v5201 = vpop.f32.mrf.mxu0
    %v5202 = vadd.f32 %v5089, %v5201
    %v5203 = vpop.f32.mrf.mxu0
    %v5204 = vadd.f32 %v5091, %v5203
    %v5205 = vpop.f32.mrf.mxu0
    %v5206 = vadd.f32 %v5093, %v5205
    %v5207 = vpop.f32.mrf.mxu0
    %v5208 = vadd.f32 %v5095, %v5207
    %5209 = vmatprep.mubr.bf16.mxu0 %v1399
    %5210 = vmatmul.mubr.bf16.gmra.mxu0 %v1398
    %v5211 = vpop.f32.mrf.mxu0
    %v5212 = vadd.f32 %v5099, %v5211
    %v5213 = vpop.f32.mrf.mxu0
    %v5214 = vadd.f32 %v5101, %v5213
    %v5215 = vpop.f32.mrf.mxu0
    %v5216 = vadd.f32 %v5103, %v5215
    %v5217 = vpop.f32.mrf.mxu0
    %v5218 = vadd.f32 %v5105, %v5217
    %5219 = vmatprep.mubr.bf16.mxu0 %v1418
    %5220 = vmatmul.mubr.bf16.gmra.mxu0 %v1417
    %v5221 = vpop.f32.mrf.mxu0
    %v5222 = vadd.f32 %v5109, %v5221
    %v5223 = vpop.f32.mrf.mxu0
    %v5224 = vadd.f32 %v5111, %v5223
    %v5225 = vpop.f32.mrf.mxu0
    %v5226 = vadd.f32 %v5113, %v5225
    %v5227 = vpop.f32.mrf.mxu0
    %v5228 = vadd.f32 %v5115, %v5227
    %5229 = vmatprep.mubr.bf16.mxu0 %v1437
    %5230 = vmatmul.mubr.bf16.gmra.mxu0 %v1436
    %v5231 = vpop.f32.mrf.mxu0
    %v5232 = vadd.f32 %v5119, %v5231
    %v5233 = vpop.f32.mrf.mxu0
    %v5234 = vadd.f32 %v5121, %v5233
    %v5235 = vpop.f32.mrf.mxu0
    %v5236 = vadd.f32 %v5123, %v5235
    %v5237 = vpop.f32.mrf.mxu0
    %v5238 = vadd.f32 %v5125, %v5237
    %5239 = vmatprep.mubr.bf16.mxu0 %v1456
    %5240 = vmatmul.mubr.bf16.gmra.mxu0 %v1455
    %v5241 = vpop.f32.mrf.mxu0
    %v5242 = vadd.f32 %v5129, %v5241
    %v5243 = vpop.f32.mrf.mxu0
    %v5244 = vadd.f32 %v5131, %v5243
    %v5245 = vpop.f32.mrf.mxu0
    %v5246 = vadd.f32 %v5133, %v5245
    %v5247 = vpop.f32.mrf.mxu0
    %v5248 = vadd.f32 %v5135, %v5247
    %5249 = vmatprep.mubr.bf16.mxu0 %v1475
    %5250 = vmatmul.mubr.bf16.gmra.mxu0 %v1474
    %v5251 = vpop.f32.mrf.mxu0
    %v5252 = vadd.f32 %v5139, %v5251
    %v5253 = vpop.f32.mrf.mxu0
    %v5254 = vadd.f32 %v5141, %v5253
    %v5255 = vpop.f32.mrf.mxu0
    %v5256 = vadd.f32 %v5143, %v5255
    %v5257 = vpop.f32.mrf.mxu0
    %v5258 = vadd.f32 %v5145, %v5257
    %5259 = vmatprep.mubr.bf16.mxu0 %v1494
    %5260 = vmatmul.mubr.bf16.gmra.mxu0 %v1493
    %v5261 = vpop.f32.mrf.mxu0
    %v5262 = vadd.f32 %v5149, %v5261
    %v5263 = vpop.f32.mrf.mxu0
    %v5264 = vadd.f32 %v5151, %v5263
    %v5265 = vpop.f32.mrf.mxu0
    %v5266 = vadd.f32 %v5153, %v5265
    %v5267 = vpop.f32.mrf.mxu0
    %v5268 = vadd.f32 %v5155, %v5267
    %5269 = vmatprep.mubr.bf16.mxu0 %v1513
    %5270 = vmatmul.mubr.bf16.gmra.mxu0 %v1512
    %v5271 = vpop.f32.mrf.mxu0
    %v5272 = vadd.f32 %v5159, %v5271
    %v5273 = vpop.f32.mrf.mxu0
    %v5274 = vadd.f32 %v5161, %v5273
    %v5275 = vpop.f32.mrf.mxu0
    %v5276 = vadd.f32 %v5163, %v5275
    %v5277 = vpop.f32.mrf.mxu0
    %v5278 = vadd.f32 %v5165, %v5277
    %5279 = vdwg.mxu0
    %5280 = vmatprep.subr.bf16.mxu0 %v3848
    %5281 = vmatpush1.bf16.msra.mxu0 %v3847
    %5282 = vmatprep.subr.bf16.mxu0 %v3844
    %5283 = vmatpush1.bf16.msra.mxu0 %v3843
    %5284 = vmatprep.subr.bf16.mxu0 %v3840
    %5285 = vmatpush1.bf16.msra.mxu0 %v3839
    %5286 = vmatprep.subr.bf16.mxu0 %v3836
    %5287 = vmatpush1.bf16.msra.mxu0 %v3835
    %5288 = vmatprep.subr.bf16.mxu0 %v3832
    %5289 = vmatpush1.bf16.msra.mxu0 %v3831
    %5290 = vmatprep.subr.bf16.mxu0 %v3828
    %5291 = vmatpush1.bf16.msra.mxu0 %v3827
    %5292 = vmatprep.subr.bf16.mxu0 %v3824
    %5293 = vmatpush1.bf16.msra.mxu0 %v3823
    %5294 = vmatprep.subr.bf16.mxu0 %v3820
    %5295 = vmatpush1.bf16.msra.mxu0 %v3819
    %5296 = vmatprep.subr.bf16.mxu0 %v3880
    %5297 = vmatpush2.bf16.msra.mxu0 %v3879
    %5298 = vmatprep.subr.bf16.mxu0 %v3876
    %5299 = vmatpush2.bf16.msra.mxu0 %v3875
    %5300 = vmatprep.subr.bf16.mxu0 %v3872
    %5301 = vmatpush2.bf16.msra.mxu0 %v3871
    %5302 = vmatprep.subr.bf16.mxu0 %v3868
    %5303 = vmatpush2.bf16.msra.mxu0 %v3867
    %5304 = vmatprep.subr.bf16.mxu0 %v3864
    %5305 = vmatpush2.bf16.msra.mxu0 %v3863
    %5306 = vmatprep.subr.bf16.mxu0 %v3860
    %5307 = vmatpush2.bf16.msra.mxu0 %v3859
    %5308 = vmatprep.subr.bf16.mxu0 %v3856
    %5309 = vmatpush2.bf16.msra.mxu0 %v3855
    %5310 = vmatprep.subr.bf16.mxu0 %v3852
    %5311 = vmatpush2.bf16.msra.mxu0 %v3851
    %5312 = vmatprep.mubr.bf16.mxu0 %v1382
    %5313 = vmatmul.mubr.bf16.gmra.mxu0 %v1381
    %v5314 = vpop.f32.mrf.mxu0
    %v5315 = vadd.f32 %v5202, %v5314
    %v5316 = vpop.f32.mrf.mxu0
    %v5317 = vadd.f32 %v5204, %v5316
    %v5318 = vpop.f32.mrf.mxu0
    %v5319 = vadd.f32 %v5206, %v5318
    %v5320 = vpop.f32.mrf.mxu0
    %v5321 = vadd.f32 %v5208, %v5320
    %5322 = vmatprep.mubr.bf16.mxu0 %v1401
    %5323 = vmatmul.mubr.bf16.gmra.mxu0 %v1400
    %v5324 = vpop.f32.mrf.mxu0
    %v5325 = vadd.f32 %v5212, %v5324
    %v5326 = vpop.f32.mrf.mxu0
    %v5327 = vadd.f32 %v5214, %v5326
    %v5328 = vpop.f32.mrf.mxu0
    %v5329 = vadd.f32 %v5216, %v5328
    %v5330 = vpop.f32.mrf.mxu0
    %v5331 = vadd.f32 %v5218, %v5330
    %5332 = vmatprep.mubr.bf16.mxu0 %v1420
    %5333 = vmatmul.mubr.bf16.gmra.mxu0 %v1419
    %v5334 = vpop.f32.mrf.mxu0
    %v5335 = vadd.f32 %v5222, %v5334
    %v5336 = vpop.f32.mrf.mxu0
    %v5337 = vadd.f32 %v5224, %v5336
    %v5338 = vpop.f32.mrf.mxu0
    %v5339 = vadd.f32 %v5226, %v5338
    %v5340 = vpop.f32.mrf.mxu0
    %v5341 = vadd.f32 %v5228, %v5340
    %5342 = vmatprep.mubr.bf16.mxu0 %v1439
    %5343 = vmatmul.mubr.bf16.gmra.mxu0 %v1438
    %v5344 = vpop.f32.mrf.mxu0
    %v5345 = vadd.f32 %v5232, %v5344
    %v5346 = vpop.f32.mrf.mxu0
    %v5347 = vadd.f32 %v5234, %v5346
    %v5348 = vpop.f32.mrf.mxu0
    %v5349 = vadd.f32 %v5236, %v5348
    %v5350 = vpop.f32.mrf.mxu0
    %v5351 = vadd.f32 %v5238, %v5350
    %5352 = vmatprep.mubr.bf16.mxu0 %v1458
    %5353 = vmatmul.mubr.bf16.gmra.mxu0 %v1457
    %v5354 = vpop.f32.mrf.mxu0
    %v5355 = vadd.f32 %v5242, %v5354
    %v5356 = vpop.f32.mrf.mxu0
    %v5357 = vadd.f32 %v5244, %v5356
    %v5358 = vpop.f32.mrf.mxu0
    %v5359 = vadd.f32 %v5246, %v5358
    %v5360 = vpop.f32.mrf.mxu0
    %v5361 = vadd.f32 %v5248, %v5360
    %5362 = vmatprep.mubr.bf16.mxu0 %v1477
    %5363 = vmatmul.mubr.bf16.gmra.mxu0 %v1476
    %v5364 = vpop.f32.mrf.mxu0
    %v5365 = vadd.f32 %v5252, %v5364
    %v5366 = vpop.f32.mrf.mxu0
    %v5367 = vadd.f32 %v5254, %v5366
    %v5368 = vpop.f32.mrf.mxu0
    %v5369 = vadd.f32 %v5256, %v5368
    %v5370 = vpop.f32.mrf.mxu0
    %v5371 = vadd.f32 %v5258, %v5370
    %5372 = vmatprep.mubr.bf16.mxu0 %v1496
    %5373 = vmatmul.mubr.bf16.gmra.mxu0 %v1495
    %v5374 = vpop.f32.mrf.mxu0
    %v5375 = vadd.f32 %v5262, %v5374
    %v5376 = vpop.f32.mrf.mxu0
    %v5377 = vadd.f32 %v5264, %v5376
    %v5378 = vpop.f32.mrf.mxu0
    %v5379 = vadd.f32 %v5266, %v5378
    %v5380 = vpop.f32.mrf.mxu0
    %v5381 = vadd.f32 %v5268, %v5380
    %5382 = vmatprep.mubr.bf16.mxu0 %v1515
    %5383 = vmatmul.mubr.bf16.gmra.mxu0 %v1514
    %v5384 = vpop.f32.mrf.mxu0
    %v5385 = vadd.f32 %v5272, %v5384
    %v5386 = vpop.f32.mrf.mxu0
    %v5387 = vadd.f32 %v5274, %v5386
    %v5388 = vpop.f32.mrf.mxu0
    %v5389 = vadd.f32 %v5276, %v5388
    %v5390 = vpop.f32.mrf.mxu0
    %v5391 = vadd.f32 %v5278, %v5390
    %5392 = vdwg.mxu0
    %5393 = vmatprep.subr.bf16.mxu0 %v3912
    %5394 = vmatpush1.bf16.msra.mxu0 %v3911
    %5395 = vmatprep.subr.bf16.mxu0 %v3908
    %5396 = vmatpush1.bf16.msra.mxu0 %v3907
    %5397 = vmatprep.subr.bf16.mxu0 %v3904
    %5398 = vmatpush1.bf16.msra.mxu0 %v3903
    %5399 = vmatprep.subr.bf16.mxu0 %v3900
    %5400 = vmatpush1.bf16.msra.mxu0 %v3899
    %5401 = vmatprep.subr.bf16.mxu0 %v3896
    %5402 = vmatpush1.bf16.msra.mxu0 %v3895
    %5403 = vmatprep.subr.bf16.mxu0 %v3892
    %5404 = vmatpush1.bf16.msra.mxu0 %v3891
    %5405 = vmatprep.subr.bf16.mxu0 %v3888
    %5406 = vmatpush1.bf16.msra.mxu0 %v3887
    %5407 = vmatprep.subr.bf16.mxu0 %v3884
    %5408 = vmatpush1.bf16.msra.mxu0 %v3883
    %5409 = vmatprep.subr.bf16.mxu0 %v3944
    %5410 = vmatpush2.bf16.msra.mxu0 %v3943
    %5411 = vmatprep.subr.bf16.mxu0 %v3940
    %5412 = vmatpush2.bf16.msra.mxu0 %v3939
    %5413 = vmatprep.subr.bf16.mxu0 %v3936
    %5414 = vmatpush2.bf16.msra.mxu0 %v3935
    %5415 = vmatprep.subr.bf16.mxu0 %v3932
    %5416 = vmatpush2.bf16.msra.mxu0 %v3931
    %5417 = vmatprep.subr.bf16.mxu0 %v3928
    %5418 = vmatpush2.bf16.msra.mxu0 %v3927
    %5419 = vmatprep.subr.bf16.mxu0 %v3924
    %5420 = vmatpush2.bf16.msra.mxu0 %v3923
    %5421 = vmatprep.subr.bf16.mxu0 %v3920
    %5422 = vmatpush2.bf16.msra.mxu0 %v3919
    %5423 = vmatprep.subr.bf16.mxu0 %v3916
    %5424 = vmatpush2.bf16.msra.mxu0 %v3915
    %5425 = vmatprep.mubr.bf16.mxu0 %v1384
    %5426 = vmatmul.mubr.bf16.gmra.mxu0 %v1383
    %v5427 = vpop.f32.mrf.mxu0
    %v5428 = vadd.f32 %v5315, %v5427
    %v5429 = vpop.f32.mrf.mxu0
    %v5430 = vadd.f32 %v5317, %v5429
    %v5431 = vpop.f32.mrf.mxu0
    %v5432 = vadd.f32 %v5319, %v5431
    %v5433 = vpop.f32.mrf.mxu0
    %v5434 = vadd.f32 %v5321, %v5433
    %5435 = vmatprep.mubr.bf16.mxu0 %v1403
    %5436 = vmatmul.mubr.bf16.gmra.mxu0 %v1402
    %v5437 = vpop.f32.mrf.mxu0
    %v5438 = vadd.f32 %v5325, %v5437
    %v5439 = vpop.f32.mrf.mxu0
    %v5440 = vadd.f32 %v5327, %v5439
    %v5441 = vpop.f32.mrf.mxu0
    %v5442 = vadd.f32 %v5329, %v5441
    %v5443 = vpop.f32.mrf.mxu0
    %v5444 = vadd.f32 %v5331, %v5443
    %5445 = vmatprep.mubr.bf16.mxu0 %v1422
    %5446 = vmatmul.mubr.bf16.gmra.mxu0 %v1421
    %v5447 = vpop.f32.mrf.mxu0
    %v5448 = vadd.f32 %v5335, %v5447
    %v5449 = vpop.f32.mrf.mxu0
    %v5450 = vadd.f32 %v5337, %v5449
    %v5451 = vpop.f32.mrf.mxu0
    %v5452 = vadd.f32 %v5339, %v5451
    %v5453 = vpop.f32.mrf.mxu0
    %v5454 = vadd.f32 %v5341, %v5453
    %5455 = vmatprep.mubr.bf16.mxu0 %v1441
    %5456 = vmatmul.mubr.bf16.gmra.mxu0 %v1440
    %v5457 = vpop.f32.mrf.mxu0
    %v5458 = vadd.f32 %v5345, %v5457
    %v5459 = vpop.f32.mrf.mxu0
    %v5460 = vadd.f32 %v5347, %v5459
    %v5461 = vpop.f32.mrf.mxu0
    %v5462 = vadd.f32 %v5349, %v5461
    %v5463 = vpop.f32.mrf.mxu0
    %v5464 = vadd.f32 %v5351, %v5463
    %5465 = vmatprep.mubr.bf16.mxu0 %v1460
    %5466 = vmatmul.mubr.bf16.gmra.mxu0 %v1459
    %v5467 = vpop.f32.mrf.mxu0
    %v5468 = vadd.f32 %v5355, %v5467
    %v5469 = vpop.f32.mrf.mxu0
    %v5470 = vadd.f32 %v5357, %v5469
    %v5471 = vpop.f32.mrf.mxu0
    %v5472 = vadd.f32 %v5359, %v5471
    %v5473 = vpop.f32.mrf.mxu0
    %v5474 = vadd.f32 %v5361, %v5473
    %5475 = vmatprep.mubr.bf16.mxu0 %v1479
    %5476 = vmatmul.mubr.bf16.gmra.mxu0 %v1478
    %v5477 = vpop.f32.mrf.mxu0
    %v5478 = vadd.f32 %v5365, %v5477
    %v5479 = vpop.f32.mrf.mxu0
    %v5480 = vadd.f32 %v5367, %v5479
    %v5481 = vpop.f32.mrf.mxu0
    %v5482 = vadd.f32 %v5369, %v5481
    %v5483 = vpop.f32.mrf.mxu0
    %v5484 = vadd.f32 %v5371, %v5483
    %5485 = vmatprep.mubr.bf16.mxu0 %v1498
    %5486 = vmatmul.mubr.bf16.gmra.mxu0 %v1497
    %v5487 = vpop.f32.mrf.mxu0
    %v5488 = vadd.f32 %v5375, %v5487
    %v5489 = vpop.f32.mrf.mxu0
    %v5490 = vadd.f32 %v5377, %v5489
    %v5491 = vpop.f32.mrf.mxu0
    %v5492 = vadd.f32 %v5379, %v5491
    %v5493 = vpop.f32.mrf.mxu0
    %v5494 = vadd.f32 %v5381, %v5493
    %5495 = vmatprep.mubr.bf16.mxu0 %v1517
    %5496 = vmatmul.mubr.bf16.gmra.mxu0 %v1516
    %v5497 = vpop.f32.mrf.mxu0
    %v5498 = vadd.f32 %v5385, %v5497
    %v5499 = vpop.f32.mrf.mxu0
    %v5500 = vadd.f32 %v5387, %v5499
    %v5501 = vpop.f32.mrf.mxu0
    %v5502 = vadd.f32 %v5389, %v5501
    %v5503 = vpop.f32.mrf.mxu0
    %v5504 = vadd.f32 %v5391, %v5503
    %5505 = vdwg.mxu0
    %5506 = vmatprep.subr.bf16.mxu0 %v3976
    %5507 = vmatpush1.bf16.msra.mxu0 %v3975
    %5508 = vmatprep.subr.bf16.mxu0 %v3972
    %5509 = vmatpush1.bf16.msra.mxu0 %v3971
    %5510 = vmatprep.subr.bf16.mxu0 %v3968
    %5511 = vmatpush1.bf16.msra.mxu0 %v3967
    %5512 = vmatprep.subr.bf16.mxu0 %v3964
    %5513 = vmatpush1.bf16.msra.mxu0 %v3963
    %5514 = vmatprep.subr.bf16.mxu0 %v3960
    %5515 = vmatpush1.bf16.msra.mxu0 %v3959
    %5516 = vmatprep.subr.bf16.mxu0 %v3956
    %5517 = vmatpush1.bf16.msra.mxu0 %v3955
    %5518 = vmatprep.subr.bf16.mxu0 %v3952
    %5519 = vmatpush1.bf16.msra.mxu0 %v3951
    %5520 = vmatprep.subr.bf16.mxu0 %v3948
    %5521 = vmatpush1.bf16.msra.mxu0 %v3947
    %5522 = vmatprep.subr.bf16.mxu0 %v4008
    %5523 = vmatpush2.bf16.msra.mxu0 %v4007
    %5524 = vmatprep.subr.bf16.mxu0 %v4004
    %5525 = vmatpush2.bf16.msra.mxu0 %v4003
    %5526 = vmatprep.subr.bf16.mxu0 %v4000
    %5527 = vmatpush2.bf16.msra.mxu0 %v3999
    %5528 = vmatprep.subr.bf16.mxu0 %v3996
    %5529 = vmatpush2.bf16.msra.mxu0 %v3995
    %5530 = vmatprep.subr.bf16.mxu0 %v3992
    %5531 = vmatpush2.bf16.msra.mxu0 %v3991
    %5532 = vmatprep.subr.bf16.mxu0 %v3988
    %5533 = vmatpush2.bf16.msra.mxu0 %v3987
    %5534 = vmatprep.subr.bf16.mxu0 %v3984
    %5535 = vmatpush2.bf16.msra.mxu0 %v3983
    %5536 = vmatprep.subr.bf16.mxu0 %v3980
    %5537 = vmatpush2.bf16.msra.mxu0 %v3979
    %5538 = vmatprep.mubr.bf16.mxu0 %v1386
    %5539 = vmatmul.mubr.bf16.gmra.mxu0 %v1385
    %v5540 = vpop.f32.mrf.mxu0
    %v5541 = vadd.f32 %v5428, %v5540
    %v5542 = vpop.f32.mrf.mxu0
    %v5543 = vadd.f32 %v5430, %v5542
    %v5544 = vpop.f32.mrf.mxu0
    %v5545 = vadd.f32 %v5432, %v5544
    %v5546 = vpop.f32.mrf.mxu0
    %v5547 = vadd.f32 %v5434, %v5546
    %5548 = vmatprep.mubr.bf16.mxu0 %v1405
    %5549 = vmatmul.mubr.bf16.gmra.mxu0 %v1404
    %v5550 = vpop.f32.mrf.mxu0
    %v5551 = vadd.f32 %v5438, %v5550
    %v5552 = vpop.f32.mrf.mxu0
    %v5553 = vadd.f32 %v5440, %v5552
    %v5554 = vpop.f32.mrf.mxu0
    %v5555 = vadd.f32 %v5442, %v5554
    %v5556 = vpop.f32.mrf.mxu0
    %v5557 = vadd.f32 %v5444, %v5556
    %5558 = vmatprep.mubr.bf16.mxu0 %v1424
    %5559 = vmatmul.mubr.bf16.gmra.mxu0 %v1423
    %v5560 = vpop.f32.mrf.mxu0
    %v5561 = vadd.f32 %v5448, %v5560
    %v5562 = vpop.f32.mrf.mxu0
    %v5563 = vadd.f32 %v5450, %v5562
    %v5564 = vpop.f32.mrf.mxu0
    %v5565 = vadd.f32 %v5452, %v5564
    %v5566 = vpop.f32.mrf.mxu0
    %v5567 = vadd.f32 %v5454, %v5566
    %5568 = vmatprep.mubr.bf16.mxu0 %v1443
    %5569 = vmatmul.mubr.bf16.gmra.mxu0 %v1442
    %v5570 = vpop.f32.mrf.mxu0
    %v5571 = vadd.f32 %v5458, %v5570
    %v5572 = vpop.f32.mrf.mxu0
    %v5573 = vadd.f32 %v5460, %v5572
    %v5574 = vpop.f32.mrf.mxu0
    %v5575 = vadd.f32 %v5462, %v5574
    %v5576 = vpop.f32.mrf.mxu0
    %v5577 = vadd.f32 %v5464, %v5576
    %5578 = vmatprep.mubr.bf16.mxu0 %v1462
    %5579 = vmatmul.mubr.bf16.gmra.mxu0 %v1461
    %v5580 = vpop.f32.mrf.mxu0
    %v5581 = vadd.f32 %v5468, %v5580
    %v5582 = vpop.f32.mrf.mxu0
    %v5583 = vadd.f32 %v5470, %v5582
    %v5584 = vpop.f32.mrf.mxu0
    %v5585 = vadd.f32 %v5472, %v5584
    %v5586 = vpop.f32.mrf.mxu0
    %v5587 = vadd.f32 %v5474, %v5586
    %5588 = vmatprep.mubr.bf16.mxu0 %v1481
    %5589 = vmatmul.mubr.bf16.gmra.mxu0 %v1480
    %v5590 = vpop.f32.mrf.mxu0
    %v5591 = vadd.f32 %v5478, %v5590
    %v5592 = vpop.f32.mrf.mxu0
    %v5593 = vadd.f32 %v5480, %v5592
    %v5594 = vpop.f32.mrf.mxu0
    %v5595 = vadd.f32 %v5482, %v5594
    %v5596 = vpop.f32.mrf.mxu0
    %v5597 = vadd.f32 %v5484, %v5596
    %5598 = vmatprep.mubr.bf16.mxu0 %v1500
    %5599 = vmatmul.mubr.bf16.gmra.mxu0 %v1499
    %v5600 = vpop.f32.mrf.mxu0
    %v5601 = vadd.f32 %v5488, %v5600
    %v5602 = vpop.f32.mrf.mxu0
    %v5603 = vadd.f32 %v5490, %v5602
    %v5604 = vpop.f32.mrf.mxu0
    %v5605 = vadd.f32 %v5492, %v5604
    %v5606 = vpop.f32.mrf.mxu0
    %v5607 = vadd.f32 %v5494, %v5606
    %5608 = vmatprep.mubr.bf16.mxu0 %v1519
    %5609 = vmatmul.mubr.bf16.gmra.mxu0 %v1518
    %v5610 = vpop.f32.mrf.mxu0
    %v5611 = vadd.f32 %v5498, %v5610
    %v5612 = vpop.f32.mrf.mxu0
    %v5613 = vadd.f32 %v5500, %v5612
    %v5614 = vpop.f32.mrf.mxu0
    %v5615 = vadd.f32 %v5502, %v5614
    %v5616 = vpop.f32.mrf.mxu0
    %v5617 = vadd.f32 %v5504, %v5616
    %5618 = vdwg.mxu0
    %5619 = vmatprep.subr.bf16.mxu0 %v4040
    %5620 = vmatpush1.bf16.msra.mxu0 %v4039
    %5621 = vmatprep.subr.bf16.mxu0 %v4036
    %5622 = vmatpush1.bf16.msra.mxu0 %v4035
    %5623 = vmatprep.subr.bf16.mxu0 %v4032
    %5624 = vmatpush1.bf16.msra.mxu0 %v4031
    %5625 = vmatprep.subr.bf16.mxu0 %v4028
    %5626 = vmatpush1.bf16.msra.mxu0 %v4027
    %5627 = vmatprep.subr.bf16.mxu0 %v4024
    %5628 = vmatpush1.bf16.msra.mxu0 %v4023
    %5629 = vmatprep.subr.bf16.mxu0 %v4020
    %5630 = vmatpush1.bf16.msra.mxu0 %v4019
    %5631 = vmatprep.subr.bf16.mxu0 %v4016
    %5632 = vmatpush1.bf16.msra.mxu0 %v4015
    %5633 = vmatprep.subr.bf16.mxu0 %v4012
    %5634 = vmatpush1.bf16.msra.mxu0 %v4011
    %5635 = vmatprep.subr.bf16.mxu0 %v4072
    %5636 = vmatpush2.bf16.msra.mxu0 %v4071
    %5637 = vmatprep.subr.bf16.mxu0 %v4068
    %5638 = vmatpush2.bf16.msra.mxu0 %v4067
    %5639 = vmatprep.subr.bf16.mxu0 %v4064
    %5640 = vmatpush2.bf16.msra.mxu0 %v4063
    %5641 = vmatprep.subr.bf16.mxu0 %v4060
    %5642 = vmatpush2.bf16.msra.mxu0 %v4059
    %5643 = vmatprep.subr.bf16.mxu0 %v4056
    %5644 = vmatpush2.bf16.msra.mxu0 %v4055
    %5645 = vmatprep.subr.bf16.mxu0 %v4052
    %5646 = vmatpush2.bf16.msra.mxu0 %v4051
    %5647 = vmatprep.subr.bf16.mxu0 %v4048
    %5648 = vmatpush2.bf16.msra.mxu0 %v4047
    %5649 = vmatprep.subr.bf16.mxu0 %v4044
    %5650 = vmatpush2.bf16.msra.mxu0 %v4043
    %5651 = vmatprep.mubr.bf16.mxu0 %v1388
    %5652 = vmatmul.mubr.bf16.gmra.mxu0 %v1387
    %v5653 = vpop.f32.mrf.mxu0
    %v5654 = vadd.f32 %v5541, %v5653
    %v5655 = vpop.f32.mrf.mxu0
    %v5656 = vadd.f32 %v5543, %v5655
    %v5657 = vpop.f32.mrf.mxu0
    %v5658 = vadd.f32 %v5545, %v5657
    %v5659 = vpop.f32.mrf.mxu0
    %v5660 = vadd.f32 %v5547, %v5659
    %5661 = vmatprep.mubr.bf16.mxu0 %v1407
    %5662 = vmatmul.mubr.bf16.gmra.mxu0 %v1406
    %v5663 = vpop.f32.mrf.mxu0
    %v5664 = vadd.f32 %v5551, %v5663
    %v5665 = vpop.f32.mrf.mxu0
    %v5666 = vadd.f32 %v5553, %v5665
    %v5667 = vpop.f32.mrf.mxu0
    %v5668 = vadd.f32 %v5555, %v5667
    %v5669 = vpop.f32.mrf.mxu0
    %v5670 = vadd.f32 %v5557, %v5669
    %5671 = vmatprep.mubr.bf16.mxu0 %v1426
    %5672 = vmatmul.mubr.bf16.gmra.mxu0 %v1425
    %v5673 = vpop.f32.mrf.mxu0
    %v5674 = vadd.f32 %v5561, %v5673
    %v5675 = vpop.f32.mrf.mxu0
    %v5676 = vadd.f32 %v5563, %v5675
    %v5677 = vpop.f32.mrf.mxu0
    %v5678 = vadd.f32 %v5565, %v5677
    %v5679 = vpop.f32.mrf.mxu0
    %v5680 = vadd.f32 %v5567, %v5679
    %5681 = vmatprep.mubr.bf16.mxu0 %v1445
    %5682 = vmatmul.mubr.bf16.gmra.mxu0 %v1444
    %v5683 = vpop.f32.mrf.mxu0
    %v5684 = vadd.f32 %v5571, %v5683
    %v5685 = vpop.f32.mrf.mxu0
    %v5686 = vadd.f32 %v5573, %v5685
    %v5687 = vpop.f32.mrf.mxu0
    %v5688 = vadd.f32 %v5575, %v5687
    %v5689 = vpop.f32.mrf.mxu0
    %v5690 = vadd.f32 %v5577, %v5689
    %5691 = vmatprep.mubr.bf16.mxu0 %v1464
    %5692 = vmatmul.mubr.bf16.gmra.mxu0 %v1463
    %v5693 = vpop.f32.mrf.mxu0
    %v5694 = vadd.f32 %v5581, %v5693
    %v5695 = vpop.f32.mrf.mxu0
    %v5696 = vadd.f32 %v5583, %v5695
    %v5697 = vpop.f32.mrf.mxu0
    %v5698 = vadd.f32 %v5585, %v5697
    %v5699 = vpop.f32.mrf.mxu0
    %v5700 = vadd.f32 %v5587, %v5699
    %5701 = vmatprep.mubr.bf16.mxu0 %v1483
    %5702 = vmatmul.mubr.bf16.gmra.mxu0 %v1482
    %v5703 = vpop.f32.mrf.mxu0
    %v5704 = vadd.f32 %v5591, %v5703
    %v5705 = vpop.f32.mrf.mxu0
    %v5706 = vadd.f32 %v5593, %v5705
    %v5707 = vpop.f32.mrf.mxu0
    %v5708 = vadd.f32 %v5595, %v5707
    %v5709 = vpop.f32.mrf.mxu0
    %v5710 = vadd.f32 %v5597, %v5709
    %5711 = vmatprep.mubr.bf16.mxu0 %v1502
    %5712 = vmatmul.mubr.bf16.gmra.mxu0 %v1501
    %v5713 = vpop.f32.mrf.mxu0
    %v5714 = vadd.f32 %v5601, %v5713
    %v5715 = vpop.f32.mrf.mxu0
    %v5716 = vadd.f32 %v5603, %v5715
    %v5717 = vpop.f32.mrf.mxu0
    %v5718 = vadd.f32 %v5605, %v5717
    %v5719 = vpop.f32.mrf.mxu0
    %v5720 = vadd.f32 %v5607, %v5719
    %5721 = vmatprep.mubr.bf16.mxu0 %v1521
    %5722 = vmatmul.mubr.bf16.gmra.mxu0 %v1520
    %v5723 = vpop.f32.mrf.mxu0
    %v5724 = vadd.f32 %v5611, %v5723
    %v5725 = vpop.f32.mrf.mxu0
    %v5726 = vadd.f32 %v5613, %v5725
    %v5727 = vpop.f32.mrf.mxu0
    %v5728 = vadd.f32 %v5615, %v5727
    %v5729 = vpop.f32.mrf.mxu0
    %v5730 = vadd.f32 %v5617, %v5729
    %5731 = vdwg.mxu0
    %5732 = vmatprep.subr.bf16.mxu0 %v4104
    %5733 = vmatpush1.bf16.msra.mxu0 %v4103
    %5734 = vmatprep.subr.bf16.mxu0 %v4100
    %5735 = vmatpush1.bf16.msra.mxu0 %v4099
    %5736 = vmatprep.subr.bf16.mxu0 %v4096
    %5737 = vmatpush1.bf16.msra.mxu0 %v4095
    %5738 = vmatprep.subr.bf16.mxu0 %v4092
    %5739 = vmatpush1.bf16.msra.mxu0 %v4091
    %5740 = vmatprep.subr.bf16.mxu0 %v4088
    %5741 = vmatpush1.bf16.msra.mxu0 %v4087
    %5742 = vmatprep.subr.bf16.mxu0 %v4084
    %5743 = vmatpush1.bf16.msra.mxu0 %v4083
    %5744 = vmatprep.subr.bf16.mxu0 %v4080
    %5745 = vmatpush1.bf16.msra.mxu0 %v4079
    %5746 = vmatprep.subr.bf16.mxu0 %v4076
    %5747 = vmatpush1.bf16.msra.mxu0 %v4075
    %5748 = vmatprep.subr.bf16.mxu0 0
    %5749 = vmatpush2.bf16.msra.mxu0 0
    %5750 = vmatprep.subr.bf16.mxu0 0
    %5751 = vmatpush2.bf16.msra.mxu0 0
    %5752 = vmatprep.subr.bf16.mxu0 0
    %5753 = vmatpush2.bf16.msra.mxu0 0
    %5754 = vmatprep.subr.bf16.mxu0 0
    %5755 = vmatpush2.bf16.msra.mxu0 0
    %5756 = vmatprep.subr.bf16.mxu0 0
    %5757 = vmatpush2.bf16.msra.mxu0 0
    %5758 = vmatprep.subr.bf16.mxu0 0
    %5759 = vmatpush2.bf16.msra.mxu0 0
    %5760 = vmatprep.subr.bf16.mxu0 0
    %5761 = vmatpush2.bf16.msra.mxu0 0
    %5762 = vmatprep.subr.bf16.mxu0 0
    %5763 = vmatpush2.bf16.msra.mxu0 0
    %5764 = vmatprep.mubr.bf16.mxu0 0
    %5765 = vmatmul.mubr.bf16.gmra.mxu0 %v1389
    %v5766 = vpop.f32.mrf.mxu0
    %v5767 = vadd.f32 %v5654, %v5766
    %v5768 = vpop.f32.mrf.mxu0
    %v5769 = vadd.f32 %v5656, %v5768
    %v5770 = vpop.f32.mrf.mxu0
    %v5771 = vadd.f32 %v5658, %v5770
    %v5772 = vpop.f32.mrf.mxu0
    %v5773 = vadd.f32 %v5660, %v5772
    %5774 = vmatprep.mubr.bf16.mxu0 0
    %5775 = vmatmul.mubr.bf16.gmra.mxu0 %v1408
    %v5776 = vpop.f32.mrf.mxu0
    %v5777 = vadd.f32 %v5664, %v5776
    %v5778 = vpop.f32.mrf.mxu0
    %v5779 = vadd.f32 %v5666, %v5778
    %v5780 = vpop.f32.mrf.mxu0
    %v5781 = vadd.f32 %v5668, %v5780
    %v5782 = vpop.f32.mrf.mxu0
    %v5783 = vadd.f32 %v5670, %v5782
    %5784 = vmatprep.mubr.bf16.mxu0 0
    %5785 = vmatmul.mubr.bf16.gmra.mxu0 %v1427
    %v5786 = vpop.f32.mrf.mxu0
    %v5787 = vadd.f32 %v5674, %v5786
    %v5788 = vpop.f32.mrf.mxu0
    %v5789 = vadd.f32 %v5676, %v5788
    %v5790 = vpop.f32.mrf.mxu0
    %v5791 = vadd.f32 %v5678, %v5790
    %v5792 = vpop.f32.mrf.mxu0
    %v5793 = vadd.f32 %v5680, %v5792
    %5794 = vmatprep.mubr.bf16.mxu0 0
    %5795 = vmatmul.mubr.bf16.gmra.mxu0 %v1446
    %v5796 = vpop.f32.mrf.mxu0
    %v5797 = vadd.f32 %v5684, %v5796
    %v5798 = vpop.f32.mrf.mxu0
    %v5799 = vadd.f32 %v5686, %v5798
    %v5800 = vpop.f32.mrf.mxu0
    %v5801 = vadd.f32 %v5688, %v5800
    %v5802 = vpop.f32.mrf.mxu0
    %v5803 = vadd.f32 %v5690, %v5802
    %5804 = vmatprep.mubr.bf16.mxu0 0
    %5805 = vmatmul.mubr.bf16.gmra.mxu0 %v1465
    %v5806 = vpop.f32.mrf.mxu0
    %v5807 = vadd.f32 %v5694, %v5806
    %v5808 = vpop.f32.mrf.mxu0
    %v5809 = vadd.f32 %v5696, %v5808
    %v5810 = vpop.f32.mrf.mxu0
    %v5811 = vadd.f32 %v5698, %v5810
    %v5812 = vpop.f32.mrf.mxu0
    %v5813 = vadd.f32 %v5700, %v5812
    %5814 = vmatprep.mubr.bf16.mxu0 0
    %5815 = vmatmul.mubr.bf16.gmra.mxu0 %v1484
    %v5816 = vpop.f32.mrf.mxu0
    %v5817 = vadd.f32 %v5704, %v5816
    %v5818 = vpop.f32.mrf.mxu0
    %v5819 = vadd.f32 %v5706, %v5818
    %v5820 = vpop.f32.mrf.mxu0
    %v5821 = vadd.f32 %v5708, %v5820
    %v5822 = vpop.f32.mrf.mxu0
    %v5823 = vadd.f32 %v5710, %v5822
    %5824 = vmatprep.mubr.bf16.mxu0 0
    %5825 = vmatmul.mubr.bf16.gmra.mxu0 %v1503
    %v5826 = vpop.f32.mrf.mxu0
    %v5827 = vadd.f32 %v5714, %v5826
    %v5828 = vpop.f32.mrf.mxu0
    %v5829 = vadd.f32 %v5716, %v5828
    %v5830 = vpop.f32.mrf.mxu0
    %v5831 = vadd.f32 %v5718, %v5830
    %v5832 = vpop.f32.mrf.mxu0
    %v5833 = vadd.f32 %v5720, %v5832
    %5834 = vmatprep.mubr.bf16.mxu0 0
    %5835 = vmatmul.mubr.bf16.gmra.mxu0 %v1522
    %v5836 = vpop.f32.mrf.mxu0
    %v5837 = vadd.f32 %v5724, %v5836
    %v5838 = vpop.f32.mrf.mxu0
    %v5839 = vadd.f32 %v5726, %v5838
    %v5840 = vpop.f32.mrf.mxu0
    %v5841 = vadd.f32 %v5728, %v5840
    %v5842 = vpop.f32.mrf.mxu0
    %v5843 = vadd.f32 %v5730, %v5842
    %5844 = vdwg.mxu0
    %5845 = vmatprep.subr.bf16.mxu0 %v3530
    %5846 = vmatpush1.bf16.msra.mxu0 %v3529
    %5847 = vmatprep.subr.bf16.mxu0 %v3526
    %5848 = vmatpush1.bf16.msra.mxu0 %v3525
    %5849 = vmatprep.subr.bf16.mxu0 %v3522
    %5850 = vmatpush1.bf16.msra.mxu0 %v3521
    %5851 = vmatprep.subr.bf16.mxu0 %v3518
    %5852 = vmatpush1.bf16.msra.mxu0 %v3517
    %5853 = vmatprep.subr.bf16.mxu0 %v3514
    %5854 = vmatpush1.bf16.msra.mxu0 %v3513
    %5855 = vmatprep.subr.bf16.mxu0 %v3510
    %5856 = vmatpush1.bf16.msra.mxu0 %v3509
    %5857 = vmatprep.subr.bf16.mxu0 %v3506
    %5858 = vmatpush1.bf16.msra.mxu0 %v3505
    %5859 = vmatprep.subr.bf16.mxu0 %v3502
    %5860 = vmatpush1.bf16.msra.mxu0 %v3501
    %5861 = vmatprep.subr.bf16.mxu0 %v3562
    %5862 = vmatpush2.bf16.msra.mxu0 %v3561
    %5863 = vmatprep.subr.bf16.mxu0 %v3558
    %5864 = vmatpush2.bf16.msra.mxu0 %v3557
    %5865 = vmatprep.subr.bf16.mxu0 %v3554
    %5866 = vmatpush2.bf16.msra.mxu0 %v3553
    %5867 = vmatprep.subr.bf16.mxu0 %v3550
    %5868 = vmatpush2.bf16.msra.mxu0 %v3549
    %5869 = vmatprep.subr.bf16.mxu0 %v3546
    %5870 = vmatpush2.bf16.msra.mxu0 %v3545
    %5871 = vmatprep.subr.bf16.mxu0 %v3542
    %5872 = vmatpush2.bf16.msra.mxu0 %v3541
    %5873 = vmatprep.subr.bf16.mxu0 %v3538
    %5874 = vmatpush2.bf16.msra.mxu0 %v3537
    %5875 = vmatprep.subr.bf16.mxu0 %v3534
    %5876 = vmatpush2.bf16.msra.mxu0 %v3533
    %5877 = vmatprep.mubr.bf16.mxu0 %v1372
    %5878 = vmatmul.mubr.bf16.gmra.mxu0 %v1371
    %v5879 = vpop.f32.mrf.mxu0
    %v5880 = vadd.f32 %v898, %v5879
    %v5881 = vpop.f32.mrf.mxu0
    %v5882 = vadd.f32 %v902, %v5881
    %v5883 = vpop.f32.mrf.mxu0
    %v5884 = vadd.f32 %v898, %v5883
    %v5885 = vpop.f32.mrf.mxu0
    %v5886 = vadd.f32 %v902, %v5885
    %5887 = vmatprep.mubr.bf16.mxu0 %v1391
    %5888 = vmatmul.mubr.bf16.gmra.mxu0 %v1390
    %v5889 = vpop.f32.mrf.mxu0
    %v5890 = vadd.f32 %v898, %v5889
    %v5891 = vpop.f32.mrf.mxu0
    %v5892 = vadd.f32 %v902, %v5891
    %v5893 = vpop.f32.mrf.mxu0
    %v5894 = vadd.f32 %v898, %v5893
    %v5895 = vpop.f32.mrf.mxu0
    %v5896 = vadd.f32 %v902, %v5895
    %5897 = vmatprep.mubr.bf16.mxu0 %v1410
    %5898 = vmatmul.mubr.bf16.gmra.mxu0 %v1409
    %v5899 = vpop.f32.mrf.mxu0
    %v5900 = vadd.f32 %v898, %v5899
    %v5901 = vpop.f32.mrf.mxu0
    %v5902 = vadd.f32 %v902, %v5901
    %v5903 = vpop.f32.mrf.mxu0
    %v5904 = vadd.f32 %v898, %v5903
    %v5905 = vpop.f32.mrf.mxu0
    %v5906 = vadd.f32 %v902, %v5905
    %5907 = vmatprep.mubr.bf16.mxu0 %v1429
    %5908 = vmatmul.mubr.bf16.gmra.mxu0 %v1428
    %v5909 = vpop.f32.mrf.mxu0
    %v5910 = vadd.f32 %v898, %v5909
    %v5911 = vpop.f32.mrf.mxu0
    %v5912 = vadd.f32 %v902, %v5911
    %v5913 = vpop.f32.mrf.mxu0
    %v5914 = vadd.f32 %v898, %v5913
    %v5915 = vpop.f32.mrf.mxu0
    %v5916 = vadd.f32 %v902, %v5915
    %5917 = vmatprep.mubr.bf16.mxu0 %v1448
    %5918 = vmatmul.mubr.bf16.gmra.mxu0 %v1447
    %v5919 = vpop.f32.mrf.mxu0
    %v5920 = vadd.f32 %v898, %v5919
    %v5921 = vpop.f32.mrf.mxu0
    %v5922 = vadd.f32 %v902, %v5921
    %v5923 = vpop.f32.mrf.mxu0
    %v5924 = vadd.f32 %v898, %v5923
    %v5925 = vpop.f32.mrf.mxu0
    %v5926 = vadd.f32 %v902, %v5925
    %5927 = vmatprep.mubr.bf16.mxu0 %v1467
    %5928 = vmatmul.mubr.bf16.gmra.mxu0 %v1466
    %v5929 = vpop.f32.mrf.mxu0
    %v5930 = vadd.f32 %v898, %v5929
    %v5931 = vpop.f32.mrf.mxu0
    %v5932 = vadd.f32 %v902, %v5931
    %v5933 = vpop.f32.mrf.mxu0
    %v5934 = vadd.f32 %v898, %v5933
    %v5935 = vpop.f32.mrf.mxu0
    %v5936 = vadd.f32 %v902, %v5935
    %5937 = vmatprep.mubr.bf16.mxu0 %v1486
    %5938 = vmatmul.mubr.bf16.gmra.mxu0 %v1485
    %v5939 = vpop.f32.mrf.mxu0
    %v5940 = vadd.f32 %v898, %v5939
    %v5941 = vpop.f32.mrf.mxu0
    %v5942 = vadd.f32 %v902, %v5941
    %v5943 = vpop.f32.mrf.mxu0
    %v5944 = vadd.f32 %v898, %v5943
    %v5945 = vpop.f32.mrf.mxu0
    %v5946 = vadd.f32 %v902, %v5945
    %5947 = vmatprep.mubr.bf16.mxu0 %v1505
    %5948 = vmatmul.mubr.bf16.gmra.mxu0 %v1504
    %v5949 = vpop.f32.mrf.mxu0
    %v5950 = vadd.f32 %v898, %v5949
    %v5951 = vpop.f32.mrf.mxu0
    %v5952 = vadd.f32 %v902, %v5951
    %v5953 = vpop.f32.mrf.mxu0
    %v5954 = vadd.f32 %v898, %v5953
    %v5955 = vpop.f32.mrf.mxu0
    %v5956 = vadd.f32 %v902, %v5955
    %5957 = vdwg.mxu0
    %5958 = vmatprep.subr.bf16.mxu0 %v3594
    %5959 = vmatpush1.bf16.msra.mxu0 %v3593
    %5960 = vmatprep.subr.bf16.mxu0 %v3590
    %5961 = vmatpush1.bf16.msra.mxu0 %v3589
    %5962 = vmatprep.subr.bf16.mxu0 %v3586
    %5963 = vmatpush1.bf16.msra.mxu0 %v3585
    %5964 = vmatprep.subr.bf16.mxu0 %v3582
    %5965 = vmatpush1.bf16.msra.mxu0 %v3581
    %5966 = vmatprep.subr.bf16.mxu0 %v3578
    %5967 = vmatpush1.bf16.msra.mxu0 %v3577
    %5968 = vmatprep.subr.bf16.mxu0 %v3574
    %5969 = vmatpush1.bf16.msra.mxu0 %v3573
    %5970 = vmatprep.subr.bf16.mxu0 %v3570
    %5971 = vmatpush1.bf16.msra.mxu0 %v3569
    %5972 = vmatprep.subr.bf16.mxu0 %v3566
    %5973 = vmatpush1.bf16.msra.mxu0 %v3565
    %5974 = vmatprep.subr.bf16.mxu0 %v3626
    %5975 = vmatpush2.bf16.msra.mxu0 %v3625
    %5976 = vmatprep.subr.bf16.mxu0 %v3622
    %5977 = vmatpush2.bf16.msra.mxu0 %v3621
    %5978 = vmatprep.subr.bf16.mxu0 %v3618
    %5979 = vmatpush2.bf16.msra.mxu0 %v3617
    %5980 = vmatprep.subr.bf16.mxu0 %v3614
    %5981 = vmatpush2.bf16.msra.mxu0 %v3613
    %5982 = vmatprep.subr.bf16.mxu0 %v3610
    %5983 = vmatpush2.bf16.msra.mxu0 %v3609
    %5984 = vmatprep.subr.bf16.mxu0 %v3606
    %5985 = vmatpush2.bf16.msra.mxu0 %v3605
    %5986 = vmatprep.subr.bf16.mxu0 %v3602
    %5987 = vmatpush2.bf16.msra.mxu0 %v3601
    %5988 = vmatprep.subr.bf16.mxu0 %v3598
    %5989 = vmatpush2.bf16.msra.mxu0 %v3597
    %5990 = vmatprep.mubr.bf16.mxu0 %v1374
    %5991 = vmatmul.mubr.bf16.gmra.mxu0 %v1373
    %v5992 = vpop.f32.mrf.mxu0
    %v5993 = vadd.f32 %v5880, %v5992
    %v5994 = vpop.f32.mrf.mxu0
    %v5995 = vadd.f32 %v5882, %v5994
    %v5996 = vpop.f32.mrf.mxu0
    %v5997 = vadd.f32 %v5884, %v5996
    %v5998 = vpop.f32.mrf.mxu0
    %v5999 = vadd.f32 %v5886, %v5998
    %6000 = vmatprep.mubr.bf16.mxu0 %v1393
    %6001 = vmatmul.mubr.bf16.gmra.mxu0 %v1392
    %v6002 = vpop.f32.mrf.mxu0
    %v6003 = vadd.f32 %v5890, %v6002
    %v6004 = vpop.f32.mrf.mxu0
    %v6005 = vadd.f32 %v5892, %v6004
    %v6006 = vpop.f32.mrf.mxu0
    %v6007 = vadd.f32 %v5894, %v6006
    %v6008 = vpop.f32.mrf.mxu0
    %v6009 = vadd.f32 %v5896, %v6008
    %6010 = vmatprep.mubr.bf16.mxu0 %v1412
    %6011 = vmatmul.mubr.bf16.gmra.mxu0 %v1411
    %v6012 = vpop.f32.mrf.mxu0
    %v6013 = vadd.f32 %v5900, %v6012
    %v6014 = vpop.f32.mrf.mxu0
    %v6015 = vadd.f32 %v5902, %v6014
    %v6016 = vpop.f32.mrf.mxu0
    %v6017 = vadd.f32 %v5904, %v6016
    %v6018 = vpop.f32.mrf.mxu0
    %v6019 = vadd.f32 %v5906, %v6018
    %6020 = vmatprep.mubr.bf16.mxu0 %v1431
    %6021 = vmatmul.mubr.bf16.gmra.mxu0 %v1430
    %v6022 = vpop.f32.mrf.mxu0
    %v6023 = vadd.f32 %v5910, %v6022
    %v6024 = vpop.f32.mrf.mxu0
    %v6025 = vadd.f32 %v5912, %v6024
    %v6026 = vpop.f32.mrf.mxu0
    %v6027 = vadd.f32 %v5914, %v6026
    %v6028 = vpop.f32.mrf.mxu0
    %v6029 = vadd.f32 %v5916, %v6028
    %6030 = vmatprep.mubr.bf16.mxu0 %v1450
    %6031 = vmatmul.mubr.bf16.gmra.mxu0 %v1449
    %v6032 = vpop.f32.mrf.mxu0
    %v6033 = vadd.f32 %v5920, %v6032
    %v6034 = vpop.f32.mrf.mxu0
    %v6035 = vadd.f32 %v5922, %v6034
    %v6036 = vpop.f32.mrf.mxu0
    %v6037 = vadd.f32 %v5924, %v6036
    %v6038 = vpop.f32.mrf.mxu0
    %v6039 = vadd.f32 %v5926, %v6038
    %6040 = vmatprep.mubr.bf16.mxu0 %v1469
    %6041 = vmatmul.mubr.bf16.gmra.mxu0 %v1468
    %v6042 = vpop.f32.mrf.mxu0
    %v6043 = vadd.f32 %v5930, %v6042
    %v6044 = vpop.f32.mrf.mxu0
    %v6045 = vadd.f32 %v5932, %v6044
    %v6046 = vpop.f32.mrf.mxu0
    %v6047 = vadd.f32 %v5934, %v6046
    %v6048 = vpop.f32.mrf.mxu0
    %v6049 = vadd.f32 %v5936, %v6048
    %6050 = vmatprep.mubr.bf16.mxu0 %v1488
    %6051 = vmatmul.mubr.bf16.gmra.mxu0 %v1487
    %v6052 = vpop.f32.mrf.mxu0
    %v6053 = vadd.f32 %v5940, %v6052
    %v6054 = vpop.f32.mrf.mxu0
    %v6055 = vadd.f32 %v5942, %v6054
    %v6056 = vpop.f32.mrf.mxu0
    %v6057 = vadd.f32 %v5944, %v6056
    %v6058 = vpop.f32.mrf.mxu0
    %v6059 = vadd.f32 %v5946, %v6058
    %6060 = vmatprep.mubr.bf16.mxu0 %v1507
    %6061 = vmatmul.mubr.bf16.gmra.mxu0 %v1506
    %v6062 = vpop.f32.mrf.mxu0
    %v6063 = vadd.f32 %v5950, %v6062
    %v6064 = vpop.f32.mrf.mxu0
    %v6065 = vadd.f32 %v5952, %v6064
    %v6066 = vpop.f32.mrf.mxu0
    %v6067 = vadd.f32 %v5954, %v6066
    %v6068 = vpop.f32.mrf.mxu0
    %v6069 = vadd.f32 %v5956, %v6068
    %6070 = vdwg.mxu0
    %6071 = vmatprep.subr.bf16.mxu0 %v3658
    %6072 = vmatpush1.bf16.msra.mxu0 %v3657
    %6073 = vmatprep.subr.bf16.mxu0 %v3654
    %6074 = vmatpush1.bf16.msra.mxu0 %v3653
    %6075 = vmatprep.subr.bf16.mxu0 %v3650
    %6076 = vmatpush1.bf16.msra.mxu0 %v3649
    %6077 = vmatprep.subr.bf16.mxu0 %v3646
    %6078 = vmatpush1.bf16.msra.mxu0 %v3645
    %6079 = vmatprep.subr.bf16.mxu0 %v3642
    %6080 = vmatpush1.bf16.msra.mxu0 %v3641
    %6081 = vmatprep.subr.bf16.mxu0 %v3638
    %6082 = vmatpush1.bf16.msra.mxu0 %v3637
    %6083 = vmatprep.subr.bf16.mxu0 %v3634
    %6084 = vmatpush1.bf16.msra.mxu0 %v3633
    %6085 = vmatprep.subr.bf16.mxu0 %v3630
    %6086 = vmatpush1.bf16.msra.mxu0 %v3629
    %6087 = vmatprep.subr.bf16.mxu0 %v3690
    %6088 = vmatpush2.bf16.msra.mxu0 %v3689
    %6089 = vmatprep.subr.bf16.mxu0 %v3686
    %6090 = vmatpush2.bf16.msra.mxu0 %v3685
    %6091 = vmatprep.subr.bf16.mxu0 %v3682
    %6092 = vmatpush2.bf16.msra.mxu0 %v3681
    %6093 = vmatprep.subr.bf16.mxu0 %v3678
    %6094 = vmatpush2.bf16.msra.mxu0 %v3677
    %6095 = vmatprep.subr.bf16.mxu0 %v3674
    %6096 = vmatpush2.bf16.msra.mxu0 %v3673
    %6097 = vmatprep.subr.bf16.mxu0 %v3670
    %6098 = vmatpush2.bf16.msra.mxu0 %v3669
    %6099 = vmatprep.subr.bf16.mxu0 %v3666
    %6100 = vmatpush2.bf16.msra.mxu0 %v3665
    %6101 = vmatprep.subr.bf16.mxu0 %v3662
    %6102 = vmatpush2.bf16.msra.mxu0 %v3661
    %6103 = vmatprep.mubr.bf16.mxu0 %v1376
    %6104 = vmatmul.mubr.bf16.gmra.mxu0 %v1375
    %v6105 = vpop.f32.mrf.mxu0
    %v6106 = vadd.f32 %v5993, %v6105
    %v6107 = vpop.f32.mrf.mxu0
    %v6108 = vadd.f32 %v5995, %v6107
    %v6109 = vpop.f32.mrf.mxu0
    %v6110 = vadd.f32 %v5997, %v6109
    %v6111 = vpop.f32.mrf.mxu0
    %v6112 = vadd.f32 %v5999, %v6111
    %6113 = vmatprep.mubr.bf16.mxu0 %v1395
    %6114 = vmatmul.mubr.bf16.gmra.mxu0 %v1394
    %v6115 = vpop.f32.mrf.mxu0
    %v6116 = vadd.f32 %v6003, %v6115
    %v6117 = vpop.f32.mrf.mxu0
    %v6118 = vadd.f32 %v6005, %v6117
    %v6119 = vpop.f32.mrf.mxu0
    %v6120 = vadd.f32 %v6007, %v6119
    %v6121 = vpop.f32.mrf.mxu0
    %v6122 = vadd.f32 %v6009, %v6121
    %6123 = vmatprep.mubr.bf16.mxu0 %v1414
    %6124 = vmatmul.mubr.bf16.gmra.mxu0 %v1413
    %v6125 = vpop.f32.mrf.mxu0
    %v6126 = vadd.f32 %v6013, %v6125
    %v6127 = vpop.f32.mrf.mxu0
    %v6128 = vadd.f32 %v6015, %v6127
    %v6129 = vpop.f32.mrf.mxu0
    %v6130 = vadd.f32 %v6017, %v6129
    %v6131 = vpop.f32.mrf.mxu0
    %v6132 = vadd.f32 %v6019, %v6131
    %6133 = vmatprep.mubr.bf16.mxu0 %v1433
    %6134 = vmatmul.mubr.bf16.gmra.mxu0 %v1432
    %v6135 = vpop.f32.mrf.mxu0
    %v6136 = vadd.f32 %v6023, %v6135
    %v6137 = vpop.f32.mrf.mxu0
    %v6138 = vadd.f32 %v6025, %v6137
    %v6139 = vpop.f32.mrf.mxu0
    %v6140 = vadd.f32 %v6027, %v6139
    %v6141 = vpop.f32.mrf.mxu0
    %v6142 = vadd.f32 %v6029, %v6141
    %6143 = vmatprep.mubr.bf16.mxu0 %v1452
    %6144 = vmatmul.mubr.bf16.gmra.mxu0 %v1451
    %v6145 = vpop.f32.mrf.mxu0
    %v6146 = vadd.f32 %v6033, %v6145
    %v6147 = vpop.f32.mrf.mxu0
    %v6148 = vadd.f32 %v6035, %v6147
    %v6149 = vpop.f32.mrf.mxu0
    %v6150 = vadd.f32 %v6037, %v6149
    %v6151 = vpop.f32.mrf.mxu0
    %v6152 = vadd.f32 %v6039, %v6151
    %6153 = vmatprep.mubr.bf16.mxu0 %v1471
    %6154 = vmatmul.mubr.bf16.gmra.mxu0 %v1470
    %v6155 = vpop.f32.mrf.mxu0
    %v6156 = vadd.f32 %v6043, %v6155
    %v6157 = vpop.f32.mrf.mxu0
    %v6158 = vadd.f32 %v6045, %v6157
    %v6159 = vpop.f32.mrf.mxu0
    %v6160 = vadd.f32 %v6047, %v6159
    %v6161 = vpop.f32.mrf.mxu0
    %v6162 = vadd.f32 %v6049, %v6161
    %6163 = vmatprep.mubr.bf16.mxu0 %v1490
    %6164 = vmatmul.mubr.bf16.gmra.mxu0 %v1489
    %v6165 = vpop.f32.mrf.mxu0
    %v6166 = vadd.f32 %v6053, %v6165
    %v6167 = vpop.f32.mrf.mxu0
    %v6168 = vadd.f32 %v6055, %v6167
    %v6169 = vpop.f32.mrf.mxu0
    %v6170 = vadd.f32 %v6057, %v6169
    %v6171 = vpop.f32.mrf.mxu0
    %v6172 = vadd.f32 %v6059, %v6171
    %6173 = vmatprep.mubr.bf16.mxu0 %v1509
    %6174 = vmatmul.mubr.bf16.gmra.mxu0 %v1508
    %v6175 = vpop.f32.mrf.mxu0
    %v6176 = vadd.f32 %v6063, %v6175
    %v6177 = vpop.f32.mrf.mxu0
    %v6178 = vadd.f32 %v6065, %v6177
    %v6179 = vpop.f32.mrf.mxu0
    %v6180 = vadd.f32 %v6067, %v6179
    %v6181 = vpop.f32.mrf.mxu0
    %v6182 = vadd.f32 %v6069, %v6181
    %6183 = vdwg.mxu0
    %6184 = vmatprep.subr.bf16.mxu0 %v3722
    %6185 = vmatpush1.bf16.msra.mxu0 %v3721
    %6186 = vmatprep.subr.bf16.mxu0 %v3718
    %6187 = vmatpush1.bf16.msra.mxu0 %v3717
    %6188 = vmatprep.subr.bf16.mxu0 %v3714
    %6189 = vmatpush1.bf16.msra.mxu0 %v3713
    %6190 = vmatprep.subr.bf16.mxu0 %v3710
    %6191 = vmatpush1.bf16.msra.mxu0 %v3709
    %6192 = vmatprep.subr.bf16.mxu0 %v3706
    %6193 = vmatpush1.bf16.msra.mxu0 %v3705
    %6194 = vmatprep.subr.bf16.mxu0 %v3702
    %6195 = vmatpush1.bf16.msra.mxu0 %v3701
    %6196 = vmatprep.subr.bf16.mxu0 %v3698
    %6197 = vmatpush1.bf16.msra.mxu0 %v3697
    %6198 = vmatprep.subr.bf16.mxu0 %v3694
    %6199 = vmatpush1.bf16.msra.mxu0 %v3693
    %6200 = vmatprep.subr.bf16.mxu0 %v3754
    %6201 = vmatpush2.bf16.msra.mxu0 %v3753
    %6202 = vmatprep.subr.bf16.mxu0 %v3750
    %6203 = vmatpush2.bf16.msra.mxu0 %v3749
    %6204 = vmatprep.subr.bf16.mxu0 %v3746
    %6205 = vmatpush2.bf16.msra.mxu0 %v3745
    %6206 = vmatprep.subr.bf16.mxu0 %v3742
    %6207 = vmatpush2.bf16.msra.mxu0 %v3741
    %6208 = vmatprep.subr.bf16.mxu0 %v3738
    %6209 = vmatpush2.bf16.msra.mxu0 %v3737
    %6210 = vmatprep.subr.bf16.mxu0 %v3734
    %6211 = vmatpush2.bf16.msra.mxu0 %v3733
    %6212 = vmatprep.subr.bf16.mxu0 %v3730
    %6213 = vmatpush2.bf16.msra.mxu0 %v3729
    %6214 = vmatprep.subr.bf16.mxu0 %v3726
    %6215 = vmatpush2.bf16.msra.mxu0 %v3725
    %6216 = vmatprep.mubr.bf16.mxu0 %v1378
    %6217 = vmatmul.mubr.bf16.gmra.mxu0 %v1377
    %v6218 = vpop.f32.mrf.mxu0
    %v6219 = vadd.f32 %v6106, %v6218
    %v6220 = vpop.f32.mrf.mxu0
    %v6221 = vadd.f32 %v6108, %v6220
    %v6222 = vpop.f32.mrf.mxu0
    %v6223 = vadd.f32 %v6110, %v6222
    %v6224 = vpop.f32.mrf.mxu0
    %v6225 = vadd.f32 %v6112, %v6224
    %6226 = vmatprep.mubr.bf16.mxu0 %v1397
    %6227 = vmatmul.mubr.bf16.gmra.mxu0 %v1396
    %v6228 = vpop.f32.mrf.mxu0
    %v6229 = vadd.f32 %v6116, %v6228
    %v6230 = vpop.f32.mrf.mxu0
    %v6231 = vadd.f32 %v6118, %v6230
    %v6232 = vpop.f32.mrf.mxu0
    %v6233 = vadd.f32 %v6120, %v6232
    %v6234 = vpop.f32.mrf.mxu0
    %v6235 = vadd.f32 %v6122, %v6234
    %6236 = vmatprep.mubr.bf16.mxu0 %v1416
    %6237 = vmatmul.mubr.bf16.gmra.mxu0 %v1415
    %v6238 = vpop.f32.mrf.mxu0
    %v6239 = vadd.f32 %v6126, %v6238
    %v6240 = vpop.f32.mrf.mxu0
    %v6241 = vadd.f32 %v6128, %v6240
    %v6242 = vpop.f32.mrf.mxu0
    %v6243 = vadd.f32 %v6130, %v6242
    %v6244 = vpop.f32.mrf.mxu0
    %v6245 = vadd.f32 %v6132, %v6244
    %6246 = vmatprep.mubr.bf16.mxu0 %v1435
    %6247 = vmatmul.mubr.bf16.gmra.mxu0 %v1434
    %v6248 = vpop.f32.mrf.mxu0
    %v6249 = vadd.f32 %v6136, %v6248
    %v6250 = vpop.f32.mrf.mxu0
    %v6251 = vadd.f32 %v6138, %v6250
    %v6252 = vpop.f32.mrf.mxu0
    %v6253 = vadd.f32 %v6140, %v6252
    %v6254 = vpop.f32.mrf.mxu0
    %v6255 = vadd.f32 %v6142, %v6254
    %6256 = vmatprep.mubr.bf16.mxu0 %v1454
    %6257 = vmatmul.mubr.bf16.gmra.mxu0 %v1453
    %v6258 = vpop.f32.mrf.mxu0
    %v6259 = vadd.f32 %v6146, %v6258
    %v6260 = vpop.f32.mrf.mxu0
    %v6261 = vadd.f32 %v6148, %v6260
    %v6262 = vpop.f32.mrf.mxu0
    %v6263 = vadd.f32 %v6150, %v6262
    %v6264 = vpop.f32.mrf.mxu0
    %v6265 = vadd.f32 %v6152, %v6264
    %6266 = vmatprep.mubr.bf16.mxu0 %v1473
    %6267 = vmatmul.mubr.bf16.gmra.mxu0 %v1472
    %v6268 = vpop.f32.mrf.mxu0
    %v6269 = vadd.f32 %v6156, %v6268
    %v6270 = vpop.f32.mrf.mxu0
    %v6271 = vadd.f32 %v6158, %v6270
    %v6272 = vpop.f32.mrf.mxu0
    %v6273 = vadd.f32 %v6160, %v6272
    %v6274 = vpop.f32.mrf.mxu0
    %v6275 = vadd.f32 %v6162, %v6274
    %6276 = vmatprep.mubr.bf16.mxu0 %v1492
    %6277 = vmatmul.mubr.bf16.gmra.mxu0 %v1491
    %v6278 = vpop.f32.mrf.mxu0
    %v6279 = vadd.f32 %v6166, %v6278
    %v6280 = vpop.f32.mrf.mxu0
    %v6281 = vadd.f32 %v6168, %v6280
    %v6282 = vpop.f32.mrf.mxu0
    %v6283 = vadd.f32 %v6170, %v6282
    %v6284 = vpop.f32.mrf.mxu0
    %v6285 = vadd.f32 %v6172, %v6284
    %6286 = vmatprep.mubr.bf16.mxu0 %v1511
    %6287 = vmatmul.mubr.bf16.gmra.mxu0 %v1510
    %v6288 = vpop.f32.mrf.mxu0
    %v6289 = vadd.f32 %v6176, %v6288
    %v6290 = vpop.f32.mrf.mxu0
    %v6291 = vadd.f32 %v6178, %v6290
    %v6292 = vpop.f32.mrf.mxu0
    %v6293 = vadd.f32 %v6180, %v6292
    %v6294 = vpop.f32.mrf.mxu0
    %v6295 = vadd.f32 %v6182, %v6294
    %6296 = vdwg.mxu0
    %6297 = vmatprep.subr.bf16.mxu0 %v3786
    %6298 = vmatpush1.bf16.msra.mxu0 %v3785
    %6299 = vmatprep.subr.bf16.mxu0 %v3782
    %6300 = vmatpush1.bf16.msra.mxu0 %v3781
    %6301 = vmatprep.subr.bf16.mxu0 %v3778
    %6302 = vmatpush1.bf16.msra.mxu0 %v3777
    %6303 = vmatprep.subr.bf16.mxu0 %v3774
    %6304 = vmatpush1.bf16.msra.mxu0 %v3773
    %6305 = vmatprep.subr.bf16.mxu0 %v3770
    %6306 = vmatpush1.bf16.msra.mxu0 %v3769
    %6307 = vmatprep.subr.bf16.mxu0 %v3766
    %6308 = vmatpush1.bf16.msra.mxu0 %v3765
    %6309 = vmatprep.subr.bf16.mxu0 %v3762
    %6310 = vmatpush1.bf16.msra.mxu0 %v3761
    %6311 = vmatprep.subr.bf16.mxu0 %v3758
    %6312 = vmatpush1.bf16.msra.mxu0 %v3757
    %6313 = vmatprep.subr.bf16.mxu0 %v3818
    %6314 = vmatpush2.bf16.msra.mxu0 %v3817
    %6315 = vmatprep.subr.bf16.mxu0 %v3814
    %6316 = vmatpush2.bf16.msra.mxu0 %v3813
    %6317 = vmatprep.subr.bf16.mxu0 %v3810
    %6318 = vmatpush2.bf16.msra.mxu0 %v3809
    %6319 = vmatprep.subr.bf16.mxu0 %v3806
    %6320 = vmatpush2.bf16.msra.mxu0 %v3805
    %6321 = vmatprep.subr.bf16.mxu0 %v3802
    %6322 = vmatpush2.bf16.msra.mxu0 %v3801
    %6323 = vmatprep.subr.bf16.mxu0 %v3798
    %6324 = vmatpush2.bf16.msra.mxu0 %v3797
    %6325 = vmatprep.subr.bf16.mxu0 %v3794
    %6326 = vmatpush2.bf16.msra.mxu0 %v3793
    %6327 = vmatprep.subr.bf16.mxu0 %v3790
    %6328 = vmatpush2.bf16.msra.mxu0 %v3789
    %6329 = vmatprep.mubr.bf16.mxu0 %v1380
    %6330 = vmatmul.mubr.bf16.gmra.mxu0 %v1379
    %v6331 = vpop.f32.mrf.mxu0
    %v6332 = vadd.f32 %v6219, %v6331
    %v6333 = vpop.f32.mrf.mxu0
    %v6334 = vadd.f32 %v6221, %v6333
    %v6335 = vpop.f32.mrf.mxu0
    %v6336 = vadd.f32 %v6223, %v6335
    %v6337 = vpop.f32.mrf.mxu0
    %v6338 = vadd.f32 %v6225, %v6337
    %6339 = vmatprep.mubr.bf16.mxu0 %v1399
    %6340 = vmatmul.mubr.bf16.gmra.mxu0 %v1398
    %v6341 = vpop.f32.mrf.mxu0
    %v6342 = vadd.f32 %v6229, %v6341
    %v6343 = vpop.f32.mrf.mxu0
    %v6344 = vadd.f32 %v6231, %v6343
    %v6345 = vpop.f32.mrf.mxu0
    %v6346 = vadd.f32 %v6233, %v6345
    %v6347 = vpop.f32.mrf.mxu0
    %v6348 = vadd.f32 %v6235, %v6347
    %6349 = vmatprep.mubr.bf16.mxu0 %v1418
    %6350 = vmatmul.mubr.bf16.gmra.mxu0 %v1417
    %v6351 = vpop.f32.mrf.mxu0
    %v6352 = vadd.f32 %v6239, %v6351
    %v6353 = vpop.f32.mrf.mxu0
    %v6354 = vadd.f32 %v6241, %v6353
    %v6355 = vpop.f32.mrf.mxu0
    %v6356 = vadd.f32 %v6243, %v6355
    %v6357 = vpop.f32.mrf.mxu0
    %v6358 = vadd.f32 %v6245, %v6357
    %6359 = vmatprep.mubr.bf16.mxu0 %v1437
    %6360 = vmatmul.mubr.bf16.gmra.mxu0 %v1436
    %v6361 = vpop.f32.mrf.mxu0
    %v6362 = vadd.f32 %v6249, %v6361
    %v6363 = vpop.f32.mrf.mxu0
    %v6364 = vadd.f32 %v6251, %v6363
    %v6365 = vpop.f32.mrf.mxu0
    %v6366 = vadd.f32 %v6253, %v6365
    %v6367 = vpop.f32.mrf.mxu0
    %v6368 = vadd.f32 %v6255, %v6367
    %6369 = vmatprep.mubr.bf16.mxu0 %v1456
    %6370 = vmatmul.mubr.bf16.gmra.mxu0 %v1455
    %v6371 = vpop.f32.mrf.mxu0
    %v6372 = vadd.f32 %v6259, %v6371
    %v6373 = vpop.f32.mrf.mxu0
    %v6374 = vadd.f32 %v6261, %v6373
    %v6375 = vpop.f32.mrf.mxu0
    %v6376 = vadd.f32 %v6263, %v6375
    %v6377 = vpop.f32.mrf.mxu0
    %v6378 = vadd.f32 %v6265, %v6377
    %6379 = vmatprep.mubr.bf16.mxu0 %v1475
    %6380 = vmatmul.mubr.bf16.gmra.mxu0 %v1474
    %v6381 = vpop.f32.mrf.mxu0
    %v6382 = vadd.f32 %v6269, %v6381
    %v6383 = vpop.f32.mrf.mxu0
    %v6384 = vadd.f32 %v6271, %v6383
    %v6385 = vpop.f32.mrf.mxu0
    %v6386 = vadd.f32 %v6273, %v6385
    %v6387 = vpop.f32.mrf.mxu0
    %v6388 = vadd.f32 %v6275, %v6387
    %6389 = vmatprep.mubr.bf16.mxu0 %v1494
    %6390 = vmatmul.mubr.bf16.gmra.mxu0 %v1493
    %v6391 = vpop.f32.mrf.mxu0
    %v6392 = vadd.f32 %v6279, %v6391
    %v6393 = vpop.f32.mrf.mxu0
    %v6394 = vadd.f32 %v6281, %v6393
    %v6395 = vpop.f32.mrf.mxu0
    %v6396 = vadd.f32 %v6283, %v6395
    %v6397 = vpop.f32.mrf.mxu0
    %v6398 = vadd.f32 %v6285, %v6397
    %6399 = vmatprep.mubr.bf16.mxu0 %v1513
    %6400 = vmatmul.mubr.bf16.gmra.mxu0 %v1512
    %v6401 = vpop.f32.mrf.mxu0
    %v6402 = vadd.f32 %v6289, %v6401
    %v6403 = vpop.f32.mrf.mxu0
    %v6404 = vadd.f32 %v6291, %v6403
    %v6405 = vpop.f32.mrf.mxu0
    %v6406 = vadd.f32 %v6293, %v6405
    %v6407 = vpop.f32.mrf.mxu0
    %v6408 = vadd.f32 %v6295, %v6407
    %6409 = vdwg.mxu0
    %6410 = vmatprep.subr.bf16.mxu0 %v3850
    %6411 = vmatpush1.bf16.msra.mxu0 %v3849
    %6412 = vmatprep.subr.bf16.mxu0 %v3846
    %6413 = vmatpush1.bf16.msra.mxu0 %v3845
    %6414 = vmatprep.subr.bf16.mxu0 %v3842
    %6415 = vmatpush1.bf16.msra.mxu0 %v3841
    %6416 = vmatprep.subr.bf16.mxu0 %v3838
    %6417 = vmatpush1.bf16.msra.mxu0 %v3837
    %6418 = vmatprep.subr.bf16.mxu0 %v3834
    %6419 = vmatpush1.bf16.msra.mxu0 %v3833
    %6420 = vmatprep.subr.bf16.mxu0 %v3830
    %6421 = vmatpush1.bf16.msra.mxu0 %v3829
    %6422 = vmatprep.subr.bf16.mxu0 %v3826
    %6423 = vmatpush1.bf16.msra.mxu0 %v3825
    %6424 = vmatprep.subr.bf16.mxu0 %v3822
    %6425 = vmatpush1.bf16.msra.mxu0 %v3821
    %6426 = vmatprep.subr.bf16.mxu0 %v3882
    %6427 = vmatpush2.bf16.msra.mxu0 %v3881
    %6428 = vmatprep.subr.bf16.mxu0 %v3878
    %6429 = vmatpush2.bf16.msra.mxu0 %v3877
    %6430 = vmatprep.subr.bf16.mxu0 %v3874
    %6431 = vmatpush2.bf16.msra.mxu0 %v3873
    %6432 = vmatprep.subr.bf16.mxu0 %v3870
    %6433 = vmatpush2.bf16.msra.mxu0 %v3869
    %6434 = vmatprep.subr.bf16.mxu0 %v3866
    %6435 = vmatpush2.bf16.msra.mxu0 %v3865
    %6436 = vmatprep.subr.bf16.mxu0 %v3862
    %6437 = vmatpush2.bf16.msra.mxu0 %v3861
    %6438 = vmatprep.subr.bf16.mxu0 %v3858
    %6439 = vmatpush2.bf16.msra.mxu0 %v3857
    %6440 = vmatprep.subr.bf16.mxu0 %v3854
    %6441 = vmatpush2.bf16.msra.mxu0 %v3853
    %6442 = vmatprep.mubr.bf16.mxu0 %v1382
    %6443 = vmatmul.mubr.bf16.gmra.mxu0 %v1381
    %v6444 = vpop.f32.mrf.mxu0
    %v6445 = vadd.f32 %v6332, %v6444
    %v6446 = vpop.f32.mrf.mxu0
    %v6447 = vadd.f32 %v6334, %v6446
    %v6448 = vpop.f32.mrf.mxu0
    %v6449 = vadd.f32 %v6336, %v6448
    %v6450 = vpop.f32.mrf.mxu0
    %v6451 = vadd.f32 %v6338, %v6450
    %6452 = vmatprep.mubr.bf16.mxu0 %v1401
    %6453 = vmatmul.mubr.bf16.gmra.mxu0 %v1400
    %v6454 = vpop.f32.mrf.mxu0
    %v6455 = vadd.f32 %v6342, %v6454
    %v6456 = vpop.f32.mrf.mxu0
    %v6457 = vadd.f32 %v6344, %v6456
    %v6458 = vpop.f32.mrf.mxu0
    %v6459 = vadd.f32 %v6346, %v6458
    %v6460 = vpop.f32.mrf.mxu0
    %v6461 = vadd.f32 %v6348, %v6460
    %6462 = vmatprep.mubr.bf16.mxu0 %v1420
    %6463 = vmatmul.mubr.bf16.gmra.mxu0 %v1419
    %v6464 = vpop.f32.mrf.mxu0
    %v6465 = vadd.f32 %v6352, %v6464
    %v6466 = vpop.f32.mrf.mxu0
    %v6467 = vadd.f32 %v6354, %v6466
    %v6468 = vpop.f32.mrf.mxu0
    %v6469 = vadd.f32 %v6356, %v6468
    %v6470 = vpop.f32.mrf.mxu0
    %v6471 = vadd.f32 %v6358, %v6470
    %6472 = vmatprep.mubr.bf16.mxu0 %v1439
    %6473 = vmatmul.mubr.bf16.gmra.mxu0 %v1438
    %v6474 = vpop.f32.mrf.mxu0
    %v6475 = vadd.f32 %v6362, %v6474
    %v6476 = vpop.f32.mrf.mxu0
    %v6477 = vadd.f32 %v6364, %v6476
    %v6478 = vpop.f32.mrf.mxu0
    %v6479 = vadd.f32 %v6366, %v6478
    %v6480 = vpop.f32.mrf.mxu0
    %v6481 = vadd.f32 %v6368, %v6480
    %6482 = vmatprep.mubr.bf16.mxu0 %v1458
    %6483 = vmatmul.mubr.bf16.gmra.mxu0 %v1457
    %v6484 = vpop.f32.mrf.mxu0
    %v6485 = vadd.f32 %v6372, %v6484
    %v6486 = vpop.f32.mrf.mxu0
    %v6487 = vadd.f32 %v6374, %v6486
    %v6488 = vpop.f32.mrf.mxu0
    %v6489 = vadd.f32 %v6376, %v6488
    %v6490 = vpop.f32.mrf.mxu0
    %v6491 = vadd.f32 %v6378, %v6490
    %6492 = vmatprep.mubr.bf16.mxu0 %v1477
    %6493 = vmatmul.mubr.bf16.gmra.mxu0 %v1476
    %v6494 = vpop.f32.mrf.mxu0
    %v6495 = vadd.f32 %v6382, %v6494
    %v6496 = vpop.f32.mrf.mxu0
    %v6497 = vadd.f32 %v6384, %v6496
    %v6498 = vpop.f32.mrf.mxu0
    %v6499 = vadd.f32 %v6386, %v6498
    %v6500 = vpop.f32.mrf.mxu0
    %v6501 = vadd.f32 %v6388, %v6500
    %6502 = vmatprep.mubr.bf16.mxu0 %v1496
    %6503 = vmatmul.mubr.bf16.gmra.mxu0 %v1495
    %v6504 = vpop.f32.mrf.mxu0
    %v6505 = vadd.f32 %v6392, %v6504
    %v6506 = vpop.f32.mrf.mxu0
    %v6507 = vadd.f32 %v6394, %v6506
    %v6508 = vpop.f32.mrf.mxu0
    %v6509 = vadd.f32 %v6396, %v6508
    %v6510 = vpop.f32.mrf.mxu0
    %v6511 = vadd.f32 %v6398, %v6510
    %6512 = vmatprep.mubr.bf16.mxu0 %v1515
    %6513 = vmatmul.mubr.bf16.gmra.mxu0 %v1514
    %v6514 = vpop.f32.mrf.mxu0
    %v6515 = vadd.f32 %v6402, %v6514
    %v6516 = vpop.f32.mrf.mxu0
    %v6517 = vadd.f32 %v6404, %v6516
    %v6518 = vpop.f32.mrf.mxu0
    %v6519 = vadd.f32 %v6406, %v6518
    %v6520 = vpop.f32.mrf.mxu0
    %v6521 = vadd.f32 %v6408, %v6520
    %6522 = vdwg.mxu0
    %6523 = vmatprep.subr.bf16.mxu0 %v3914
    %6524 = vmatpush1.bf16.msra.mxu0 %v3913
    %6525 = vmatprep.subr.bf16.mxu0 %v3910
    %6526 = vmatpush1.bf16.msra.mxu0 %v3909
    %6527 = vmatprep.subr.bf16.mxu0 %v3906
    %6528 = vmatpush1.bf16.msra.mxu0 %v3905
    %6529 = vmatprep.subr.bf16.mxu0 %v3902
    %6530 = vmatpush1.bf16.msra.mxu0 %v3901
    %6531 = vmatprep.subr.bf16.mxu0 %v3898
    %6532 = vmatpush1.bf16.msra.mxu0 %v3897
    %6533 = vmatprep.subr.bf16.mxu0 %v3894
    %6534 = vmatpush1.bf16.msra.mxu0 %v3893
    %6535 = vmatprep.subr.bf16.mxu0 %v3890
    %6536 = vmatpush1.bf16.msra.mxu0 %v3889
    %6537 = vmatprep.subr.bf16.mxu0 %v3886
    %6538 = vmatpush1.bf16.msra.mxu0 %v3885
    %6539 = vmatprep.subr.bf16.mxu0 %v3946
    %6540 = vmatpush2.bf16.msra.mxu0 %v3945
    %6541 = vmatprep.subr.bf16.mxu0 %v3942
    %6542 = vmatpush2.bf16.msra.mxu0 %v3941
    %6543 = vmatprep.subr.bf16.mxu0 %v3938
    %6544 = vmatpush2.bf16.msra.mxu0 %v3937
    %6545 = vmatprep.subr.bf16.mxu0 %v3934
    %6546 = vmatpush2.bf16.msra.mxu0 %v3933
    %6547 = vmatprep.subr.bf16.mxu0 %v3930
    %6548 = vmatpush2.bf16.msra.mxu0 %v3929
    %6549 = vmatprep.subr.bf16.mxu0 %v3926
    %6550 = vmatpush2.bf16.msra.mxu0 %v3925
    %6551 = vmatprep.subr.bf16.mxu0 %v3922
    %6552 = vmatpush2.bf16.msra.mxu0 %v3921
    %6553 = vmatprep.subr.bf16.mxu0 %v3918
    %6554 = vmatpush2.bf16.msra.mxu0 %v3917
    %6555 = vmatprep.mubr.bf16.mxu0 %v1384
    %6556 = vmatmul.mubr.bf16.gmra.mxu0 %v1383
    %v6557 = vpop.f32.mrf.mxu0
    %v6558 = vadd.f32 %v6445, %v6557
    %v6559 = vpop.f32.mrf.mxu0
    %v6560 = vadd.f32 %v6447, %v6559
    %v6561 = vpop.f32.mrf.mxu0
    %v6562 = vadd.f32 %v6449, %v6561
    %v6563 = vpop.f32.mrf.mxu0
    %v6564 = vadd.f32 %v6451, %v6563
    %6565 = vmatprep.mubr.bf16.mxu0 %v1403
    %6566 = vmatmul.mubr.bf16.gmra.mxu0 %v1402
    %v6567 = vpop.f32.mrf.mxu0
    %v6568 = vadd.f32 %v6455, %v6567
    %v6569 = vpop.f32.mrf.mxu0
    %v6570 = vadd.f32 %v6457, %v6569
    %v6571 = vpop.f32.mrf.mxu0
    %v6572 = vadd.f32 %v6459, %v6571
    %v6573 = vpop.f32.mrf.mxu0
    %v6574 = vadd.f32 %v6461, %v6573
    %6575 = vmatprep.mubr.bf16.mxu0 %v1422
    %6576 = vmatmul.mubr.bf16.gmra.mxu0 %v1421
    %v6577 = vpop.f32.mrf.mxu0
    %v6578 = vadd.f32 %v6465, %v6577
    %v6579 = vpop.f32.mrf.mxu0
    %v6580 = vadd.f32 %v6467, %v6579
    %v6581 = vpop.f32.mrf.mxu0
    %v6582 = vadd.f32 %v6469, %v6581
    %v6583 = vpop.f32.mrf.mxu0
    %v6584 = vadd.f32 %v6471, %v6583
    %6585 = vmatprep.mubr.bf16.mxu0 %v1441
    %6586 = vmatmul.mubr.bf16.gmra.mxu0 %v1440
    %v6587 = vpop.f32.mrf.mxu0
    %v6588 = vadd.f32 %v6475, %v6587
    %v6589 = vpop.f32.mrf.mxu0
    %v6590 = vadd.f32 %v6477, %v6589
    %v6591 = vpop.f32.mrf.mxu0
    %v6592 = vadd.f32 %v6479, %v6591
    %v6593 = vpop.f32.mrf.mxu0
    %v6594 = vadd.f32 %v6481, %v6593
    %6595 = vmatprep.mubr.bf16.mxu0 %v1460
    %6596 = vmatmul.mubr.bf16.gmra.mxu0 %v1459
    %v6597 = vpop.f32.mrf.mxu0
    %v6598 = vadd.f32 %v6485, %v6597
    %v6599 = vpop.f32.mrf.mxu0
    %v6600 = vadd.f32 %v6487, %v6599
    %v6601 = vpop.f32.mrf.mxu0
    %v6602 = vadd.f32 %v6489, %v6601
    %v6603 = vpop.f32.mrf.mxu0
    %v6604 = vadd.f32 %v6491, %v6603
    %6605 = vmatprep.mubr.bf16.mxu0 %v1479
    %6606 = vmatmul.mubr.bf16.gmra.mxu0 %v1478
    %v6607 = vpop.f32.mrf.mxu0
    %v6608 = vadd.f32 %v6495, %v6607
    %v6609 = vpop.f32.mrf.mxu0
    %v6610 = vadd.f32 %v6497, %v6609
    %v6611 = vpop.f32.mrf.mxu0
    %v6612 = vadd.f32 %v6499, %v6611
    %v6613 = vpop.f32.mrf.mxu0
    %v6614 = vadd.f32 %v6501, %v6613
    %6615 = vmatprep.mubr.bf16.mxu0 %v1498
    %6616 = vmatmul.mubr.bf16.gmra.mxu0 %v1497
    %v6617 = vpop.f32.mrf.mxu0
    %v6618 = vadd.f32 %v6505, %v6617
    %v6619 = vpop.f32.mrf.mxu0
    %v6620 = vadd.f32 %v6507, %v6619
    %v6621 = vpop.f32.mrf.mxu0
    %v6622 = vadd.f32 %v6509, %v6621
    %v6623 = vpop.f32.mrf.mxu0
    %v6624 = vadd.f32 %v6511, %v6623
    %6625 = vmatprep.mubr.bf16.mxu0 %v1517
    %6626 = vmatmul.mubr.bf16.gmra.mxu0 %v1516
    %v6627 = vpop.f32.mrf.mxu0
    %v6628 = vadd.f32 %v6515, %v6627
    %v6629 = vpop.f32.mrf.mxu0
    %v6630 = vadd.f32 %v6517, %v6629
    %v6631 = vpop.f32.mrf.mxu0
    %v6632 = vadd.f32 %v6519, %v6631
    %v6633 = vpop.f32.mrf.mxu0
    %v6634 = vadd.f32 %v6521, %v6633
    %6635 = vdwg.mxu0
    %6636 = vmatprep.subr.bf16.mxu0 %v3978
    %6637 = vmatpush1.bf16.msra.mxu0 %v3977
    %6638 = vmatprep.subr.bf16.mxu0 %v3974
    %6639 = vmatpush1.bf16.msra.mxu0 %v3973
    %6640 = vmatprep.subr.bf16.mxu0 %v3970
    %6641 = vmatpush1.bf16.msra.mxu0 %v3969
    %6642 = vmatprep.subr.bf16.mxu0 %v3966
    %6643 = vmatpush1.bf16.msra.mxu0 %v3965
    %6644 = vmatprep.subr.bf16.mxu0 %v3962
    %6645 = vmatpush1.bf16.msra.mxu0 %v3961
    %6646 = vmatprep.subr.bf16.mxu0 %v3958
    %6647 = vmatpush1.bf16.msra.mxu0 %v3957
    %6648 = vmatprep.subr.bf16.mxu0 %v3954
    %6649 = vmatpush1.bf16.msra.mxu0 %v3953
    %6650 = vmatprep.subr.bf16.mxu0 %v3950
    %6651 = vmatpush1.bf16.msra.mxu0 %v3949
    %6652 = vmatprep.subr.bf16.mxu0 %v4010
    %6653 = vmatpush2.bf16.msra.mxu0 %v4009
    %6654 = vmatprep.subr.bf16.mxu0 %v4006
    %6655 = vmatpush2.bf16.msra.mxu0 %v4005
    %6656 = vmatprep.subr.bf16.mxu0 %v4002
    %6657 = vmatpush2.bf16.msra.mxu0 %v4001
    %6658 = vmatprep.subr.bf16.mxu0 %v3998
    %6659 = vmatpush2.bf16.msra.mxu0 %v3997
    %6660 = vmatprep.subr.bf16.mxu0 %v3994
    %6661 = vmatpush2.bf16.msra.mxu0 %v3993
    %6662 = vmatprep.subr.bf16.mxu0 %v3990
    %6663 = vmatpush2.bf16.msra.mxu0 %v3989
    %6664 = vmatprep.subr.bf16.mxu0 %v3986
    %6665 = vmatpush2.bf16.msra.mxu0 %v3985
    %6666 = vmatprep.subr.bf16.mxu0 %v3982
    %6667 = vmatpush2.bf16.msra.mxu0 %v3981
    %6668 = vmatprep.mubr.bf16.mxu0 %v1386
    %6669 = vmatmul.mubr.bf16.gmra.mxu0 %v1385
    %v6670 = vpop.f32.mrf.mxu0
    %v6671 = vadd.f32 %v6558, %v6670
    %v6672 = vpop.f32.mrf.mxu0
    %v6673 = vadd.f32 %v6560, %v6672
    %v6674 = vpop.f32.mrf.mxu0
    %v6675 = vadd.f32 %v6562, %v6674
    %v6676 = vpop.f32.mrf.mxu0
    %v6677 = vadd.f32 %v6564, %v6676
    %6678 = vmatprep.mubr.bf16.mxu0 %v1405
    %6679 = vmatmul.mubr.bf16.gmra.mxu0 %v1404
    %v6680 = vpop.f32.mrf.mxu0
    %v6681 = vadd.f32 %v6568, %v6680
    %v6682 = vpop.f32.mrf.mxu0
    %v6683 = vadd.f32 %v6570, %v6682
    %v6684 = vpop.f32.mrf.mxu0
    %v6685 = vadd.f32 %v6572, %v6684
    %v6686 = vpop.f32.mrf.mxu0
    %v6687 = vadd.f32 %v6574, %v6686
    %6688 = vmatprep.mubr.bf16.mxu0 %v1424
    %6689 = vmatmul.mubr.bf16.gmra.mxu0 %v1423
    %v6690 = vpop.f32.mrf.mxu0
    %v6691 = vadd.f32 %v6578, %v6690
    %v6692 = vpop.f32.mrf.mxu0
    %v6693 = vadd.f32 %v6580, %v6692
    %v6694 = vpop.f32.mrf.mxu0
    %v6695 = vadd.f32 %v6582, %v6694
    %v6696 = vpop.f32.mrf.mxu0
    %v6697 = vadd.f32 %v6584, %v6696
    %6698 = vmatprep.mubr.bf16.mxu0 %v1443
    %6699 = vmatmul.mubr.bf16.gmra.mxu0 %v1442
    %v6700 = vpop.f32.mrf.mxu0
    %v6701 = vadd.f32 %v6588, %v6700
    %v6702 = vpop.f32.mrf.mxu0
    %v6703 = vadd.f32 %v6590, %v6702
    %v6704 = vpop.f32.mrf.mxu0
    %v6705 = vadd.f32 %v6592, %v6704
    %v6706 = vpop.f32.mrf.mxu0
    %v6707 = vadd.f32 %v6594, %v6706
    %6708 = vmatprep.mubr.bf16.mxu0 %v1462
    %6709 = vmatmul.mubr.bf16.gmra.mxu0 %v1461
    %v6710 = vpop.f32.mrf.mxu0
    %v6711 = vadd.f32 %v6598, %v6710
    %v6712 = vpop.f32.mrf.mxu0
    %v6713 = vadd.f32 %v6600, %v6712
    %v6714 = vpop.f32.mrf.mxu0
    %v6715 = vadd.f32 %v6602, %v6714
    %v6716 = vpop.f32.mrf.mxu0
    %v6717 = vadd.f32 %v6604, %v6716
    %6718 = vmatprep.mubr.bf16.mxu0 %v1481
    %6719 = vmatmul.mubr.bf16.gmra.mxu0 %v1480
    %v6720 = vpop.f32.mrf.mxu0
    %v6721 = vadd.f32 %v6608, %v6720
    %v6722 = vpop.f32.mrf.mxu0
    %v6723 = vadd.f32 %v6610, %v6722
    %v6724 = vpop.f32.mrf.mxu0
    %v6725 = vadd.f32 %v6612, %v6724
    %v6726 = vpop.f32.mrf.mxu0
    %v6727 = vadd.f32 %v6614, %v6726
    %6728 = vmatprep.mubr.bf16.mxu0 %v1500
    %6729 = vmatmul.mubr.bf16.gmra.mxu0 %v1499
    %v6730 = vpop.f32.mrf.mxu0
    %v6731 = vadd.f32 %v6618, %v6730
    %v6732 = vpop.f32.mrf.mxu0
    %v6733 = vadd.f32 %v6620, %v6732
    %v6734 = vpop.f32.mrf.mxu0
    %v6735 = vadd.f32 %v6622, %v6734
    %v6736 = vpop.f32.mrf.mxu0
    %v6737 = vadd.f32 %v6624, %v6736
    %6738 = vmatprep.mubr.bf16.mxu0 %v1519
    %6739 = vmatmul.mubr.bf16.gmra.mxu0 %v1518
    %v6740 = vpop.f32.mrf.mxu0
    %v6741 = vadd.f32 %v6628, %v6740
    %v6742 = vpop.f32.mrf.mxu0
    %v6743 = vadd.f32 %v6630, %v6742
    %v6744 = vpop.f32.mrf.mxu0
    %v6745 = vadd.f32 %v6632, %v6744
    %v6746 = vpop.f32.mrf.mxu0
    %v6747 = vadd.f32 %v6634, %v6746
    %6748 = vdwg.mxu0
    %6749 = vmatprep.subr.bf16.mxu0 %v4042
    %6750 = vmatpush1.bf16.msra.mxu0 %v4041
    %6751 = vmatprep.subr.bf16.mxu0 %v4038
    %6752 = vmatpush1.bf16.msra.mxu0 %v4037
    %6753 = vmatprep.subr.bf16.mxu0 %v4034
    %6754 = vmatpush1.bf16.msra.mxu0 %v4033
    %6755 = vmatprep.subr.bf16.mxu0 %v4030
    %6756 = vmatpush1.bf16.msra.mxu0 %v4029
    %6757 = vmatprep.subr.bf16.mxu0 %v4026
    %6758 = vmatpush1.bf16.msra.mxu0 %v4025
    %6759 = vmatprep.subr.bf16.mxu0 %v4022
    %6760 = vmatpush1.bf16.msra.mxu0 %v4021
    %6761 = vmatprep.subr.bf16.mxu0 %v4018
    %6762 = vmatpush1.bf16.msra.mxu0 %v4017
    %6763 = vmatprep.subr.bf16.mxu0 %v4014
    %6764 = vmatpush1.bf16.msra.mxu0 %v4013
    %6765 = vmatprep.subr.bf16.mxu0 %v4074
    %6766 = vmatpush2.bf16.msra.mxu0 %v4073
    %6767 = vmatprep.subr.bf16.mxu0 %v4070
    %6768 = vmatpush2.bf16.msra.mxu0 %v4069
    %6769 = vmatprep.subr.bf16.mxu0 %v4066
    %6770 = vmatpush2.bf16.msra.mxu0 %v4065
    %6771 = vmatprep.subr.bf16.mxu0 %v4062
    %6772 = vmatpush2.bf16.msra.mxu0 %v4061
    %6773 = vmatprep.subr.bf16.mxu0 %v4058
    %6774 = vmatpush2.bf16.msra.mxu0 %v4057
    %6775 = vmatprep.subr.bf16.mxu0 %v4054
    %6776 = vmatpush2.bf16.msra.mxu0 %v4053
    %6777 = vmatprep.subr.bf16.mxu0 %v4050
    %6778 = vmatpush2.bf16.msra.mxu0 %v4049
    %6779 = vmatprep.subr.bf16.mxu0 %v4046
    %6780 = vmatpush2.bf16.msra.mxu0 %v4045
    %6781 = vmatprep.mubr.bf16.mxu0 %v1388
    %6782 = vmatmul.mubr.bf16.gmra.mxu0 %v1387
    %v6783 = vpop.f32.mrf.mxu0
    %v6784 = vadd.f32 %v6671, %v6783
    %v6785 = vpop.f32.mrf.mxu0
    %v6786 = vadd.f32 %v6673, %v6785
    %v6787 = vpop.f32.mrf.mxu0
    %v6788 = vadd.f32 %v6675, %v6787
    %v6789 = vpop.f32.mrf.mxu0
    %v6790 = vadd.f32 %v6677, %v6789
    %6791 = vmatprep.mubr.bf16.mxu0 %v1407
    %6792 = vmatmul.mubr.bf16.gmra.mxu0 %v1406
    %v6793 = vpop.f32.mrf.mxu0
    %v6794 = vadd.f32 %v6681, %v6793
    %v6795 = vpop.f32.mrf.mxu0
    %v6796 = vadd.f32 %v6683, %v6795
    %v6797 = vpop.f32.mrf.mxu0
    %v6798 = vadd.f32 %v6685, %v6797
    %v6799 = vpop.f32.mrf.mxu0
    %v6800 = vadd.f32 %v6687, %v6799
    %6801 = vmatprep.mubr.bf16.mxu0 %v1426
    %6802 = vmatmul.mubr.bf16.gmra.mxu0 %v1425
    %v6803 = vpop.f32.mrf.mxu0
    %v6804 = vadd.f32 %v6691, %v6803
    %v6805 = vpop.f32.mrf.mxu0
    %v6806 = vadd.f32 %v6693, %v6805
    %v6807 = vpop.f32.mrf.mxu0
    %v6808 = vadd.f32 %v6695, %v6807
    %v6809 = vpop.f32.mrf.mxu0
    %v6810 = vadd.f32 %v6697, %v6809
    %6811 = vmatprep.mubr.bf16.mxu0 %v1445
    %6812 = vmatmul.mubr.bf16.gmra.mxu0 %v1444
    %v6813 = vpop.f32.mrf.mxu0
    %v6814 = vadd.f32 %v6701, %v6813
    %v6815 = vpop.f32.mrf.mxu0
    %v6816 = vadd.f32 %v6703, %v6815
    %v6817 = vpop.f32.mrf.mxu0
    %v6818 = vadd.f32 %v6705, %v6817
    %v6819 = vpop.f32.mrf.mxu0
    %v6820 = vadd.f32 %v6707, %v6819
    %6821 = vmatprep.mubr.bf16.mxu0 %v1464
    %6822 = vmatmul.mubr.bf16.gmra.mxu0 %v1463
    %v6823 = vpop.f32.mrf.mxu0
    %v6824 = vadd.f32 %v6711, %v6823
    %v6825 = vpop.f32.mrf.mxu0
    %v6826 = vadd.f32 %v6713, %v6825
    %v6827 = vpop.f32.mrf.mxu0
    %v6828 = vadd.f32 %v6715, %v6827
    %v6829 = vpop.f32.mrf.mxu0
    %v6830 = vadd.f32 %v6717, %v6829
    %6831 = vmatprep.mubr.bf16.mxu0 %v1483
    %6832 = vmatmul.mubr.bf16.gmra.mxu0 %v1482
    %v6833 = vpop.f32.mrf.mxu0
    %v6834 = vadd.f32 %v6721, %v6833
    %v6835 = vpop.f32.mrf.mxu0
    %v6836 = vadd.f32 %v6723, %v6835
    %v6837 = vpop.f32.mrf.mxu0
    %v6838 = vadd.f32 %v6725, %v6837
    %v6839 = vpop.f32.mrf.mxu0
    %v6840 = vadd.f32 %v6727, %v6839
    %6841 = vmatprep.mubr.bf16.mxu0 %v1502
    %6842 = vmatmul.mubr.bf16.gmra.mxu0 %v1501
    %v6843 = vpop.f32.mrf.mxu0
    %v6844 = vadd.f32 %v6731, %v6843
    %v6845 = vpop.f32.mrf.mxu0
    %v6846 = vadd.f32 %v6733, %v6845
    %v6847 = vpop.f32.mrf.mxu0
    %v6848 = vadd.f32 %v6735, %v6847
    %v6849 = vpop.f32.mrf.mxu0
    %v6850 = vadd.f32 %v6737, %v6849
    %6851 = vmatprep.mubr.bf16.mxu0 %v1521
    %6852 = vmatmul.mubr.bf16.gmra.mxu0 %v1520
    %v6853 = vpop.f32.mrf.mxu0
    %v6854 = vadd.f32 %v6741, %v6853
    %v6855 = vpop.f32.mrf.mxu0
    %v6856 = vadd.f32 %v6743, %v6855
    %v6857 = vpop.f32.mrf.mxu0
    %v6858 = vadd.f32 %v6745, %v6857
    %v6859 = vpop.f32.mrf.mxu0
    %v6860 = vadd.f32 %v6747, %v6859
    %6861 = vdwg.mxu0
    %6862 = vmatprep.subr.bf16.mxu0 %v4106
    %6863 = vmatpush1.bf16.msra.mxu0 %v4105
    %6864 = vmatprep.subr.bf16.mxu0 %v4102
    %6865 = vmatpush1.bf16.msra.mxu0 %v4101
    %6866 = vmatprep.subr.bf16.mxu0 %v4098
    %6867 = vmatpush1.bf16.msra.mxu0 %v4097
    %6868 = vmatprep.subr.bf16.mxu0 %v4094
    %6869 = vmatpush1.bf16.msra.mxu0 %v4093
    %6870 = vmatprep.subr.bf16.mxu0 %v4090
    %6871 = vmatpush1.bf16.msra.mxu0 %v4089
    %6872 = vmatprep.subr.bf16.mxu0 %v4086
    %6873 = vmatpush1.bf16.msra.mxu0 %v4085
    %6874 = vmatprep.subr.bf16.mxu0 %v4082
    %6875 = vmatpush1.bf16.msra.mxu0 %v4081
    %6876 = vmatprep.subr.bf16.mxu0 %v4078
    %6877 = vmatpush1.bf16.msra.mxu0 %v4077
    %6878 = vmatprep.subr.bf16.mxu0 0
    %6879 = vmatpush2.bf16.msra.mxu0 0
    %6880 = vmatprep.subr.bf16.mxu0 0
    %6881 = vmatpush2.bf16.msra.mxu0 0
    %6882 = vmatprep.subr.bf16.mxu0 0
    %6883 = vmatpush2.bf16.msra.mxu0 0
    %6884 = vmatprep.subr.bf16.mxu0 0
    %6885 = vmatpush2.bf16.msra.mxu0 0
    %6886 = vmatprep.subr.bf16.mxu0 0
    %6887 = vmatpush2.bf16.msra.mxu0 0
    %6888 = vmatprep.subr.bf16.mxu0 0
    %6889 = vmatpush2.bf16.msra.mxu0 0
    %6890 = vmatprep.subr.bf16.mxu0 0
    %6891 = vmatpush2.bf16.msra.mxu0 0
    %6892 = vmatprep.subr.bf16.mxu0 0
    %6893 = vmatpush2.bf16.msra.mxu0 0
    %6894 = vmatprep.mubr.bf16.mxu0 0
    %6895 = vmatmul.mubr.bf16.gmra.mxu0 %v1389
    %v6896 = vpop.f32.mrf.mxu0
    %v6897 = vadd.f32 %v6784, %v6896
    %v6898 = vpop.f32.mrf.mxu0
    %v6899 = vadd.f32 %v6786, %v6898
    %v6900 = vpop.f32.mrf.mxu0
    %v6901 = vadd.f32 %v6788, %v6900
    %v6902 = vpop.f32.mrf.mxu0
    %v6903 = vadd.f32 %v6790, %v6902
    %6904 = vmatprep.mubr.bf16.mxu0 0
    %6905 = vmatmul.mubr.bf16.gmra.mxu0 %v1408
    %v6906 = vpop.f32.mrf.mxu0
    %v6907 = vadd.f32 %v6794, %v6906
    %v6908 = vpop.f32.mrf.mxu0
    %v6909 = vadd.f32 %v6796, %v6908
    %v6910 = vpop.f32.mrf.mxu0
    %v6911 = vadd.f32 %v6798, %v6910
    %v6912 = vpop.f32.mrf.mxu0
    %v6913 = vadd.f32 %v6800, %v6912
    %6914 = vmatprep.mubr.bf16.mxu0 0
    %6915 = vmatmul.mubr.bf16.gmra.mxu0 %v1427
    %v6916 = vpop.f32.mrf.mxu0
    %v6917 = vadd.f32 %v6804, %v6916
    %v6918 = vpop.f32.mrf.mxu0
    %v6919 = vadd.f32 %v6806, %v6918
    %v6920 = vpop.f32.mrf.mxu0
    %v6921 = vadd.f32 %v6808, %v6920
    %v6922 = vpop.f32.mrf.mxu0
    %v6923 = vadd.f32 %v6810, %v6922
    %6924 = vmatprep.mubr.bf16.mxu0 0
    %6925 = vmatmul.mubr.bf16.gmra.mxu0 %v1446
    %v6926 = vpop.f32.mrf.mxu0
    %v6927 = vadd.f32 %v6814, %v6926
    %v6928 = vpop.f32.mrf.mxu0
    %v6929 = vadd.f32 %v6816, %v6928
    %v6930 = vpop.f32.mrf.mxu0
    %v6931 = vadd.f32 %v6818, %v6930
    %v6932 = vpop.f32.mrf.mxu0
    %v6933 = vadd.f32 %v6820, %v6932
    %6934 = vmatprep.mubr.bf16.mxu0 0
    %6935 = vmatmul.mubr.bf16.gmra.mxu0 %v1465
    %v6936 = vpop.f32.mrf.mxu0
    %v6937 = vadd.f32 %v6824, %v6936
    %v6938 = vpop.f32.mrf.mxu0
    %v6939 = vadd.f32 %v6826, %v6938
    %v6940 = vpop.f32.mrf.mxu0
    %v6941 = vadd.f32 %v6828, %v6940
    %v6942 = vpop.f32.mrf.mxu0
    %v6943 = vadd.f32 %v6830, %v6942
    %6944 = vmatprep.mubr.bf16.mxu0 0
    %6945 = vmatmul.mubr.bf16.gmra.mxu0 %v1484
    %v6946 = vpop.f32.mrf.mxu0
    %v6947 = vadd.f32 %v6834, %v6946
    %v6948 = vpop.f32.mrf.mxu0
    %v6949 = vadd.f32 %v6836, %v6948
    %v6950 = vpop.f32.mrf.mxu0
    %v6951 = vadd.f32 %v6838, %v6950
    %v6952 = vpop.f32.mrf.mxu0
    %v6953 = vadd.f32 %v6840, %v6952
    %6954 = vmatprep.mubr.bf16.mxu0 0
    %6955 = vmatmul.mubr.bf16.gmra.mxu0 %v1503
    %v6956 = vpop.f32.mrf.mxu0
    %v6957 = vadd.f32 %v6844, %v6956
    %v6958 = vpop.f32.mrf.mxu0
    %v6959 = vadd.f32 %v6846, %v6958
    %v6960 = vpop.f32.mrf.mxu0
    %v6961 = vadd.f32 %v6848, %v6960
    %v6962 = vpop.f32.mrf.mxu0
    %v6963 = vadd.f32 %v6850, %v6962
    %6964 = vmatprep.mubr.bf16.mxu0 0
    %6965 = vmatmul.mubr.bf16.gmra.mxu0 %v1522
    %v6966 = vpop.f32.mrf.mxu0
    %v6967 = vadd.f32 %v6854, %v6966
    %v6968 = vpop.f32.mrf.mxu0
    %v6969 = vadd.f32 %v6856, %v6968
    %v6970 = vpop.f32.mrf.mxu0
    %v6971 = vadd.f32 %v6858, %v6970
    %v6972 = vpop.f32.mrf.mxu0
    %v6973 = vadd.f32 %v6860, %v6972
    %6974 = vdwg.mxu0
    %v6975 = vmax.f32 %v5767, 0.0
    %v6976 = vmax.f32 %v5769, 0.0
    %v6977 = vmax.f32 %v6897, 0.0
    %v6978 = vmax.f32 %v6899, 0.0
    %v6979 = vmax.f32 %v5771, 0.0
    %v6980 = vmax.f32 %v5773, 0.0
    %v6981 = vmax.f32 %v6901, 0.0
    %v6982 = vmax.f32 %v6903, 0.0
    %v6983 = vmax.f32 %v5777, 0.0
    %v6984 = vmax.f32 %v5779, 0.0
    %v6985 = vmax.f32 %v6907, 0.0
    %v6986 = vmax.f32 %v6909, 0.0
    %v6987 = vmax.f32 %v5781, 0.0
    %v6988 = vmax.f32 %v5783, 0.0
    %v6989 = vmax.f32 %v6911, 0.0
    %v6990 = vmax.f32 %v6913, 0.0
    %v6991 = vmax.f32 %v5787, 0.0
    %v6992 = vmax.f32 %v5789, 0.0
    %v6993 = vmax.f32 %v6917, 0.0
    %v6994 = vmax.f32 %v6919, 0.0
    %v6995 = vmax.f32 %v5791, 0.0
    %v6996 = vmax.f32 %v5793, 0.0
    %v6997 = vmax.f32 %v6921, 0.0
    %v6998 = vmax.f32 %v6923, 0.0
    %v6999 = vmax.f32 %v5797, 0.0
    %v7000 = vmax.f32 %v5799, 0.0
    %v7001 = vmax.f32 %v6927, 0.0
    %v7002 = vmax.f32 %v6929, 0.0
    %v7003 = vmax.f32 %v5801, 0.0
    %v7004 = vmax.f32 %v5803, 0.0
    %v7005 = vmax.f32 %v6931, 0.0
    %v7006 = vmax.f32 %v6933, 0.0
    %v7007 = vmax.f32 %v5807, 0.0
    %v7008 = vmax.f32 %v5809, 0.0
    %v7009 = vmax.f32 %v6937, 0.0
    %v7010 = vmax.f32 %v6939, 0.0
    %v7011 = vmax.f32 %v5811, 0.0
    %v7012 = vmax.f32 %v5813, 0.0
    %v7013 = vmax.f32 %v6941, 0.0
    %v7014 = vmax.f32 %v6943, 0.0
    %v7015 = vmax.f32 %v5817, 0.0
    %v7016 = vmax.f32 %v5819, 0.0
    %v7017 = vmax.f32 %v6947, 0.0
    %v7018 = vmax.f32 %v6949, 0.0
    %v7019 = vmax.f32 %v5821, 0.0
    %v7020 = vmax.f32 %v5823, 0.0
    %v7021 = vmax.f32 %v6951, 0.0
    %v7022 = vmax.f32 %v6953, 0.0
    %v7023 = vmax.f32 %v5827, 0.0
    %v7024 = vmax.f32 %v5829, 0.0
    %v7025 = vmax.f32 %v6957, 0.0
    %v7026 = vmax.f32 %v6959, 0.0
    %v7027 = vmax.f32 %v5831, 0.0
    %v7028 = vmax.f32 %v5833, 0.0
    %v7029 = vmax.f32 %v6961, 0.0
    %v7030 = vmax.f32 %v6963, 0.0
    %v7031 = vmax.f32 %v5837, 0.0
    %v7032 = vmax.f32 %v5839, 0.0
    %v7033 = vmax.f32 %v6967, 0.0
    %v7034 = vmax.f32 %v6969, 0.0
    %v7035 = vmax.f32 %v5841, 0.0
    %v7036 = vmax.f32 %v5843, 0.0
    %v7037 = vmax.f32 %v6971, 0.0
    %v7038 = vmax.f32 %v6973, 0.0
    %v7039 = vpack.c.bf16 %v6979, %v6975
    %v7040 = vpack.c.bf16 %v6980, %v6976
    %v7041 = vpack.c.bf16 %v6981, %v6977
    %v7042 = vpack.c.bf16 %v6982, %v6978
    %v7043 = vpack.c.bf16 %v6987, %v6983
    %v7044 = vpack.c.bf16 %v6988, %v6984
    %v7045 = vpack.c.bf16 %v6989, %v6985
    %v7046 = vpack.c.bf16 %v6990, %v6986
    %v7047 = vpack.c.bf16 %v6995, %v6991
    %v7048 = vpack.c.bf16 %v6996, %v6992
    %v7049 = vpack.c.bf16 %v6997, %v6993
    %v7050 = vpack.c.bf16 %v6998, %v6994
    %v7051 = vpack.c.bf16 %v7003, %v6999
    %v7052 = vpack.c.bf16 %v7004, %v7000
    %v7053 = vpack.c.bf16 %v7005, %v7001
    %v7054 = vpack.c.bf16 %v7006, %v7002
    %v7055 = vpack.c.bf16 %v7011, %v7007
    %v7056 = vpack.c.bf16 %v7012, %v7008
    %v7057 = vpack.c.bf16 %v7013, %v7009
    %v7058 = vpack.c.bf16 %v7014, %v7010
    %v7059 = vpack.c.bf16 %v7019, %v7015
    %v7060 = vpack.c.bf16 %v7020, %v7016
    %v7061 = vpack.c.bf16 %v7021, %v7017
    %v7062 = vpack.c.bf16 %v7022, %v7018
    %v7063 = vpack.c.bf16 %v7027, %v7023
    %v7064 = vpack.c.bf16 %v7028, %v7024
    %v7065 = vpack.c.bf16 %v7029, %v7025
    %v7066 = vpack.c.bf16 %v7030, %v7026
    %v7067 = vpack.c.bf16 %v7035, %v7031
    %v7068 = vpack.c.bf16 %v7036, %v7032
    %v7069 = vpack.c.bf16 %v7037, %v7033
    %v7070 = vpack.c.bf16 %v7038, %v7034
    %v7071 = vld [vmem:[#allocation8] sm:$0xff]
    %v7072 = vld [vmem:[#allocation8 + $0x8] sm:$0xff]
    %v7073 = vld [vmem:[#allocation8 + $0x10] sm:$0xff]
    %v7074 = vld [vmem:[#allocation8 + $0x18] sm:$0xff]
    %v7075 = vld [vmem:[#allocation8 + $0x20] sm:$0xff]
    %v7076 = vld [vmem:[#allocation8 + $0x28] sm:$0xff]
    %v7077 = vld [vmem:[#allocation8 + $0x30] sm:$0xff]
    %v7078 = vld [vmem:[#allocation8 + $0x38] sm:$0xff]
    %v7079 = vld [vmem:[#allocation8 + $0x40] sm:$0xff]
    %v7080 = vld [vmem:[#allocation8 + $0x48] sm:$0xff]
    %v7081 = vld [vmem:[#allocation8 + $0x50] sm:$0xff]
    %v7082 = vld [vmem:[#allocation8 + $0x58] sm:$0xff]
    %v7083 = vld [vmem:[#allocation8 + $0x60] sm:$0xff]
    %v7084 = vld [vmem:[#allocation8 + $0x68] sm:$0xff]
    %v7085 = vld [vmem:[#allocation8 + $0x70] sm:$0xff]
    %v7086 = vld [vmem:[#allocation8 + $0x78] sm:$0xff]
    %v7087 = vld [vmem:[#allocation8 + $0x80] sm:$0xff]
    %v7088 = vld [vmem:[#allocation8 + $0x88] sm:$0xff]
    %v7089 = vld [vmem:[#allocation8 + $0x90] sm:$0xff]
    %v7090 = vld [vmem:[#allocation8 + $0x98] sm:$0xff]
    %v7091 = vld [vmem:[#allocation8 + $0xa0] sm:$0xff]
    %v7092 = vld [vmem:[#allocation8 + $0xa8] sm:$0xff]
    %v7093 = vld [vmem:[#allocation8 + $0xb0] sm:$0xff]
    %v7094 = vld [vmem:[#allocation8 + $0xb8] sm:$0xff]
    %v7095 = vld [vmem:[#allocation8 + $0xc0] sm:$0xff]
    %v7096 = vld [vmem:[#allocation8 + $0xc8] sm:$0xff]
    %v7097 = vld [vmem:[#allocation8 + $0xd0] sm:$0xff]
    %v7098 = vld [vmem:[#allocation8 + $0xd8] sm:$0xff]
    %v7099 = vld [vmem:[#allocation8 + $0xe0] sm:$0xff]
    %v7100 = vld [vmem:[#allocation8 + $0xe8] sm:$0xff]
    %v7101 = vld [vmem:[#allocation8 + $0xf0] sm:$0xff]
    %v7102 = vld [vmem:[#allocation8 + $0xf8] sm:$0xff]
    %v7103 = vld [vmem:[#allocation8 + $0x100] sm:$0xff]
    %v7104 = vld [vmem:[#allocation8 + $0x108] sm:$0xff]
    %v7105 = vld [vmem:[#allocation8 + $0x110] sm:$0xff]
    %v7106 = vld [vmem:[#allocation8 + $0x118] sm:$0xff]
    %v7107 = vld [vmem:[#allocation8 + $0x120] sm:$0xff]
    %v7108 = vld [vmem:[#allocation8 + $0x128] sm:$0xff]
    %v7109 = vld [vmem:[#allocation8 + $0x130] sm:$0xff]
    %v7110 = vld [vmem:[#allocation8 + $0x138] sm:$0xff]
    %v7111 = vld [vmem:[#allocation8 + $0x140] sm:$0xff]
    %v7112 = vld [vmem:[#allocation8 + $0x148] sm:$0xff]
    %v7113 = vld [vmem:[#allocation8 + $0x150] sm:$0xff]
    %v7114 = vld [vmem:[#allocation8 + $0x158] sm:$0xff]
    %v7115 = vld [vmem:[#allocation8 + $0x160] sm:$0xff]
    %v7116 = vld [vmem:[#allocation8 + $0x168] sm:$0xff]
    %v7117 = vld [vmem:[#allocation8 + $0x170] sm:$0xff]
    %v7118 = vld [vmem:[#allocation8 + $0x178] sm:$0xff]
    %v7119 = vld [vmem:[#allocation8 + $0x180] sm:$0xff]
    %v7120 = vld [vmem:[#allocation8 + $0x188] sm:$0xff]
    %v7121 = vld [vmem:[#allocation8 + $0x190] sm:$0xff]
    %v7122 = vld [vmem:[#allocation8 + $0x198] sm:$0xff]
    %v7123 = vld [vmem:[#allocation8 + $0x1a0] sm:$0xff]
    %v7124 = vld [vmem:[#allocation8 + $0x1a8] sm:$0xff]
    %v7125 = vld [vmem:[#allocation8 + $0x1b0] sm:$0xff]
    %v7126 = vld [vmem:[#allocation8 + $0x1b8] sm:$0xff]
    %v7127 = vld [vmem:[#allocation8 + $0x1c0] sm:$0xff]
    %v7128 = vld [vmem:[#allocation8 + $0x1c8] sm:$0xff]
    %v7129 = vld [vmem:[#allocation8 + $0x1d0] sm:$0xff]
    %v7130 = vld [vmem:[#allocation8 + $0x1d8] sm:$0xff]
    %v7131 = vld [vmem:[#allocation8 + $0x1e0] sm:$0xff]
    %v7132 = vld [vmem:[#allocation8 + $0x1e8] sm:$0xff]
    %v7133 = vld [vmem:[#allocation8 + $0x1f0] sm:$0xff]
    %v7134 = vld [vmem:[#allocation8 + $0x1f8] sm:$0xff]
    %v7135 = vld [vmem:[#allocation8 + $0x200] sm:$0xff]
    %v7136 = vld [vmem:[#allocation8 + $0x208] sm:$0xff]
    %v7137 = vld [vmem:[#allocation8 + $0x210] sm:$0xff]
    %v7138 = vld [vmem:[#allocation8 + $0x218] sm:$0xff]
    %v7139 = vld [vmem:[#allocation8 + $0x220] sm:$0xff]
    %v7140 = vld [vmem:[#allocation8 + $0x228] sm:$0xff]
    %v7141 = vld [vmem:[#allocation8 + $0x230] sm:$0xff]
    %v7142 = vld [vmem:[#allocation8 + $0x238] sm:$0xff]
    %v7143 = vld [vmem:[#allocation8 + $0x240] sm:$0xff]
    %v7144 = vld [vmem:[#allocation8 + $0x248] sm:$0xff]
    %v7145 = vld [vmem:[#allocation8 + $0x250] sm:$0xff]
    %v7146 = vld [vmem:[#allocation8 + $0x258] sm:$0xff]
    %v7147 = vld [vmem:[#allocation8 + $0x260] sm:$0xff]
    %v7148 = vld [vmem:[#allocation8 + $0x268] sm:$0xff]
    %v7149 = vld [vmem:[#allocation8 + $0x270] sm:$0xff]
    %v7150 = vld [vmem:[#allocation8 + $0x278] sm:$0xff]
    %v7151 = vld [vmem:[#allocation8 + $0x280] sm:$0xff]
    %v7152 = vld [vmem:[#allocation8 + $0x288] sm:$0xff]
    %v7153 = vld [vmem:[#allocation8 + $0x290] sm:$0xff]
    %v7154 = vld [vmem:[#allocation8 + $0x298] sm:$0xff]
    %v7155 = vld [vmem:[#allocation8 + $0x2a0] sm:$0xff]
    %v7156 = vld [vmem:[#allocation8 + $0x2a8] sm:$0xff]
    %v7157 = vld [vmem:[#allocation8 + $0x2b0] sm:$0xff]
    %v7158 = vld [vmem:[#allocation8 + $0x2b8] sm:$0xff]
    %v7159 = vld [vmem:[#allocation8 + $0x2c0] sm:$0xff]
    %v7160 = vld [vmem:[#allocation8 + $0x2c8] sm:$0xff]
    %v7161 = vld [vmem:[#allocation8 + $0x2d0] sm:$0xff]
    %v7162 = vld [vmem:[#allocation8 + $0x2d8] sm:$0xff]
    %v7163 = vld [vmem:[#allocation8 + $0x2e0] sm:$0xff]
    %v7164 = vld [vmem:[#allocation8 + $0x2e8] sm:$0xff]
    %v7165 = vld [vmem:[#allocation8 + $0x2f0] sm:$0xff]
    %v7166 = vld [vmem:[#allocation8 + $0x2f8] sm:$0xff]
    %v7167 = vld [vmem:[#allocation8 + $0x300] sm:$0xff]
    %v7168 = vld [vmem:[#allocation8 + $0x308] sm:$0xff]
    %v7169 = vld [vmem:[#allocation8 + $0x310] sm:$0xff]
    %v7170 = vld [vmem:[#allocation8 + $0x318] sm:$0xff]
    %v7171 = vld [vmem:[#allocation8 + $0x320] sm:$0xff]
    %v7172 = vld [vmem:[#allocation8 + $0x328] sm:$0xff]
    %v7173 = vld [vmem:[#allocation8 + $0x330] sm:$0xff]
    %v7174 = vld [vmem:[#allocation8 + $0x338] sm:$0xff]
    %v7175 = vld [vmem:[#allocation8 + $0x340] sm:$0xff]
    %v7176 = vld [vmem:[#allocation8 + $0x348] sm:$0xff]
    %v7177 = vld [vmem:[#allocation8 + $0x350] sm:$0xff]
    %v7178 = vld [vmem:[#allocation8 + $0x358] sm:$0xff]
    %v7179 = vld [vmem:[#allocation8 + $0x360] sm:$0xff]
    %v7180 = vld [vmem:[#allocation8 + $0x368] sm:$0xff]
    %v7181 = vld [vmem:[#allocation8 + $0x370] sm:$0xff]
    %v7182 = vld [vmem:[#allocation8 + $0x378] sm:$0xff]
    %v7183 = vld [vmem:[#allocation8 + $0x380] sm:$0xff]
    %v7184 = vld [vmem:[#allocation8 + $0x388] sm:$0xff]
    %v7185 = vld [vmem:[#allocation8 + $0x390] sm:$0xff]
    %v7186 = vld [vmem:[#allocation8 + $0x398] sm:$0xff]
    %v7187 = vld [vmem:[#allocation8 + $0x3a0] sm:$0xff]
    %v7188 = vld [vmem:[#allocation8 + $0x3a8] sm:$0xff]
    %v7189 = vld [vmem:[#allocation8 + $0x3b0] sm:$0xff]
    %v7190 = vld [vmem:[#allocation8 + $0x3b8] sm:$0xff]
    %v7191 = vld [vmem:[#allocation8 + $0x3c0] sm:$0xff]
    %v7192 = vld [vmem:[#allocation8 + $0x3c8] sm:$0xff]
    %v7193 = vld [vmem:[#allocation8 + $0x3d0] sm:$0xff]
    %v7194 = vld [vmem:[#allocation8 + $0x3d8] sm:$0xff]
    %v7195 = vld [vmem:[#allocation8 + $0x3e0] sm:$0xff]
    %v7196 = vld [vmem:[#allocation8 + $0x3e8] sm:$0xff]
    %v7197 = vld [vmem:[#allocation8 + $0x3f0] sm:$0xff]
    %v7198 = vld [vmem:[#allocation8 + $0x3f8] sm:$0xff]
    %v7199 = vld [vmem:[#allocation10] sm:$0xf]
    %v7201 = vlaneseq
    %v7202 = vshrl.u32 %v7201, 7
    %v7203 = vsub.s32 0, %v7202
    %v7204 = vrot.slane %v7199, %v7203
    %v7205 = vlaneseq
    %v7206 = vshrl.u32 %v7205, 7
    %v7207 = vsub.s32 1, %v7206
    %v7208 = vrot.slane %v7199, %v7207
    %v7209 = vlaneseq
    %v7210 = vshrl.u32 %v7209, 7
    %v7211 = vsub.s32 2, %v7210
    %v7212 = vrot.slane %v7199, %v7211
    %v7213 = vlaneseq
    %v7214 = vshrl.u32 %v7213, 7
    %v7215 = vsub.s32 3, %v7214
    %v7216 = vrot.slane %v7199, %v7215
    %v7349 = vunpack.c.l.b16 %v7071
    %v7350 = vunpack.c.h.b16 %v7071
    %v7351 = vunpack.c.l.b16 %v7072
    %v7352 = vunpack.c.h.b16 %v7072
    %v7353 = vunpack.c.l.b16 %v7073
    %v7354 = vunpack.c.h.b16 %v7073
    %v7355 = vunpack.c.l.b16 %v7074
    %v7356 = vunpack.c.h.b16 %v7074
    %v7357 = vunpack.c.l.b16 %v7075
    %v7358 = vunpack.c.h.b16 %v7075
    %v7359 = vunpack.c.l.b16 %v7076
    %v7360 = vunpack.c.h.b16 %v7076
    %v7361 = vunpack.c.l.b16 %v7077
    %v7362 = vunpack.c.h.b16 %v7077
    %v7363 = vunpack.c.l.b16 %v7078
    %v7364 = vunpack.c.h.b16 %v7078
    %v7365 = vunpack.c.l.b16 %v7079
    %v7366 = vunpack.c.h.b16 %v7079
    %v7367 = vunpack.c.l.b16 %v7080
    %v7368 = vunpack.c.h.b16 %v7080
    %v7369 = vunpack.c.l.b16 %v7081
    %v7370 = vunpack.c.h.b16 %v7081
    %v7371 = vunpack.c.l.b16 %v7082
    %v7372 = vunpack.c.h.b16 %v7082
    %v7373 = vunpack.c.l.b16 %v7083
    %v7374 = vunpack.c.h.b16 %v7083
    %v7375 = vunpack.c.l.b16 %v7084
    %v7376 = vunpack.c.h.b16 %v7084
    %v7377 = vunpack.c.l.b16 %v7085
    %v7378 = vunpack.c.h.b16 %v7085
    %v7379 = vunpack.c.l.b16 %v7086
    %v7380 = vunpack.c.h.b16 %v7086
    %v7381 = vunpack.c.l.b16 %v7087
    %v7382 = vunpack.c.h.b16 %v7087
    %v7383 = vunpack.c.l.b16 %v7088
    %v7384 = vunpack.c.h.b16 %v7088
    %v7385 = vunpack.c.l.b16 %v7089
    %v7386 = vunpack.c.h.b16 %v7089
    %v7387 = vunpack.c.l.b16 %v7090
    %v7388 = vunpack.c.h.b16 %v7090
    %v7389 = vunpack.c.l.b16 %v7091
    %v7390 = vunpack.c.h.b16 %v7091
    %v7391 = vunpack.c.l.b16 %v7092
    %v7392 = vunpack.c.h.b16 %v7092
    %v7393 = vunpack.c.l.b16 %v7093
    %v7394 = vunpack.c.h.b16 %v7093
    %v7395 = vunpack.c.l.b16 %v7094
    %v7396 = vunpack.c.h.b16 %v7094
    %v7397 = vunpack.c.l.b16 %v7095
    %v7398 = vunpack.c.h.b16 %v7095
    %v7399 = vunpack.c.l.b16 %v7096
    %v7400 = vunpack.c.h.b16 %v7096
    %v7401 = vunpack.c.l.b16 %v7097
    %v7402 = vunpack.c.h.b16 %v7097
    %v7403 = vunpack.c.l.b16 %v7098
    %v7404 = vunpack.c.h.b16 %v7098
    %v7405 = vunpack.c.l.b16 %v7099
    %v7406 = vunpack.c.h.b16 %v7099
    %v7407 = vunpack.c.l.b16 %v7100
    %v7408 = vunpack.c.h.b16 %v7100
    %v7409 = vunpack.c.l.b16 %v7101
    %v7410 = vunpack.c.h.b16 %v7101
    %v7411 = vunpack.c.l.b16 %v7102
    %v7412 = vunpack.c.h.b16 %v7102
    %v7413 = vunpack.c.l.b16 %v7103
    %v7414 = vunpack.c.h.b16 %v7103
    %v7415 = vunpack.c.l.b16 %v7104
    %v7416 = vunpack.c.h.b16 %v7104
    %v7417 = vunpack.c.l.b16 %v7105
    %v7418 = vunpack.c.h.b16 %v7105
    %v7419 = vunpack.c.l.b16 %v7106
    %v7420 = vunpack.c.h.b16 %v7106
    %v7421 = vunpack.c.l.b16 %v7107
    %v7422 = vunpack.c.h.b16 %v7107
    %v7423 = vunpack.c.l.b16 %v7108
    %v7424 = vunpack.c.h.b16 %v7108
    %v7425 = vunpack.c.l.b16 %v7109
    %v7426 = vunpack.c.h.b16 %v7109
    %v7427 = vunpack.c.l.b16 %v7110
    %v7428 = vunpack.c.h.b16 %v7110
    %v7429 = vunpack.c.l.b16 %v7111
    %v7430 = vunpack.c.h.b16 %v7111
    %v7431 = vunpack.c.l.b16 %v7112
    %v7432 = vunpack.c.h.b16 %v7112
    %v7433 = vunpack.c.l.b16 %v7113
    %v7434 = vunpack.c.h.b16 %v7113
    %v7435 = vunpack.c.l.b16 %v7114
    %v7436 = vunpack.c.h.b16 %v7114
    %v7437 = vunpack.c.l.b16 %v7115
    %v7438 = vunpack.c.h.b16 %v7115
    %v7439 = vunpack.c.l.b16 %v7116
    %v7440 = vunpack.c.h.b16 %v7116
    %v7441 = vunpack.c.l.b16 %v7117
    %v7442 = vunpack.c.h.b16 %v7117
    %v7443 = vunpack.c.l.b16 %v7118
    %v7444 = vunpack.c.h.b16 %v7118
    %v7445 = vunpack.c.l.b16 %v7119
    %v7446 = vunpack.c.h.b16 %v7119
    %v7447 = vunpack.c.l.b16 %v7120
    %v7448 = vunpack.c.h.b16 %v7120
    %v7449 = vunpack.c.l.b16 %v7121
    %v7450 = vunpack.c.h.b16 %v7121
    %v7451 = vunpack.c.l.b16 %v7122
    %v7452 = vunpack.c.h.b16 %v7122
    %v7453 = vunpack.c.l.b16 %v7123
    %v7454 = vunpack.c.h.b16 %v7123
    %v7455 = vunpack.c.l.b16 %v7124
    %v7456 = vunpack.c.h.b16 %v7124
    %v7457 = vunpack.c.l.b16 %v7125
    %v7458 = vunpack.c.h.b16 %v7125
    %v7459 = vunpack.c.l.b16 %v7126
    %v7460 = vunpack.c.h.b16 %v7126
    %v7461 = vunpack.c.l.b16 %v7127
    %v7462 = vunpack.c.h.b16 %v7127
    %v7463 = vunpack.c.l.b16 %v7128
    %v7464 = vunpack.c.h.b16 %v7128
    %v7465 = vunpack.c.l.b16 %v7129
    %v7466 = vunpack.c.h.b16 %v7129
    %v7467 = vunpack.c.l.b16 %v7130
    %v7468 = vunpack.c.h.b16 %v7130
    %v7469 = vunpack.c.l.b16 %v7131
    %v7470 = vunpack.c.h.b16 %v7131
    %v7471 = vunpack.c.l.b16 %v7132
    %v7472 = vunpack.c.h.b16 %v7132
    %v7473 = vunpack.c.l.b16 %v7133
    %v7474 = vunpack.c.h.b16 %v7133
    %v7475 = vunpack.c.l.b16 %v7134
    %v7476 = vunpack.c.h.b16 %v7134
    %v7477 = vunpack.c.l.b16 %v7135
    %v7478 = vunpack.c.h.b16 %v7135
    %v7479 = vunpack.c.l.b16 %v7136
    %v7480 = vunpack.c.h.b16 %v7136
    %v7481 = vunpack.c.l.b16 %v7137
    %v7482 = vunpack.c.h.b16 %v7137
    %v7483 = vunpack.c.l.b16 %v7138
    %v7484 = vunpack.c.h.b16 %v7138
    %v7485 = vunpack.c.l.b16 %v7139
    %v7486 = vunpack.c.h.b16 %v7139
    %v7487 = vunpack.c.l.b16 %v7140
    %v7488 = vunpack.c.h.b16 %v7140
    %v7489 = vunpack.c.l.b16 %v7141
    %v7490 = vunpack.c.h.b16 %v7141
    %v7491 = vunpack.c.l.b16 %v7142
    %v7492 = vunpack.c.h.b16 %v7142
    %v7493 = vunpack.c.l.b16 %v7143
    %v7494 = vunpack.c.h.b16 %v7143
    %v7495 = vunpack.c.l.b16 %v7144
    %v7496 = vunpack.c.h.b16 %v7144
    %v7497 = vunpack.c.l.b16 %v7145
    %v7498 = vunpack.c.h.b16 %v7145
    %v7499 = vunpack.c.l.b16 %v7146
    %v7500 = vunpack.c.h.b16 %v7146
    %v7501 = vunpack.c.l.b16 %v7147
    %v7502 = vunpack.c.h.b16 %v7147
    %v7503 = vunpack.c.l.b16 %v7148
    %v7504 = vunpack.c.h.b16 %v7148
    %v7505 = vunpack.c.l.b16 %v7149
    %v7506 = vunpack.c.h.b16 %v7149
    %v7507 = vunpack.c.l.b16 %v7150
    %v7508 = vunpack.c.h.b16 %v7150
    %v7509 = vunpack.c.l.b16 %v7151
    %v7510 = vunpack.c.h.b16 %v7151
    %v7511 = vunpack.c.l.b16 %v7152
    %v7512 = vunpack.c.h.b16 %v7152
    %v7513 = vunpack.c.l.b16 %v7153
    %v7514 = vunpack.c.h.b16 %v7153
    %v7515 = vunpack.c.l.b16 %v7154
    %v7516 = vunpack.c.h.b16 %v7154
    %v7517 = vunpack.c.l.b16 %v7155
    %v7518 = vunpack.c.h.b16 %v7155
    %v7519 = vunpack.c.l.b16 %v7156
    %v7520 = vunpack.c.h.b16 %v7156
    %v7521 = vunpack.c.l.b16 %v7157
    %v7522 = vunpack.c.h.b16 %v7157
    %v7523 = vunpack.c.l.b16 %v7158
    %v7524 = vunpack.c.h.b16 %v7158
    %v7525 = vunpack.c.l.b16 %v7159
    %v7526 = vunpack.c.h.b16 %v7159
    %v7527 = vunpack.c.l.b16 %v7160
    %v7528 = vunpack.c.h.b16 %v7160
    %v7529 = vunpack.c.l.b16 %v7161
    %v7530 = vunpack.c.h.b16 %v7161
    %v7531 = vunpack.c.l.b16 %v7162
    %v7532 = vunpack.c.h.b16 %v7162
    %v7533 = vunpack.c.l.b16 %v7163
    %v7534 = vunpack.c.h.b16 %v7163
    %v7535 = vunpack.c.l.b16 %v7164
    %v7536 = vunpack.c.h.b16 %v7164
    %v7537 = vunpack.c.l.b16 %v7165
    %v7538 = vunpack.c.h.b16 %v7165
    %v7539 = vunpack.c.l.b16 %v7166
    %v7540 = vunpack.c.h.b16 %v7166
    %v7541 = vunpack.c.l.b16 %v7167
    %v7542 = vunpack.c.h.b16 %v7167
    %v7543 = vunpack.c.l.b16 %v7168
    %v7544 = vunpack.c.h.b16 %v7168
    %v7545 = vunpack.c.l.b16 %v7169
    %v7546 = vunpack.c.h.b16 %v7169
    %v7547 = vunpack.c.l.b16 %v7170
    %v7548 = vunpack.c.h.b16 %v7170
    %v7549 = vunpack.c.l.b16 %v7171
    %v7550 = vunpack.c.h.b16 %v7171
    %v7551 = vunpack.c.l.b16 %v7172
    %v7552 = vunpack.c.h.b16 %v7172
    %v7553 = vunpack.c.l.b16 %v7173
    %v7554 = vunpack.c.h.b16 %v7173
    %v7555 = vunpack.c.l.b16 %v7174
    %v7556 = vunpack.c.h.b16 %v7174
    %v7557 = vunpack.c.l.b16 %v7175
    %v7558 = vunpack.c.h.b16 %v7175
    %v7559 = vunpack.c.l.b16 %v7176
    %v7560 = vunpack.c.h.b16 %v7176
    %v7561 = vunpack.c.l.b16 %v7177
    %v7562 = vunpack.c.h.b16 %v7177
    %v7563 = vunpack.c.l.b16 %v7178
    %v7564 = vunpack.c.h.b16 %v7178
    %v7565 = vunpack.c.l.b16 %v7179
    %v7566 = vunpack.c.h.b16 %v7179
    %v7567 = vunpack.c.l.b16 %v7180
    %v7568 = vunpack.c.h.b16 %v7180
    %v7569 = vunpack.c.l.b16 %v7181
    %v7570 = vunpack.c.h.b16 %v7181
    %v7571 = vunpack.c.l.b16 %v7182
    %v7572 = vunpack.c.h.b16 %v7182
    %v7573 = vunpack.c.l.b16 %v7183
    %v7574 = vunpack.c.h.b16 %v7183
    %v7575 = vunpack.c.l.b16 %v7184
    %v7576 = vunpack.c.h.b16 %v7184
    %v7577 = vunpack.c.l.b16 %v7185
    %v7578 = vunpack.c.h.b16 %v7185
    %v7579 = vunpack.c.l.b16 %v7186
    %v7580 = vunpack.c.h.b16 %v7186
    %v7581 = vunpack.c.l.b16 %v7187
    %v7582 = vunpack.c.h.b16 %v7187
    %v7583 = vunpack.c.l.b16 %v7188
    %v7584 = vunpack.c.h.b16 %v7188
    %v7585 = vunpack.c.l.b16 %v7189
    %v7586 = vunpack.c.h.b16 %v7189
    %v7587 = vunpack.c.l.b16 %v7190
    %v7588 = vunpack.c.h.b16 %v7190
    %v7589 = vunpack.c.l.b16 %v7191
    %v7590 = vunpack.c.h.b16 %v7191
    %v7591 = vunpack.c.l.b16 %v7192
    %v7592 = vunpack.c.h.b16 %v7192
    %v7593 = vunpack.c.l.b16 %v7193
    %v7594 = vunpack.c.h.b16 %v7193
    %v7595 = vunpack.c.l.b16 %v7194
    %v7596 = vunpack.c.h.b16 %v7194
    %v7597 = vunpack.c.l.b16 %v7195
    %v7598 = vunpack.c.h.b16 %v7195
    %v7599 = vunpack.c.l.b16 %v7196
    %v7600 = vunpack.c.h.b16 %v7196
    %v7601 = vunpack.c.l.b16 %v7197
    %v7602 = vunpack.c.h.b16 %v7197
    %v7603 = vunpack.c.l.b16 %v7198
    %v7604 = vunpack.c.h.b16 %v7198
    %v7605 = vpack.c.b16 %v7353, %v7349
    %v7606 = vpack.c.b16 %v7354, %v7350
    %v7607 = vpack.c.b16 %v7355, %v7351
    %v7608 = vpack.c.b16 %v7356, %v7352
    %v7609 = vpack.c.b16 %v7361, %v7357
    %v7610 = vpack.c.b16 %v7362, %v7358
    %v7611 = vpack.c.b16 %v7363, %v7359
    %v7612 = vpack.c.b16 %v7364, %v7360
    %v7613 = vpack.c.b16 %v7369, %v7365
    %v7614 = vpack.c.b16 %v7370, %v7366
    %v7615 = vpack.c.b16 %v7371, %v7367
    %v7616 = vpack.c.b16 %v7372, %v7368
    %v7617 = vpack.c.b16 %v7377, %v7373
    %v7618 = vpack.c.b16 %v7378, %v7374
    %v7619 = vpack.c.b16 %v7379, %v7375
    %v7620 = vpack.c.b16 %v7380, %v7376
    %v7621 = vpack.c.b16 %v7385, %v7381
    %v7622 = vpack.c.b16 %v7386, %v7382
    %v7623 = vpack.c.b16 %v7387, %v7383
    %v7624 = vpack.c.b16 %v7388, %v7384
    %v7625 = vpack.c.b16 %v7393, %v7389
    %v7626 = vpack.c.b16 %v7394, %v7390
    %v7627 = vpack.c.b16 %v7395, %v7391
    %v7628 = vpack.c.b16 %v7396, %v7392
    %v7629 = vpack.c.b16 %v7401, %v7397
    %v7630 = vpack.c.b16 %v7402, %v7398
    %v7631 = vpack.c.b16 %v7403, %v7399
    %v7632 = vpack.c.b16 %v7404, %v7400
    %v7633 = vpack.c.b16 %v7409, %v7405
    %v7634 = vpack.c.b16 %v7410, %v7406
    %v7635 = vpack.c.b16 %v7411, %v7407
    %v7636 = vpack.c.b16 %v7412, %v7408
    %v7637 = vpack.c.b16 %v7417, %v7413
    %v7638 = vpack.c.b16 %v7418, %v7414
    %v7639 = vpack.c.b16 %v7419, %v7415
    %v7640 = vpack.c.b16 %v7420, %v7416
    %v7641 = vpack.c.b16 %v7425, %v7421
    %v7642 = vpack.c.b16 %v7426, %v7422
    %v7643 = vpack.c.b16 %v7427, %v7423
    %v7644 = vpack.c.b16 %v7428, %v7424
    %v7645 = vpack.c.b16 %v7433, %v7429
    %v7646 = vpack.c.b16 %v7434, %v7430
    %v7647 = vpack.c.b16 %v7435, %v7431
    %v7648 = vpack.c.b16 %v7436, %v7432
    %v7649 = vpack.c.b16 %v7441, %v7437
    %v7650 = vpack.c.b16 %v7442, %v7438
    %v7651 = vpack.c.b16 %v7443, %v7439
    %v7652 = vpack.c.b16 %v7444, %v7440
    %v7653 = vpack.c.b16 %v7449, %v7445
    %v7654 = vpack.c.b16 %v7450, %v7446
    %v7655 = vpack.c.b16 %v7451, %v7447
    %v7656 = vpack.c.b16 %v7452, %v7448
    %v7657 = vpack.c.b16 %v7457, %v7453
    %v7658 = vpack.c.b16 %v7458, %v7454
    %v7659 = vpack.c.b16 %v7459, %v7455
    %v7660 = vpack.c.b16 %v7460, %v7456
    %v7661 = vpack.c.b16 %v7465, %v7461
    %v7662 = vpack.c.b16 %v7466, %v7462
    %v7663 = vpack.c.b16 %v7467, %v7463
    %v7664 = vpack.c.b16 %v7468, %v7464
    %v7665 = vpack.c.b16 %v7473, %v7469
    %v7666 = vpack.c.b16 %v7474, %v7470
    %v7667 = vpack.c.b16 %v7475, %v7471
    %v7668 = vpack.c.b16 %v7476, %v7472
    %v7669 = vpack.c.b16 %v7481, %v7477
    %v7670 = vpack.c.b16 %v7482, %v7478
    %v7671 = vpack.c.b16 %v7483, %v7479
    %v7672 = vpack.c.b16 %v7484, %v7480
    %v7673 = vpack.c.b16 %v7489, %v7485
    %v7674 = vpack.c.b16 %v7490, %v7486
    %v7675 = vpack.c.b16 %v7491, %v7487
    %v7676 = vpack.c.b16 %v7492, %v7488
    %v7677 = vpack.c.b16 %v7497, %v7493
    %v7678 = vpack.c.b16 %v7498, %v7494
    %v7679 = vpack.c.b16 %v7499, %v7495
    %v7680 = vpack.c.b16 %v7500, %v7496
    %v7681 = vpack.c.b16 %v7505, %v7501
    %v7682 = vpack.c.b16 %v7506, %v7502
    %v7683 = vpack.c.b16 %v7507, %v7503
    %v7684 = vpack.c.b16 %v7508, %v7504
    %v7685 = vpack.c.b16 %v7513, %v7509
    %v7686 = vpack.c.b16 %v7514, %v7510
    %v7687 = vpack.c.b16 %v7515, %v7511
    %v7688 = vpack.c.b16 %v7516, %v7512
    %v7689 = vpack.c.b16 %v7521, %v7517
    %v7690 = vpack.c.b16 %v7522, %v7518
    %v7691 = vpack.c.b16 %v7523, %v7519
    %v7692 = vpack.c.b16 %v7524, %v7520
    %v7693 = vpack.c.b16 %v7529, %v7525
    %v7694 = vpack.c.b16 %v7530, %v7526
    %v7695 = vpack.c.b16 %v7531, %v7527
    %v7696 = vpack.c.b16 %v7532, %v7528
    %v7697 = vpack.c.b16 %v7537, %v7533
    %v7698 = vpack.c.b16 %v7538, %v7534
    %v7699 = vpack.c.b16 %v7539, %v7535
    %v7700 = vpack.c.b16 %v7540, %v7536
    %v7701 = vpack.c.b16 %v7545, %v7541
    %v7702 = vpack.c.b16 %v7546, %v7542
    %v7703 = vpack.c.b16 %v7547, %v7543
    %v7704 = vpack.c.b16 %v7548, %v7544
    %v7705 = vpack.c.b16 %v7553, %v7549
    %v7706 = vpack.c.b16 %v7554, %v7550
    %v7707 = vpack.c.b16 %v7555, %v7551
    %v7708 = vpack.c.b16 %v7556, %v7552
    %v7709 = vpack.c.b16 %v7561, %v7557
    %v7710 = vpack.c.b16 %v7562, %v7558
    %v7711 = vpack.c.b16 %v7563, %v7559
    %v7712 = vpack.c.b16 %v7564, %v7560
    %v7713 = vpack.c.b16 %v7569, %v7565
    %v7714 = vpack.c.b16 %v7570, %v7566
    %v7715 = vpack.c.b16 %v7571, %v7567
    %v7716 = vpack.c.b16 %v7572, %v7568
    %v7717 = vpack.c.b16 %v7577, %v7573
    %v7718 = vpack.c.b16 %v7578, %v7574
    %v7719 = vpack.c.b16 %v7579, %v7575
    %v7720 = vpack.c.b16 %v7580, %v7576
    %v7721 = vpack.c.b16 %v7585, %v7581
    %v7722 = vpack.c.b16 %v7586, %v7582
    %v7723 = vpack.c.b16 %v7587, %v7583
    %v7724 = vpack.c.b16 %v7588, %v7584
    %v7725 = vpack.c.b16 %v7593, %v7589
    %v7726 = vpack.c.b16 %v7594, %v7590
    %v7727 = vpack.c.b16 %v7595, %v7591
    %v7728 = vpack.c.b16 %v7596, %v7592
    %v7729 = vpack.c.b16 %v7601, %v7597
    %v7730 = vpack.c.b16 %v7602, %v7598
    %v7731 = vpack.c.b16 %v7603, %v7599
    %v7732 = vpack.c.b16 %v7604, %v7600
    %7861 = vmatprep.subr.bf16.mxu0 %v7634
    %7862 = vmatpush1.bf16.msra.mxu0 %v7633
    %7863 = vmatprep.subr.bf16.mxu0 %v7630
    %7864 = vmatpush1.bf16.msra.mxu0 %v7629
    %7865 = vmatprep.subr.bf16.mxu0 %v7626
    %7866 = vmatpush1.bf16.msra.mxu0 %v7625
    %7867 = vmatprep.subr.bf16.mxu0 %v7622
    %7868 = vmatpush1.bf16.msra.mxu0 %v7621
    %7869 = vmatprep.subr.bf16.mxu0 %v7618
    %7870 = vmatpush1.bf16.msra.mxu0 %v7617
    %7871 = vmatprep.subr.bf16.mxu0 %v7614
    %7872 = vmatpush1.bf16.msra.mxu0 %v7613
    %7873 = vmatprep.subr.bf16.mxu0 %v7610
    %7874 = vmatpush1.bf16.msra.mxu0 %v7609
    %7875 = vmatprep.subr.bf16.mxu0 %v7606
    %7876 = vmatpush1.bf16.msra.mxu0 %v7605
    %7877 = vmatprep.subr.bf16.mxu0 %v7666
    %7878 = vmatpush2.bf16.msra.mxu0 %v7665
    %7879 = vmatprep.subr.bf16.mxu0 %v7662
    %7880 = vmatpush2.bf16.msra.mxu0 %v7661
    %7881 = vmatprep.subr.bf16.mxu0 %v7658
    %7882 = vmatpush2.bf16.msra.mxu0 %v7657
    %7883 = vmatprep.subr.bf16.mxu0 %v7654
    %7884 = vmatpush2.bf16.msra.mxu0 %v7653
    %7885 = vmatprep.subr.bf16.mxu0 %v7650
    %7886 = vmatpush2.bf16.msra.mxu0 %v7649
    %7887 = vmatprep.subr.bf16.mxu0 %v7646
    %7888 = vmatpush2.bf16.msra.mxu0 %v7645
    %7889 = vmatprep.subr.bf16.mxu0 %v7642
    %7890 = vmatpush2.bf16.msra.mxu0 %v7641
    %7891 = vmatprep.subr.bf16.mxu0 %v7638
    %7892 = vmatpush2.bf16.msra.mxu0 %v7637
    %7893 = vmatprep.mubr.bf16.mxu0 %v7040
    %7894 = vmatmul.mubr.bf16.gmra.mxu0 %v7039
    %v7895 = vpop.f32.mrf.mxu0
    %v7896 = vadd.f32 %v7204, %v7895
    %v7897 = vpop.f32.mrf.mxu0
    %v7898 = vadd.f32 %v7208, %v7897
    %v7899 = vpop.f32.mrf.mxu0
    %v7900 = vadd.f32 %v7204, %v7899
    %v7901 = vpop.f32.mrf.mxu0
    %v7902 = vadd.f32 %v7208, %v7901
    %7903 = vmatprep.mubr.bf16.mxu0 %v7044
    %7904 = vmatmul.mubr.bf16.gmra.mxu0 %v7043
    %v7905 = vpop.f32.mrf.mxu0
    %v7906 = vadd.f32 %v7204, %v7905
    %v7907 = vpop.f32.mrf.mxu0
    %v7908 = vadd.f32 %v7208, %v7907
    %v7909 = vpop.f32.mrf.mxu0
    %v7910 = vadd.f32 %v7204, %v7909
    %v7911 = vpop.f32.mrf.mxu0
    %v7912 = vadd.f32 %v7208, %v7911
    %7913 = vmatprep.mubr.bf16.mxu0 %v7048
    %7914 = vmatmul.mubr.bf16.gmra.mxu0 %v7047
    %v7915 = vpop.f32.mrf.mxu0
    %v7916 = vadd.f32 %v7204, %v7915
    %v7917 = vpop.f32.mrf.mxu0
    %v7918 = vadd.f32 %v7208, %v7917
    %v7919 = vpop.f32.mrf.mxu0
    %v7920 = vadd.f32 %v7204, %v7919
    %v7921 = vpop.f32.mrf.mxu0
    %v7922 = vadd.f32 %v7208, %v7921
    %7923 = vmatprep.mubr.bf16.mxu0 %v7052
    %7924 = vmatmul.mubr.bf16.gmra.mxu0 %v7051
    %v7925 = vpop.f32.mrf.mxu0
    %v7926 = vadd.f32 %v7204, %v7925
    %v7927 = vpop.f32.mrf.mxu0
    %v7928 = vadd.f32 %v7208, %v7927
    %v7929 = vpop.f32.mrf.mxu0
    %v7930 = vadd.f32 %v7204, %v7929
    %v7931 = vpop.f32.mrf.mxu0
    %v7932 = vadd.f32 %v7208, %v7931
    %7933 = vmatprep.mubr.bf16.mxu0 %v7056
    %7934 = vmatmul.mubr.bf16.gmra.mxu0 %v7055
    %v7935 = vpop.f32.mrf.mxu0
    %v7936 = vadd.f32 %v7204, %v7935
    %v7937 = vpop.f32.mrf.mxu0
    %v7938 = vadd.f32 %v7208, %v7937
    %v7939 = vpop.f32.mrf.mxu0
    %v7940 = vadd.f32 %v7204, %v7939
    %v7941 = vpop.f32.mrf.mxu0
    %v7942 = vadd.f32 %v7208, %v7941
    %7943 = vmatprep.mubr.bf16.mxu0 %v7060
    %7944 = vmatmul.mubr.bf16.gmra.mxu0 %v7059
    %v7945 = vpop.f32.mrf.mxu0
    %v7946 = vadd.f32 %v7204, %v7945
    %v7947 = vpop.f32.mrf.mxu0
    %v7948 = vadd.f32 %v7208, %v7947
    %v7949 = vpop.f32.mrf.mxu0
    %v7950 = vadd.f32 %v7204, %v7949
    %v7951 = vpop.f32.mrf.mxu0
    %v7952 = vadd.f32 %v7208, %v7951
    %7953 = vmatprep.mubr.bf16.mxu0 %v7064
    %7954 = vmatmul.mubr.bf16.gmra.mxu0 %v7063
    %v7955 = vpop.f32.mrf.mxu0
    %v7956 = vadd.f32 %v7204, %v7955
    %v7957 = vpop.f32.mrf.mxu0
    %v7958 = vadd.f32 %v7208, %v7957
    %v7959 = vpop.f32.mrf.mxu0
    %v7960 = vadd.f32 %v7204, %v7959
    %v7961 = vpop.f32.mrf.mxu0
    %v7962 = vadd.f32 %v7208, %v7961
    %7963 = vmatprep.mubr.bf16.mxu0 %v7068
    %7964 = vmatmul.mubr.bf16.gmra.mxu0 %v7067
    %v7965 = vpop.f32.mrf.mxu0
    %v7966 = vadd.f32 %v7204, %v7965
    %v7967 = vpop.f32.mrf.mxu0
    %v7968 = vadd.f32 %v7208, %v7967
    %v7969 = vpop.f32.mrf.mxu0
    %v7970 = vadd.f32 %v7204, %v7969
    %v7971 = vpop.f32.mrf.mxu0
    %v7972 = vadd.f32 %v7208, %v7971
    %7973 = vdwg.mxu0
    %7974 = vmatprep.subr.bf16.mxu0 %v7698
    %7975 = vmatpush1.bf16.msra.mxu0 %v7697
    %7976 = vmatprep.subr.bf16.mxu0 %v7694
    %7977 = vmatpush1.bf16.msra.mxu0 %v7693
    %7978 = vmatprep.subr.bf16.mxu0 %v7690
    %7979 = vmatpush1.bf16.msra.mxu0 %v7689
    %7980 = vmatprep.subr.bf16.mxu0 %v7686
    %7981 = vmatpush1.bf16.msra.mxu0 %v7685
    %7982 = vmatprep.subr.bf16.mxu0 %v7682
    %7983 = vmatpush1.bf16.msra.mxu0 %v7681
    %7984 = vmatprep.subr.bf16.mxu0 %v7678
    %7985 = vmatpush1.bf16.msra.mxu0 %v7677
    %7986 = vmatprep.subr.bf16.mxu0 %v7674
    %7987 = vmatpush1.bf16.msra.mxu0 %v7673
    %7988 = vmatprep.subr.bf16.mxu0 %v7670
    %7989 = vmatpush1.bf16.msra.mxu0 %v7669
    %7990 = vmatprep.subr.bf16.mxu0 %v7730
    %7991 = vmatpush2.bf16.msra.mxu0 %v7729
    %7992 = vmatprep.subr.bf16.mxu0 %v7726
    %7993 = vmatpush2.bf16.msra.mxu0 %v7725
    %7994 = vmatprep.subr.bf16.mxu0 %v7722
    %7995 = vmatpush2.bf16.msra.mxu0 %v7721
    %7996 = vmatprep.subr.bf16.mxu0 %v7718
    %7997 = vmatpush2.bf16.msra.mxu0 %v7717
    %7998 = vmatprep.subr.bf16.mxu0 %v7714
    %7999 = vmatpush2.bf16.msra.mxu0 %v7713
    %8000 = vmatprep.subr.bf16.mxu0 %v7710
    %8001 = vmatpush2.bf16.msra.mxu0 %v7709
    %8002 = vmatprep.subr.bf16.mxu0 %v7706
    %8003 = vmatpush2.bf16.msra.mxu0 %v7705
    %8004 = vmatprep.subr.bf16.mxu0 %v7702
    %8005 = vmatpush2.bf16.msra.mxu0 %v7701
    %8006 = vmatprep.mubr.bf16.mxu0 %v7042
    %8007 = vmatmul.mubr.bf16.gmra.mxu0 %v7041
    %v8008 = vpop.f32.mrf.mxu0
    %v8009 = vadd.f32 %v7896, %v8008
    %v8010 = vpop.f32.mrf.mxu0
    %v8011 = vadd.f32 %v7898, %v8010
    %v8012 = vpop.f32.mrf.mxu0
    %v8013 = vadd.f32 %v7900, %v8012
    %v8014 = vpop.f32.mrf.mxu0
    %v8015 = vadd.f32 %v7902, %v8014
    %8016 = vmatprep.mubr.bf16.mxu0 %v7046
    %8017 = vmatmul.mubr.bf16.gmra.mxu0 %v7045
    %v8018 = vpop.f32.mrf.mxu0
    %v8019 = vadd.f32 %v7906, %v8018
    %v8020 = vpop.f32.mrf.mxu0
    %v8021 = vadd.f32 %v7908, %v8020
    %v8022 = vpop.f32.mrf.mxu0
    %v8023 = vadd.f32 %v7910, %v8022
    %v8024 = vpop.f32.mrf.mxu0
    %v8025 = vadd.f32 %v7912, %v8024
    %8026 = vmatprep.mubr.bf16.mxu0 %v7050
    %8027 = vmatmul.mubr.bf16.gmra.mxu0 %v7049
    %v8028 = vpop.f32.mrf.mxu0
    %v8029 = vadd.f32 %v7916, %v8028
    %v8030 = vpop.f32.mrf.mxu0
    %v8031 = vadd.f32 %v7918, %v8030
    %v8032 = vpop.f32.mrf.mxu0
    %v8033 = vadd.f32 %v7920, %v8032
    %v8034 = vpop.f32.mrf.mxu0
    %v8035 = vadd.f32 %v7922, %v8034
    %8036 = vmatprep.mubr.bf16.mxu0 %v7054
    %8037 = vmatmul.mubr.bf16.gmra.mxu0 %v7053
    %v8038 = vpop.f32.mrf.mxu0
    %v8039 = vadd.f32 %v7926, %v8038
    %v8040 = vpop.f32.mrf.mxu0
    %v8041 = vadd.f32 %v7928, %v8040
    %v8042 = vpop.f32.mrf.mxu0
    %v8043 = vadd.f32 %v7930, %v8042
    %v8044 = vpop.f32.mrf.mxu0
    %v8045 = vadd.f32 %v7932, %v8044
    %8046 = vmatprep.mubr.bf16.mxu0 %v7058
    %8047 = vmatmul.mubr.bf16.gmra.mxu0 %v7057
    %v8048 = vpop.f32.mrf.mxu0
    %v8049 = vadd.f32 %v7936, %v8048
    %v8050 = vpop.f32.mrf.mxu0
    %v8051 = vadd.f32 %v7938, %v8050
    %v8052 = vpop.f32.mrf.mxu0
    %v8053 = vadd.f32 %v7940, %v8052
    %v8054 = vpop.f32.mrf.mxu0
    %v8055 = vadd.f32 %v7942, %v8054
    %8056 = vmatprep.mubr.bf16.mxu0 %v7062
    %8057 = vmatmul.mubr.bf16.gmra.mxu0 %v7061
    %v8058 = vpop.f32.mrf.mxu0
    %v8059 = vadd.f32 %v7946, %v8058
    %v8060 = vpop.f32.mrf.mxu0
    %v8061 = vadd.f32 %v7948, %v8060
    %v8062 = vpop.f32.mrf.mxu0
    %v8063 = vadd.f32 %v7950, %v8062
    %v8064 = vpop.f32.mrf.mxu0
    %v8065 = vadd.f32 %v7952, %v8064
    %8066 = vmatprep.mubr.bf16.mxu0 %v7066
    %8067 = vmatmul.mubr.bf16.gmra.mxu0 %v7065
    %v8068 = vpop.f32.mrf.mxu0
    %v8069 = vadd.f32 %v7956, %v8068
    %v8070 = vpop.f32.mrf.mxu0
    %v8071 = vadd.f32 %v7958, %v8070
    %v8072 = vpop.f32.mrf.mxu0
    %v8073 = vadd.f32 %v7960, %v8072
    %v8074 = vpop.f32.mrf.mxu0
    %v8075 = vadd.f32 %v7962, %v8074
    %8076 = vmatprep.mubr.bf16.mxu0 %v7070
    %8077 = vmatmul.mubr.bf16.gmra.mxu0 %v7069
    %v8078 = vpop.f32.mrf.mxu0
    %v8079 = vadd.f32 %v7966, %v8078
    %v8080 = vpop.f32.mrf.mxu0
    %v8081 = vadd.f32 %v7968, %v8080
    %v8082 = vpop.f32.mrf.mxu0
    %v8083 = vadd.f32 %v7970, %v8082
    %v8084 = vpop.f32.mrf.mxu0
    %v8085 = vadd.f32 %v7972, %v8084
    %8086 = vdwg.mxu0
    %8087 = vmatprep.subr.bf16.mxu0 %v7636
    %8088 = vmatpush1.bf16.msra.mxu0 %v7635
    %8089 = vmatprep.subr.bf16.mxu0 %v7632
    %8090 = vmatpush1.bf16.msra.mxu0 %v7631
    %8091 = vmatprep.subr.bf16.mxu0 %v7628
    %8092 = vmatpush1.bf16.msra.mxu0 %v7627
    %8093 = vmatprep.subr.bf16.mxu0 %v7624
    %8094 = vmatpush1.bf16.msra.mxu0 %v7623
    %8095 = vmatprep.subr.bf16.mxu0 %v7620
    %8096 = vmatpush1.bf16.msra.mxu0 %v7619
    %8097 = vmatprep.subr.bf16.mxu0 %v7616
    %8098 = vmatpush1.bf16.msra.mxu0 %v7615
    %8099 = vmatprep.subr.bf16.mxu0 %v7612
    %8100 = vmatpush1.bf16.msra.mxu0 %v7611
    %8101 = vmatprep.subr.bf16.mxu0 %v7608
    %8102 = vmatpush1.bf16.msra.mxu0 %v7607
    %8103 = vmatprep.subr.bf16.mxu0 %v7668
    %8104 = vmatpush2.bf16.msra.mxu0 %v7667
    %8105 = vmatprep.subr.bf16.mxu0 %v7664
    %8106 = vmatpush2.bf16.msra.mxu0 %v7663
    %8107 = vmatprep.subr.bf16.mxu0 %v7660
    %8108 = vmatpush2.bf16.msra.mxu0 %v7659
    %8109 = vmatprep.subr.bf16.mxu0 %v7656
    %8110 = vmatpush2.bf16.msra.mxu0 %v7655
    %8111 = vmatprep.subr.bf16.mxu0 %v7652
    %8112 = vmatpush2.bf16.msra.mxu0 %v7651
    %8113 = vmatprep.subr.bf16.mxu0 %v7648
    %8114 = vmatpush2.bf16.msra.mxu0 %v7647
    %8115 = vmatprep.subr.bf16.mxu0 %v7644
    %8116 = vmatpush2.bf16.msra.mxu0 %v7643
    %8117 = vmatprep.subr.bf16.mxu0 %v7640
    %8118 = vmatpush2.bf16.msra.mxu0 %v7639
    %8119 = vmatprep.mubr.bf16.mxu0 %v7040
    %8120 = vmatmul.mubr.bf16.gmra.mxu0 %v7039
    %v8121 = vpop.f32.mrf.mxu0
    %v8122 = vadd.f32 %v7212, %v8121
    %v8123 = vpop.f32.mrf.mxu0
    %v8124 = vadd.f32 %v7216, %v8123
    %v8125 = vpop.f32.mrf.mxu0
    %v8126 = vadd.f32 %v7212, %v8125
    %v8127 = vpop.f32.mrf.mxu0
    %v8128 = vadd.f32 %v7216, %v8127
    %8129 = vmatprep.mubr.bf16.mxu0 %v7044
    %8130 = vmatmul.mubr.bf16.gmra.mxu0 %v7043
    %v8131 = vpop.f32.mrf.mxu0
    %v8132 = vadd.f32 %v7212, %v8131
    %v8133 = vpop.f32.mrf.mxu0
    %v8134 = vadd.f32 %v7216, %v8133
    %v8135 = vpop.f32.mrf.mxu0
    %v8136 = vadd.f32 %v7212, %v8135
    %v8137 = vpop.f32.mrf.mxu0
    %v8138 = vadd.f32 %v7216, %v8137
    %8139 = vmatprep.mubr.bf16.mxu0 %v7048
    %8140 = vmatmul.mubr.bf16.gmra.mxu0 %v7047
    %v8141 = vpop.f32.mrf.mxu0
    %v8142 = vadd.f32 %v7212, %v8141
    %v8143 = vpop.f32.mrf.mxu0
    %v8144 = vadd.f32 %v7216, %v8143
    %v8145 = vpop.f32.mrf.mxu0
    %v8146 = vadd.f32 %v7212, %v8145
    %v8147 = vpop.f32.mrf.mxu0
    %v8148 = vadd.f32 %v7216, %v8147
    %8149 = vmatprep.mubr.bf16.mxu0 %v7052
    %8150 = vmatmul.mubr.bf16.gmra.mxu0 %v7051
    %v8151 = vpop.f32.mrf.mxu0
    %v8152 = vadd.f32 %v7212, %v8151
    %v8153 = vpop.f32.mrf.mxu0
    %v8154 = vadd.f32 %v7216, %v8153
    %v8155 = vpop.f32.mrf.mxu0
    %v8156 = vadd.f32 %v7212, %v8155
    %v8157 = vpop.f32.mrf.mxu0
    %v8158 = vadd.f32 %v7216, %v8157
    %8159 = vmatprep.mubr.bf16.mxu0 %v7056
    %8160 = vmatmul.mubr.bf16.gmra.mxu0 %v7055
    %v8161 = vpop.f32.mrf.mxu0
    %v8162 = vadd.f32 %v7212, %v8161
    %v8163 = vpop.f32.mrf.mxu0
    %v8164 = vadd.f32 %v7216, %v8163
    %v8165 = vpop.f32.mrf.mxu0
    %v8166 = vadd.f32 %v7212, %v8165
    %v8167 = vpop.f32.mrf.mxu0
    %v8168 = vadd.f32 %v7216, %v8167
    %8169 = vmatprep.mubr.bf16.mxu0 %v7060
    %8170 = vmatmul.mubr.bf16.gmra.mxu0 %v7059
    %v8171 = vpop.f32.mrf.mxu0
    %v8172 = vadd.f32 %v7212, %v8171
    %v8173 = vpop.f32.mrf.mxu0
    %v8174 = vadd.f32 %v7216, %v8173
    %v8175 = vpop.f32.mrf.mxu0
    %v8176 = vadd.f32 %v7212, %v8175
    %v8177 = vpop.f32.mrf.mxu0
    %v8178 = vadd.f32 %v7216, %v8177
    %8179 = vmatprep.mubr.bf16.mxu0 %v7064
    %8180 = vmatmul.mubr.bf16.gmra.mxu0 %v7063
    %v8181 = vpop.f32.mrf.mxu0
    %v8182 = vadd.f32 %v7212, %v8181
    %v8183 = vpop.f32.mrf.mxu0
    %v8184 = vadd.f32 %v7216, %v8183
    %v8185 = vpop.f32.mrf.mxu0
    %v8186 = vadd.f32 %v7212, %v8185
    %v8187 = vpop.f32.mrf.mxu0
    %v8188 = vadd.f32 %v7216, %v8187
    %8189 = vmatprep.mubr.bf16.mxu0 %v7068
    %8190 = vmatmul.mubr.bf16.gmra.mxu0 %v7067
    %v8191 = vpop.f32.mrf.mxu0
    %v8192 = vadd.f32 %v7212, %v8191
    %v8193 = vpop.f32.mrf.mxu0
    %v8194 = vadd.f32 %v7216, %v8193
    %v8195 = vpop.f32.mrf.mxu0
    %v8196 = vadd.f32 %v7212, %v8195
    %v8197 = vpop.f32.mrf.mxu0
    %v8198 = vadd.f32 %v7216, %v8197
    %8199 = vdwg.mxu0
    %8200 = vmatprep.subr.bf16.mxu0 %v7700
    %8201 = vmatpush1.bf16.msra.mxu0 %v7699
    %8202 = vmatprep.subr.bf16.mxu0 %v7696
    %8203 = vmatpush1.bf16.msra.mxu0 %v7695
    %8204 = vmatprep.subr.bf16.mxu0 %v7692
    %8205 = vmatpush1.bf16.msra.mxu0 %v7691
    %8206 = vmatprep.subr.bf16.mxu0 %v7688
    %8207 = vmatpush1.bf16.msra.mxu0 %v7687
    %8208 = vmatprep.subr.bf16.mxu0 %v7684
    %8209 = vmatpush1.bf16.msra.mxu0 %v7683
    %8210 = vmatprep.subr.bf16.mxu0 %v7680
    %8211 = vmatpush1.bf16.msra.mxu0 %v7679
    %8212 = vmatprep.subr.bf16.mxu0 %v7676
    %8213 = vmatpush1.bf16.msra.mxu0 %v7675
    %8214 = vmatprep.subr.bf16.mxu0 %v7672
    %8215 = vmatpush1.bf16.msra.mxu0 %v7671
    %8216 = vmatprep.subr.bf16.mxu0 %v7732
    %8217 = vmatpush2.bf16.msra.mxu0 %v7731
    %8218 = vmatprep.subr.bf16.mxu0 %v7728
    %8219 = vmatpush2.bf16.msra.mxu0 %v7727
    %8220 = vmatprep.subr.bf16.mxu0 %v7724
    %8221 = vmatpush2.bf16.msra.mxu0 %v7723
    %8222 = vmatprep.subr.bf16.mxu0 %v7720
    %8223 = vmatpush2.bf16.msra.mxu0 %v7719
    %8224 = vmatprep.subr.bf16.mxu0 %v7716
    %8225 = vmatpush2.bf16.msra.mxu0 %v7715
    %8226 = vmatprep.subr.bf16.mxu0 %v7712
    %8227 = vmatpush2.bf16.msra.mxu0 %v7711
    %8228 = vmatprep.subr.bf16.mxu0 %v7708
    %8229 = vmatpush2.bf16.msra.mxu0 %v7707
    %8230 = vmatprep.subr.bf16.mxu0 %v7704
    %8231 = vmatpush2.bf16.msra.mxu0 %v7703
    %8232 = vmatprep.mubr.bf16.mxu0 %v7042
    %8233 = vmatmul.mubr.bf16.gmra.mxu0 %v7041
    %v8234 = vpop.f32.mrf.mxu0
    %v8235 = vadd.f32 %v8122, %v8234
    %v8236 = vpop.f32.mrf.mxu0
    %v8237 = vadd.f32 %v8124, %v8236
    %v8238 = vpop.f32.mrf.mxu0
    %v8239 = vadd.f32 %v8126, %v8238
    %v8240 = vpop.f32.mrf.mxu0
    %v8241 = vadd.f32 %v8128, %v8240
    %8242 = vmatprep.mubr.bf16.mxu0 %v7046
    %8243 = vmatmul.mubr.bf16.gmra.mxu0 %v7045
    %v8244 = vpop.f32.mrf.mxu0
    %v8245 = vadd.f32 %v8132, %v8244
    %v8246 = vpop.f32.mrf.mxu0
    %v8247 = vadd.f32 %v8134, %v8246
    %v8248 = vpop.f32.mrf.mxu0
    %v8249 = vadd.f32 %v8136, %v8248
    %v8250 = vpop.f32.mrf.mxu0
    %v8251 = vadd.f32 %v8138, %v8250
    %8252 = vmatprep.mubr.bf16.mxu0 %v7050
    %8253 = vmatmul.mubr.bf16.gmra.mxu0 %v7049
    %v8254 = vpop.f32.mrf.mxu0
    %v8255 = vadd.f32 %v8142, %v8254
    %v8256 = vpop.f32.mrf.mxu0
    %v8257 = vadd.f32 %v8144, %v8256
    %v8258 = vpop.f32.mrf.mxu0
    %v8259 = vadd.f32 %v8146, %v8258
    %v8260 = vpop.f32.mrf.mxu0
    %v8261 = vadd.f32 %v8148, %v8260
    %8262 = vmatprep.mubr.bf16.mxu0 %v7054
    %8263 = vmatmul.mubr.bf16.gmra.mxu0 %v7053
    %v8264 = vpop.f32.mrf.mxu0
    %v8265 = vadd.f32 %v8152, %v8264
    %v8266 = vpop.f32.mrf.mxu0
    %v8267 = vadd.f32 %v8154, %v8266
    %v8268 = vpop.f32.mrf.mxu0
    %v8269 = vadd.f32 %v8156, %v8268
    %v8270 = vpop.f32.mrf.mxu0
    %v8271 = vadd.f32 %v8158, %v8270
    %8272 = vmatprep.mubr.bf16.mxu0 %v7058
    %8273 = vmatmul.mubr.bf16.gmra.mxu0 %v7057
    %v8274 = vpop.f32.mrf.mxu0
    %v8275 = vadd.f32 %v8162, %v8274
    %v8276 = vpop.f32.mrf.mxu0
    %v8277 = vadd.f32 %v8164, %v8276
    %v8278 = vpop.f32.mrf.mxu0
    %v8279 = vadd.f32 %v8166, %v8278
    %v8280 = vpop.f32.mrf.mxu0
    %v8281 = vadd.f32 %v8168, %v8280
    %8282 = vmatprep.mubr.bf16.mxu0 %v7062
    %8283 = vmatmul.mubr.bf16.gmra.mxu0 %v7061
    %v8284 = vpop.f32.mrf.mxu0
    %v8285 = vadd.f32 %v8172, %v8284
    %v8286 = vpop.f32.mrf.mxu0
    %v8287 = vadd.f32 %v8174, %v8286
    %v8288 = vpop.f32.mrf.mxu0
    %v8289 = vadd.f32 %v8176, %v8288
    %v8290 = vpop.f32.mrf.mxu0
    %v8291 = vadd.f32 %v8178, %v8290
    %8292 = vmatprep.mubr.bf16.mxu0 %v7066
    %8293 = vmatmul.mubr.bf16.gmra.mxu0 %v7065
    %v8294 = vpop.f32.mrf.mxu0
    %v8295 = vadd.f32 %v8182, %v8294
    %v8296 = vpop.f32.mrf.mxu0
    %v8297 = vadd.f32 %v8184, %v8296
    %v8298 = vpop.f32.mrf.mxu0
    %v8299 = vadd.f32 %v8186, %v8298
    %v8300 = vpop.f32.mrf.mxu0
    %v8301 = vadd.f32 %v8188, %v8300
    %8302 = vmatprep.mubr.bf16.mxu0 %v7070
    %8303 = vmatmul.mubr.bf16.gmra.mxu0 %v7069
    %v8304 = vpop.f32.mrf.mxu0
    %v8305 = vadd.f32 %v8192, %v8304
    %v8306 = vpop.f32.mrf.mxu0
    %v8307 = vadd.f32 %v8194, %v8306
    %v8308 = vpop.f32.mrf.mxu0
    %v8309 = vadd.f32 %v8196, %v8308
    %v8310 = vpop.f32.mrf.mxu0
    %v8311 = vadd.f32 %v8198, %v8310
    %8312 = vdwg.mxu0
    %v8313 = vmax.f32 %v8009, 0.0
    %v8314 = vmax.f32 %v8011, 0.0
    %v8315 = vmax.f32 %v8235, 0.0
    %v8316 = vmax.f32 %v8237, 0.0
    %v8317 = vmax.f32 %v8013, 0.0
    %v8318 = vmax.f32 %v8015, 0.0
    %v8319 = vmax.f32 %v8239, 0.0
    %v8320 = vmax.f32 %v8241, 0.0
    %v8321 = vmax.f32 %v8019, 0.0
    %v8322 = vmax.f32 %v8021, 0.0
    %v8323 = vmax.f32 %v8245, 0.0
    %v8324 = vmax.f32 %v8247, 0.0
    %v8325 = vmax.f32 %v8023, 0.0
    %v8326 = vmax.f32 %v8025, 0.0
    %v8327 = vmax.f32 %v8249, 0.0
    %v8328 = vmax.f32 %v8251, 0.0
    %v8329 = vmax.f32 %v8029, 0.0
    %v8330 = vmax.f32 %v8031, 0.0
    %v8331 = vmax.f32 %v8255, 0.0
    %v8332 = vmax.f32 %v8257, 0.0
    %v8333 = vmax.f32 %v8033, 0.0
    %v8334 = vmax.f32 %v8035, 0.0
    %v8335 = vmax.f32 %v8259, 0.0
    %v8336 = vmax.f32 %v8261, 0.0
    %v8337 = vmax.f32 %v8039, 0.0
    %v8338 = vmax.f32 %v8041, 0.0
    %v8339 = vmax.f32 %v8265, 0.0
    %v8340 = vmax.f32 %v8267, 0.0
    %v8341 = vmax.f32 %v8043, 0.0
    %v8342 = vmax.f32 %v8045, 0.0
    %v8343 = vmax.f32 %v8269, 0.0
    %v8344 = vmax.f32 %v8271, 0.0
    %v8345 = vmax.f32 %v8049, 0.0
    %v8346 = vmax.f32 %v8051, 0.0
    %v8347 = vmax.f32 %v8275, 0.0
    %v8348 = vmax.f32 %v8277, 0.0
    %v8349 = vmax.f32 %v8053, 0.0
    %v8350 = vmax.f32 %v8055, 0.0
    %v8351 = vmax.f32 %v8279, 0.0
    %v8352 = vmax.f32 %v8281, 0.0
    %v8353 = vmax.f32 %v8059, 0.0
    %v8354 = vmax.f32 %v8061, 0.0
    %v8355 = vmax.f32 %v8285, 0.0
    %v8356 = vmax.f32 %v8287, 0.0
    %v8357 = vmax.f32 %v8063, 0.0
    %v8358 = vmax.f32 %v8065, 0.0
    %v8359 = vmax.f32 %v8289, 0.0
    %v8360 = vmax.f32 %v8291, 0.0
    %v8361 = vmax.f32 %v8069, 0.0
    %v8362 = vmax.f32 %v8071, 0.0
    %v8363 = vmax.f32 %v8295, 0.0
    %v8364 = vmax.f32 %v8297, 0.0
    %v8365 = vmax.f32 %v8073, 0.0
    %v8366 = vmax.f32 %v8075, 0.0
    %v8367 = vmax.f32 %v8299, 0.0
    %v8368 = vmax.f32 %v8301, 0.0
    %v8369 = vmax.f32 %v8079, 0.0
    %v8370 = vmax.f32 %v8081, 0.0
    %v8371 = vmax.f32 %v8305, 0.0
    %v8372 = vmax.f32 %v8307, 0.0
    %v8373 = vmax.f32 %v8083, 0.0
    %v8374 = vmax.f32 %v8085, 0.0
    %v8375 = vmax.f32 %v8309, 0.0
    %v8376 = vmax.f32 %v8311, 0.0
    %v8377 = vpack.c.bf16 %v8317, %v8313
    %v8378 = vpack.c.bf16 %v8318, %v8314
    %v8379 = vpack.c.bf16 %v8319, %v8315
    %v8380 = vpack.c.bf16 %v8320, %v8316
    %v8381 = vpack.c.bf16 %v8325, %v8321
    %v8382 = vpack.c.bf16 %v8326, %v8322
    %v8383 = vpack.c.bf16 %v8327, %v8323
    %v8384 = vpack.c.bf16 %v8328, %v8324
    %v8385 = vpack.c.bf16 %v8333, %v8329
    %v8386 = vpack.c.bf16 %v8334, %v8330
    %v8387 = vpack.c.bf16 %v8335, %v8331
    %v8388 = vpack.c.bf16 %v8336, %v8332
    %v8389 = vpack.c.bf16 %v8341, %v8337
    %v8390 = vpack.c.bf16 %v8342, %v8338
    %v8391 = vpack.c.bf16 %v8343, %v8339
    %v8392 = vpack.c.bf16 %v8344, %v8340
    %v8393 = vpack.c.bf16 %v8349, %v8345
    %v8394 = vpack.c.bf16 %v8350, %v8346
    %v8395 = vpack.c.bf16 %v8351, %v8347
    %v8396 = vpack.c.bf16 %v8352, %v8348
    %v8397 = vpack.c.bf16 %v8357, %v8353
    %v8398 = vpack.c.bf16 %v8358, %v8354
    %v8399 = vpack.c.bf16 %v8359, %v8355
    %v8400 = vpack.c.bf16 %v8360, %v8356
    %v8401 = vpack.c.bf16 %v8365, %v8361
    %v8402 = vpack.c.bf16 %v8366, %v8362
    %v8403 = vpack.c.bf16 %v8367, %v8363
    %v8404 = vpack.c.bf16 %v8368, %v8364
    %v8405 = vpack.c.bf16 %v8373, %v8369
    %v8406 = vpack.c.bf16 %v8374, %v8370
    %v8407 = vpack.c.bf16 %v8375, %v8371
    %v8408 = vpack.c.bf16 %v8376, %v8372
    %v8409 = vld [vmem:[#allocation11] sm:$0xf]
    %v8410 = vld [vmem:[#allocation11 + $0x4] sm:$0xf]
    %v8411 = vld [vmem:[#allocation11 + $0x8] sm:$0xf]
    %v8412 = vld [vmem:[#allocation11 + $0xc] sm:$0xf]
    %v8413 = vld [vmem:[#allocation11 + $0x10] sm:$0xf]
    %v8414 = vld [vmem:[#allocation11 + $0x14] sm:$0xf]
    %v8415 = vld [vmem:[#allocation11 + $0x18] sm:$0xf]
    %v8416 = vld [vmem:[#allocation11 + $0x1c] sm:$0xf]
    %v8417 = vld [vmem:[#allocation11 + $0x20] sm:$0xf]
    %v8418 = vld [vmem:[#allocation11 + $0x24] sm:$0xf]
    %v8419 = vld [vmem:[#allocation11 + $0x28] sm:$0xf]
    %v8420 = vld [vmem:[#allocation11 + $0x2c] sm:$0xf]
    %v8421 = vld [vmem:[#allocation11 + $0x30] sm:$0xf]
    %v8422 = vld [vmem:[#allocation11 + $0x34] sm:$0xf]
    %v8423 = vld [vmem:[#allocation11 + $0x38] sm:$0xf]
    %v8424 = vld [vmem:[#allocation11 + $0x3c] sm:$0xf]
    %v8425 = vld [vmem:[#allocation11 + $0x40] sm:$0xf]
    %v8426 = vld [vmem:[#allocation11 + $0x44] sm:$0xf]
    %v8427 = vld [vmem:[#allocation11 + $0x48] sm:$0xf]
    %v8428 = vld [vmem:[#allocation11 + $0x4c] sm:$0xf]
    %v8429 = vld [vmem:[#allocation11 + $0x50] sm:$0xf]
    %v8430 = vld [vmem:[#allocation11 + $0x54] sm:$0xf]
    %v8431 = vld [vmem:[#allocation11 + $0x58] sm:$0xf]
    %v8432 = vld [vmem:[#allocation11 + $0x5c] sm:$0xf]
    %v8433 = vld [vmem:[#allocation11 + $0x60] sm:$0xf]
    %v8434 = vld [vmem:[#allocation11 + $0x64] sm:$0xf]
    %v8435 = vld [vmem:[#allocation11 + $0x68] sm:$0xf]
    %v8436 = vld [vmem:[#allocation11 + $0x6c] sm:$0xf]
    %v8437 = vld [vmem:[#allocation11 + $0x70] sm:$0xf]
    %v8438 = vld [vmem:[#allocation11 + $0x74] sm:$0xf]
    %v8439 = vld [vmem:[#allocation11 + $0x78] sm:$0xf]
    %v8440 = vld [vmem:[#allocation11 + $0x7c] sm:$0xf]
    %v8441 = vld [vmem:[#allocation11 + $0x80] sm:$0xf]
    %v8442 = vld [vmem:[#allocation11 + $0x84] sm:$0xf]
    %v8443 = vld [vmem:[#allocation11 + $0x88] sm:$0xf]
    %v8444 = vld [vmem:[#allocation11 + $0x8c] sm:$0xf]
    %v8445 = vld [vmem:[#allocation11 + $0x90] sm:$0xf]
    %v8446 = vld [vmem:[#allocation11 + $0x94] sm:$0xf]
    %v8447 = vld [vmem:[#allocation11 + $0x98] sm:$0xf]
    %v8448 = vld [vmem:[#allocation11 + $0x9c] sm:$0xf]
    %v8449 = vld [vmem:[#allocation11 + $0xa0] sm:$0xf]
    %v8450 = vld [vmem:[#allocation11 + $0xa4] sm:$0xf]
    %v8451 = vld [vmem:[#allocation11 + $0xa8] sm:$0xf]
    %v8452 = vld [vmem:[#allocation11 + $0xac] sm:$0xf]
    %v8453 = vld [vmem:[#allocation11 + $0xb0] sm:$0xf]
    %v8454 = vld [vmem:[#allocation11 + $0xb4] sm:$0xf]
    %v8455 = vld [vmem:[#allocation11 + $0xb8] sm:$0xf]
    %v8456 = vld [vmem:[#allocation11 + $0xbc] sm:$0xf]
    %v8457 = vld [vmem:[#allocation11 + $0xc0] sm:$0xf]
    %v8458 = vld [vmem:[#allocation11 + $0xc4] sm:$0xf]
    %v8459 = vld [vmem:[#allocation11 + $0xc8] sm:$0xf]
    %v8460 = vld [vmem:[#allocation11 + $0xcc] sm:$0xf]
    %v8461 = vld [vmem:[#allocation11 + $0xd0] sm:$0xf]
    %v8462 = vld [vmem:[#allocation11 + $0xd4] sm:$0xf]
    %v8463 = vld [vmem:[#allocation11 + $0xd8] sm:$0xf]
    %v8464 = vld [vmem:[#allocation11 + $0xdc] sm:$0xf]
    %v8465 = vld [vmem:[#allocation11 + $0xe0] sm:$0xf]
    %v8466 = vld [vmem:[#allocation11 + $0xe4] sm:$0xf]
    %v8467 = vld [vmem:[#allocation11 + $0xe8] sm:$0xf]
    %v8468 = vld [vmem:[#allocation11 + $0xec] sm:$0xf]
    %v8469 = vld [vmem:[#allocation11 + $0xf0] sm:$0xf]
    %v8470 = vld [vmem:[#allocation11 + $0xf4] sm:$0xf]
    %v8471 = vld [vmem:[#allocation11 + $0xf8] sm:$0xf]
    %v8472 = vld [vmem:[#allocation11 + $0xfc] sm:$0xf]
    %v8473 = vld [vmem:[#allocation13] sm:$0x1]
    %v8475 = vlaneseq
    %v8476 = vshrl.u32 %v8475, 7
    %v8477 = vsub.s32 0, %v8476
    %v8478 = vrot.slane %v8473, %v8477
    %v8544 = vunpack.c.l.b16 %v8409
    %v8545 = vunpack.c.l.b16 %v8410
    %v8546 = vunpack.c.l.b16 %v8411
    %v8547 = vunpack.c.l.b16 %v8412
    %v8548 = vunpack.c.l.b16 %v8413
    %v8549 = vunpack.c.l.b16 %v8414
    %v8550 = vunpack.c.l.b16 %v8415
    %v8551 = vunpack.c.l.b16 %v8416
    %v8552 = vunpack.c.l.b16 %v8417
    %v8553 = vunpack.c.l.b16 %v8418
    %v8554 = vunpack.c.l.b16 %v8419
    %v8555 = vunpack.c.l.b16 %v8420
    %v8556 = vunpack.c.l.b16 %v8421
    %v8557 = vunpack.c.l.b16 %v8422
    %v8558 = vunpack.c.l.b16 %v8423
    %v8559 = vunpack.c.l.b16 %v8424
    %v8560 = vunpack.c.l.b16 %v8425
    %v8561 = vunpack.c.l.b16 %v8426
    %v8562 = vunpack.c.l.b16 %v8427
    %v8563 = vunpack.c.l.b16 %v8428
    %v8564 = vunpack.c.l.b16 %v8429
    %v8565 = vunpack.c.l.b16 %v8430
    %v8566 = vunpack.c.l.b16 %v8431
    %v8567 = vunpack.c.l.b16 %v8432
    %v8568 = vunpack.c.l.b16 %v8433
    %v8569 = vunpack.c.l.b16 %v8434
    %v8570 = vunpack.c.l.b16 %v8435
    %v8571 = vunpack.c.l.b16 %v8436
    %v8572 = vunpack.c.l.b16 %v8437
    %v8573 = vunpack.c.l.b16 %v8438
    %v8574 = vunpack.c.l.b16 %v8439
    %v8575 = vunpack.c.l.b16 %v8440
    %v8576 = vunpack.c.l.b16 %v8441
    %v8577 = vunpack.c.l.b16 %v8442
    %v8578 = vunpack.c.l.b16 %v8443
    %v8579 = vunpack.c.l.b16 %v8444
    %v8580 = vunpack.c.l.b16 %v8445
    %v8581 = vunpack.c.l.b16 %v8446
    %v8582 = vunpack.c.l.b16 %v8447
    %v8583 = vunpack.c.l.b16 %v8448
    %v8584 = vunpack.c.l.b16 %v8449
    %v8585 = vunpack.c.l.b16 %v8450
    %v8586 = vunpack.c.l.b16 %v8451
    %v8587 = vunpack.c.l.b16 %v8452
    %v8588 = vunpack.c.l.b16 %v8453
    %v8589 = vunpack.c.l.b16 %v8454
    %v8590 = vunpack.c.l.b16 %v8455
    %v8591 = vunpack.c.l.b16 %v8456
    %v8592 = vunpack.c.l.b16 %v8457
    %v8593 = vunpack.c.l.b16 %v8458
    %v8594 = vunpack.c.l.b16 %v8459
    %v8595 = vunpack.c.l.b16 %v8460
    %v8596 = vunpack.c.l.b16 %v8461
    %v8597 = vunpack.c.l.b16 %v8462
    %v8598 = vunpack.c.l.b16 %v8463
    %v8599 = vunpack.c.l.b16 %v8464
    %v8600 = vunpack.c.l.b16 %v8465
    %v8601 = vunpack.c.l.b16 %v8466
    %v8602 = vunpack.c.l.b16 %v8467
    %v8603 = vunpack.c.l.b16 %v8468
    %v8604 = vunpack.c.l.b16 %v8469
    %v8605 = vunpack.c.l.b16 %v8470
    %v8606 = vunpack.c.l.b16 %v8471
    %v8607 = vunpack.c.l.b16 %v8472
    %v8608 = vpack.c.b16 %v8545, %v8544
    %v8609 = vpack.c.b16 %v8547, %v8546
    %v8610 = vpack.c.b16 %v8549, %v8548
    %v8611 = vpack.c.b16 %v8551, %v8550
    %v8612 = vpack.c.b16 %v8553, %v8552
    %v8613 = vpack.c.b16 %v8555, %v8554
    %v8614 = vpack.c.b16 %v8557, %v8556
    %v8615 = vpack.c.b16 %v8559, %v8558
    %v8616 = vpack.c.b16 %v8561, %v8560
    %v8617 = vpack.c.b16 %v8563, %v8562
    %v8618 = vpack.c.b16 %v8565, %v8564
    %v8619 = vpack.c.b16 %v8567, %v8566
    %v8620 = vpack.c.b16 %v8569, %v8568
    %v8621 = vpack.c.b16 %v8571, %v8570
    %v8622 = vpack.c.b16 %v8573, %v8572
    %v8623 = vpack.c.b16 %v8575, %v8574
    %v8624 = vpack.c.b16 %v8577, %v8576
    %v8625 = vpack.c.b16 %v8579, %v8578
    %v8626 = vpack.c.b16 %v8581, %v8580
    %v8627 = vpack.c.b16 %v8583, %v8582
    %v8628 = vpack.c.b16 %v8585, %v8584
    %v8629 = vpack.c.b16 %v8587, %v8586
    %v8630 = vpack.c.b16 %v8589, %v8588
    %v8631 = vpack.c.b16 %v8591, %v8590
    %v8632 = vpack.c.b16 %v8593, %v8592
    %v8633 = vpack.c.b16 %v8595, %v8594
    %v8634 = vpack.c.b16 %v8597, %v8596
    %v8635 = vpack.c.b16 %v8599, %v8598
    %v8636 = vpack.c.b16 %v8601, %v8600
    %v8637 = vpack.c.b16 %v8603, %v8602
    %v8638 = vpack.c.b16 %v8605, %v8604
    %v8639 = vpack.c.b16 %v8607, %v8606
    %8672 = vmatprep.subr.bf16.mxu0 0
    %8673 = vmatpush1.bf16.msra.mxu0 %v8615
    %8674 = vmatprep.subr.bf16.mxu0 0
    %8675 = vmatpush1.bf16.msra.mxu0 %v8614
    %8676 = vmatprep.subr.bf16.mxu0 0
    %8677 = vmatpush1.bf16.msra.mxu0 %v8613
    %8678 = vmatprep.subr.bf16.mxu0 0
    %8679 = vmatpush1.bf16.msra.mxu0 %v8612
    %8680 = vmatprep.subr.bf16.mxu0 0
    %8681 = vmatpush1.bf16.msra.mxu0 %v8611
    %8682 = vmatprep.subr.bf16.mxu0 0
    %8683 = vmatpush1.bf16.msra.mxu0 %v8610
    %8684 = vmatprep.subr.bf16.mxu0 0
    %8685 = vmatpush1.bf16.msra.mxu0 %v8609
    %8686 = vmatprep.subr.bf16.mxu0 0
    %8687 = vmatpush1.bf16.msra.mxu0 %v8608
    %8688 = vmatprep.subr.bf16.mxu0 0
    %8689 = vmatpush2.bf16.msra.mxu0 %v8623
    %8690 = vmatprep.subr.bf16.mxu0 0
    %8691 = vmatpush2.bf16.msra.mxu0 %v8622
    %8692 = vmatprep.subr.bf16.mxu0 0
    %8693 = vmatpush2.bf16.msra.mxu0 %v8621
    %8694 = vmatprep.subr.bf16.mxu0 0
    %8695 = vmatpush2.bf16.msra.mxu0 %v8620
    %8696 = vmatprep.subr.bf16.mxu0 0
    %8697 = vmatpush2.bf16.msra.mxu0 %v8619
    %8698 = vmatprep.subr.bf16.mxu0 0
    %8699 = vmatpush2.bf16.msra.mxu0 %v8618
    %8700 = vmatprep.subr.bf16.mxu0 0
    %8701 = vmatpush2.bf16.msra.mxu0 %v8617
    %8702 = vmatprep.subr.bf16.mxu0 0
    %8703 = vmatpush2.bf16.msra.mxu0 %v8616
    %8704 = vmatprep.mubr.bf16.mxu0 %v8378
    %8705 = vmatmul.mubr.bf16.gmra.mxu0 %v8377
    %v8706 = vpop.f32.mrf.mxu0
    %v8707 = vadd.f32 %v8478, %v8706
    %v8708 = vpop.f32.mrf.mxu0
    %v8709 = vpop.f32.mrf.mxu0
    %v8710 = vadd.f32 %v8478, %v8709
    %v8711 = vpop.f32.mrf.mxu0
    %8712 = vmatprep.mubr.bf16.mxu0 %v8382
    %8713 = vmatmul.mubr.bf16.gmra.mxu0 %v8381
    %v8714 = vpop.f32.mrf.mxu0
    %v8715 = vadd.f32 %v8478, %v8714
    %v8716 = vpop.f32.mrf.mxu0
    %v8717 = vpop.f32.mrf.mxu0
    %v8718 = vadd.f32 %v8478, %v8717
    %v8719 = vpop.f32.mrf.mxu0
    %8720 = vmatprep.mubr.bf16.mxu0 %v8386
    %8721 = vmatmul.mubr.bf16.gmra.mxu0 %v8385
    %v8722 = vpop.f32.mrf.mxu0
    %v8723 = vadd.f32 %v8478, %v8722
    %v8724 = vpop.f32.mrf.mxu0
    %v8725 = vpop.f32.mrf.mxu0
    %v8726 = vadd.f32 %v8478, %v8725
    %v8727 = vpop.f32.mrf.mxu0
    %8728 = vmatprep.mubr.bf16.mxu0 %v8390
    %8729 = vmatmul.mubr.bf16.gmra.mxu0 %v8389
    %v8730 = vpop.f32.mrf.mxu0
    %v8731 = vadd.f32 %v8478, %v8730
    %v8732 = vpop.f32.mrf.mxu0
    %v8733 = vpop.f32.mrf.mxu0
    %v8734 = vadd.f32 %v8478, %v8733
    %v8735 = vpop.f32.mrf.mxu0
    %8736 = vmatprep.mubr.bf16.mxu0 %v8394
    %8737 = vmatmul.mubr.bf16.gmra.mxu0 %v8393
    %v8738 = vpop.f32.mrf.mxu0
    %v8739 = vadd.f32 %v8478, %v8738
    %v8740 = vpop.f32.mrf.mxu0
    %v8741 = vpop.f32.mrf.mxu0
    %v8742 = vadd.f32 %v8478, %v8741
    %v8743 = vpop.f32.mrf.mxu0
    %8744 = vmatprep.mubr.bf16.mxu0 %v8398
    %8745 = vmatmul.mubr.bf16.gmra.mxu0 %v8397
    %v8746 = vpop.f32.mrf.mxu0
    %v8747 = vadd.f32 %v8478, %v8746
    %v8748 = vpop.f32.mrf.mxu0
    %v8749 = vpop.f32.mrf.mxu0
    %v8750 = vadd.f32 %v8478, %v8749
    %v8751 = vpop.f32.mrf.mxu0
    %8752 = vmatprep.mubr.bf16.mxu0 %v8402
    %8753 = vmatmul.mubr.bf16.gmra.mxu0 %v8401
    %v8754 = vpop.f32.mrf.mxu0
    %v8755 = vadd.f32 %v8478, %v8754
    %v8756 = vpop.f32.mrf.mxu0
    %v8757 = vpop.f32.mrf.mxu0
    %v8758 = vadd.f32 %v8478, %v8757
    %v8759 = vpop.f32.mrf.mxu0
    %8760 = vmatprep.mubr.bf16.mxu0 %v8406
    %8761 = vmatmul.mubr.bf16.gmra.mxu0 %v8405
    %v8762 = vpop.f32.mrf.mxu0
    %v8763 = vadd.f32 %v8478, %v8762
    %v8764 = vpop.f32.mrf.mxu0
    %v8765 = vpop.f32.mrf.mxu0
    %v8766 = vadd.f32 %v8478, %v8765
    %v8767 = vpop.f32.mrf.mxu0
    %8768 = vdwg.mxu0
    %8769 = vmatprep.subr.bf16.mxu0 0
    %8770 = vmatpush1.bf16.msra.mxu0 %v8631
    %8771 = vmatprep.subr.bf16.mxu0 0
    %8772 = vmatpush1.bf16.msra.mxu0 %v8630
    %8773 = vmatprep.subr.bf16.mxu0 0
    %8774 = vmatpush1.bf16.msra.mxu0 %v8629
    %8775 = vmatprep.subr.bf16.mxu0 0
    %8776 = vmatpush1.bf16.msra.mxu0 %v8628
    %8777 = vmatprep.subr.bf16.mxu0 0
    %8778 = vmatpush1.bf16.msra.mxu0 %v8627
    %8779 = vmatprep.subr.bf16.mxu0 0
    %8780 = vmatpush1.bf16.msra.mxu0 %v8626
    %8781 = vmatprep.subr.bf16.mxu0 0
    %8782 = vmatpush1.bf16.msra.mxu0 %v8625
    %8783 = vmatprep.subr.bf16.mxu0 0
    %8784 = vmatpush1.bf16.msra.mxu0 %v8624
    %8785 = vmatprep.subr.bf16.mxu0 0
    %8786 = vmatpush2.bf16.msra.mxu0 %v8639
    %8787 = vmatprep.subr.bf16.mxu0 0
    %8788 = vmatpush2.bf16.msra.mxu0 %v8638
    %8789 = vmatprep.subr.bf16.mxu0 0
    %8790 = vmatpush2.bf16.msra.mxu0 %v8637
    %8791 = vmatprep.subr.bf16.mxu0 0
    %8792 = vmatpush2.bf16.msra.mxu0 %v8636
    %8793 = vmatprep.subr.bf16.mxu0 0
    %8794 = vmatpush2.bf16.msra.mxu0 %v8635
    %8795 = vmatprep.subr.bf16.mxu0 0
    %8796 = vmatpush2.bf16.msra.mxu0 %v8634
    %8797 = vmatprep.subr.bf16.mxu0 0
    %8798 = vmatpush2.bf16.msra.mxu0 %v8633
    %8799 = vmatprep.subr.bf16.mxu0 0
    %8800 = vmatpush2.bf16.msra.mxu0 %v8632
    %8801 = vmatprep.mubr.bf16.mxu0 %v8380
    %8802 = vmatmul.mubr.bf16.gmra.mxu0 %v8379
    %v8803 = vpop.f32.mrf.mxu0
    %v8804 = vadd.f32 %v8707, %v8803
    %v8805 = vpop.f32.mrf.mxu0
    %v8806 = vpop.f32.mrf.mxu0
    %v8807 = vadd.f32 %v8710, %v8806
    %v8808 = vpop.f32.mrf.mxu0
    %8809 = vmatprep.mubr.bf16.mxu0 %v8384
    %8810 = vmatmul.mubr.bf16.gmra.mxu0 %v8383
    %v8811 = vpop.f32.mrf.mxu0
    %v8812 = vadd.f32 %v8715, %v8811
    %v8813 = vpop.f32.mrf.mxu0
    %v8814 = vpop.f32.mrf.mxu0
    %v8815 = vadd.f32 %v8718, %v8814
    %v8816 = vpop.f32.mrf.mxu0
    %8817 = vmatprep.mubr.bf16.mxu0 %v8388
    %8818 = vmatmul.mubr.bf16.gmra.mxu0 %v8387
    %v8819 = vpop.f32.mrf.mxu0
    %v8820 = vadd.f32 %v8723, %v8819
    %v8821 = vpop.f32.mrf.mxu0
    %v8822 = vpop.f32.mrf.mxu0
    %v8823 = vadd.f32 %v8726, %v8822
    %v8824 = vpop.f32.mrf.mxu0
    %8825 = vmatprep.mubr.bf16.mxu0 %v8392
    %8826 = vmatmul.mubr.bf16.gmra.mxu0 %v8391
    %v8827 = vpop.f32.mrf.mxu0
    %v8828 = vadd.f32 %v8731, %v8827
    %v8829 = vpop.f32.mrf.mxu0
    %v8830 = vpop.f32.mrf.mxu0
    %v8831 = vadd.f32 %v8734, %v8830
    %v8832 = vpop.f32.mrf.mxu0
    %8833 = vmatprep.mubr.bf16.mxu0 %v8396
    %8834 = vmatmul.mubr.bf16.gmra.mxu0 %v8395
    %v8835 = vpop.f32.mrf.mxu0
    %v8836 = vadd.f32 %v8739, %v8835
    %v8837 = vpop.f32.mrf.mxu0
    %v8838 = vpop.f32.mrf.mxu0
    %v8839 = vadd.f32 %v8742, %v8838
    %v8840 = vpop.f32.mrf.mxu0
    %8841 = vmatprep.mubr.bf16.mxu0 %v8400
    %8842 = vmatmul.mubr.bf16.gmra.mxu0 %v8399
    %v8843 = vpop.f32.mrf.mxu0
    %v8844 = vadd.f32 %v8747, %v8843
    %v8845 = vpop.f32.mrf.mxu0
    %v8846 = vpop.f32.mrf.mxu0
    %v8847 = vadd.f32 %v8750, %v8846
    %v8848 = vpop.f32.mrf.mxu0
    %8849 = vmatprep.mubr.bf16.mxu0 %v8404
    %8850 = vmatmul.mubr.bf16.gmra.mxu0 %v8403
    %v8851 = vpop.f32.mrf.mxu0
    %v8852 = vadd.f32 %v8755, %v8851
    %v8853 = vpop.f32.mrf.mxu0
    %v8854 = vpop.f32.mrf.mxu0
    %v8855 = vadd.f32 %v8758, %v8854
    %v8856 = vpop.f32.mrf.mxu0
    %8857 = vmatprep.mubr.bf16.mxu0 %v8408
    %8858 = vmatmul.mubr.bf16.gmra.mxu0 %v8407
    %v8859 = vpop.f32.mrf.mxu0
    %v8860 = vadd.f32 %v8763, %v8859
    %v8861 = vpop.f32.mrf.mxu0
    %v8862 = vpop.f32.mrf.mxu0
    %v8863 = vadd.f32 %v8766, %v8862
    %v8864 = vpop.f32.mrf.mxu0
    %8865 = vdwg.mxu0
    %8866 = vmax.xlane.f32.xlu0 %v8804
    %v8867 = vpop.xlane.xlu0 %8866
    %8868 = vmax.xlane.f32.xlu0 %v8807
    %v8869 = vpop.xlane.xlu0 %8868
    %8870 = vmax.xlane.f32.xlu0 %v8812
    %v8871 = vpop.xlane.xlu0 %8870
    %8872 = vmax.xlane.f32.xlu0 %v8815
    %v8873 = vpop.xlane.xlu0 %8872
    %8874 = vmax.xlane.f32.xlu0 %v8820
    %v8875 = vpop.xlane.xlu0 %8874
    %8876 = vmax.xlane.f32.xlu0 %v8823
    %v8877 = vpop.xlane.xlu0 %8876
    %8878 = vmax.xlane.f32.xlu0 %v8828
    %v8879 = vpop.xlane.xlu0 %8878
    %8880 = vmax.xlane.f32.xlu0 %v8831
    %v8881 = vpop.xlane.xlu0 %8880
    %8882 = vmax.xlane.f32.xlu0 %v8836
    %v8883 = vpop.xlane.xlu0 %8882
    %8884 = vmax.xlane.f32.xlu0 %v8839
    %v8885 = vpop.xlane.xlu0 %8884
    %8886 = vmax.xlane.f32.xlu0 %v8844
    %v8887 = vpop.xlane.xlu0 %8886
    %8888 = vmax.xlane.f32.xlu0 %v8847
    %v8889 = vpop.xlane.xlu0 %8888
    %8890 = vmax.xlane.f32.xlu0 %v8852
    %v8891 = vpop.xlane.xlu0 %8890
    %8892 = vmax.xlane.f32.xlu0 %v8855
    %v8893 = vpop.xlane.xlu0 %8892
    %8894 = vmax.xlane.f32.xlu0 %v8860
    %v8895 = vpop.xlane.xlu0 %8894
    %8896 = vmax.xlane.f32.xlu0 %v8863
    %v8897 = vpop.xlane.xlu0 %8896
    %v8898 = vsub.f32 %v8804, %v8867
    %v8899 = vsub.f32 %v8807, %v8869
    %v8900 = vsub.f32 %v8812, %v8871
    %v8901 = vsub.f32 %v8815, %v8873
    %v8902 = vsub.f32 %v8820, %v8875
    %v8903 = vsub.f32 %v8823, %v8877
    %v8904 = vsub.f32 %v8828, %v8879
    %v8905 = vsub.f32 %v8831, %v8881
    %v8906 = vsub.f32 %v8836, %v8883
    %v8907 = vsub.f32 %v8839, %v8885
    %v8908 = vsub.f32 %v8844, %v8887
    %v8909 = vsub.f32 %v8847, %v8889
    %v8910 = vsub.f32 %v8852, %v8891
    %v8911 = vsub.f32 %v8855, %v8893
    %v8912 = vsub.f32 %v8860, %v8895
    %v8913 = vsub.f32 %v8863, %v8897
    %v8914 = vmul.f32 %v8898, 1.442695
    %v8915 = vpow.pop %v8914
    %v8916 = vmul.f32 %v8899, 1.442695
    %v8917 = vpow.pop %v8916
    %v8918 = vmul.f32 %v8900, 1.442695
    %v8919 = vpow.pop %v8918
    %v8920 = vmul.f32 %v8901, 1.442695
    %v8921 = vpow.pop %v8920
    %v8922 = vmul.f32 %v8902, 1.442695
    %v8923 = vpow.pop %v8922
    %v8924 = vmul.f32 %v8903, 1.442695
    %v8925 = vpow.pop %v8924
    %v8926 = vmul.f32 %v8904, 1.442695
    %v8927 = vpow.pop %v8926
    %v8928 = vmul.f32 %v8905, 1.442695
    %v8929 = vpow.pop %v8928
    %v8930 = vmul.f32 %v8906, 1.442695
    %v8931 = vpow.pop %v8930
    %v8932 = vmul.f32 %v8907, 1.442695
    %v8933 = vpow.pop %v8932
    %v8934 = vmul.f32 %v8908, 1.442695
    %v8935 = vpow.pop %v8934
    %v8936 = vmul.f32 %v8909, 1.442695
    %v8937 = vpow.pop %v8936
    %v8938 = vmul.f32 %v8910, 1.442695
    %v8939 = vpow.pop %v8938
    %v8940 = vmul.f32 %v8911, 1.442695
    %v8941 = vpow.pop %v8940
    %v8942 = vmul.f32 %v8912, 1.442695
    %v8943 = vpow.pop %v8942
    %v8944 = vmul.f32 %v8913, 1.442695
    %v8945 = vpow.pop %v8944
    %8946 = vadd.xlane.f32.xlu0 %v8915
    %v8947 = vpop.xlane.xlu0 %8946
    %8948 = vadd.xlane.f32.xlu0 %v8917
    %v8949 = vpop.xlane.xlu0 %8948
    %8950 = vadd.xlane.f32.xlu0 %v8919
    %v8951 = vpop.xlane.xlu0 %8950
    %8952 = vadd.xlane.f32.xlu0 %v8921
    %v8953 = vpop.xlane.xlu0 %8952
    %8954 = vadd.xlane.f32.xlu0 %v8923
    %v8955 = vpop.xlane.xlu0 %8954
    %8956 = vadd.xlane.f32.xlu0 %v8925
    %v8957 = vpop.xlane.xlu0 %8956
    %8958 = vadd.xlane.f32.xlu0 %v8927
    %v8959 = vpop.xlane.xlu0 %8958
    %8960 = vadd.xlane.f32.xlu0 %v8929
    %v8961 = vpop.xlane.xlu0 %8960
    %8962 = vadd.xlane.f32.xlu0 %v8931
    %v8963 = vpop.xlane.xlu0 %8962
    %8964 = vadd.xlane.f32.xlu0 %v8933
    %v8965 = vpop.xlane.xlu0 %8964
    %8966 = vadd.xlane.f32.xlu0 %v8935
    %v8967 = vpop.xlane.xlu0 %8966
    %8968 = vadd.xlane.f32.xlu0 %v8937
    %v8969 = vpop.xlane.xlu0 %8968
    %8970 = vadd.xlane.f32.xlu0 %v8939
    %v8971 = vpop.xlane.xlu0 %8970
    %8972 = vadd.xlane.f32.xlu0 %v8941
    %v8973 = vpop.xlane.xlu0 %8972
    %8974 = vadd.xlane.f32.xlu0 %v8943
    %v8975 = vpop.xlane.xlu0 %8974
    %8976 = vadd.xlane.f32.xlu0 %v8945
    %v8977 = vpop.xlane.xlu0 %8976
    %v8978 = vrcp.pop %v8947
    %v8979 = vrcp.pop %v8949
    %v8980 = vrcp.pop %v8951
    %v8981 = vrcp.pop %v8953
    %v8982 = vrcp.pop %v8955
    %v8983 = vrcp.pop %v8957
    %v8984 = vrcp.pop %v8959
    %v8985 = vrcp.pop %v8961
    %v8986 = vrcp.pop %v8963
    %v8987 = vrcp.pop %v8965
    %v8988 = vrcp.pop %v8967
    %v8989 = vrcp.pop %v8969
    %v8990 = vrcp.pop %v8971
    %v8991 = vrcp.pop %v8973
    %v8992 = vrcp.pop %v8975
    %v8993 = vrcp.pop %v8977
    %v8994 = vmul.f32 %v8915, %v8978
    %v8995 = vmul.f32 %v8917, %v8979
    %v8996 = vmul.f32 %v8919, %v8980
    %v8997 = vmul.f32 %v8921, %v8981
    %v8998 = vmul.f32 %v8923, %v8982
    %v8999 = vmul.f32 %v8925, %v8983
    %v9000 = vmul.f32 %v8927, %v8984
    %v9001 = vmul.f32 %v8929, %v8985
    %v9002 = vmul.f32 %v8931, %v8986
    %v9003 = vmul.f32 %v8933, %v8987
    %v9004 = vmul.f32 %v8935, %v8988
    %v9005 = vmul.f32 %v8937, %v8989
    %v9006 = vmul.f32 %v8939, %v8990
    %v9007 = vmul.f32 %v8941, %v8991
    %v9008 = vmul.f32 %v8943, %v8992
    %v9009 = vmul.f32 %v8945, %v8993
    %9010 = vst [vmem:[#allocation14] sm:$0xff] %v8994
    %9011 = vst [vmem:[#allocation14 + $0x8] sm:$0xff] %v8995
    %9012 = vst [vmem:[#allocation14 + $0x10] sm:$0xff] %v8996
    %9013 = vst [vmem:[#allocation14 + $0x18] sm:$0xff] %v8997
    %9014 = vst [vmem:[#allocation14 + $0x20] sm:$0xff] %v8998
    %9015 = vst [vmem:[#allocation14 + $0x28] sm:$0xff] %v8999
    %9016 = vst [vmem:[#allocation14 + $0x30] sm:$0xff] %v9000
    %9017 = vst [vmem:[#allocation14 + $0x38] sm:$0xff] %v9001
    %9018 = vst [vmem:[#allocation14 + $0x40] sm:$0xff] %v9002
    %9019 = vst [vmem:[#allocation14 + $0x48] sm:$0xff] %v9003
    %9020 = vst [vmem:[#allocation14 + $0x50] sm:$0xff] %v9004
    %9021 = vst [vmem:[#allocation14 + $0x58] sm:$0xff] %v9005
    %9022 = vst [vmem:[#allocation14 + $0x60] sm:$0xff] %v9006
    %9023 = vst [vmem:[#allocation14 + $0x68] sm:$0xff] %v9007
    %9024 = vst [vmem:[#allocation14 + $0x70] sm:$0xff] %v9008
    %9025 = vst [vmem:[#allocation14 + $0x78] sm:$0xff] %v9009
    // Predicated region
    $region58: #{tpu_custom_call.1} parent=1 // pred_check
      _
    $region59: #{tpu_custom_call.1} parent=1 // pred_check_branch
      %9027 = sbr.rel (0) target = $region61
    $region60: #{tpu_custom_call.1} parent=1 // pred_region
      %s9029 = ssub.s32 2048, 2048
      %9030 = vsyncadd [#allocation4], %s9029
      %s9031 = sshll.u32 [#allocation14], 4
      %s9032 = int_to_ptr.vmem [resolvable:$true] %s9031
      %9037 = dma.vmem_to_hbm [thread:$0]  %s9032, 2048, %s7, [#allocation4], 128, 128, 8
    $region61: #{tpu_custom_call.1} parent=1 // pred_fallthru
      _
    // Predicated region
    $region62: #{tpu_custom_call.1} parent=1 // pred_check
      _
    $region63: #{tpu_custom_call.1} parent=1 // pred_check_branch
      %9039 = sbr.rel (0) target = $region65
    $region64: #{tpu_custom_call.1} parent=1 // pred_region
      %9040 = dma.done [#allocation4], 2048
    $region65: #{tpu_custom_call.1} parent=1 // pred_fallthru
      _
    %9041 = vsyncpa [#allocation3], 1
    %9042 = vsyncpa [#allocation6], 1
    %9043 = vsyncpa [#allocation9], 1
    %9044 = vsyncpa [#allocation12], 1
    %9045 = vsyncpa [#allocation4], 1

</llo_original>
